<compile_context>
chip_gen: v6e
topology: v6e:2x2x1
jax: 0.10.0
libtpu: 0.0.40
codegen_flags: <defaults>
</compile_context>

<pallas_src>
import math

import jax
import jax.numpy as jnp
from jax import lax
from jax.experimental import pallas as pl
from jax.experimental.pallas import tpu as pltpu

# ----------------------------- configuration --------------------------------
N = 4                   # cyclic group order C_N
HIDDEN = 32             # hidden_type.size  (HIDDEN // N regular fields)
HF = HIDDEN // N
T_DIM = 16              # t_type.size (trivial fields)
N_BLOCKS = 5
OUT_DIM = 3             # out_type.size == point dim (3 trivial fields)
C_PLANE = 8             # per-plane feature channels
IN_DIM = 3 * C_PLANE    # in_type.size = 24 (= IN_F regular fields)
IN_F = IN_DIM // N
PLANE_RES = 16

TM_MAX = 1024           # points per tile on the lane axis (sweep 1024-2048 for large M)
_PREC = lax.Precision.HIGHEST   # pin MXU precision (full f32) for kernel + reference

# packed-buffer layout (feature-major weights)
P1_DIM = OUT_DIM + 1                          # [xyz ; 1]
CP1_DIM = IN_DIM + P1_DIM                     # 28 rows: [tri-plane feats | xyz | 1]
WB_CC_OFF = 0                                 # stacked fc_c (c-part) weights
WB_FC0_OFF = N_BLOCKS * HIDDEN                # 160
WB_FC1_OFF = 2 * N_BLOCKS * HIDDEN            # 320
WB_OUT_OFF = 3 * N_BLOCKS * HIDDEN            # 480
WB_ROWS = WB_OUT_OFF + OUT_DIM                # 483
B_FC0_OFF = 0
B_FC1_OFF = N_BLOCKS * HIDDEN                 # 160
B_OUT_OFF = 2 * N_BLOCKS * HIDDEN             # 320
BIAS_ROWS = B_OUT_OFF + OUT_DIM               # 323


def _round_up(x, m):
    return ((x + m - 1) // m) * m


# ----------------- equivariant weight construction (glue) -------------------
def expand_reg_reg(w):
    """w: (out_f, in_f, N) free params -> (out_f*N, in_f*N) block-circulant."""
    of, inf_, n = w.shape
    idx = (jnp.arange(n)[None, :] - jnp.arange(n)[:, None]) % n      # (N, N)
    blocks = w[:, :, idx]                                            # (of, inf, N, N)
    return blocks.transpose(0, 2, 1, 3).reshape(of * n, inf_ * n)


def expand_triv_reg(w):
    """w: (out_f, in_dim) -> (out_f*N, in_dim): trivial -> regular (rows repeated)."""
    return jnp.repeat(w, N, axis=0)


def expand_reg_triv(w):
    """w: (out_dim, in_f) -> (out_dim, in_f*N): regular -> trivial (group average)."""
    return jnp.repeat(w, N, axis=1)


def expand_reg_bias(b):
    """Bias on regular fields: constant within each N-block."""
    return jnp.repeat(b, N)


def init_params(key):
    ks = jax.random.split(key, 20)
    s = 0.3

    def nrm(k, shape):
        return jax.random.normal(k, shape, dtype=jnp.float32) * s

    p = {}
    # lifting: enn.Linear(in_type [IN_F x regular] -> hidden_type [HF x regular])
    p['w_lift'] = expand_reg_reg(nrm(ks[0], (HF, IN_F, N)))            # (32, 24)
    p['b_lift'] = expand_reg_bias(nrm(ks[1], (HF,)))                   # (32,)
    # fc_p: enn.Linear(out_type [3 x trivial] -> hidden_type)
    p['w_fp'] = expand_triv_reg(nrm(ks[2], (HF, OUT_DIM)))             # (32, 3)
    p['b_fp'] = expand_reg_bias(nrm(ks[3], (HF,)))
    # fc_c[i]: enn.Linear(hidden_type + t_type -> hidden_type)
    kc = jax.random.split(ks[4], N_BLOCKS)
    kt = jax.random.split(ks[5], N_BLOCKS)
    kb = jax.random.split(ks[6], N_BLOCKS)
    p['w_fcc_c'] = jnp.stack([expand_reg_reg(nrm(k, (HF, HF, N))) for k in kc])    # (5,32,32)
    p['w_fcc_t'] = jnp.stack([expand_triv_reg(nrm(k, (HF, T_DIM))) for k in kt])   # (5,32,16)
    p['b_fcc'] = jnp.stack([expand_reg_bias(nrm(k, (HF,))) for k in kb])           # (5,32)
    # blocks[i] = EquiResnetBlockFC(hidden_type): fc_0, fc_1 (hidden -> hidden)
    k0w = jax.random.split(ks[7], N_BLOCKS)
    k0b = jax.random.split(ks[8], N_BLOCKS)
    k1w = jax.random.split(ks[9], N_BLOCKS)
    k1b = jax.random.split(ks[10], N_BLOCKS)
    p['w_fc0'] = jnp.stack([expand_reg_reg(nrm(k, (HF, HF, N))) for k in k0w])
    p['b_fc0'] = jnp.stack([expand_reg_bias(nrm(k, (HF,))) for k in k0b])
    p['w_fc1'] = jnp.stack([expand_reg_reg(nrm(k, (HF, HF, N))) for k in k1w])
    p['b_fc1'] = jnp.stack([expand_reg_bias(nrm(k, (HF,))) for k in k1b])
    # out_layer: enn.Linear(hidden_type -> out_type [3 x trivial])
    p['w_out'] = expand_reg_triv(nrm(ks[11], (OUT_DIM, HF)))           # (3, 32)
    p['b_out'] = nrm(ks[12], (OUT_DIM,))
    # time_mlp: SinusoidalPosEmb(T_DIM) -> Linear(16,32) -> Mish -> Linear(32,16)
    p['w_t1'] = nrm(ks[13], (T_DIM * 2, T_DIM))
    p['b_t1'] = nrm(ks[14], (T_DIM * 2,))
    p['w_t2'] = nrm(ks[15], (T_DIM, T_DIM * 2))
    p['b_t2'] = nrm(ks[16], (T_DIM,))
    return p


# --------------------- BilinearSampler (JAX glue, gather) -------------------
# TODO(synk): F.grid_sample is a per-point gather; no clean dense Pallas TPU
# equivalent at this size, so the tri-plane bilinear sampling stays in JAX glue
# (fused into a single stacked-plane gather, emitted feature-major at the padded
# width so the kernel reads it with zero extra relayout).
def _normalize_coordinate(p, plane, padding=0.0):
    if plane == 'xz':
        xy = jnp.stack([p[..., 0], p[..., 2]], axis=-1)
    elif plane == 'xy':
        xy = jnp.stack([p[..., 0], p[..., 1]], axis=-1)
    else:  # 'yz'
        xy = jnp.stack([p[..., 1], p[..., 2]], axis=-1)
    xy = xy / (1.0 + padding + 10e-6) + 0.5
    xy = jnp.where(xy >= 1.0, 1.0 - 10e-6, xy)
    xy = jnp.where(xy < 0.0, 0.0, xy)
    return xy


def _grid_sample_bilinear_border(feat, x, y):
    """feat: (C, H, W); x, y: (S,) in [-1, 1]; align_corners=True, border pad."""
    C, H, W = feat.shape
    ix = jnp.clip((x + 1.0) * 0.5 * (W - 1), 0.0, W - 1)
    iy = jnp.clip((y + 1.0) * 0.5 * (H - 1), 0.0, H - 1)
    ix0 = jnp.floor(ix)
    iy0 = jnp.floor(iy)
    wx1 = ix - ix0
    wy1 = iy - iy0
    wx0 = 1.0 - wx1
    wy0 = 1.0 - wy1
    ix0c = jnp.clip(ix0, 0, W - 1).astype(jnp.int32)
    ix1c = jnp.clip(ix0 + 1.0, 0, W - 1).astype(jnp.int32)
    iy0c = jnp.clip(iy0, 0, H - 1).astype(jnp.int32)
    iy1c = jnp.clip(iy0 + 1.0, 0, H - 1).astype(jnp.int32)
    v00 = feat[:, iy0c, ix0c]
    v01 = feat[:, iy0c, ix1c]
    v10 = feat[:, iy1c, ix0c]
    v11 = feat[:, iy1c, ix1c]
    return v00 * (wy0 * wx0) + v01 * (wy0 * wx1) + v10 * (wy1 * wx0) + v11 * (wy1 * wx1)


def bilinear_sampler_bcs(p, c_plane):
    """BilinearSampler (concat_feat=True, planes ['xy','xz','yz']) -> (B, 3C, S)."""
    planes = ('xy', 'xz', 'yz')
    p = p.astype(jnp.float32)
    B, S, _ = p.shape
    xy = jnp.stack([_normalize_coordinate(p, pln) for pln in planes], axis=1)   # (B,3,S,2)
    vgrid = 2.0 * xy - 1.0
    feats = jnp.stack([c_plane[k] for k in planes], axis=1)                     # (B,3,C,H,W)
    sampled = jax.vmap(jax.vmap(_grid_sample_bilinear_border))(
        feats, vgrid[..., 0], vgrid[..., 1])                                    # (B,3,C,S)
    return sampled.reshape(B, 3 * C_PLANE, S)                                   # (B, 3C, S)


# ------------------------------ time MLP (glue) ------------------------------
def time_mlp_apply(t, params):
    half = T_DIM // 2
    scale = math.log(10000.0) / (half - 1)
    freqs = jnp.exp(-scale * jnp.arange(half, dtype=jnp.float32))
    emb = t.astype(jnp.float32)[:, None] * freqs[None, :]
    emb = jnp.concatenate([jnp.sin(emb), jnp.cos(emb)], axis=-1)      # (n, T_DIM)
    h = emb @ params['w_t1'].T + params['b_t1']
    h = h * jnp.tanh(jax.nn.softplus(h))                              # Mish
    return h @ params['w_t2'].T + params['b_t2']                      # (n, T_DIM)


# ------------------------ packed feature-major weights -----------------------
def pack_weights(params):
    f32 = jnp.float32
    # wa: fused [lifting | fc_p | bias] block weight acting on [c ; p ; 1] (28 cols).
    wa = jnp.concatenate([
        jnp.concatenate([params['w_lift'], jnp.zeros((HIDDEN, OUT_DIM), f32),
                         params['b_lift'][:, None]], axis=1),
        jnp.concatenate([jnp.zeros((HIDDEN, IN_DIM), f32), params['w_fp'],
                         params['b_fp'][:, None]], axis=1),
    ], axis=0)                                                          # (64, 28)
    # wb: stacked [fc_c(c-part) ; fc0 ; fc1 ; out] weights, all (*, HIDDEN).
    wb = jnp.concatenate([
        params['w_fcc_c'].reshape(N_BLOCKS * HIDDEN, HIDDEN),
        params['w_fc0'].reshape(N_BLOCKS * HIDDEN, HIDDEN),
        params['w_fc1'].reshape(N_BLOCKS * HIDDEN, HIDDEN),
        params['w_out'],
    ], axis=0)                                                          # (483, 32)
    # remaining biases (fc_c bias is folded into the per-batch time contribution,
    # b_lift / b_fp are folded into wa via the ones row).
    bias = jnp.concatenate([
        params['b_fc0'].reshape(-1), params['b_fc1'].reshape(-1), params['b_out'],
    ])[:, None]                                                         # (323, 1)
    return wa, wb, bias


# ------------------------------ Pallas kernel --------------------------------
def decoder_kernel(c_ref, p1_ref, tc_ref, wa_ref, wb_ref, bias_ref, o_ref):
    f32 = jnp.float32
    # Feature-major, lane-dense: [tri-plane feats ; xyz ; 1] on 8-aligned sublane offsets.
    cp1 = jnp.concatenate([c_ref[...], p1_ref[...]], axis=0)            # (28, TM)

    # Fused lifting + fc_p (+ their biases via the ones row): one MXU push.
    y = jnp.dot(wa_ref[...], cp1, preferred_element_type=f32, precision=_PREC)
    cfeat = jnp.maximum(y[:HIDDEN, :], 0.0)        # act(lifting(c))
    net = y[HIDDEN:2 * HIDDEN, :]                  # fc_p(p)

    tc = tc_ref[...]                               # (5*HIDDEN, 1) per-batch time part (+ b_fcc)

    # fc_c is computed per block (un-hoisted): intermediates stay (32, TM) and are
    # consumed immediately, avoiding the (160, TM) spill/store traffic of a hoisted
    # cc_all (binding on v5e's single vector-store slot; a wash on v6e/v7x).
    for i in range(N_BLOCKS):
        lo = i * HIDDEN
        hi = lo + HIDDEN
        # net = net + fc_c[i](cat(c, t))
        net = (net
               + jnp.dot(wb_ref[WB_CC_OFF + lo:WB_CC_OFF + hi, :], cfeat,
                         preferred_element_type=f32, precision=_PREC)
               + tc[lo:hi, :])
        # EquiResnetBlockFC: x + fc_1(relu(fc_0(relu(x))))
        h = (jnp.dot(wb_ref[WB_FC0_OFF + lo:WB_FC0_OFF + hi, :], jnp.maximum(net, 0.0),
                     preferred_element_type=f32, precision=_PREC)
             + bias_ref[B_FC0_OFF + lo:B_FC0_OFF + hi, :])
        dx = (jnp.dot(wb_ref[WB_FC1_OFF + lo:WB_FC1_OFF + hi, :], jnp.maximum(h, 0.0),
                      preferred_element_type=f32, precision=_PREC)
              + bias_ref[B_FC1_OFF + lo:B_FC1_OFF + hi, :])
        net = net + dx

    # out_layer -> lane-dense (3, TM) store
    o_ref[...] = (jnp.dot(wb_ref[WB_OUT_OFF:WB_OUT_OFF + OUT_DIM, :], net,
                          preferred_element_type=f32, precision=_PREC)
                  + bias_ref[B_OUT_OFF:B_OUT_OFF + OUT_DIM, :])


# ------------------------------ forward wrapper ------------------------------
@jax.jit
def _decoder_impl(data, c_plane, time, params):
    B, S, _ = data.shape
    f32 = jnp.float32

    if time.ndim != 1:
        # TODO(synk): per-point time conditioning would need a per-point t channel in
        # the kernel; only the per-batch (diffusion-time) path is implemented.
        raise NotImplementedError("per-point time not supported by the fused kernel")

    # Tile sizing: large lane tiles; for B == 1 split the single tile so the grid has
    # >= 2 parallel steps (keeps both TensorCores busy on v7x).
    # TODO(synk): for small-S / large-B workloads tiles are capped at round_up(S, 128);
    # packing multiple batches per tile would need per-column time conditioning.
    s128 = _round_up(S, 128)
    tm = min(TM_MAX, s128)
    if B == 1 and s128 <= TM_MAX and s128 >= 256:
        tm = _round_up(s128 // 2, 128)
    s_pad = _round_up(S, tm)
    tpb = s_pad // tm                                                  # tiles per batch

    # Pad only the query points (12 B/point); the sampler then emits feature-major
    # output directly at the padded width -> no pad/concat/transpose of the big c array.
    data_pad = jnp.pad(data.astype(f32), ((0, 0), (0, s_pad - S), (0, 0)))  # (B, s_pad, 3)

    if isinstance(c_plane, dict):
        c_f = bilinear_sampler_bcs(data_pad, c_plane)                  # (B, 24, s_pad)
    else:
        # point-major dense features: one unavoidable relayout for this input format
        c_f = jnp.pad(jnp.transpose(c_plane.astype(f32), (0, 2, 1)),
                      ((0, 0), (0, 0), (0, s_pad - S)))                # (B, 24, s_pad)

    # [xyz ; 1] feature-major; the ones row folds b_lift / b_fp into wa on the MXU.
    p1_f = jnp.concatenate([jnp.transpose(data_pad, (0, 2, 1)),
                            jnp.ones((B, 1, s_pad), f32)], axis=1)     # (B, 4, s_pad)

    # Per-batch time: fold the fc_c time contribution (+ fc_c bias) into (B, 160, 1).
    t_emb = time_mlp_apply(time.reshape(-1), params)                   # (B, T_DIM)
    tc = (jnp.einsum('iht,bt->bih', params['w_fcc_t'], t_emb, precision=_PREC)
          + params['b_fcc'][None]).reshape(B, N_BLOCKS * HIDDEN, 1)

    wa, wb, bias = pack_weights(params)

    out = pl.pallas_call(
        decoder_kernel,
        out_shape=jax.ShapeDtypeStruct((B, OUT_DIM, s_pad), f32),
        grid_spec=pltpu.PrefetchScalarGridSpec(
            num_scalar_prefetch=0,
            grid=(B, tpb),
            in_specs=[
                pl.BlockSpec((None, IN_DIM, tm), lambda b, j: (b, 0, j)),
                pl.BlockSpec((None, P1_DIM, tm), lambda b, j: (b, 0, j)),
                pl.BlockSpec((None, N_BLOCKS * HIDDEN, 1), lambda b, j: (b, 0, 0)),
                pl.BlockSpec((2 * HIDDEN, CP1_DIM), lambda b, j: (0, 0)),
                pl.BlockSpec((WB_ROWS, HIDDEN), lambda b, j: (0, 0)),
                pl.BlockSpec((BIAS_ROWS, 1), lambda b, j: (0, 0)),
            ],
            out_specs=pl.BlockSpec((None, OUT_DIM, tm), lambda b, j: (b, 0, j)),
        ),
        compiler_params=pltpu.CompilerParams(
            dimension_semantics=("parallel", "parallel")),
    )(c_f, p1_f, tc, wa, wb, bias)

    out = out[:, :, :S]
    # .reshape(B, S, -1).squeeze(-1) : squeeze is a no-op since OUT_DIM == 3
    return jnp.transpose(out, (0, 2, 1))                               # (B, S, OUT_DIM)


def tri_time_equi_decoder(data, c_plane, time, params):
    return _decoder_impl(data, c_plane, time, params)


# ------------------------- pure-JAX reference (check) ------------------------
def _mm(a, b):
    return jnp.dot(a, b, precision=_PREC)


def reference_forward(data, c_plane, time, params):
    B, S, _ = data.shape
    if isinstance(c_plane, dict):
        c = jnp.transpose(bilinear_sampler_bcs(data, c_plane), (0, 2, 1))
    else:
        c = c_plane
    t_emb = time_mlp_apply(time.reshape(-1), params)
    t = jnp.broadcast_to(t_emb.reshape(B, 1, T_DIM), (B, S, T_DIM)).reshape(B * S, T_DIM)
    c = c.reshape(B * S, IN_DIM)
    p = data.reshape(B * S, OUT_DIM).astype(jnp.float32)
    cfeat = jnp.maximum(_mm(c, params['w_lift'].T) + params['b_lift'], 0.0)
    net = _mm(p, params['w_fp'].T) + params['b_fp']
    cc = jnp.concatenate([cfeat, t], axis=-1)
    for i in range(N_BLOCKS):
        w_fcc = jnp.concatenate([params['w_fcc_c'][i], params['w_fcc_t'][i]], axis=1)
        net = net + _mm(cc, w_fcc.T) + params['b_fcc'][i]
        h = _mm(jnp.maximum(net, 0.0), params['w_fc0'][i].T) + params['b_fc0'][i]
        dx = _mm(jnp.maximum(h, 0.0), params['w_fc1'][i].T) + params['b_fc1'][i]
        net = net + dx
    out = _mm(net, params['w_out'].T) + params['b_out']
    return out.reshape(B, S, -1)


# ------------------------------------ main -----------------------------------
if __name__ == "__main__":
    key = jax.random.PRNGKey(0)
    kp, kd, kt, kx, ky, kz = jax.random.split(key, 6)
    params = init_params(kp)

    B, S = 2, 128
    data = jax.random.uniform(kd, (B, S, 3), minval=-0.5, maxval=0.5, dtype=jnp.float32)
    time = jax.random.uniform(kt, (B,), minval=0.0, maxval=1.0, dtype=jnp.float32)
    c_plane = {
        'xy': jax.random.normal(kx, (B, C_PLANE, PLANE_RES, PLANE_RES), jnp.float32),
        'xz': jax.random.normal(ky, (B, C_PLANE, PLANE_RES, PLANE_RES), jnp.float32),
        'yz': jax.random.normal(kz, (B, C_PLANE, PLANE_RES, PLANE_RES), jnp.float32),
    }

    out = tri_time_equi_decoder(data, c_plane, time, params)
    out = jax.block_until_ready(out)

    ref = reference_forward(data, c_plane, time, params)
    assert out.shape == (B, S, OUT_DIM), out.shape
    err = float(jnp.max(jnp.abs(out - ref)))
    assert err < 2e-4, f"mismatch vs reference: {err}"
    print("KERNEL_OK")
</pallas_src>

<mosaic_0001>
module attributes {stable_mosaic.version = 11 : i64} {
  func.func @decoder_kernel(%arg0: i32, %arg1: i32, %arg2: memref<1x24x128xf32, #tpu.memory_space<vmem>>, %arg3: memref<1x4x128xf32, #tpu.memory_space<vmem>>, %arg4: memref<1x160x1xf32, #tpu.memory_space<vmem>>, %arg5: memref<64x28xf32, #tpu.memory_space<vmem>>, %arg6: memref<483x32xf32, #tpu.memory_space<vmem>>, %arg7: memref<323x1xf32, #tpu.memory_space<vmem>>, %arg8: memref<1x3x128xf32, #tpu.memory_space<vmem>>) attributes {dimension_semantics = [#tpu.dimension_semantics<parallel>, #tpu.dimension_semantics<parallel>], iteration_bounds = array<i64: 2, 1>, scalar_prefetch = 0 : i64, scratch_operands = 0 : i64, tpu.core_type = #tpu.core_type<tc>, window_params = [{transform_indices = @transform_0, window_bounds = array<i64: 1, 24, 128>}, {transform_indices = @transform_1, window_bounds = array<i64: 1, 4, 128>}, {transform_indices = @transform_2, window_bounds = array<i64: 1, 160, 1>}, {pipeline_mode = #tpu.pipeline_mode<synchronous>, transform_indices = @transform_3, window_bounds = array<i64: 64, 28>}, {pipeline_mode = #tpu.pipeline_mode<synchronous>, transform_indices = @transform_4, window_bounds = array<i64: 483, 32>}, {pipeline_mode = #tpu.pipeline_mode<synchronous>, transform_indices = @transform_5, window_bounds = array<i64: 323, 1>}, {transform_indices = @transform_6, window_bounds = array<i64: 1, 3, 128>}]} {
    %c0 = arith.constant 0 : index
    %c0_0 = arith.constant 0 : index
    %c0_1 = arith.constant 0 : index
    %0 = vector.load %arg2[%c0, %c0_0, %c0_1] : memref<1x24x128xf32, #tpu.memory_space<vmem>>, vector<1x24x128xf32>
    %1 = vector.shape_cast %0 : vector<1x24x128xf32> to vector<24x128xf32>
    %c0_2 = arith.constant 0 : index
    %c0_3 = arith.constant 0 : index
    %c0_4 = arith.constant 0 : index
    %2 = vector.load %arg3[%c0_2, %c0_3, %c0_4] : memref<1x4x128xf32, #tpu.memory_space<vmem>>, vector<1x4x128xf32>
    %3 = vector.shape_cast %2 : vector<1x4x128xf32> to vector<4x128xf32>
    %4 = tpu.concatenate %1, %3 in 0 : vector<24x128xf32>, vector<4x128xf32> -> vector<28x128xf32>
    %c0_5 = arith.constant 0 : index
    %c0_6 = arith.constant 0 : index
    %5 = vector.load %arg5[%c0_5, %c0_6] : memref<64x28xf32, #tpu.memory_space<vmem>>, vector<64x28xf32>
    %cst = arith.constant dense<0.000000e+00> : vector<64x128xf32>
    %6 = tpu.matmul %5, %4, %cst {dimension_numbers = #tpu.dot_dimension_numbers<[1], [0], [0], [1], [0, 0, 1, 1], [], []>, precision = #tpu.contract_precision<fp32>} : vector<64x28xf32>, vector<28x128xf32>, vector<64x128xf32> -> vector<64x128xf32>
    %7 = vector.extract_strided_slice %6 {offsets = [0, 0], sizes = [32, 128], strides = [1, 1]} : vector<64x128xf32> to vector<32x128xf32>
    %cst_7 = arith.constant 0.000000e+00 : f32
    %8 = vector.broadcast %cst_7 : f32 to vector<32x128xf32>
    %9 = arith.maximumf %7, %8 : vector<32x128xf32>
    %10 = vector.extract_strided_slice %6 {offsets = [32, 0], sizes = [32, 128], strides = [1, 1]} : vector<64x128xf32> to vector<32x128xf32>
    %c0_8 = arith.constant 0 : index
    %c0_9 = arith.constant 0 : index
    %c0_10 = arith.constant 0 : index
    %11 = vector.load %arg4[%c0_8, %c0_9, %c0_10] : memref<1x160x1xf32, #tpu.memory_space<vmem>>, vector<1x160x1xf32>
    %12 = vector.shape_cast %11 : vector<1x160x1xf32> to vector<160x1xf32>
    %c0_11 = arith.constant 0 : index
    %c0_12 = arith.constant 0 : index
    %13 = vector.load %arg6[%c0_11, %c0_12] : memref<483x32xf32, #tpu.memory_space<vmem>>, vector<32x32xf32>
    %cst_13 = arith.constant dense<0.000000e+00> : vector<32x128xf32>
    %14 = tpu.matmul %13, %9, %cst_13 {dimension_numbers = #tpu.dot_dimension_numbers<[1], [0], [0], [1], [0, 0, 1, 1], [], []>, precision = #tpu.contract_precision<fp32>} : vector<32x32xf32>, vector<32x128xf32>, vector<32x128xf32> -> vector<32x128xf32>
    %15 = arith.addf %10, %14 : vector<32x128xf32>
    %16 = vector.extract_strided_slice %12 {offsets = [0, 0], sizes = [32, 1], strides = [1, 1]} : vector<160x1xf32> to vector<32x1xf32>
    %17 = vector.broadcast %16 : vector<32x1xf32> to vector<32x128xf32>
    %18 = arith.addf %15, %17 : vector<32x128xf32>
    %c160 = arith.constant 160 : index
    %c0_14 = arith.constant 0 : index
    %19 = vector.load %arg6[%c160, %c0_14] : memref<483x32xf32, #tpu.memory_space<vmem>>, vector<32x32xf32>
    %cst_15 = arith.constant 0.000000e+00 : f32
    %20 = vector.broadcast %cst_15 : f32 to vector<32x128xf32>
    %21 = arith.maximumf %18, %20 : vector<32x128xf32>
    %cst_16 = arith.constant dense<0.000000e+00> : vector<32x128xf32>
    %22 = tpu.matmul %19, %21, %cst_16 {dimension_numbers = #tpu.dot_dimension_numbers<[1], [0], [0], [1], [0, 0, 1, 1], [], []>, precision = #tpu.contract_precision<fp32>} : vector<32x32xf32>, vector<32x128xf32>, vector<32x128xf32> -> vector<32x128xf32>
    %c0_17 = arith.constant 0 : index
    %c0_18 = arith.constant 0 : index
    %23 = vector.load %arg7[%c0_17, %c0_18] : memref<323x1xf32, #tpu.memory_space<vmem>>, vector<32x1xf32>
    %24 = vector.broadcast %23 : vector<32x1xf32> to vector<32x128xf32>
    %25 = arith.addf %22, %24 : vector<32x128xf32>
    %c320 = arith.constant 320 : index
    %c0_19 = arith.constant 0 : index
    %26 = vector.load %arg6[%c320, %c0_19] : memref<483x32xf32, #tpu.memory_space<vmem>>, vector<32x32xf32>
    %cst_20 = arith.constant 0.000000e+00 : f32
    %27 = vector.broadcast %cst_20 : f32 to vector<32x128xf32>
    %28 = arith.maximumf %25, %27 : vector<32x128xf32>
    %cst_21 = arith.constant dense<0.000000e+00> : vector<32x128xf32>
    %29 = tpu.matmul %26, %28, %cst_21 {dimension_numbers = #tpu.dot_dimension_numbers<[1], [0], [0], [1], [0, 0, 1, 1], [], []>, precision = #tpu.contract_precision<fp32>} : vector<32x32xf32>, vector<32x128xf32>, vector<32x128xf32> -> vector<32x128xf32>
    %c160_22 = arith.constant 160 : index
    %c0_23 = arith.constant 0 : index
    %30 = vector.load %arg7[%c160_22, %c0_23] : memref<323x1xf32, #tpu.memory_space<vmem>>, vector<32x1xf32>
    %31 = vector.broadcast %30 : vector<32x1xf32> to vector<32x128xf32>
    %32 = arith.addf %29, %31 : vector<32x128xf32>
    %33 = arith.addf %18, %32 : vector<32x128xf32>
    %c32 = arith.constant 32 : index
    %c0_24 = arith.constant 0 : index
    %34 = vector.load %arg6[%c32, %c0_24] : memref<483x32xf32, #tpu.memory_space<vmem>>, vector<32x32xf32>
    %cst_25 = arith.constant dense<0.000000e+00> : vector<32x128xf32>
    %35 = tpu.matmul %34, %9, %cst_25 {dimension_numbers = #tpu.dot_dimension_numbers<[1], [0], [0], [1], [0, 0, 1, 1], [], []>, precision = #tpu.contract_precision<fp32>} : vector<32x32xf32>, vector<32x128xf32>, vector<32x128xf32> -> vector<32x128xf32>
    %36 = arith.addf %33, %35 : vector<32x128xf32>
    %37 = vector.extract_strided_slice %12 {offsets = [32, 0], sizes = [32, 1], strides = [1, 1]} : vector<160x1xf32> to vector<32x1xf32>
    %38 = vector.broadcast %37 : vector<32x1xf32> to vector<32x128xf32>
    %39 = arith.addf %36, %38 : vector<32x128xf32>
    %c192 = arith.constant 192 : index
    %c0_26 = arith.constant 0 : index
    %40 = vector.load %arg6[%c192, %c0_26] : memref<483x32xf32, #tpu.memory_space<vmem>>, vector<32x32xf32>
    %cst_27 = arith.constant 0.000000e+00 : f32
    %41 = vector.broadcast %cst_27 : f32 to vector<32x128xf32>
    %42 = arith.maximumf %39, %41 : vector<32x128xf32>
    %cst_28 = arith.constant dense<0.000000e+00> : vector<32x128xf32>
    %43 = tpu.matmul %40, %42, %cst_28 {dimension_numbers = #tpu.dot_dimension_numbers<[1], [0], [0], [1], [0, 0, 1, 1], [], []>, precision = #tpu.contract_precision<fp32>} : vector<32x32xf32>, vector<32x128xf32>, vector<32x128xf32> -> vector<32x128xf32>
    %c32_29 = arith.constant 32 : index
    %c0_30 = arith.constant 0 : index
    %44 = vector.load %arg7[%c32_29, %c0_30] : memref<323x1xf32, #tpu.memory_space<vmem>>, vector<32x1xf32>
    %45 = vector.broadcast %44 : vector<32x1xf32> to vector<32x128xf32>
    %46 = arith.addf %43, %45 : vector<32x128xf32>
    %c352 = arith.constant 352 : index
    %c0_31 = arith.constant 0 : index
    %47 = vector.load %arg6[%c352, %c0_31] : memref<483x32xf32, #tpu.memory_space<vmem>>, vector<32x32xf32>
    %cst_32 = arith.constant 0.000000e+00 : f32
    %48 = vector.broadcast %cst_32 : f32 to vector<32x128xf32>
    %49 = arith.maximumf %46, %48 : vector<32x128xf32>
    %cst_33 = arith.constant dense<0.000000e+00> : vector<32x128xf32>
    %50 = tpu.matmul %47, %49, %cst_33 {dimension_numbers = #tpu.dot_dimension_numbers<[1], [0], [0], [1], [0, 0, 1, 1], [], []>, precision = #tpu.contract_precision<fp32>} : vector<32x32xf32>, vector<32x128xf32>, vector<32x128xf32> -> vector<32x128xf32>
    %c192_34 = arith.constant 192 : index
    %c0_35 = arith.constant 0 : index
    %51 = vector.load %arg7[%c192_34, %c0_35] : memref<323x1xf32, #tpu.memory_space<vmem>>, vector<32x1xf32>
    %52 = vector.broadcast %51 : vector<32x1xf32> to vector<32x128xf32>
    %53 = arith.addf %50, %52 : vector<32x128xf32>
    %54 = arith.addf %39, %53 : vector<32x128xf32>
    %c64 = arith.constant 64 : index
    %c0_36 = arith.constant 0 : index
    %55 = vector.load %arg6[%c64, %c0_36] : memref<483x32xf32, #tpu.memory_space<vmem>>, vector<32x32xf32>
    %cst_37 = arith.constant dense<0.000000e+00> : vector<32x128xf32>
    %56 = tpu.matmul %55, %9, %cst_37 {dimension_numbers = #tpu.dot_dimension_numbers<[1], [0], [0], [1], [0, 0, 1, 1], [], []>, precision = #tpu.contract_precision<fp32>} : vector<32x32xf32>, vector<32x128xf32>, vector<32x128xf32> -> vector<32x128xf32>
    %57 = arith.addf %54, %56 : vector<32x128xf32>
    %58 = vector.extract_strided_slice %12 {offsets = [64, 0], sizes = [32, 1], strides = [1, 1]} : vector<160x1xf32> to vector<32x1xf32>
    %59 = vector.broadcast %58 : vector<32x1xf32> to vector<32x128xf32>
    %60 = arith.addf %57, %59 : vector<32x128xf32>
    %c224 = arith.constant 224 : index
    %c0_38 = arith.constant 0 : index
    %61 = vector.load %arg6[%c224, %c0_38] : memref<483x32xf32, #tpu.memory_space<vmem>>, vector<32x32xf32>
    %cst_39 = arith.constant 0.000000e+00 : f32
    %62 = vector.broadcast %cst_39 : f32 to vector<32x128xf32>
    %63 = arith.maximumf %60, %62 : vector<32x128xf32>
    %cst_40 = arith.constant dense<0.000000e+00> : vector<32x128xf32>
    %64 = tpu.matmul %61, %63, %cst_40 {dimension_numbers = #tpu.dot_dimension_numbers<[1], [0], [0], [1], [0, 0, 1, 1], [], []>, precision = #tpu.contract_precision<fp32>} : vector<32x32xf32>, vector<32x128xf32>, vector<32x128xf32> -> vector<32x128xf32>
    %c64_41 = arith.constant 64 : index
    %c0_42 = arith.constant 0 : index
    %65 = vector.load %arg7[%c64_41, %c0_42] : memref<323x1xf32, #tpu.memory_space<vmem>>, vector<32x1xf32>
    %66 = vector.broadcast %65 : vector<32x1xf32> to vector<32x128xf32>
    %67 = arith.addf %64, %66 : vector<32x128xf32>
    %c384 = arith.constant 384 : index
    %c0_43 = arith.constant 0 : index
    %68 = vector.load %arg6[%c384, %c0_43] : memref<483x32xf32, #tpu.memory_space<vmem>>, vector<32x32xf32>
    %cst_44 = arith.constant 0.000000e+00 : f32
    %69 = vector.broadcast %cst_44 : f32 to vector<32x128xf32>
    %70 = arith.maximumf %67, %69 : vector<32x128xf32>
    %cst_45 = arith.constant dense<0.000000e+00> : vector<32x128xf32>
    %71 = tpu.matmul %68, %70, %cst_45 {dimension_numbers = #tpu.dot_dimension_numbers<[1], [0], [0], [1], [0, 0, 1, 1], [], []>, precision = #tpu.contract_precision<fp32>} : vector<32x32xf32>, vector<32x128xf32>, vector<32x128xf32> -> vector<32x128xf32>
    %c224_46 = arith.constant 224 : index
    %c0_47 = arith.constant 0 : index
    %72 = vector.load %arg7[%c224_46, %c0_47] : memref<323x1xf32, #tpu.memory_space<vmem>>, vector<32x1xf32>
    %73 = vector.broadcast %72 : vector<32x1xf32> to vector<32x128xf32>
    %74 = arith.addf %71, %73 : vector<32x128xf32>
    %75 = arith.addf %60, %74 : vector<32x128xf32>
    %c96 = arith.constant 96 : index
    %c0_48 = arith.constant 0 : index
    %76 = vector.load %arg6[%c96, %c0_48] : memref<483x32xf32, #tpu.memory_space<vmem>>, vector<32x32xf32>
    %cst_49 = arith.constant dense<0.000000e+00> : vector<32x128xf32>
    %77 = tpu.matmul %76, %9, %cst_49 {dimension_numbers = #tpu.dot_dimension_numbers<[1], [0], [0], [1], [0, 0, 1, 1], [], []>, precision = #tpu.contract_precision<fp32>} : vector<32x32xf32>, vector<32x128xf32>, vector<32x128xf32> -> vector<32x128xf32>
    %78 = arith.addf %75, %77 : vector<32x128xf32>
    %79 = vector.extract_strided_slice %12 {offsets = [96, 0], sizes = [32, 1], strides = [1, 1]} : vector<160x1xf32> to vector<32x1xf32>
    %80 = vector.broadcast %79 : vector<32x1xf32> to vector<32x128xf32>
    %81 = arith.addf %78, %80 : vector<32x128xf32>
    %c256 = arith.constant 256 : index
    %c0_50 = arith.constant 0 : index
    %82 = vector.load %arg6[%c256, %c0_50] : memref<483x32xf32, #tpu.memory_space<vmem>>, vector<32x32xf32>
    %cst_51 = arith.constant 0.000000e+00 : f32
    %83 = vector.broadcast %cst_51 : f32 to vector<32x128xf32>
    %84 = arith.maximumf %81, %83 : vector<32x128xf32>
    %cst_52 = arith.constant dense<0.000000e+00> : vector<32x128xf32>
    %85 = tpu.matmul %82, %84, %cst_52 {dimension_numbers = #tpu.dot_dimension_numbers<[1], [0], [0], [1], [0, 0, 1, 1], [], []>, precision = #tpu.contract_precision<fp32>} : vector<32x32xf32>, vector<32x128xf32>, vector<32x128xf32> -> vector<32x128xf32>
    %c96_53 = arith.constant 96 : index
    %c0_54 = arith.constant 0 : index
    %86 = vector.load %arg7[%c96_53, %c0_54] : memref<323x1xf32, #tpu.memory_space<vmem>>, vector<32x1xf32>
    %87 = vector.broadcast %86 : vector<32x1xf32> to vector<32x128xf32>
    %88 = arith.addf %85, %87 : vector<32x128xf32>
    %c416 = arith.constant 416 : index
    %c0_55 = arith.constant 0 : index
    %89 = vector.load %arg6[%c416, %c0_55] : memref<483x32xf32, #tpu.memory_space<vmem>>, vector<32x32xf32>
    %cst_56 = arith.constant 0.000000e+00 : f32
    %90 = vector.broadcast %cst_56 : f32 to vector<32x128xf32>
    %91 = arith.maximumf %88, %90 : vector<32x128xf32>
    %cst_57 = arith.constant dense<0.000000e+00> : vector<32x128xf32>
    %92 = tpu.matmul %89, %91, %cst_57 {dimension_numbers = #tpu.dot_dimension_numbers<[1], [0], [0], [1], [0, 0, 1, 1], [], []>, precision = #tpu.contract_precision<fp32>} : vector<32x32xf32>, vector<32x128xf32>, vector<32x128xf32> -> vector<32x128xf32>
    %c256_58 = arith.constant 256 : index
    %c0_59 = arith.constant 0 : index
    %93 = vector.load %arg7[%c256_58, %c0_59] : memref<323x1xf32, #tpu.memory_space<vmem>>, vector<32x1xf32>
    %94 = vector.broadcast %93 : vector<32x1xf32> to vector<32x128xf32>
    %95 = arith.addf %92, %94 : vector<32x128xf32>
    %96 = arith.addf %81, %95 : vector<32x128xf32>
    %c128 = arith.constant 128 : index
    %c0_60 = arith.constant 0 : index
    %97 = vector.load %arg6[%c128, %c0_60] : memref<483x32xf32, #tpu.memory_space<vmem>>, vector<32x32xf32>
    %cst_61 = arith.constant dense<0.000000e+00> : vector<32x128xf32>
    %98 = tpu.matmul %97, %9, %cst_61 {dimension_numbers = #tpu.dot_dimension_numbers<[1], [0], [0], [1], [0, 0, 1, 1], [], []>, precision = #tpu.contract_precision<fp32>} : vector<32x32xf32>, vector<32x128xf32>, vector<32x128xf32> -> vector<32x128xf32>
    %99 = arith.addf %96, %98 : vector<32x128xf32>
    %100 = vector.extract_strided_slice %12 {offsets = [128, 0], sizes = [32, 1], strides = [1, 1]} : vector<160x1xf32> to vector<32x1xf32>
    %101 = vector.broadcast %100 : vector<32x1xf32> to vector<32x128xf32>
    %102 = arith.addf %99, %101 : vector<32x128xf32>
    %c288 = arith.constant 288 : index
    %c0_62 = arith.constant 0 : index
    %103 = vector.load %arg6[%c288, %c0_62] : memref<483x32xf32, #tpu.memory_space<vmem>>, vector<32x32xf32>
    %cst_63 = arith.constant 0.000000e+00 : f32
    %104 = vector.broadcast %cst_63 : f32 to vector<32x128xf32>
    %105 = arith.maximumf %102, %104 : vector<32x128xf32>
    %cst_64 = arith.constant dense<0.000000e+00> : vector<32x128xf32>
    %106 = tpu.matmul %103, %105, %cst_64 {dimension_numbers = #tpu.dot_dimension_numbers<[1], [0], [0], [1], [0, 0, 1, 1], [], []>, precision = #tpu.contract_precision<fp32>} : vector<32x32xf32>, vector<32x128xf32>, vector<32x128xf32> -> vector<32x128xf32>
    %c128_65 = arith.constant 128 : index
    %c0_66 = arith.constant 0 : index
    %107 = vector.load %arg7[%c128_65, %c0_66] : memref<323x1xf32, #tpu.memory_space<vmem>>, vector<32x1xf32>
    %108 = vector.broadcast %107 : vector<32x1xf32> to vector<32x128xf32>
    %109 = arith.addf %106, %108 : vector<32x128xf32>
    %c448 = arith.constant 448 : index
    %c0_67 = arith.constant 0 : index
    %110 = vector.load %arg6[%c448, %c0_67] : memref<483x32xf32, #tpu.memory_space<vmem>>, vector<32x32xf32>
    %cst_68 = arith.constant 0.000000e+00 : f32
    %111 = vector.broadcast %cst_68 : f32 to vector<32x128xf32>
    %112 = arith.maximumf %109, %111 : vector<32x128xf32>
    %cst_69 = arith.constant dense<0.000000e+00> : vector<32x128xf32>
    %113 = tpu.matmul %110, %112, %cst_69 {dimension_numbers = #tpu.dot_dimension_numbers<[1], [0], [0], [1], [0, 0, 1, 1], [], []>, precision = #tpu.contract_precision<fp32>} : vector<32x32xf32>, vector<32x128xf32>, vector<32x128xf32> -> vector<32x128xf32>
    %c288_70 = arith.constant 288 : index
    %c0_71 = arith.constant 0 : index
    %114 = vector.load %arg7[%c288_70, %c0_71] : memref<323x1xf32, #tpu.memory_space<vmem>>, vector<32x1xf32>
    %115 = vector.broadcast %114 : vector<32x1xf32> to vector<32x128xf32>
    %116 = arith.addf %113, %115 : vector<32x128xf32>
    %117 = arith.addf %102, %116 : vector<32x128xf32>
    %c480 = arith.constant 480 : index
    %c0_72 = arith.constant 0 : index
    %118 = vector.load %arg6[%c480, %c0_72] : memref<483x32xf32, #tpu.memory_space<vmem>>, vector<3x32xf32>
    %cst_73 = arith.constant dense<0.000000e+00> : vector<3x128xf32>
    %119 = tpu.matmul %118, %117, %cst_73 {dimension_numbers = #tpu.dot_dimension_numbers<[1], [0], [0], [1], [0, 0, 1, 1], [], []>, precision = #tpu.contract_precision<fp32>} : vector<3x32xf32>, vector<32x128xf32>, vector<3x128xf32> -> vector<3x128xf32>
    %c320_74 = arith.constant 320 : index
    %c0_75 = arith.constant 0 : index
    %120 = vector.load %arg7[%c320_74, %c0_75] : memref<323x1xf32, #tpu.memory_space<vmem>>, vector<3x1xf32>
    %121 = vector.broadcast %120 : vector<3x1xf32> to vector<3x128xf32>
    %122 = arith.addf %119, %121 : vector<3x128xf32>
    %c0_76 = arith.constant 0 : index
    %c0_77 = arith.constant 0 : index
    %c0_78 = arith.constant 0 : index
    %123 = vector.load %arg8[%c0_76, %c0_77, %c0_78] : memref<1x3x128xf32, #tpu.memory_space<vmem>>, vector<1x3x128xf32>
    %124 = vector.shape_cast %123 : vector<1x3x128xf32> to vector<3x128xf32>
    %125 = vector.shape_cast %122 : vector<3x128xf32> to vector<1x3x128xf32>
    tpu.vector_store %arg8[%c0_76, %c0_77, %c0_78], %125 {strides = array<i32>} : memref<1x3x128xf32, #tpu.memory_space<vmem>>, vector<1x3x128xf32>,
    return
  }
  func.func @transform_0(%arg0: i32, %arg1: i32) -> (i32, i32, i32) {
    %c0_i32 = arith.constant 0 : i32
    %c0_i32_0 = arith.constant 0 : i32
    return %arg0, %c0_i32, %arg1 : i32, i32, i32
  }
  func.func @transform_1(%arg0: i32, %arg1: i32) -> (i32, i32, i32) {
    %c0_i32 = arith.constant 0 : i32
    %c0_i32_0 = arith.constant 0 : i32
    return %arg0, %c0_i32, %arg1 : i32, i32, i32
  }
  func.func @transform_2(%arg0: i32, %arg1: i32) -> (i32, i32, i32) {
    %c0_i32 = arith.constant 0 : i32
    %c0_i32_0 = arith.constant 0 : i32
    %c0_i32_1 = arith.constant 0 : i32
    return %arg0, %c0_i32, %c0_i32_0 : i32, i32, i32
  }
  func.func @transform_3(%arg0: i32, %arg1: i32) -> (i32, i32) {
    %c0_i32 = arith.constant 0 : i32
    %c0_i32_0 = arith.constant 0 : i32
    %c0_i32_1 = arith.constant 0 : i32
    return %c0_i32, %c0_i32_0 : i32, i32
  }
  func.func @transform_4(%arg0: i32, %arg1: i32) -> (i32, i32) {
    %c0_i32 = arith.constant 0 : i32
    %c0_i32_0 = arith.constant 0 : i32
    %c0_i32_1 = arith.constant 0 : i32
    return %c0_i32, %c0_i32_0 : i32, i32
  }
  func.func @transform_5(%arg0: i32, %arg1: i32) -> (i32, i32) {
    %c0_i32 = arith.constant 0 : i32
    %c0_i32_0 = arith.constant 0 : i32
    %c0_i32_1 = arith.constant 0 : i32
    return %c0_i32, %c0_i32_0 : i32, i32
  }
  func.func @transform_6(%arg0: i32, %arg1: i32) -> (i32, i32, i32) {
    %c0_i32 = arith.constant 0 : i32
    %c0_i32_0 = arith.constant 0 : i32
    return %arg0, %c0_i32, %arg1 : i32, i32, i32
  }
}

</mosaic_0001>

<llo_original>
// kernel: _decoder_impl.1
$region0: #{_decoder_impl.1}
  #allocation0 [shape = 'u32[]', space=smem, size = 0x4, offset = 0x4, fixed_abs, tag = 'smem constant byte address 0x4 - core index']
  #allocation1 [shape = 'u32[144,128]{1,0:T(1,128)}', space=vmem, size = 0x12000, scoped, tag = 'internal scratch']
  %s0 = inlined_call_operand.vmem [shape: f32[2,24,128], index: 0, kind: input, shape index: {}]
  %s1 = inlined_call_operand.vmem [shape: f32[2,4,128], index: 1, kind: input, shape index: {}]
  %s2 = inlined_call_operand.vmem [shape: f32[2,160,1], index: 2, kind: input, shape index: {}]
  %s3 = inlined_call_operand.vmem [shape: f32[64,28], index: 3, kind: input, shape index: {}]
  %s4 = inlined_call_operand.vmem [shape: f32[483,32], index: 4, kind: input, shape index: {}]
  %s5 = inlined_call_operand.vmem [shape: f32[323,1], index: 5, kind: input, shape index: {}]
  %s6 = inlined_call_operand.vmem [shape: f32[2,3,128], index: 6, kind: output, shape index: {}]
  %s7 = sld [smem:[#allocation0]]
  $region57: #{_decoder_impl.1} parent=0
    _
  %s9 = ssub.s32 1, %s7
  %s10 = scalar_select 0, %s9, %s7
  loop: start=0, step=1, limit=4
  $region2: #{_decoder_impl.1} parent=0 // loop_pre_header
    _
  $region3: #{_decoder_impl.1} parent=0 // loop_header
    %s12 = sphi 0, %s16
    %p13 = scmp.ge.s32.totalorder %s12, 4
    %s19 = sphi 0, %s31
    %s20 = sphi 0, %s27
    %s21 = sphi 0, %s19
    %s22 = sphi 0, %s20
    %s23 = sphi 0, %s21
    %s24 = sphi 0, %s22
    %s36 = sphi 0, %s38
    %s39 = sphi 0, %s36
    %s40 = sphi 0, %s39
    %s56 = sphi 0, %s40
    %s64 = sphi 0, %s66
    %s67 = sphi 0, %s64
    %s68 = sphi 0, %s67
    %s84 = sphi 0, %s68
    %s90 = sphi 0, %s92
    %s93 = sphi 0, %s90
    %s94 = sphi 0, %s93
    %s110 = sphi 0, %s94
    %s114 = sphi 0, %s114
    %s116 = sphi 0, %s114
    %s117 = sphi 0, %s116
    %s131 = sphi 0, %s117
    %s135 = sphi 0, %s135
    %s137 = sphi 0, %s135
    %s138 = sphi 0, %s137
    %s152 = sphi 0, %s138
    %s156 = sphi 0, %s156
    %s158 = sphi 0, %s156
    %s159 = sphi 0, %s158
    %s173 = sphi 0, %s159
    %s181 = sphi 0, %s183
    %s184 = sphi 0, %s181
    %s185 = sphi 0, %s184
    %s201 = sphi 0, %s185
  $region4: #{_decoder_impl.1} parent=0 // loop_header_branch
    %15 = sbr.rel (%p13) target = $region8
  $region5: #{_decoder_impl.1} parent=0 // loop_body
    %s17 = ssub.s32 %s12, 1
    %s18 = ssub.s32 %s12, 2
    %s25 = sadd.s32 1, %s20
    %p26 = scmp.ge.s32.totalorder %s25, 1
    %s27 = scalar_select %p26, 0, %s25
    %s28 = sadd.s32 1, %s19
    %s29 = scalar_select %p26, %s28, %s19
    %p30 = scmp.ge.s32.totalorder %s29, 2
    %s31 = scalar_select %p30, 0, %s29
    %s32 = ssub.s32 %s19, %s31
    %s33 = ssub.s32 %s20, %s27
    %s34 = sor.u32 %s32, %s33
    %p35 = scmp.eq.s32.totalorder %s34, 0
    %s37 = sadd.s32 %s36, 1
    %s38 = scalar_select %p35, %s36, %s37
    %p41 = pneg %p35
    %p42 = scmp.eq.s32.totalorder %s12, 1
    %p43 = por %p41, %p42
    %p44 = scmp.ne.s32.totalorder %s36, %s39
    %p45 = scmp.eq.s32.totalorder %s12, 0
    %p46 = por %p44, %p45
    %p47 = scmp.ne.s32.totalorder %s36, %s39
    %p48 = scmp.eq.s32.totalorder %s17, 1
    %p49 = por %p47, %p48
    %p50 = scmp.ne.s32.totalorder %s39, %s40
    %p51 = scmp.eq.s32.totalorder %s17, 0
    %p52 = por %p50, %p51
    %p53 = scmp.ne.s32.totalorder %s39, %s40
    %p54 = scmp.eq.s32.totalorder %s18, 1
    %p55 = por %p53, %p54
    %p57 = scmp.ne.s32.totalorder %s40, %s56
    %p58 = scmp.eq.s32.totalorder %s18, 0
    %p59 = por %p57, %p58
    %s60 = ssub.s32 %s19, %s31
    %s61 = ssub.s32 %s20, %s27
    %s62 = sor.u32 %s60, %s61
    %p63 = scmp.eq.s32.totalorder %s62, 0
    %s65 = sadd.s32 %s64, 1
    %s66 = scalar_select %p63, %s64, %s65
    %p69 = pneg %p63
    %p70 = scmp.eq.s32.totalorder %s12, 1
    %p71 = por %p69, %p70
    %p72 = scmp.ne.s32.totalorder %s64, %s67
    %p73 = scmp.eq.s32.totalorder %s12, 0
    %p74 = por %p72, %p73
    %p75 = scmp.ne.s32.totalorder %s64, %s67
    %p76 = scmp.eq.s32.totalorder %s17, 1
    %p77 = por %p75, %p76
    %p78 = scmp.ne.s32.totalorder %s67, %s68
    %p79 = scmp.eq.s32.totalorder %s17, 0
    %p80 = por %p78, %p79
    %p81 = scmp.ne.s32.totalorder %s67, %s68
    %p82 = scmp.eq.s32.totalorder %s18, 1
    %p83 = por %p81, %p82
    %p85 = scmp.ne.s32.totalorder %s68, %s84
    %p86 = scmp.eq.s32.totalorder %s18, 0
    %p87 = por %p85, %p86
    %s88 = ssub.s32 %s19, %s31
    %p89 = scmp.eq.s32.totalorder %s88, 0
    %s91 = sadd.s32 %s90, 1
    %s92 = scalar_select %p89, %s90, %s91
    %p95 = pneg %p89
    %p96 = scmp.eq.s32.totalorder %s12, 1
    %p97 = por %p95, %p96
    %p98 = scmp.ne.s32.totalorder %s90, %s93
    %p99 = scmp.eq.s32.totalorder %s12, 0
    %p100 = por %p98, %p99
    %p101 = scmp.ne.s32.totalorder %s90, %s93
    %p102 = scmp.eq.s32.totalorder %s17, 1
    %p103 = por %p101, %p102
    %p104 = scmp.ne.s32.totalorder %s93, %s94
    %p105 = scmp.eq.s32.totalorder %s17, 0
    %p106 = por %p104, %p105
    %p107 = scmp.ne.s32.totalorder %s93, %s94
    %p108 = scmp.eq.s32.totalorder %s18, 1
    %p109 = por %p107, %p108
    %p111 = scmp.ne.s32.totalorder %s94, %s110
    %p112 = scmp.eq.s32.totalorder %s18, 0
    %p113 = por %p111, %p112
    %s115 = sadd.s32 %s114, 1
    %p118 = scmp.eq.s32.totalorder %s12, 1
    %p119 = scmp.ne.s32.totalorder %s114, %s116
    %p120 = scmp.eq.s32.totalorder %s12, 0
    %p121 = por %p119, %p120
    %p122 = scmp.ne.s32.totalorder %s114, %s116
    %p123 = scmp.eq.s32.totalorder %s17, 1
    %p124 = por %p122, %p123
    %p125 = scmp.ne.s32.totalorder %s116, %s117
    %p126 = scmp.eq.s32.totalorder %s17, 0
    %p127 = por %p125, %p126
    %p128 = scmp.ne.s32.totalorder %s116, %s117
    %p129 = scmp.eq.s32.totalorder %s18, 1
    %p130 = por %p128, %p129
    %p132 = scmp.ne.s32.totalorder %s117, %s131
    %p133 = scmp.eq.s32.totalorder %s18, 0
    %p134 = por %p132, %p133
    %s136 = sadd.s32 %s135, 1
    %p139 = scmp.eq.s32.totalorder %s12, 1
    %p140 = scmp.ne.s32.totalorder %s135, %s137
    %p141 = scmp.eq.s32.totalorder %s12, 0
    %p142 = por %p140, %p141
    %p143 = scmp.ne.s32.totalorder %s135, %s137
    %p144 = scmp.eq.s32.totalorder %s17, 1
    %p145 = por %p143, %p144
    %p146 = scmp.ne.s32.totalorder %s137, %s138
    %p147 = scmp.eq.s32.totalorder %s17, 0
    %p148 = por %p146, %p147
    %p149 = scmp.ne.s32.totalorder %s137, %s138
    %p150 = scmp.eq.s32.totalorder %s18, 1
    %p151 = por %p149, %p150
    %p153 = scmp.ne.s32.totalorder %s138, %s152
    %p154 = scmp.eq.s32.totalorder %s18, 0
    %p155 = por %p153, %p154
    %s157 = sadd.s32 %s156, 1
    %p160 = scmp.eq.s32.totalorder %s12, 1
    %p161 = scmp.ne.s32.totalorder %s156, %s158
    %p162 = scmp.eq.s32.totalorder %s12, 0
    %p163 = por %p161, %p162
    %p164 = scmp.ne.s32.totalorder %s156, %s158
    %p165 = scmp.eq.s32.totalorder %s17, 1
    %p166 = por %p164, %p165
    %p167 = scmp.ne.s32.totalorder %s158, %s159
    %p168 = scmp.eq.s32.totalorder %s17, 0
    %p169 = por %p167, %p168
    %p170 = scmp.ne.s32.totalorder %s158, %s159
    %p171 = scmp.eq.s32.totalorder %s18, 1
    %p172 = por %p170, %p171
    %p174 = scmp.ne.s32.totalorder %s159, %s173
    %p175 = scmp.eq.s32.totalorder %s18, 0
    %p176 = por %p174, %p175
    %s177 = ssub.s32 %s19, %s31
    %s178 = ssub.s32 %s20, %s27
    %s179 = sor.u32 %s177, %s178
    %p180 = scmp.eq.s32.totalorder %s179, 0
    %s182 = sadd.s32 %s181, 1
    %s183 = scalar_select %p180, %s181, %s182
    %p186 = pneg %p180
    %p187 = scmp.eq.s32.totalorder %s12, 1
    %p188 = por %p186, %p187
    %p189 = scmp.ne.s32.totalorder %s181, %s184
    %p190 = scmp.eq.s32.totalorder %s12, 0
    %p191 = por %p189, %p190
    %p192 = scmp.ne.s32.totalorder %s181, %s184
    %p193 = scmp.eq.s32.totalorder %s17, 1
    %p194 = por %p192, %p193
    %p195 = scmp.ne.s32.totalorder %s184, %s185
    %p196 = scmp.eq.s32.totalorder %s17, 0
    %p197 = por %p195, %p196
    %p198 = scmp.ne.s32.totalorder %s184, %s185
    %p199 = scmp.eq.s32.totalorder %s18, 1
    %p200 = por %p198, %p199
    %p202 = scmp.ne.s32.totalorder %s185, %s201
    %p203 = scmp.eq.s32.totalorder %s18, 0
    %p204 = por %p202, %p203
    %p205 = scmp.le.s32.totalorder 1, %s12
    %p206 = scmp.lt.s32.totalorder %s12, 3
    %p207 = pnand %p205, %p206
    %p208 = pneg %p207
    // Predicated region
    $region9: #{_decoder_impl.1} parent=5 // pred_check
      _
    $region10: #{_decoder_impl.1} parent=5 // pred_check_branch
      %210 = sbr.rel (%p207) target = $region12
    $region11: #{_decoder_impl.1} parent=5 // pred_region
      %s211 = ssub.s32 %s12, 1
      // Predicated region
      $region13: #{_decoder_impl.1} parent=11 // pred_check
        %p212 = pneg %p127
      $region14: #{_decoder_impl.1} parent=11 // pred_check_branch
        %214 = sbr.rel (%p212) target = $region16
      $region15: #{_decoder_impl.1} parent=11 // pred_region
        _
      $region16: #{_decoder_impl.1} parent=11 // pred_fallthru
        _
      // Predicated region
      $region17: #{_decoder_impl.1} parent=11 // pred_check
        %p215 = pneg %p148
      $region18: #{_decoder_impl.1} parent=11 // pred_check_branch
        %217 = sbr.rel (%p215) target = $region20
      $region19: #{_decoder_impl.1} parent=11 // pred_region
        _
      $region20: #{_decoder_impl.1} parent=11 // pred_fallthru
        _
      // Predicated region
      $region21: #{_decoder_impl.1} parent=11 // pred_check
        %p218 = pneg %p169
      $region22: #{_decoder_impl.1} parent=11 // pred_check_branch
        %220 = sbr.rel (%p218) target = $region24
      $region23: #{_decoder_impl.1} parent=11 // pred_region
        _
      $region24: #{_decoder_impl.1} parent=11 // pred_fallthru
        _
    $region12: #{_decoder_impl.1} parent=5 // pred_fallthru
      _
    %p221 = scmp.lt.s32.totalorder %s12, 2
    // Predicated region
    $region25: #{_decoder_impl.1} parent=5 // pred_check
      %p222 = pneg %p221
    $region26: #{_decoder_impl.1} parent=5 // pred_check_branch
      %224 = sbr.rel (%p222) target = $region28
    $region27: #{_decoder_impl.1} parent=5 // pred_region
      // Predicated region
      $region29: #{_decoder_impl.1} parent=27 // pred_check
        %p225 = pneg %p46
      $region30: #{_decoder_impl.1} parent=27 // pred_check_branch
        %227 = sbr.rel (%p225) target = $region32
      $region31: #{_decoder_impl.1} parent=27 // pred_region
        %p228 = scmp.lt.s32.totalorder %s19, 1
        %s229 = scalar_select %p228, %s19, 1
        %p230 = scmp.lt.s32.totalorder %s20, 0
        %s231 = scalar_select %p230, %s20, 0
        %s232 = smul.addr %s229, 3
        %s233 = sadd.s32 %s231, %s232
        %s234 = smul.addr %s233, 8
        %s235 = scalar_lea.vmem %s0, %s234
      $region32: #{_decoder_impl.1} parent=27 // pred_fallthru
        _
      // Predicated region
      $region33: #{_decoder_impl.1} parent=27 // pred_check
        %p236 = pneg %p74
      $region34: #{_decoder_impl.1} parent=27 // pred_check_branch
        %238 = sbr.rel (%p236) target = $region36
      $region35: #{_decoder_impl.1} parent=27 // pred_region
        %p239 = scmp.lt.s32.totalorder %s19, 1
        %s240 = scalar_select %p239, %s19, 1
        %p241 = scmp.lt.s32.totalorder %s20, 0
        %s242 = scalar_select %p241, %s20, 0
        %s243 = sadd.s32 %s242, %s240
        %s244 = smul.addr %s243, 4
        %s245 = scalar_lea.vmem %s1, %s244
      $region36: #{_decoder_impl.1} parent=27 // pred_fallthru
        _
      // Predicated region
      $region37: #{_decoder_impl.1} parent=27 // pred_check
        %p246 = pneg %p100
      $region38: #{_decoder_impl.1} parent=27 // pred_check_branch
        %248 = sbr.rel (%p246) target = $region40
      $region39: #{_decoder_impl.1} parent=27 // pred_region
        %p249 = scmp.lt.s32.totalorder %s19, 1
        %s250 = scalar_select %p249, %s19, 1
        %s251 = smul.addr %s250, 20
        %s252 = smul.addr %s251, 8
        %s253 = scalar_lea.vmem %s2, %s252
      $region40: #{_decoder_impl.1} parent=27 // pred_fallthru
        _
    $region28: #{_decoder_impl.1} parent=5 // pred_fallthru
      _
    %p254 = scmp.le.s32.totalorder 1, %s12
    %p255 = scmp.lt.s32.totalorder %s12, 3
    %p256 = pnand %p254, %p255
    %p257 = pneg %p256
    // Predicated region
    $region41: #{_decoder_impl.1} parent=5 // pred_check
      _
    $region42: #{_decoder_impl.1} parent=5 // pred_check_branch
      %259 = sbr.rel (%p256) target = $region44
    $region43: #{_decoder_impl.1} parent=5 // pred_region
      %s260 = ssub.s32 %s12, 1
      %p261 = scmp.lt.s32.totalorder %s21, 1
      %s262 = scalar_select %p261, %s21, 1
      %p263 = scmp.lt.s32.totalorder %s22, 0
      %s264 = scalar_select %p263, %s22, 0
      %s265 = smul.addr %s262, 3
      %s266 = sadd.s32 %s264, %s265
      %s267 = smul.addr %s266, 8
      %s268 = scalar_lea.vmem %s0, %s267
      %p269 = pneg %p52
      %p270 = pneg %p49
      %p271 = scmp.lt.s32.totalorder %s21, 1
      %s272 = scalar_select %p271, %s21, 1
      %p273 = scmp.lt.s32.totalorder %s22, 0
      %s274 = scalar_select %p273, %s22, 0
      %s275 = sadd.s32 %s274, %s272
      %s276 = smul.addr %s275, 4
      %s277 = scalar_lea.vmem %s1, %s276
      %p278 = pneg %p80
      %p279 = pneg %p77
      %p280 = scmp.lt.s32.totalorder %s21, 1
      %s281 = scalar_select %p280, %s21, 1
      %s282 = smul.addr %s281, 20
      %s283 = smul.addr %s282, 8
      %s284 = scalar_lea.vmem %s2, %s283
      %p285 = pneg %p106
      %p286 = pneg %p103
      %p287 = pneg %p127
      %p288 = pneg %p124
      %p289 = pneg %p148
      %p290 = pneg %p145
      %p291 = pneg %p169
      %p292 = pneg %p166
      %p293 = pneg %p197
      %p294 = pneg %p194
      %p295 = scmp.lt.s32.totalorder %s21, 1
      %s296 = scalar_select %p295, %s21, 1
      %p297 = scmp.lt.s32.totalorder %s22, 0
      %s298 = scalar_select %p297, %s22, 0
      %s299 = sadd.s32 %s298, %s296
      %s300 = smul.addr %s299, 4
      %s301 = scalar_lea.vmem %s6, %s300
      %p302 = scmp.lt.s32.totalorder %s21, 1
      %s303 = scalar_select %p302, %s21, 1
      %p304 = scmp.lt.s32.totalorder %s22, 0
      %s305 = scalar_select %p304, %s22, 0
      %s306 = smul.addr %s303, 3
      %s307 = sadd.s32 %s305, %s306
      %s308 = smul.addr %s307, 8
      %s309 = scalar_lea.vmem %s0, %s308
      %p310 = scmp.lt.s32.totalorder %s21, 1
      %s311 = scalar_select %p310, %s21, 1
      %p312 = scmp.lt.s32.totalorder %s22, 0
      %s313 = scalar_select %p312, %s22, 0
      %s314 = sadd.s32 %s313, %s311
      %s315 = smul.addr %s314, 4
      %s316 = scalar_lea.vmem %s1, %s315
      %p317 = scmp.lt.s32.totalorder %s21, 1
      %s318 = scalar_select %p317, %s21, 1
      %s319 = smul.addr %s318, 20
      %s320 = smul.addr %s319, 8
      %s321 = scalar_lea.vmem %s2, %s320
      %p322 = scmp.lt.s32.totalorder %s21, 1
      %s323 = scalar_select %p322, %s21, 1
      %p324 = scmp.lt.s32.totalorder %s22, 0
      %s325 = scalar_select %p324, %s22, 0
      %s326 = sadd.s32 %s325, %s323
      %s327 = smul.addr %s326, 4
      %s328 = scalar_lea.vmem %s6, %s327
      %v329 = vld [vmem:[%s309] sm:$0xff]
      %v330 = vld [vmem:[%s309 + $0x8] sm:$0xff]
      %v331 = vld [vmem:[%s309 + $0x10] sm:$0xff]
      %v332 = vld [vmem:[%s316] sm:$0xf]
      %v333 = vld [vmem:[%s3] sm:$0xff]
      %v334 = vld [vmem:[%s3 + $0x8] sm:$0xff]
      %v335 = vld [vmem:[%s3 + $0x10] sm:$0xff]
      %v336 = vld [vmem:[%s3 + $0x18] sm:$0xff]
      %v337 = vld [vmem:[%s3 + $0x20] sm:$0xff]
      %v338 = vld [vmem:[%s3 + $0x28] sm:$0xff]
      %v339 = vld [vmem:[%s3 + $0x30] sm:$0xff]
      %v340 = vld [vmem:[%s3 + $0x38] sm:$0xff]
      %vm341 = vcmask 228352
      %v343 = vsel %vm341, %v333, 0
      %v346 = vsel %vm341, %v334, 0
      %v349 = vsel %vm341, %v335, 0
      %v352 = vsel %vm341, %v336, 0
      %v355 = vsel %vm341, %v337, 0
      %v358 = vsel %vm341, %v338, 0
      %v361 = vsel %vm341, %v339, 0
      %v364 = vsel %vm341, %v340, 0
      %vm366 = vcmask 1043456
      %v368 = vsel %vm366, %v332, 0
      %370 = vmatprep.subr.mxu0 0.0
      %371 = vmatpush1.msra.mxu0 0.0
      %372 = vmatprep.subr.mxu0 0.0
      %373 = vmatpush1.msra.mxu0 0.0
      %374 = vmatprep.subr.mxu0 0.0
      %375 = vmatpush1.msra.mxu0 0.0
      %376 = vmatprep.subr.mxu0 0.0
      %377 = vmatpush1.msra.mxu0 0.0
      %378 = vmatprep.subr.mxu0 0.0
      %379 = vmatpush1.msra.mxu0 0.0
      %380 = vmatprep.subr.mxu0 0.0
      %381 = vmatpush1.msra.mxu0 0.0
      %382 = vmatprep.subr.mxu0 0.0
      %383 = vmatpush1.msra.mxu0 0.0
      %384 = vmatprep.subr.mxu0 0.0
      %385 = vmatpush1.msra.mxu0 0.0
      %386 = vmatprep.subr.mxu0 0.0
      %387 = vmatpush1.msra.mxu0 0.0
      %388 = vmatprep.subr.mxu0 0.0
      %389 = vmatpush1.msra.mxu0 0.0
      %390 = vmatprep.subr.mxu0 0.0
      %391 = vmatpush1.msra.mxu0 0.0
      %392 = vmatprep.subr.mxu0 0.0
      %393 = vmatpush1.msra.mxu0 0.0
      %394 = vmatprep.subr.mxu0 0.0
      %v395 = vand.u32 %v368, 4294901760
      %396 = vmatpush1.msra.mxu0 %v395
      %397 = vmatprep.subr.mxu0 0.0
      %v398 = vand.u32 %v331, 4294901760
      %399 = vmatpush1.msra.mxu0 %v398
      %400 = vmatprep.subr.mxu0 0.0
      %v401 = vand.u32 %v330, 4294901760
      %402 = vmatpush1.msra.mxu0 %v401
      %403 = vmatprep.subr.mxu0 0.0
      %v404 = vand.u32 %v329, 4294901760
      %405 = vmatpush1.msra.mxu0 %v404
      %406 = vmatprep.subr.mxu0 0.0
      %407 = vmatpush2.msra.mxu0 0.0
      %408 = vmatprep.subr.mxu0 0.0
      %409 = vmatpush2.msra.mxu0 0.0
      %410 = vmatprep.subr.mxu0 0.0
      %411 = vmatpush2.msra.mxu0 0.0
      %412 = vmatprep.subr.mxu0 0.0
      %413 = vmatpush2.msra.mxu0 0.0
      %414 = vmatprep.subr.mxu0 0.0
      %415 = vmatpush2.msra.mxu0 0.0
      %416 = vmatprep.subr.mxu0 0.0
      %417 = vmatpush2.msra.mxu0 0.0
      %418 = vmatprep.subr.mxu0 0.0
      %419 = vmatpush2.msra.mxu0 0.0
      %420 = vmatprep.subr.mxu0 0.0
      %421 = vmatpush2.msra.mxu0 0.0
      %422 = vmatprep.subr.mxu0 0.0
      %423 = vmatpush2.msra.mxu0 0.0
      %424 = vmatprep.subr.mxu0 0.0
      %425 = vmatpush2.msra.mxu0 0.0
      %426 = vmatprep.subr.mxu0 0.0
      %427 = vmatpush2.msra.mxu0 0.0
      %428 = vmatprep.subr.mxu0 0.0
      %429 = vmatpush2.msra.mxu0 0.0
      %430 = vmatprep.subr.mxu0 0.0
      %431 = vmatpush2.msra.mxu0 0.0
      %432 = vmatprep.subr.mxu0 0.0
      %433 = vmatpush2.msra.mxu0 0.0
      %434 = vmatprep.subr.mxu0 0.0
      %435 = vmatpush2.msra.mxu0 0.0
      %436 = vmatprep.subr.mxu0 0.0
      %437 = vmatpush2.msra.mxu0 0.0
      %438 = vmatprep.mubr.f32.mxu0 0.0
      %v439 = vand.u32 %v343, 4294901760
      %v440 = vsub.f32 %v343, %v439
      %v441 = vand.u32 %v440, 4294901760
      %v442 = vsub.f32 %v440, %v441
      %v443 = vand.u32 %v442, 4294901760
      %444 = vmatmul.mubr.f32.gmra.mxu0 %v443
      %v445 = vpop.f32.mrf.mxu0
      %v446 = vadd.f32 0.0, %v445
      %v447 = vpop.f32.mrf.mxu0
      %448 = vmatprep.mubr.f32.mxu0 0.0
      %v449 = vand.u32 %v346, 4294901760
      %v450 = vsub.f32 %v346, %v449
      %v451 = vand.u32 %v450, 4294901760
      %v452 = vsub.f32 %v450, %v451
      %v453 = vand.u32 %v452, 4294901760
      %454 = vmatmul.mubr.f32.gmra.mxu0 %v453
      %v455 = vpop.f32.mrf.mxu0
      %v456 = vadd.f32 0.0, %v455
      %v457 = vpop.f32.mrf.mxu0
      %458 = vmatprep.mubr.f32.mxu0 0.0
      %v459 = vand.u32 %v349, 4294901760
      %v460 = vsub.f32 %v349, %v459
      %v461 = vand.u32 %v460, 4294901760
      %v462 = vsub.f32 %v460, %v461
      %v463 = vand.u32 %v462, 4294901760
      %464 = vmatmul.mubr.f32.gmra.mxu0 %v463
      %v465 = vpop.f32.mrf.mxu0
      %v466 = vadd.f32 0.0, %v465
      %v467 = vpop.f32.mrf.mxu0
      %468 = vmatprep.mubr.f32.mxu0 0.0
      %v469 = vand.u32 %v352, 4294901760
      %v470 = vsub.f32 %v352, %v469
      %v471 = vand.u32 %v470, 4294901760
      %v472 = vsub.f32 %v470, %v471
      %v473 = vand.u32 %v472, 4294901760
      %474 = vmatmul.mubr.f32.gmra.mxu0 %v473
      %v475 = vpop.f32.mrf.mxu0
      %v476 = vadd.f32 0.0, %v475
      %v477 = vpop.f32.mrf.mxu0
      %478 = vmatprep.mubr.f32.mxu0 0.0
      %v479 = vand.u32 %v355, 4294901760
      %v480 = vsub.f32 %v355, %v479
      %v481 = vand.u32 %v480, 4294901760
      %v482 = vsub.f32 %v480, %v481
      %v483 = vand.u32 %v482, 4294901760
      %484 = vmatmul.mubr.f32.gmra.mxu0 %v483
      %v485 = vpop.f32.mrf.mxu0
      %v486 = vadd.f32 0.0, %v485
      %v487 = vpop.f32.mrf.mxu0
      %488 = vmatprep.mubr.f32.mxu0 0.0
      %v489 = vand.u32 %v358, 4294901760
      %v490 = vsub.f32 %v358, %v489
      %v491 = vand.u32 %v490, 4294901760
      %v492 = vsub.f32 %v490, %v491
      %v493 = vand.u32 %v492, 4294901760
      %494 = vmatmul.mubr.f32.gmra.mxu0 %v493
      %v495 = vpop.f32.mrf.mxu0
      %v496 = vadd.f32 0.0, %v495
      %v497 = vpop.f32.mrf.mxu0
      %498 = vmatprep.mubr.f32.mxu0 0.0
      %v499 = vand.u32 %v361, 4294901760
      %v500 = vsub.f32 %v361, %v499
      %v501 = vand.u32 %v500, 4294901760
      %v502 = vsub.f32 %v500, %v501
      %v503 = vand.u32 %v502, 4294901760
      %504 = vmatmul.mubr.f32.gmra.mxu0 %v503
      %v505 = vpop.f32.mrf.mxu0
      %v506 = vadd.f32 0.0, %v505
      %v507 = vpop.f32.mrf.mxu0
      %508 = vmatprep.mubr.f32.mxu0 0.0
      %v509 = vand.u32 %v364, 4294901760
      %v510 = vsub.f32 %v364, %v509
      %v511 = vand.u32 %v510, 4294901760
      %v512 = vsub.f32 %v510, %v511
      %v513 = vand.u32 %v512, 4294901760
      %514 = vmatmul.mubr.f32.gmra.mxu0 %v513
      %v515 = vpop.f32.mrf.mxu0
      %v516 = vadd.f32 0.0, %v515
      %v517 = vpop.f32.mrf.mxu0
      %518 = vdwg.mxu0
      %519 = vmatprep.subr.mxu0 0.0
      %520 = vmatpush1.msra.mxu0 0.0
      %521 = vmatprep.subr.mxu0 0.0
      %522 = vmatpush1.msra.mxu0 0.0
      %523 = vmatprep.subr.mxu0 0.0
      %524 = vmatpush1.msra.mxu0 0.0
      %525 = vmatprep.subr.mxu0 0.0
      %526 = vmatpush1.msra.mxu0 0.0
      %527 = vmatprep.subr.mxu0 0.0
      %528 = vmatpush1.msra.mxu0 0.0
      %529 = vmatprep.subr.mxu0 0.0
      %530 = vmatpush1.msra.mxu0 0.0
      %531 = vmatprep.subr.mxu0 0.0
      %532 = vmatpush1.msra.mxu0 0.0
      %533 = vmatprep.subr.mxu0 0.0
      %534 = vmatpush1.msra.mxu0 0.0
      %535 = vmatprep.subr.mxu0 0.0
      %536 = vmatpush1.msra.mxu0 0.0
      %537 = vmatprep.subr.mxu0 0.0
      %538 = vmatpush1.msra.mxu0 0.0
      %539 = vmatprep.subr.mxu0 0.0
      %540 = vmatpush1.msra.mxu0 0.0
      %541 = vmatprep.subr.mxu0 0.0
      %542 = vmatpush1.msra.mxu0 0.0
      %543 = vmatprep.subr.mxu0 0.0
      %v544 = vand.u32 %v368, 4294901760
      %v545 = vsub.f32 %v368, %v544
      %v546 = vand.u32 %v545, 4294901760
      %v547 = vsub.f32 %v545, %v546
      %v548 = vand.u32 %v547, 4294901760
      %549 = vmatpush1.msra.mxu0 %v548
      %550 = vmatprep.subr.mxu0 0.0
      %v551 = vand.u32 %v331, 4294901760
      %v552 = vsub.f32 %v331, %v551
      %v553 = vand.u32 %v552, 4294901760
      %v554 = vsub.f32 %v552, %v553
      %v555 = vand.u32 %v554, 4294901760
      %556 = vmatpush1.msra.mxu0 %v555
      %557 = vmatprep.subr.mxu0 0.0
      %v558 = vand.u32 %v330, 4294901760
      %v559 = vsub.f32 %v330, %v558
      %v560 = vand.u32 %v559, 4294901760
      %v561 = vsub.f32 %v559, %v560
      %v562 = vand.u32 %v561, 4294901760
      %563 = vmatpush1.msra.mxu0 %v562
      %564 = vmatprep.subr.mxu0 0.0
      %v565 = vand.u32 %v329, 4294901760
      %v566 = vsub.f32 %v329, %v565
      %v567 = vand.u32 %v566, 4294901760
      %v568 = vsub.f32 %v566, %v567
      %v569 = vand.u32 %v568, 4294901760
      %570 = vmatpush1.msra.mxu0 %v569
      %571 = vmatprep.subr.mxu0 0.0
      %572 = vmatpush2.msra.mxu0 0.0
      %573 = vmatprep.subr.mxu0 0.0
      %574 = vmatpush2.msra.mxu0 0.0
      %575 = vmatprep.subr.mxu0 0.0
      %576 = vmatpush2.msra.mxu0 0.0
      %577 = vmatprep.subr.mxu0 0.0
      %578 = vmatpush2.msra.mxu0 0.0
      %579 = vmatprep.subr.mxu0 0.0
      %580 = vmatpush2.msra.mxu0 0.0
      %581 = vmatprep.subr.mxu0 0.0
      %582 = vmatpush2.msra.mxu0 0.0
      %583 = vmatprep.subr.mxu0 0.0
      %584 = vmatpush2.msra.mxu0 0.0
      %585 = vmatprep.subr.mxu0 0.0
      %586 = vmatpush2.msra.mxu0 0.0
      %587 = vmatprep.subr.mxu0 0.0
      %588 = vmatpush2.msra.mxu0 0.0
      %589 = vmatprep.subr.mxu0 0.0
      %590 = vmatpush2.msra.mxu0 0.0
      %591 = vmatprep.subr.mxu0 0.0
      %592 = vmatpush2.msra.mxu0 0.0
      %593 = vmatprep.subr.mxu0 0.0
      %594 = vmatpush2.msra.mxu0 0.0
      %595 = vmatprep.subr.mxu0 0.0
      %596 = vmatpush2.msra.mxu0 0.0
      %597 = vmatprep.subr.mxu0 0.0
      %598 = vmatpush2.msra.mxu0 0.0
      %599 = vmatprep.subr.mxu0 0.0
      %600 = vmatpush2.msra.mxu0 0.0
      %601 = vmatprep.subr.mxu0 0.0
      %602 = vmatpush2.msra.mxu0 0.0
      %603 = vmatprep.mubr.f32.mxu0 0.0
      %v604 = vand.u32 %v343, 4294901760
      %605 = vmatmul.mubr.f32.gmra.mxu0 %v604
      %v606 = vpop.f32.mrf.mxu0
      %v607 = vadd.f32 %v446, %v606
      %v608 = vpop.f32.mrf.mxu0
      %609 = vmatprep.mubr.f32.mxu0 0.0
      %v610 = vand.u32 %v346, 4294901760
      %611 = vmatmul.mubr.f32.gmra.mxu0 %v610
      %v612 = vpop.f32.mrf.mxu0
      %v613 = vadd.f32 %v456, %v612
      %v614 = vpop.f32.mrf.mxu0
      %615 = vmatprep.mubr.f32.mxu0 0.0
      %v616 = vand.u32 %v349, 4294901760
      %617 = vmatmul.mubr.f32.gmra.mxu0 %v616
      %v618 = vpop.f32.mrf.mxu0
      %v619 = vadd.f32 %v466, %v618
      %v620 = vpop.f32.mrf.mxu0
      %621 = vmatprep.mubr.f32.mxu0 0.0
      %v622 = vand.u32 %v352, 4294901760
      %623 = vmatmul.mubr.f32.gmra.mxu0 %v622
      %v624 = vpop.f32.mrf.mxu0
      %v625 = vadd.f32 %v476, %v624
      %v626 = vpop.f32.mrf.mxu0
      %627 = vmatprep.mubr.f32.mxu0 0.0
      %v628 = vand.u32 %v355, 4294901760
      %629 = vmatmul.mubr.f32.gmra.mxu0 %v628
      %v630 = vpop.f32.mrf.mxu0
      %v631 = vadd.f32 %v486, %v630
      %v632 = vpop.f32.mrf.mxu0
      %633 = vmatprep.mubr.f32.mxu0 0.0
      %v634 = vand.u32 %v358, 4294901760
      %635 = vmatmul.mubr.f32.gmra.mxu0 %v634
      %v636 = vpop.f32.mrf.mxu0
      %v637 = vadd.f32 %v496, %v636
      %v638 = vpop.f32.mrf.mxu0
      %639 = vmatprep.mubr.f32.mxu0 0.0
      %v640 = vand.u32 %v361, 4294901760
      %641 = vmatmul.mubr.f32.gmra.mxu0 %v640
      %v642 = vpop.f32.mrf.mxu0
      %v643 = vadd.f32 %v506, %v642
      %v644 = vpop.f32.mrf.mxu0
      %645 = vmatprep.mubr.f32.mxu0 0.0
      %v646 = vand.u32 %v364, 4294901760
      %647 = vmatmul.mubr.f32.gmra.mxu0 %v646
      %v648 = vpop.f32.mrf.mxu0
      %v649 = vadd.f32 %v516, %v648
      %v650 = vpop.f32.mrf.mxu0
      %651 = vdwg.mxu0
      %652 = vmatprep.subr.mxu0 0.0
      %653 = vmatpush1.msra.mxu0 0.0
      %654 = vmatprep.subr.mxu0 0.0
      %655 = vmatpush1.msra.mxu0 0.0
      %656 = vmatprep.subr.mxu0 0.0
      %657 = vmatpush1.msra.mxu0 0.0
      %658 = vmatprep.subr.mxu0 0.0
      %659 = vmatpush1.msra.mxu0 0.0
      %660 = vmatprep.subr.mxu0 0.0
      %661 = vmatpush1.msra.mxu0 0.0
      %662 = vmatprep.subr.mxu0 0.0
      %663 = vmatpush1.msra.mxu0 0.0
      %664 = vmatprep.subr.mxu0 0.0
      %665 = vmatpush1.msra.mxu0 0.0
      %666 = vmatprep.subr.mxu0 0.0
      %667 = vmatpush1.msra.mxu0 0.0
      %668 = vmatprep.subr.mxu0 0.0
      %669 = vmatpush1.msra.mxu0 0.0
      %670 = vmatprep.subr.mxu0 0.0
      %671 = vmatpush1.msra.mxu0 0.0
      %672 = vmatprep.subr.mxu0 0.0
      %673 = vmatpush1.msra.mxu0 0.0
      %674 = vmatprep.subr.mxu0 0.0
      %675 = vmatpush1.msra.mxu0 0.0
      %676 = vmatprep.subr.mxu0 0.0
      %v677 = vand.u32 %v368, 4294901760
      %v678 = vsub.f32 %v368, %v677
      %679 = vmatpush1.msra.mxu0 %v678
      %680 = vmatprep.subr.mxu0 0.0
      %v681 = vand.u32 %v331, 4294901760
      %v682 = vsub.f32 %v331, %v681
      %683 = vmatpush1.msra.mxu0 %v682
      %684 = vmatprep.subr.mxu0 0.0
      %v685 = vand.u32 %v330, 4294901760
      %v686 = vsub.f32 %v330, %v685
      %687 = vmatpush1.msra.mxu0 %v686
      %688 = vmatprep.subr.mxu0 0.0
      %v689 = vand.u32 %v329, 4294901760
      %v690 = vsub.f32 %v329, %v689
      %691 = vmatpush1.msra.mxu0 %v690
      %692 = vmatprep.subr.mxu0 0.0
      %693 = vmatpush2.msra.mxu0 0.0
      %694 = vmatprep.subr.mxu0 0.0
      %695 = vmatpush2.msra.mxu0 0.0
      %696 = vmatprep.subr.mxu0 0.0
      %697 = vmatpush2.msra.mxu0 0.0
      %698 = vmatprep.subr.mxu0 0.0
      %699 = vmatpush2.msra.mxu0 0.0
      %700 = vmatprep.subr.mxu0 0.0
      %701 = vmatpush2.msra.mxu0 0.0
      %702 = vmatprep.subr.mxu0 0.0
      %703 = vmatpush2.msra.mxu0 0.0
      %704 = vmatprep.subr.mxu0 0.0
      %705 = vmatpush2.msra.mxu0 0.0
      %706 = vmatprep.subr.mxu0 0.0
      %707 = vmatpush2.msra.mxu0 0.0
      %708 = vmatprep.subr.mxu0 0.0
      %709 = vmatpush2.msra.mxu0 0.0
      %710 = vmatprep.subr.mxu0 0.0
      %711 = vmatpush2.msra.mxu0 0.0
      %712 = vmatprep.subr.mxu0 0.0
      %713 = vmatpush2.msra.mxu0 0.0
      %714 = vmatprep.subr.mxu0 0.0
      %715 = vmatpush2.msra.mxu0 0.0
      %716 = vmatprep.subr.mxu0 0.0
      %717 = vmatpush2.msra.mxu0 0.0
      %718 = vmatprep.subr.mxu0 0.0
      %719 = vmatpush2.msra.mxu0 0.0
      %720 = vmatprep.subr.mxu0 0.0
      %721 = vmatpush2.msra.mxu0 0.0
      %722 = vmatprep.subr.mxu0 0.0
      %723 = vmatpush2.msra.mxu0 0.0
      %724 = vmatprep.mubr.f32.mxu0 0.0
      %v725 = vand.u32 %v343, 4294901760
      %v726 = vsub.f32 %v343, %v725
      %727 = vmatmul.mubr.f32.gmra.mxu0 %v726
      %v728 = vpop.f32.mrf.mxu0
      %v729 = vadd.f32 %v607, %v728
      %v730 = vpop.f32.mrf.mxu0
      %731 = vmatprep.mubr.f32.mxu0 0.0
      %v732 = vand.u32 %v346, 4294901760
      %v733 = vsub.f32 %v346, %v732
      %734 = vmatmul.mubr.f32.gmra.mxu0 %v733
      %v735 = vpop.f32.mrf.mxu0
      %v736 = vadd.f32 %v613, %v735
      %v737 = vpop.f32.mrf.mxu0
      %738 = vmatprep.mubr.f32.mxu0 0.0
      %v739 = vand.u32 %v349, 4294901760
      %v740 = vsub.f32 %v349, %v739
      %741 = vmatmul.mubr.f32.gmra.mxu0 %v740
      %v742 = vpop.f32.mrf.mxu0
      %v743 = vadd.f32 %v619, %v742
      %v744 = vpop.f32.mrf.mxu0
      %745 = vmatprep.mubr.f32.mxu0 0.0
      %v746 = vand.u32 %v352, 4294901760
      %v747 = vsub.f32 %v352, %v746
      %748 = vmatmul.mubr.f32.gmra.mxu0 %v747
      %v749 = vpop.f32.mrf.mxu0
      %v750 = vadd.f32 %v625, %v749
      %v751 = vpop.f32.mrf.mxu0
      %752 = vmatprep.mubr.f32.mxu0 0.0
      %v753 = vand.u32 %v355, 4294901760
      %v754 = vsub.f32 %v355, %v753
      %755 = vmatmul.mubr.f32.gmra.mxu0 %v754
      %v756 = vpop.f32.mrf.mxu0
      %v757 = vadd.f32 %v631, %v756
      %v758 = vpop.f32.mrf.mxu0
      %759 = vmatprep.mubr.f32.mxu0 0.0
      %v760 = vand.u32 %v358, 4294901760
      %v761 = vsub.f32 %v358, %v760
      %762 = vmatmul.mubr.f32.gmra.mxu0 %v761
      %v763 = vpop.f32.mrf.mxu0
      %v764 = vadd.f32 %v637, %v763
      %v765 = vpop.f32.mrf.mxu0
      %766 = vmatprep.mubr.f32.mxu0 0.0
      %v767 = vand.u32 %v361, 4294901760
      %v768 = vsub.f32 %v361, %v767
      %769 = vmatmul.mubr.f32.gmra.mxu0 %v768
      %v770 = vpop.f32.mrf.mxu0
      %v771 = vadd.f32 %v643, %v770
      %v772 = vpop.f32.mrf.mxu0
      %773 = vmatprep.mubr.f32.mxu0 0.0
      %v774 = vand.u32 %v364, 4294901760
      %v775 = vsub.f32 %v364, %v774
      %776 = vmatmul.mubr.f32.gmra.mxu0 %v775
      %v777 = vpop.f32.mrf.mxu0
      %v778 = vadd.f32 %v649, %v777
      %v779 = vpop.f32.mrf.mxu0
      %780 = vdwg.mxu0
      %781 = vmatprep.subr.mxu0 0.0
      %782 = vmatpush1.msra.mxu0 0.0
      %783 = vmatprep.subr.mxu0 0.0
      %784 = vmatpush1.msra.mxu0 0.0
      %785 = vmatprep.subr.mxu0 0.0
      %786 = vmatpush1.msra.mxu0 0.0
      %787 = vmatprep.subr.mxu0 0.0
      %788 = vmatpush1.msra.mxu0 0.0
      %789 = vmatprep.subr.mxu0 0.0
      %790 = vmatpush1.msra.mxu0 0.0
      %791 = vmatprep.subr.mxu0 0.0
      %792 = vmatpush1.msra.mxu0 0.0
      %793 = vmatprep.subr.mxu0 0.0
      %794 = vmatpush1.msra.mxu0 0.0
      %795 = vmatprep.subr.mxu0 0.0
      %796 = vmatpush1.msra.mxu0 0.0
      %797 = vmatprep.subr.mxu0 0.0
      %798 = vmatpush1.msra.mxu0 0.0
      %799 = vmatprep.subr.mxu0 0.0
      %800 = vmatpush1.msra.mxu0 0.0
      %801 = vmatprep.subr.mxu0 0.0
      %802 = vmatpush1.msra.mxu0 0.0
      %803 = vmatprep.subr.mxu0 0.0
      %804 = vmatpush1.msra.mxu0 0.0
      %805 = vmatprep.subr.mxu0 0.0
      %v806 = vand.u32 %v368, 4294901760
      %807 = vmatpush1.msra.mxu0 %v806
      %808 = vmatprep.subr.mxu0 0.0
      %v809 = vand.u32 %v331, 4294901760
      %810 = vmatpush1.msra.mxu0 %v809
      %811 = vmatprep.subr.mxu0 0.0
      %v812 = vand.u32 %v330, 4294901760
      %813 = vmatpush1.msra.mxu0 %v812
      %814 = vmatprep.subr.mxu0 0.0
      %v815 = vand.u32 %v329, 4294901760
      %816 = vmatpush1.msra.mxu0 %v815
      %817 = vmatprep.subr.mxu0 0.0
      %818 = vmatpush2.msra.mxu0 0.0
      %819 = vmatprep.subr.mxu0 0.0
      %820 = vmatpush2.msra.mxu0 0.0
      %821 = vmatprep.subr.mxu0 0.0
      %822 = vmatpush2.msra.mxu0 0.0
      %823 = vmatprep.subr.mxu0 0.0
      %824 = vmatpush2.msra.mxu0 0.0
      %825 = vmatprep.subr.mxu0 0.0
      %826 = vmatpush2.msra.mxu0 0.0
      %827 = vmatprep.subr.mxu0 0.0
      %828 = vmatpush2.msra.mxu0 0.0
      %829 = vmatprep.subr.mxu0 0.0
      %830 = vmatpush2.msra.mxu0 0.0
      %831 = vmatprep.subr.mxu0 0.0
      %832 = vmatpush2.msra.mxu0 0.0
      %833 = vmatprep.subr.mxu0 0.0
      %834 = vmatpush2.msra.mxu0 0.0
      %835 = vmatprep.subr.mxu0 0.0
      %836 = vmatpush2.msra.mxu0 0.0
      %837 = vmatprep.subr.mxu0 0.0
      %838 = vmatpush2.msra.mxu0 0.0
      %839 = vmatprep.subr.mxu0 0.0
      %840 = vmatpush2.msra.mxu0 0.0
      %841 = vmatprep.subr.mxu0 0.0
      %842 = vmatpush2.msra.mxu0 0.0
      %843 = vmatprep.subr.mxu0 0.0
      %844 = vmatpush2.msra.mxu0 0.0
      %845 = vmatprep.subr.mxu0 0.0
      %846 = vmatpush2.msra.mxu0 0.0
      %847 = vmatprep.subr.mxu0 0.0
      %848 = vmatpush2.msra.mxu0 0.0
      %849 = vmatprep.mubr.f32.mxu0 0.0
      %v850 = vand.u32 %v343, 4294901760
      %v851 = vsub.f32 %v343, %v850
      %v852 = vand.u32 %v851, 4294901760
      %853 = vmatmul.mubr.f32.gmra.mxu0 %v852
      %v854 = vpop.f32.mrf.mxu0
      %v855 = vadd.f32 %v729, %v854
      %v856 = vpop.f32.mrf.mxu0
      %857 = vmatprep.mubr.f32.mxu0 0.0
      %v858 = vand.u32 %v346, 4294901760
      %v859 = vsub.f32 %v346, %v858
      %v860 = vand.u32 %v859, 4294901760
      %861 = vmatmul.mubr.f32.gmra.mxu0 %v860
      %v862 = vpop.f32.mrf.mxu0
      %v863 = vadd.f32 %v736, %v862
      %v864 = vpop.f32.mrf.mxu0
      %865 = vmatprep.mubr.f32.mxu0 0.0
      %v866 = vand.u32 %v349, 4294901760
      %v867 = vsub.f32 %v349, %v866
      %v868 = vand.u32 %v867, 4294901760
      %869 = vmatmul.mubr.f32.gmra.mxu0 %v868
      %v870 = vpop.f32.mrf.mxu0
      %v871 = vadd.f32 %v743, %v870
      %v872 = vpop.f32.mrf.mxu0
      %873 = vmatprep.mubr.f32.mxu0 0.0
      %v874 = vand.u32 %v352, 4294901760
      %v875 = vsub.f32 %v352, %v874
      %v876 = vand.u32 %v875, 4294901760
      %877 = vmatmul.mubr.f32.gmra.mxu0 %v876
      %v878 = vpop.f32.mrf.mxu0
      %v879 = vadd.f32 %v750, %v878
      %v880 = vpop.f32.mrf.mxu0
      %881 = vmatprep.mubr.f32.mxu0 0.0
      %v882 = vand.u32 %v355, 4294901760
      %v883 = vsub.f32 %v355, %v882
      %v884 = vand.u32 %v883, 4294901760
      %885 = vmatmul.mubr.f32.gmra.mxu0 %v884
      %v886 = vpop.f32.mrf.mxu0
      %v887 = vadd.f32 %v757, %v886
      %v888 = vpop.f32.mrf.mxu0
      %889 = vmatprep.mubr.f32.mxu0 0.0
      %v890 = vand.u32 %v358, 4294901760
      %v891 = vsub.f32 %v358, %v890
      %v892 = vand.u32 %v891, 4294901760
      %893 = vmatmul.mubr.f32.gmra.mxu0 %v892
      %v894 = vpop.f32.mrf.mxu0
      %v895 = vadd.f32 %v764, %v894
      %v896 = vpop.f32.mrf.mxu0
      %897 = vmatprep.mubr.f32.mxu0 0.0
      %v898 = vand.u32 %v361, 4294901760
      %v899 = vsub.f32 %v361, %v898
      %v900 = vand.u32 %v899, 4294901760
      %901 = vmatmul.mubr.f32.gmra.mxu0 %v900
      %v902 = vpop.f32.mrf.mxu0
      %v903 = vadd.f32 %v771, %v902
      %v904 = vpop.f32.mrf.mxu0
      %905 = vmatprep.mubr.f32.mxu0 0.0
      %v906 = vand.u32 %v364, 4294901760
      %v907 = vsub.f32 %v364, %v906
      %v908 = vand.u32 %v907, 4294901760
      %909 = vmatmul.mubr.f32.gmra.mxu0 %v908
      %v910 = vpop.f32.mrf.mxu0
      %v911 = vadd.f32 %v778, %v910
      %v912 = vpop.f32.mrf.mxu0
      %913 = vdwg.mxu0
      %914 = vmatprep.subr.mxu0 0.0
      %915 = vmatpush1.msra.mxu0 0.0
      %916 = vmatprep.subr.mxu0 0.0
      %917 = vmatpush1.msra.mxu0 0.0
      %918 = vmatprep.subr.mxu0 0.0
      %919 = vmatpush1.msra.mxu0 0.0
      %920 = vmatprep.subr.mxu0 0.0
      %921 = vmatpush1.msra.mxu0 0.0
      %922 = vmatprep.subr.mxu0 0.0
      %923 = vmatpush1.msra.mxu0 0.0
      %924 = vmatprep.subr.mxu0 0.0
      %925 = vmatpush1.msra.mxu0 0.0
      %926 = vmatprep.subr.mxu0 0.0
      %927 = vmatpush1.msra.mxu0 0.0
      %928 = vmatprep.subr.mxu0 0.0
      %929 = vmatpush1.msra.mxu0 0.0
      %930 = vmatprep.subr.mxu0 0.0
      %931 = vmatpush1.msra.mxu0 0.0
      %932 = vmatprep.subr.mxu0 0.0
      %933 = vmatpush1.msra.mxu0 0.0
      %934 = vmatprep.subr.mxu0 0.0
      %935 = vmatpush1.msra.mxu0 0.0
      %936 = vmatprep.subr.mxu0 0.0
      %937 = vmatpush1.msra.mxu0 0.0
      %938 = vmatprep.subr.mxu0 0.0
      %v939 = vand.u32 %v368, 4294901760
      %v940 = vsub.f32 %v368, %v939
      %v941 = vand.u32 %v940, 4294901760
      %942 = vmatpush1.msra.mxu0 %v941
      %943 = vmatprep.subr.mxu0 0.0
      %v944 = vand.u32 %v331, 4294901760
      %v945 = vsub.f32 %v331, %v944
      %v946 = vand.u32 %v945, 4294901760
      %947 = vmatpush1.msra.mxu0 %v946
      %948 = vmatprep.subr.mxu0 0.0
      %v949 = vand.u32 %v330, 4294901760
      %v950 = vsub.f32 %v330, %v949
      %v951 = vand.u32 %v950, 4294901760
      %952 = vmatpush1.msra.mxu0 %v951
      %953 = vmatprep.subr.mxu0 0.0
      %v954 = vand.u32 %v329, 4294901760
      %v955 = vsub.f32 %v329, %v954
      %v956 = vand.u32 %v955, 4294901760
      %957 = vmatpush1.msra.mxu0 %v956
      %958 = vmatprep.subr.mxu0 0.0
      %959 = vmatpush2.msra.mxu0 0.0
      %960 = vmatprep.subr.mxu0 0.0
      %961 = vmatpush2.msra.mxu0 0.0
      %962 = vmatprep.subr.mxu0 0.0
      %963 = vmatpush2.msra.mxu0 0.0
      %964 = vmatprep.subr.mxu0 0.0
      %965 = vmatpush2.msra.mxu0 0.0
      %966 = vmatprep.subr.mxu0 0.0
      %967 = vmatpush2.msra.mxu0 0.0
      %968 = vmatprep.subr.mxu0 0.0
      %969 = vmatpush2.msra.mxu0 0.0
      %970 = vmatprep.subr.mxu0 0.0
      %971 = vmatpush2.msra.mxu0 0.0
      %972 = vmatprep.subr.mxu0 0.0
      %973 = vmatpush2.msra.mxu0 0.0
      %974 = vmatprep.subr.mxu0 0.0
      %975 = vmatpush2.msra.mxu0 0.0
      %976 = vmatprep.subr.mxu0 0.0
      %977 = vmatpush2.msra.mxu0 0.0
      %978 = vmatprep.subr.mxu0 0.0
      %979 = vmatpush2.msra.mxu0 0.0
      %980 = vmatprep.subr.mxu0 0.0
      %981 = vmatpush2.msra.mxu0 0.0
      %982 = vmatprep.subr.mxu0 0.0
      %983 = vmatpush2.msra.mxu0 0.0
      %984 = vmatprep.subr.mxu0 0.0
      %985 = vmatpush2.msra.mxu0 0.0
      %986 = vmatprep.subr.mxu0 0.0
      %987 = vmatpush2.msra.mxu0 0.0
      %988 = vmatprep.subr.mxu0 0.0
      %989 = vmatpush2.msra.mxu0 0.0
      %990 = vmatprep.mubr.f32.mxu0 0.0
      %v991 = vand.u32 %v343, 4294901760
      %992 = vmatmul.mubr.f32.gmra.mxu0 %v991
      %v993 = vpop.f32.mrf.mxu0
      %v994 = vadd.f32 %v855, %v993
      %v995 = vpop.f32.mrf.mxu0
      %996 = vmatprep.mubr.f32.mxu0 0.0
      %v997 = vand.u32 %v346, 4294901760
      %998 = vmatmul.mubr.f32.gmra.mxu0 %v997
      %v999 = vpop.f32.mrf.mxu0
      %v1000 = vadd.f32 %v863, %v999
      %v1001 = vpop.f32.mrf.mxu0
      %1002 = vmatprep.mubr.f32.mxu0 0.0
      %v1003 = vand.u32 %v349, 4294901760
      %1004 = vmatmul.mubr.f32.gmra.mxu0 %v1003
      %v1005 = vpop.f32.mrf.mxu0
      %v1006 = vadd.f32 %v871, %v1005
      %v1007 = vpop.f32.mrf.mxu0
      %1008 = vmatprep.mubr.f32.mxu0 0.0
      %v1009 = vand.u32 %v352, 4294901760
      %1010 = vmatmul.mubr.f32.gmra.mxu0 %v1009
      %v1011 = vpop.f32.mrf.mxu0
      %v1012 = vadd.f32 %v879, %v1011
      %v1013 = vpop.f32.mrf.mxu0
      %1014 = vmatprep.mubr.f32.mxu0 0.0
      %v1015 = vand.u32 %v355, 4294901760
      %1016 = vmatmul.mubr.f32.gmra.mxu0 %v1015
      %v1017 = vpop.f32.mrf.mxu0
      %v1018 = vadd.f32 %v887, %v1017
      %v1019 = vpop.f32.mrf.mxu0
      %1020 = vmatprep.mubr.f32.mxu0 0.0
      %v1021 = vand.u32 %v358, 4294901760
      %1022 = vmatmul.mubr.f32.gmra.mxu0 %v1021
      %v1023 = vpop.f32.mrf.mxu0
      %v1024 = vadd.f32 %v895, %v1023
      %v1025 = vpop.f32.mrf.mxu0
      %1026 = vmatprep.mubr.f32.mxu0 0.0
      %v1027 = vand.u32 %v361, 4294901760
      %1028 = vmatmul.mubr.f32.gmra.mxu0 %v1027
      %v1029 = vpop.f32.mrf.mxu0
      %v1030 = vadd.f32 %v903, %v1029
      %v1031 = vpop.f32.mrf.mxu0
      %1032 = vmatprep.mubr.f32.mxu0 0.0
      %v1033 = vand.u32 %v364, 4294901760
      %1034 = vmatmul.mubr.f32.gmra.mxu0 %v1033
      %v1035 = vpop.f32.mrf.mxu0
      %v1036 = vadd.f32 %v911, %v1035
      %v1037 = vpop.f32.mrf.mxu0
      %1038 = vdwg.mxu0
      %1039 = vmatprep.subr.mxu0 0.0
      %1040 = vmatpush1.msra.mxu0 0.0
      %1041 = vmatprep.subr.mxu0 0.0
      %1042 = vmatpush1.msra.mxu0 0.0
      %1043 = vmatprep.subr.mxu0 0.0
      %1044 = vmatpush1.msra.mxu0 0.0
      %1045 = vmatprep.subr.mxu0 0.0
      %1046 = vmatpush1.msra.mxu0 0.0
      %1047 = vmatprep.subr.mxu0 0.0
      %1048 = vmatpush1.msra.mxu0 0.0
      %1049 = vmatprep.subr.mxu0 0.0
      %1050 = vmatpush1.msra.mxu0 0.0
      %1051 = vmatprep.subr.mxu0 0.0
      %1052 = vmatpush1.msra.mxu0 0.0
      %1053 = vmatprep.subr.mxu0 0.0
      %1054 = vmatpush1.msra.mxu0 0.0
      %1055 = vmatprep.subr.mxu0 0.0
      %1056 = vmatpush1.msra.mxu0 0.0
      %1057 = vmatprep.subr.mxu0 0.0
      %1058 = vmatpush1.msra.mxu0 0.0
      %1059 = vmatprep.subr.mxu0 0.0
      %1060 = vmatpush1.msra.mxu0 0.0
      %1061 = vmatprep.subr.mxu0 0.0
      %1062 = vmatpush1.msra.mxu0 0.0
      %1063 = vmatprep.subr.mxu0 0.0
      %v1064 = vand.u32 %v368, 4294901760
      %1065 = vmatpush1.msra.mxu0 %v1064
      %1066 = vmatprep.subr.mxu0 0.0
      %v1067 = vand.u32 %v331, 4294901760
      %1068 = vmatpush1.msra.mxu0 %v1067
      %1069 = vmatprep.subr.mxu0 0.0
      %v1070 = vand.u32 %v330, 4294901760
      %1071 = vmatpush1.msra.mxu0 %v1070
      %1072 = vmatprep.subr.mxu0 0.0
      %v1073 = vand.u32 %v329, 4294901760
      %1074 = vmatpush1.msra.mxu0 %v1073
      %1075 = vmatprep.subr.mxu0 0.0
      %1076 = vmatpush2.msra.mxu0 0.0
      %1077 = vmatprep.subr.mxu0 0.0
      %1078 = vmatpush2.msra.mxu0 0.0
      %1079 = vmatprep.subr.mxu0 0.0
      %1080 = vmatpush2.msra.mxu0 0.0
      %1081 = vmatprep.subr.mxu0 0.0
      %1082 = vmatpush2.msra.mxu0 0.0
      %1083 = vmatprep.subr.mxu0 0.0
      %1084 = vmatpush2.msra.mxu0 0.0
      %1085 = vmatprep.subr.mxu0 0.0
      %1086 = vmatpush2.msra.mxu0 0.0
      %1087 = vmatprep.subr.mxu0 0.0
      %1088 = vmatpush2.msra.mxu0 0.0
      %1089 = vmatprep.subr.mxu0 0.0
      %1090 = vmatpush2.msra.mxu0 0.0
      %1091 = vmatprep.subr.mxu0 0.0
      %1092 = vmatpush2.msra.mxu0 0.0
      %1093 = vmatprep.subr.mxu0 0.0
      %1094 = vmatpush2.msra.mxu0 0.0
      %1095 = vmatprep.subr.mxu0 0.0
      %1096 = vmatpush2.msra.mxu0 0.0
      %1097 = vmatprep.subr.mxu0 0.0
      %1098 = vmatpush2.msra.mxu0 0.0
      %1099 = vmatprep.subr.mxu0 0.0
      %1100 = vmatpush2.msra.mxu0 0.0
      %1101 = vmatprep.subr.mxu0 0.0
      %1102 = vmatpush2.msra.mxu0 0.0
      %1103 = vmatprep.subr.mxu0 0.0
      %1104 = vmatpush2.msra.mxu0 0.0
      %1105 = vmatprep.subr.mxu0 0.0
      %1106 = vmatpush2.msra.mxu0 0.0
      %1107 = vmatprep.mubr.f32.mxu0 0.0
      %v1108 = vand.u32 %v343, 4294901760
      %1109 = vmatmul.mubr.f32.gmra.mxu0 %v1108
      %v1110 = vpop.f32.mrf.mxu0
      %v1111 = vadd.f32 %v994, %v1110
      %v1112 = vpop.f32.mrf.mxu0
      %1113 = vmatprep.mubr.f32.mxu0 0.0
      %v1114 = vand.u32 %v346, 4294901760
      %1115 = vmatmul.mubr.f32.gmra.mxu0 %v1114
      %v1116 = vpop.f32.mrf.mxu0
      %v1117 = vadd.f32 %v1000, %v1116
      %v1118 = vpop.f32.mrf.mxu0
      %1119 = vmatprep.mubr.f32.mxu0 0.0
      %v1120 = vand.u32 %v349, 4294901760
      %1121 = vmatmul.mubr.f32.gmra.mxu0 %v1120
      %v1122 = vpop.f32.mrf.mxu0
      %v1123 = vadd.f32 %v1006, %v1122
      %v1124 = vpop.f32.mrf.mxu0
      %1125 = vmatprep.mubr.f32.mxu0 0.0
      %v1126 = vand.u32 %v352, 4294901760
      %1127 = vmatmul.mubr.f32.gmra.mxu0 %v1126
      %v1128 = vpop.f32.mrf.mxu0
      %v1129 = vadd.f32 %v1012, %v1128
      %v1130 = vpop.f32.mrf.mxu0
      %1131 = vmatprep.mubr.f32.mxu0 0.0
      %v1132 = vand.u32 %v355, 4294901760
      %1133 = vmatmul.mubr.f32.gmra.mxu0 %v1132
      %v1134 = vpop.f32.mrf.mxu0
      %v1135 = vadd.f32 %v1018, %v1134
      %v1136 = vpop.f32.mrf.mxu0
      %1137 = vmatprep.mubr.f32.mxu0 0.0
      %v1138 = vand.u32 %v358, 4294901760
      %1139 = vmatmul.mubr.f32.gmra.mxu0 %v1138
      %v1140 = vpop.f32.mrf.mxu0
      %v1141 = vadd.f32 %v1024, %v1140
      %v1142 = vpop.f32.mrf.mxu0
      %1143 = vmatprep.mubr.f32.mxu0 0.0
      %v1144 = vand.u32 %v361, 4294901760
      %1145 = vmatmul.mubr.f32.gmra.mxu0 %v1144
      %v1146 = vpop.f32.mrf.mxu0
      %v1147 = vadd.f32 %v1030, %v1146
      %v1148 = vpop.f32.mrf.mxu0
      %1149 = vmatprep.mubr.f32.mxu0 0.0
      %v1150 = vand.u32 %v364, 4294901760
      %1151 = vmatmul.mubr.f32.gmra.mxu0 %v1150
      %v1152 = vpop.f32.mrf.mxu0
      %v1153 = vadd.f32 %v1036, %v1152
      %v1154 = vpop.f32.mrf.mxu0
      %1155 = vdwg.mxu0
      %v1156 = vmax.f32 %v1111, 0.0
      %v1157 = vmax.f32 %v1117, 0.0
      %v1158 = vmax.f32 %v1123, 0.0
      %v1159 = vmax.f32 %v1129, 0.0
      %v1160 = vld [vmem:[%s321] sm:$0xff]
      %v1161 = vld [vmem:[%s321 + $0x8] sm:$0xff]
      %v1162 = vld [vmem:[%s321 + $0x10] sm:$0xff]
      %v1163 = vld [vmem:[%s321 + $0x18] sm:$0xff]
      %v1164 = vld [vmem:[%s321 + $0x20] sm:$0xff]
      %v1165 = vld [vmem:[%s321 + $0x28] sm:$0xff]
      %v1166 = vld [vmem:[%s321 + $0x30] sm:$0xff]
      %v1167 = vld [vmem:[%s321 + $0x38] sm:$0xff]
      %v1168 = vld [vmem:[%s321 + $0x40] sm:$0xff]
      %v1169 = vld [vmem:[%s321 + $0x48] sm:$0xff]
      %v1170 = vld [vmem:[%s321 + $0x50] sm:$0xff]
      %v1171 = vld [vmem:[%s321 + $0x58] sm:$0xff]
      %v1172 = vld [vmem:[%s321 + $0x60] sm:$0xff]
      %v1173 = vld [vmem:[%s321 + $0x68] sm:$0xff]
      %v1174 = vld [vmem:[%s321 + $0x70] sm:$0xff]
      %v1175 = vld [vmem:[%s321 + $0x78] sm:$0xff]
      %v1176 = vld [vmem:[%s321 + $0x80] sm:$0xff]
      %v1177 = vld [vmem:[%s321 + $0x88] sm:$0xff]
      %v1178 = vld [vmem:[%s321 + $0x90] sm:$0xff]
      %v1179 = vld [vmem:[%s321 + $0x98] sm:$0xff]
      %v1180 = vld [vmem:[%s4] sm:$0xff]
      %v1181 = vld [vmem:[%s4 + $0x8] sm:$0xff]
      %v1182 = vld [vmem:[%s4 + $0x10] sm:$0xff]
      %v1183 = vld [vmem:[%s4 + $0x18] sm:$0xff]
      %vm1184 = vcmask 261120
      %v1186 = vsel %vm1184, %v1180, 0
      %v1189 = vsel %vm1184, %v1181, 0
      %v1192 = vsel %vm1184, %v1182, 0
      %v1195 = vsel %vm1184, %v1183, 0
      %1197 = vmatprep.subr.mxu0 0.0
      %1198 = vmatpush1.msra.mxu0 0.0
      %1199 = vmatprep.subr.mxu0 0.0
      %1200 = vmatpush1.msra.mxu0 0.0
      %1201 = vmatprep.subr.mxu0 0.0
      %1202 = vmatpush1.msra.mxu0 0.0
      %1203 = vmatprep.subr.mxu0 0.0
      %1204 = vmatpush1.msra.mxu0 0.0
      %1205 = vmatprep.subr.mxu0 0.0
      %1206 = vmatpush1.msra.mxu0 0.0
      %1207 = vmatprep.subr.mxu0 0.0
      %1208 = vmatpush1.msra.mxu0 0.0
      %1209 = vmatprep.subr.mxu0 0.0
      %1210 = vmatpush1.msra.mxu0 0.0
      %1211 = vmatprep.subr.mxu0 0.0
      %1212 = vmatpush1.msra.mxu0 0.0
      %1213 = vmatprep.subr.mxu0 0.0
      %1214 = vmatpush1.msra.mxu0 0.0
      %1215 = vmatprep.subr.mxu0 0.0
      %1216 = vmatpush1.msra.mxu0 0.0
      %1217 = vmatprep.subr.mxu0 0.0
      %1218 = vmatpush1.msra.mxu0 0.0
      %1219 = vmatprep.subr.mxu0 0.0
      %1220 = vmatpush1.msra.mxu0 0.0
      %1221 = vmatprep.subr.mxu0 0.0
      %v1222 = vand.u32 %v1159, 4294901760
      %1223 = vmatpush1.msra.mxu0 %v1222
      %1224 = vmatprep.subr.mxu0 0.0
      %v1225 = vand.u32 %v1158, 4294901760
      %1226 = vmatpush1.msra.mxu0 %v1225
      %1227 = vmatprep.subr.mxu0 0.0
      %v1228 = vand.u32 %v1157, 4294901760
      %1229 = vmatpush1.msra.mxu0 %v1228
      %1230 = vmatprep.subr.mxu0 0.0
      %v1231 = vand.u32 %v1156, 4294901760
      %1232 = vmatpush1.msra.mxu0 %v1231
      %1233 = vmatprep.subr.mxu0 0.0
      %1234 = vmatpush2.msra.mxu0 0.0
      %1235 = vmatprep.subr.mxu0 0.0
      %1236 = vmatpush2.msra.mxu0 0.0
      %1237 = vmatprep.subr.mxu0 0.0
      %1238 = vmatpush2.msra.mxu0 0.0
      %1239 = vmatprep.subr.mxu0 0.0
      %1240 = vmatpush2.msra.mxu0 0.0
      %1241 = vmatprep.subr.mxu0 0.0
      %1242 = vmatpush2.msra.mxu0 0.0
      %1243 = vmatprep.subr.mxu0 0.0
      %1244 = vmatpush2.msra.mxu0 0.0
      %1245 = vmatprep.subr.mxu0 0.0
      %1246 = vmatpush2.msra.mxu0 0.0
      %1247 = vmatprep.subr.mxu0 0.0
      %1248 = vmatpush2.msra.mxu0 0.0
      %1249 = vmatprep.subr.mxu0 0.0
      %1250 = vmatpush2.msra.mxu0 0.0
      %1251 = vmatprep.subr.mxu0 0.0
      %1252 = vmatpush2.msra.mxu0 0.0
      %1253 = vmatprep.subr.mxu0 0.0
      %1254 = vmatpush2.msra.mxu0 0.0
      %1255 = vmatprep.subr.mxu0 0.0
      %1256 = vmatpush2.msra.mxu0 0.0
      %1257 = vmatprep.subr.mxu0 0.0
      %1258 = vmatpush2.msra.mxu0 0.0
      %1259 = vmatprep.subr.mxu0 0.0
      %1260 = vmatpush2.msra.mxu0 0.0
      %1261 = vmatprep.subr.mxu0 0.0
      %1262 = vmatpush2.msra.mxu0 0.0
      %1263 = vmatprep.subr.mxu0 0.0
      %1264 = vmatpush2.msra.mxu0 0.0
      %1265 = vmatprep.mubr.f32.mxu0 0.0
      %v1266 = vand.u32 %v1186, 4294901760
      %v1267 = vsub.f32 %v1186, %v1266
      %v1268 = vand.u32 %v1267, 4294901760
      %v1269 = vsub.f32 %v1267, %v1268
      %v1270 = vand.u32 %v1269, 4294901760
      %1271 = vmatmul.mubr.f32.gmra.mxu0 %v1270
      %v1272 = vpop.f32.mrf.mxu0
      %v1273 = vadd.f32 0.0, %v1272
      %v1274 = vpop.f32.mrf.mxu0
      %1275 = vmatprep.mubr.f32.mxu0 0.0
      %v1276 = vand.u32 %v1189, 4294901760
      %v1277 = vsub.f32 %v1189, %v1276
      %v1278 = vand.u32 %v1277, 4294901760
      %v1279 = vsub.f32 %v1277, %v1278
      %v1280 = vand.u32 %v1279, 4294901760
      %1281 = vmatmul.mubr.f32.gmra.mxu0 %v1280
      %v1282 = vpop.f32.mrf.mxu0
      %v1283 = vadd.f32 0.0, %v1282
      %v1284 = vpop.f32.mrf.mxu0
      %1285 = vmatprep.mubr.f32.mxu0 0.0
      %v1286 = vand.u32 %v1192, 4294901760
      %v1287 = vsub.f32 %v1192, %v1286
      %v1288 = vand.u32 %v1287, 4294901760
      %v1289 = vsub.f32 %v1287, %v1288
      %v1290 = vand.u32 %v1289, 4294901760
      %1291 = vmatmul.mubr.f32.gmra.mxu0 %v1290
      %v1292 = vpop.f32.mrf.mxu0
      %v1293 = vadd.f32 0.0, %v1292
      %v1294 = vpop.f32.mrf.mxu0
      %1295 = vmatprep.mubr.f32.mxu0 0.0
      %v1296 = vand.u32 %v1195, 4294901760
      %v1297 = vsub.f32 %v1195, %v1296
      %v1298 = vand.u32 %v1297, 4294901760
      %v1299 = vsub.f32 %v1297, %v1298
      %v1300 = vand.u32 %v1299, 4294901760
      %1301 = vmatmul.mubr.f32.gmra.mxu0 %v1300
      %v1302 = vpop.f32.mrf.mxu0
      %v1303 = vadd.f32 0.0, %v1302
      %v1304 = vpop.f32.mrf.mxu0
      %1305 = vdwg.mxu0
      %1306 = vmatprep.subr.mxu0 0.0
      %1307 = vmatpush1.msra.mxu0 0.0
      %1308 = vmatprep.subr.mxu0 0.0
      %1309 = vmatpush1.msra.mxu0 0.0
      %1310 = vmatprep.subr.mxu0 0.0
      %1311 = vmatpush1.msra.mxu0 0.0
      %1312 = vmatprep.subr.mxu0 0.0
      %1313 = vmatpush1.msra.mxu0 0.0
      %1314 = vmatprep.subr.mxu0 0.0
      %1315 = vmatpush1.msra.mxu0 0.0
      %1316 = vmatprep.subr.mxu0 0.0
      %1317 = vmatpush1.msra.mxu0 0.0
      %1318 = vmatprep.subr.mxu0 0.0
      %1319 = vmatpush1.msra.mxu0 0.0
      %1320 = vmatprep.subr.mxu0 0.0
      %1321 = vmatpush1.msra.mxu0 0.0
      %1322 = vmatprep.subr.mxu0 0.0
      %1323 = vmatpush1.msra.mxu0 0.0
      %1324 = vmatprep.subr.mxu0 0.0
      %1325 = vmatpush1.msra.mxu0 0.0
      %1326 = vmatprep.subr.mxu0 0.0
      %1327 = vmatpush1.msra.mxu0 0.0
      %1328 = vmatprep.subr.mxu0 0.0
      %1329 = vmatpush1.msra.mxu0 0.0
      %1330 = vmatprep.subr.mxu0 0.0
      %v1331 = vand.u32 %v1159, 4294901760
      %v1332 = vsub.f32 %v1159, %v1331
      %v1333 = vand.u32 %v1332, 4294901760
      %v1334 = vsub.f32 %v1332, %v1333
      %v1335 = vand.u32 %v1334, 4294901760
      %1336 = vmatpush1.msra.mxu0 %v1335
      %1337 = vmatprep.subr.mxu0 0.0
      %v1338 = vand.u32 %v1158, 4294901760
      %v1339 = vsub.f32 %v1158, %v1338
      %v1340 = vand.u32 %v1339, 4294901760
      %v1341 = vsub.f32 %v1339, %v1340
      %v1342 = vand.u32 %v1341, 4294901760
      %1343 = vmatpush1.msra.mxu0 %v1342
      %1344 = vmatprep.subr.mxu0 0.0
      %v1345 = vand.u32 %v1157, 4294901760
      %v1346 = vsub.f32 %v1157, %v1345
      %v1347 = vand.u32 %v1346, 4294901760
      %v1348 = vsub.f32 %v1346, %v1347
      %v1349 = vand.u32 %v1348, 4294901760
      %1350 = vmatpush1.msra.mxu0 %v1349
      %1351 = vmatprep.subr.mxu0 0.0
      %v1352 = vand.u32 %v1156, 4294901760
      %v1353 = vsub.f32 %v1156, %v1352
      %v1354 = vand.u32 %v1353, 4294901760
      %v1355 = vsub.f32 %v1353, %v1354
      %v1356 = vand.u32 %v1355, 4294901760
      %1357 = vmatpush1.msra.mxu0 %v1356
      %1358 = vmatprep.subr.mxu0 0.0
      %1359 = vmatpush2.msra.mxu0 0.0
      %1360 = vmatprep.subr.mxu0 0.0
      %1361 = vmatpush2.msra.mxu0 0.0
      %1362 = vmatprep.subr.mxu0 0.0
      %1363 = vmatpush2.msra.mxu0 0.0
      %1364 = vmatprep.subr.mxu0 0.0
      %1365 = vmatpush2.msra.mxu0 0.0
      %1366 = vmatprep.subr.mxu0 0.0
      %1367 = vmatpush2.msra.mxu0 0.0
      %1368 = vmatprep.subr.mxu0 0.0
      %1369 = vmatpush2.msra.mxu0 0.0
      %1370 = vmatprep.subr.mxu0 0.0
      %1371 = vmatpush2.msra.mxu0 0.0
      %1372 = vmatprep.subr.mxu0 0.0
      %1373 = vmatpush2.msra.mxu0 0.0
      %1374 = vmatprep.subr.mxu0 0.0
      %1375 = vmatpush2.msra.mxu0 0.0
      %1376 = vmatprep.subr.mxu0 0.0
      %1377 = vmatpush2.msra.mxu0 0.0
      %1378 = vmatprep.subr.mxu0 0.0
      %1379 = vmatpush2.msra.mxu0 0.0
      %1380 = vmatprep.subr.mxu0 0.0
      %1381 = vmatpush2.msra.mxu0 0.0
      %1382 = vmatprep.subr.mxu0 0.0
      %1383 = vmatpush2.msra.mxu0 0.0
      %1384 = vmatprep.subr.mxu0 0.0
      %1385 = vmatpush2.msra.mxu0 0.0
      %1386 = vmatprep.subr.mxu0 0.0
      %1387 = vmatpush2.msra.mxu0 0.0
      %1388 = vmatprep.subr.mxu0 0.0
      %1389 = vmatpush2.msra.mxu0 0.0
      %1390 = vmatprep.mubr.f32.mxu0 0.0
      %v1391 = vand.u32 %v1186, 4294901760
      %1392 = vmatmul.mubr.f32.gmra.mxu0 %v1391
      %v1393 = vpop.f32.mrf.mxu0
      %v1394 = vadd.f32 %v1273, %v1393
      %v1395 = vpop.f32.mrf.mxu0
      %1396 = vmatprep.mubr.f32.mxu0 0.0
      %v1397 = vand.u32 %v1189, 4294901760
      %1398 = vmatmul.mubr.f32.gmra.mxu0 %v1397
      %v1399 = vpop.f32.mrf.mxu0
      %v1400 = vadd.f32 %v1283, %v1399
      %v1401 = vpop.f32.mrf.mxu0
      %1402 = vmatprep.mubr.f32.mxu0 0.0
      %v1403 = vand.u32 %v1192, 4294901760
      %1404 = vmatmul.mubr.f32.gmra.mxu0 %v1403
      %v1405 = vpop.f32.mrf.mxu0
      %v1406 = vadd.f32 %v1293, %v1405
      %v1407 = vpop.f32.mrf.mxu0
      %1408 = vmatprep.mubr.f32.mxu0 0.0
      %v1409 = vand.u32 %v1195, 4294901760
      %1410 = vmatmul.mubr.f32.gmra.mxu0 %v1409
      %v1411 = vpop.f32.mrf.mxu0
      %v1412 = vadd.f32 %v1303, %v1411
      %v1413 = vpop.f32.mrf.mxu0
      %1414 = vdwg.mxu0
      %1415 = vmatprep.subr.mxu0 0.0
      %1416 = vmatpush1.msra.mxu0 0.0
      %1417 = vmatprep.subr.mxu0 0.0
      %1418 = vmatpush1.msra.mxu0 0.0
      %1419 = vmatprep.subr.mxu0 0.0
      %1420 = vmatpush1.msra.mxu0 0.0
      %1421 = vmatprep.subr.mxu0 0.0
      %1422 = vmatpush1.msra.mxu0 0.0
      %1423 = vmatprep.subr.mxu0 0.0
      %1424 = vmatpush1.msra.mxu0 0.0
      %1425 = vmatprep.subr.mxu0 0.0
      %1426 = vmatpush1.msra.mxu0 0.0
      %1427 = vmatprep.subr.mxu0 0.0
      %1428 = vmatpush1.msra.mxu0 0.0
      %1429 = vmatprep.subr.mxu0 0.0
      %1430 = vmatpush1.msra.mxu0 0.0
      %1431 = vmatprep.subr.mxu0 0.0
      %1432 = vmatpush1.msra.mxu0 0.0
      %1433 = vmatprep.subr.mxu0 0.0
      %1434 = vmatpush1.msra.mxu0 0.0
      %1435 = vmatprep.subr.mxu0 0.0
      %1436 = vmatpush1.msra.mxu0 0.0
      %1437 = vmatprep.subr.mxu0 0.0
      %1438 = vmatpush1.msra.mxu0 0.0
      %1439 = vmatprep.subr.mxu0 0.0
      %v1440 = vand.u32 %v1159, 4294901760
      %v1441 = vsub.f32 %v1159, %v1440
      %1442 = vmatpush1.msra.mxu0 %v1441
      %1443 = vmatprep.subr.mxu0 0.0
      %v1444 = vand.u32 %v1158, 4294901760
      %v1445 = vsub.f32 %v1158, %v1444
      %1446 = vmatpush1.msra.mxu0 %v1445
      %1447 = vmatprep.subr.mxu0 0.0
      %v1448 = vand.u32 %v1157, 4294901760
      %v1449 = vsub.f32 %v1157, %v1448
      %1450 = vmatpush1.msra.mxu0 %v1449
      %1451 = vmatprep.subr.mxu0 0.0
      %v1452 = vand.u32 %v1156, 4294901760
      %v1453 = vsub.f32 %v1156, %v1452
      %1454 = vmatpush1.msra.mxu0 %v1453
      %1455 = vmatprep.subr.mxu0 0.0
      %1456 = vmatpush2.msra.mxu0 0.0
      %1457 = vmatprep.subr.mxu0 0.0
      %1458 = vmatpush2.msra.mxu0 0.0
      %1459 = vmatprep.subr.mxu0 0.0
      %1460 = vmatpush2.msra.mxu0 0.0
      %1461 = vmatprep.subr.mxu0 0.0
      %1462 = vmatpush2.msra.mxu0 0.0
      %1463 = vmatprep.subr.mxu0 0.0
      %1464 = vmatpush2.msra.mxu0 0.0
      %1465 = vmatprep.subr.mxu0 0.0
      %1466 = vmatpush2.msra.mxu0 0.0
      %1467 = vmatprep.subr.mxu0 0.0
      %1468 = vmatpush2.msra.mxu0 0.0
      %1469 = vmatprep.subr.mxu0 0.0
      %1470 = vmatpush2.msra.mxu0 0.0
      %1471 = vmatprep.subr.mxu0 0.0
      %1472 = vmatpush2.msra.mxu0 0.0
      %1473 = vmatprep.subr.mxu0 0.0
      %1474 = vmatpush2.msra.mxu0 0.0
      %1475 = vmatprep.subr.mxu0 0.0
      %1476 = vmatpush2.msra.mxu0 0.0
      %1477 = vmatprep.subr.mxu0 0.0
      %1478 = vmatpush2.msra.mxu0 0.0
      %1479 = vmatprep.subr.mxu0 0.0
      %1480 = vmatpush2.msra.mxu0 0.0
      %1481 = vmatprep.subr.mxu0 0.0
      %1482 = vmatpush2.msra.mxu0 0.0
      %1483 = vmatprep.subr.mxu0 0.0
      %1484 = vmatpush2.msra.mxu0 0.0
      %1485 = vmatprep.subr.mxu0 0.0
      %1486 = vmatpush2.msra.mxu0 0.0
      %1487 = vmatprep.mubr.f32.mxu0 0.0
      %v1488 = vand.u32 %v1186, 4294901760
      %v1489 = vsub.f32 %v1186, %v1488
      %1490 = vmatmul.mubr.f32.gmra.mxu0 %v1489
      %v1491 = vpop.f32.mrf.mxu0
      %v1492 = vadd.f32 %v1394, %v1491
      %v1493 = vpop.f32.mrf.mxu0
      %1494 = vmatprep.mubr.f32.mxu0 0.0
      %v1495 = vand.u32 %v1189, 4294901760
      %v1496 = vsub.f32 %v1189, %v1495
      %1497 = vmatmul.mubr.f32.gmra.mxu0 %v1496
      %v1498 = vpop.f32.mrf.mxu0
      %v1499 = vadd.f32 %v1400, %v1498
      %v1500 = vpop.f32.mrf.mxu0
      %1501 = vmatprep.mubr.f32.mxu0 0.0
      %v1502 = vand.u32 %v1192, 4294901760
      %v1503 = vsub.f32 %v1192, %v1502
      %1504 = vmatmul.mubr.f32.gmra.mxu0 %v1503
      %v1505 = vpop.f32.mrf.mxu0
      %v1506 = vadd.f32 %v1406, %v1505
      %v1507 = vpop.f32.mrf.mxu0
      %1508 = vmatprep.mubr.f32.mxu0 0.0
      %v1509 = vand.u32 %v1195, 4294901760
      %v1510 = vsub.f32 %v1195, %v1509
      %1511 = vmatmul.mubr.f32.gmra.mxu0 %v1510
      %v1512 = vpop.f32.mrf.mxu0
      %v1513 = vadd.f32 %v1412, %v1512
      %v1514 = vpop.f32.mrf.mxu0
      %1515 = vdwg.mxu0
      %1516 = vmatprep.subr.mxu0 0.0
      %1517 = vmatpush1.msra.mxu0 0.0
      %1518 = vmatprep.subr.mxu0 0.0
      %1519 = vmatpush1.msra.mxu0 0.0
      %1520 = vmatprep.subr.mxu0 0.0
      %1521 = vmatpush1.msra.mxu0 0.0
      %1522 = vmatprep.subr.mxu0 0.0
      %1523 = vmatpush1.msra.mxu0 0.0
      %1524 = vmatprep.subr.mxu0 0.0
      %1525 = vmatpush1.msra.mxu0 0.0
      %1526 = vmatprep.subr.mxu0 0.0
      %1527 = vmatpush1.msra.mxu0 0.0
      %1528 = vmatprep.subr.mxu0 0.0
      %1529 = vmatpush1.msra.mxu0 0.0
      %1530 = vmatprep.subr.mxu0 0.0
      %1531 = vmatpush1.msra.mxu0 0.0
      %1532 = vmatprep.subr.mxu0 0.0
      %1533 = vmatpush1.msra.mxu0 0.0
      %1534 = vmatprep.subr.mxu0 0.0
      %1535 = vmatpush1.msra.mxu0 0.0
      %1536 = vmatprep.subr.mxu0 0.0
      %1537 = vmatpush1.msra.mxu0 0.0
      %1538 = vmatprep.subr.mxu0 0.0
      %1539 = vmatpush1.msra.mxu0 0.0
      %1540 = vmatprep.subr.mxu0 0.0
      %v1541 = vand.u32 %v1159, 4294901760
      %1542 = vmatpush1.msra.mxu0 %v1541
      %1543 = vmatprep.subr.mxu0 0.0
      %v1544 = vand.u32 %v1158, 4294901760
      %1545 = vmatpush1.msra.mxu0 %v1544
      %1546 = vmatprep.subr.mxu0 0.0
      %v1547 = vand.u32 %v1157, 4294901760
      %1548 = vmatpush1.msra.mxu0 %v1547
      %1549 = vmatprep.subr.mxu0 0.0
      %v1550 = vand.u32 %v1156, 4294901760
      %1551 = vmatpush1.msra.mxu0 %v1550
      %1552 = vmatprep.subr.mxu0 0.0
      %1553 = vmatpush2.msra.mxu0 0.0
      %1554 = vmatprep.subr.mxu0 0.0
      %1555 = vmatpush2.msra.mxu0 0.0
      %1556 = vmatprep.subr.mxu0 0.0
      %1557 = vmatpush2.msra.mxu0 0.0
      %1558 = vmatprep.subr.mxu0 0.0
      %1559 = vmatpush2.msra.mxu0 0.0
      %1560 = vmatprep.subr.mxu0 0.0
      %1561 = vmatpush2.msra.mxu0 0.0
      %1562 = vmatprep.subr.mxu0 0.0
      %1563 = vmatpush2.msra.mxu0 0.0
      %1564 = vmatprep.subr.mxu0 0.0
      %1565 = vmatpush2.msra.mxu0 0.0
      %1566 = vmatprep.subr.mxu0 0.0
      %1567 = vmatpush2.msra.mxu0 0.0
      %1568 = vmatprep.subr.mxu0 0.0
      %1569 = vmatpush2.msra.mxu0 0.0
      %1570 = vmatprep.subr.mxu0 0.0
      %1571 = vmatpush2.msra.mxu0 0.0
      %1572 = vmatprep.subr.mxu0 0.0
      %1573 = vmatpush2.msra.mxu0 0.0
      %1574 = vmatprep.subr.mxu0 0.0
      %1575 = vmatpush2.msra.mxu0 0.0
      %1576 = vmatprep.subr.mxu0 0.0
      %1577 = vmatpush2.msra.mxu0 0.0
      %1578 = vmatprep.subr.mxu0 0.0
      %1579 = vmatpush2.msra.mxu0 0.0
      %1580 = vmatprep.subr.mxu0 0.0
      %1581 = vmatpush2.msra.mxu0 0.0
      %1582 = vmatprep.subr.mxu0 0.0
      %1583 = vmatpush2.msra.mxu0 0.0
      %1584 = vmatprep.mubr.f32.mxu0 0.0
      %v1585 = vand.u32 %v1186, 4294901760
      %v1586 = vsub.f32 %v1186, %v1585
      %v1587 = vand.u32 %v1586, 4294901760
      %1588 = vmatmul.mubr.f32.gmra.mxu0 %v1587
      %v1589 = vpop.f32.mrf.mxu0
      %v1590 = vadd.f32 %v1492, %v1589
      %v1591 = vpop.f32.mrf.mxu0
      %1592 = vmatprep.mubr.f32.mxu0 0.0
      %v1593 = vand.u32 %v1189, 4294901760
      %v1594 = vsub.f32 %v1189, %v1593
      %v1595 = vand.u32 %v1594, 4294901760
      %1596 = vmatmul.mubr.f32.gmra.mxu0 %v1595
      %v1597 = vpop.f32.mrf.mxu0
      %v1598 = vadd.f32 %v1499, %v1597
      %v1599 = vpop.f32.mrf.mxu0
      %1600 = vmatprep.mubr.f32.mxu0 0.0
      %v1601 = vand.u32 %v1192, 4294901760
      %v1602 = vsub.f32 %v1192, %v1601
      %v1603 = vand.u32 %v1602, 4294901760
      %1604 = vmatmul.mubr.f32.gmra.mxu0 %v1603
      %v1605 = vpop.f32.mrf.mxu0
      %v1606 = vadd.f32 %v1506, %v1605
      %v1607 = vpop.f32.mrf.mxu0
      %1608 = vmatprep.mubr.f32.mxu0 0.0
      %v1609 = vand.u32 %v1195, 4294901760
      %v1610 = vsub.f32 %v1195, %v1609
      %v1611 = vand.u32 %v1610, 4294901760
      %1612 = vmatmul.mubr.f32.gmra.mxu0 %v1611
      %v1613 = vpop.f32.mrf.mxu0
      %v1614 = vadd.f32 %v1513, %v1613
      %v1615 = vpop.f32.mrf.mxu0
      %1616 = vdwg.mxu0
      %1617 = vmatprep.subr.mxu0 0.0
      %1618 = vmatpush1.msra.mxu0 0.0
      %1619 = vmatprep.subr.mxu0 0.0
      %1620 = vmatpush1.msra.mxu0 0.0
      %1621 = vmatprep.subr.mxu0 0.0
      %1622 = vmatpush1.msra.mxu0 0.0
      %1623 = vmatprep.subr.mxu0 0.0
      %1624 = vmatpush1.msra.mxu0 0.0
      %1625 = vmatprep.subr.mxu0 0.0
      %1626 = vmatpush1.msra.mxu0 0.0
      %1627 = vmatprep.subr.mxu0 0.0
      %1628 = vmatpush1.msra.mxu0 0.0
      %1629 = vmatprep.subr.mxu0 0.0
      %1630 = vmatpush1.msra.mxu0 0.0
      %1631 = vmatprep.subr.mxu0 0.0
      %1632 = vmatpush1.msra.mxu0 0.0
      %1633 = vmatprep.subr.mxu0 0.0
      %1634 = vmatpush1.msra.mxu0 0.0
      %1635 = vmatprep.subr.mxu0 0.0
      %1636 = vmatpush1.msra.mxu0 0.0
      %1637 = vmatprep.subr.mxu0 0.0
      %1638 = vmatpush1.msra.mxu0 0.0
      %1639 = vmatprep.subr.mxu0 0.0
      %1640 = vmatpush1.msra.mxu0 0.0
      %1641 = vmatprep.subr.mxu0 0.0
      %v1642 = vand.u32 %v1159, 4294901760
      %v1643 = vsub.f32 %v1159, %v1642
      %v1644 = vand.u32 %v1643, 4294901760
      %1645 = vmatpush1.msra.mxu0 %v1644
      %1646 = vmatprep.subr.mxu0 0.0
      %v1647 = vand.u32 %v1158, 4294901760
      %v1648 = vsub.f32 %v1158, %v1647
      %v1649 = vand.u32 %v1648, 4294901760
      %1650 = vmatpush1.msra.mxu0 %v1649
      %1651 = vmatprep.subr.mxu0 0.0
      %v1652 = vand.u32 %v1157, 4294901760
      %v1653 = vsub.f32 %v1157, %v1652
      %v1654 = vand.u32 %v1653, 4294901760
      %1655 = vmatpush1.msra.mxu0 %v1654
      %1656 = vmatprep.subr.mxu0 0.0
      %v1657 = vand.u32 %v1156, 4294901760
      %v1658 = vsub.f32 %v1156, %v1657
      %v1659 = vand.u32 %v1658, 4294901760
      %1660 = vmatpush1.msra.mxu0 %v1659
      %1661 = vmatprep.subr.mxu0 0.0
      %1662 = vmatpush2.msra.mxu0 0.0
      %1663 = vmatprep.subr.mxu0 0.0
      %1664 = vmatpush2.msra.mxu0 0.0
      %1665 = vmatprep.subr.mxu0 0.0
      %1666 = vmatpush2.msra.mxu0 0.0
      %1667 = vmatprep.subr.mxu0 0.0
      %1668 = vmatpush2.msra.mxu0 0.0
      %1669 = vmatprep.subr.mxu0 0.0
      %1670 = vmatpush2.msra.mxu0 0.0
      %1671 = vmatprep.subr.mxu0 0.0
      %1672 = vmatpush2.msra.mxu0 0.0
      %1673 = vmatprep.subr.mxu0 0.0
      %1674 = vmatpush2.msra.mxu0 0.0
      %1675 = vmatprep.subr.mxu0 0.0
      %1676 = vmatpush2.msra.mxu0 0.0
      %1677 = vmatprep.subr.mxu0 0.0
      %1678 = vmatpush2.msra.mxu0 0.0
      %1679 = vmatprep.subr.mxu0 0.0
      %1680 = vmatpush2.msra.mxu0 0.0
      %1681 = vmatprep.subr.mxu0 0.0
      %1682 = vmatpush2.msra.mxu0 0.0
      %1683 = vmatprep.subr.mxu0 0.0
      %1684 = vmatpush2.msra.mxu0 0.0
      %1685 = vmatprep.subr.mxu0 0.0
      %1686 = vmatpush2.msra.mxu0 0.0
      %1687 = vmatprep.subr.mxu0 0.0
      %1688 = vmatpush2.msra.mxu0 0.0
      %1689 = vmatprep.subr.mxu0 0.0
      %1690 = vmatpush2.msra.mxu0 0.0
      %1691 = vmatprep.subr.mxu0 0.0
      %1692 = vmatpush2.msra.mxu0 0.0
      %1693 = vmatprep.mubr.f32.mxu0 0.0
      %v1694 = vand.u32 %v1186, 4294901760
      %1695 = vmatmul.mubr.f32.gmra.mxu0 %v1694
      %v1696 = vpop.f32.mrf.mxu0
      %v1697 = vadd.f32 %v1590, %v1696
      %v1698 = vpop.f32.mrf.mxu0
      %1699 = vmatprep.mubr.f32.mxu0 0.0
      %v1700 = vand.u32 %v1189, 4294901760
      %1701 = vmatmul.mubr.f32.gmra.mxu0 %v1700
      %v1702 = vpop.f32.mrf.mxu0
      %v1703 = vadd.f32 %v1598, %v1702
      %v1704 = vpop.f32.mrf.mxu0
      %1705 = vmatprep.mubr.f32.mxu0 0.0
      %v1706 = vand.u32 %v1192, 4294901760
      %1707 = vmatmul.mubr.f32.gmra.mxu0 %v1706
      %v1708 = vpop.f32.mrf.mxu0
      %v1709 = vadd.f32 %v1606, %v1708
      %v1710 = vpop.f32.mrf.mxu0
      %1711 = vmatprep.mubr.f32.mxu0 0.0
      %v1712 = vand.u32 %v1195, 4294901760
      %1713 = vmatmul.mubr.f32.gmra.mxu0 %v1712
      %v1714 = vpop.f32.mrf.mxu0
      %v1715 = vadd.f32 %v1614, %v1714
      %v1716 = vpop.f32.mrf.mxu0
      %1717 = vdwg.mxu0
      %1718 = vmatprep.subr.mxu0 0.0
      %1719 = vmatpush1.msra.mxu0 0.0
      %1720 = vmatprep.subr.mxu0 0.0
      %1721 = vmatpush1.msra.mxu0 0.0
      %1722 = vmatprep.subr.mxu0 0.0
      %1723 = vmatpush1.msra.mxu0 0.0
      %1724 = vmatprep.subr.mxu0 0.0
      %1725 = vmatpush1.msra.mxu0 0.0
      %1726 = vmatprep.subr.mxu0 0.0
      %1727 = vmatpush1.msra.mxu0 0.0
      %1728 = vmatprep.subr.mxu0 0.0
      %1729 = vmatpush1.msra.mxu0 0.0
      %1730 = vmatprep.subr.mxu0 0.0
      %1731 = vmatpush1.msra.mxu0 0.0
      %1732 = vmatprep.subr.mxu0 0.0
      %1733 = vmatpush1.msra.mxu0 0.0
      %1734 = vmatprep.subr.mxu0 0.0
      %1735 = vmatpush1.msra.mxu0 0.0
      %1736 = vmatprep.subr.mxu0 0.0
      %1737 = vmatpush1.msra.mxu0 0.0
      %1738 = vmatprep.subr.mxu0 0.0
      %1739 = vmatpush1.msra.mxu0 0.0
      %1740 = vmatprep.subr.mxu0 0.0
      %1741 = vmatpush1.msra.mxu0 0.0
      %1742 = vmatprep.subr.mxu0 0.0
      %v1743 = vand.u32 %v1159, 4294901760
      %1744 = vmatpush1.msra.mxu0 %v1743
      %1745 = vmatprep.subr.mxu0 0.0
      %v1746 = vand.u32 %v1158, 4294901760
      %1747 = vmatpush1.msra.mxu0 %v1746
      %1748 = vmatprep.subr.mxu0 0.0
      %v1749 = vand.u32 %v1157, 4294901760
      %1750 = vmatpush1.msra.mxu0 %v1749
      %1751 = vmatprep.subr.mxu0 0.0
      %v1752 = vand.u32 %v1156, 4294901760
      %1753 = vmatpush1.msra.mxu0 %v1752
      %1754 = vmatprep.subr.mxu0 0.0
      %1755 = vmatpush2.msra.mxu0 0.0
      %1756 = vmatprep.subr.mxu0 0.0
      %1757 = vmatpush2.msra.mxu0 0.0
      %1758 = vmatprep.subr.mxu0 0.0
      %1759 = vmatpush2.msra.mxu0 0.0
      %1760 = vmatprep.subr.mxu0 0.0
      %1761 = vmatpush2.msra.mxu0 0.0
      %1762 = vmatprep.subr.mxu0 0.0
      %1763 = vmatpush2.msra.mxu0 0.0
      %1764 = vmatprep.subr.mxu0 0.0
      %1765 = vmatpush2.msra.mxu0 0.0
      %1766 = vmatprep.subr.mxu0 0.0
      %1767 = vmatpush2.msra.mxu0 0.0
      %1768 = vmatprep.subr.mxu0 0.0
      %1769 = vmatpush2.msra.mxu0 0.0
      %1770 = vmatprep.subr.mxu0 0.0
      %1771 = vmatpush2.msra.mxu0 0.0
      %1772 = vmatprep.subr.mxu0 0.0
      %1773 = vmatpush2.msra.mxu0 0.0
      %1774 = vmatprep.subr.mxu0 0.0
      %1775 = vmatpush2.msra.mxu0 0.0
      %1776 = vmatprep.subr.mxu0 0.0
      %1777 = vmatpush2.msra.mxu0 0.0
      %1778 = vmatprep.subr.mxu0 0.0
      %1779 = vmatpush2.msra.mxu0 0.0
      %1780 = vmatprep.subr.mxu0 0.0
      %1781 = vmatpush2.msra.mxu0 0.0
      %1782 = vmatprep.subr.mxu0 0.0
      %1783 = vmatpush2.msra.mxu0 0.0
      %1784 = vmatprep.subr.mxu0 0.0
      %1785 = vmatpush2.msra.mxu0 0.0
      %1786 = vmatprep.mubr.f32.mxu0 0.0
      %v1787 = vand.u32 %v1186, 4294901760
      %1788 = vmatmul.mubr.f32.gmra.mxu0 %v1787
      %v1789 = vpop.f32.mrf.mxu0
      %v1790 = vadd.f32 %v1697, %v1789
      %v1791 = vpop.f32.mrf.mxu0
      %1792 = vmatprep.mubr.f32.mxu0 0.0
      %v1793 = vand.u32 %v1189, 4294901760
      %1794 = vmatmul.mubr.f32.gmra.mxu0 %v1793
      %v1795 = vpop.f32.mrf.mxu0
      %v1796 = vadd.f32 %v1703, %v1795
      %v1797 = vpop.f32.mrf.mxu0
      %1798 = vmatprep.mubr.f32.mxu0 0.0
      %v1799 = vand.u32 %v1192, 4294901760
      %1800 = vmatmul.mubr.f32.gmra.mxu0 %v1799
      %v1801 = vpop.f32.mrf.mxu0
      %v1802 = vadd.f32 %v1709, %v1801
      %v1803 = vpop.f32.mrf.mxu0
      %1804 = vmatprep.mubr.f32.mxu0 0.0
      %v1805 = vand.u32 %v1195, 4294901760
      %1806 = vmatmul.mubr.f32.gmra.mxu0 %v1805
      %v1807 = vpop.f32.mrf.mxu0
      %v1808 = vadd.f32 %v1715, %v1807
      %v1809 = vpop.f32.mrf.mxu0
      %1810 = vdwg.mxu0
      %v1811 = vadd.f32 %v1135, %v1790
      %v1812 = vadd.f32 %v1141, %v1796
      %v1813 = vadd.f32 %v1147, %v1802
      %v1814 = vadd.f32 %v1153, %v1808
      %1816 = vset.pattern.permute.xlu0 0
      %1817 = vperm.xlu0 %1816, %v1160
      %v1818 = vpop.permute.xlu0 %1817
      %1821 = vset.pattern.permute.xlu0 0
      %1822 = vperm.xlu0 %1821, %v1161
      %v1823 = vpop.permute.xlu0 %1822
      %1826 = vset.pattern.permute.xlu0 0
      %1827 = vperm.xlu0 %1826, %v1162
      %v1828 = vpop.permute.xlu0 %1827
      %1831 = vset.pattern.permute.xlu0 0
      %1832 = vperm.xlu0 %1831, %v1163
      %v1833 = vpop.permute.xlu0 %1832
      %v1835 = vadd.f32 %v1811, %v1818
      %v1836 = vadd.f32 %v1812, %v1823
      %v1837 = vadd.f32 %v1813, %v1828
      %v1838 = vadd.f32 %v1814, %v1833
      %v1839 = vld [vmem:[%s4 + $0xa0] sm:$0xff]
      %v1840 = vld [vmem:[%s4 + $0xa8] sm:$0xff]
      %v1841 = vld [vmem:[%s4 + $0xb0] sm:$0xff]
      %v1842 = vld [vmem:[%s4 + $0xb8] sm:$0xff]
      %v1843 = vmax.f32 %v1835, 0.0
      %v1844 = vmax.f32 %v1836, 0.0
      %v1845 = vmax.f32 %v1837, 0.0
      %v1846 = vmax.f32 %v1838, 0.0
      %v1847 = vld [vmem:[%s5] sm:$0xff]
      %v1848 = vld [vmem:[%s5 + $0x8] sm:$0xff]
      %v1849 = vld [vmem:[%s5 + $0x10] sm:$0xff]
      %v1850 = vld [vmem:[%s5 + $0x18] sm:$0xff]
      %1852 = vset.pattern.permute.xlu0 0
      %1853 = vperm.xlu0 %1852, %v1847
      %v1854 = vpop.permute.xlu0 %1853
      %1857 = vset.pattern.permute.xlu0 0
      %1858 = vperm.xlu0 %1857, %v1848
      %v1859 = vpop.permute.xlu0 %1858
      %1862 = vset.pattern.permute.xlu0 0
      %1863 = vperm.xlu0 %1862, %v1849
      %v1864 = vpop.permute.xlu0 %1863
      %1867 = vset.pattern.permute.xlu0 0
      %1868 = vperm.xlu0 %1867, %v1850
      %v1869 = vpop.permute.xlu0 %1868
      %v1872 = vsel %vm1184, %v1839, 0
      %v1875 = vsel %vm1184, %v1840, 0
      %v1878 = vsel %vm1184, %v1841, 0
      %v1881 = vsel %vm1184, %v1842, 0
      %1883 = vmatprep.subr.mxu0 0.0
      %1884 = vmatpush1.msra.mxu0 0.0
      %1885 = vmatprep.subr.mxu0 0.0
      %1886 = vmatpush1.msra.mxu0 0.0
      %1887 = vmatprep.subr.mxu0 0.0
      %1888 = vmatpush1.msra.mxu0 0.0
      %1889 = vmatprep.subr.mxu0 0.0
      %1890 = vmatpush1.msra.mxu0 0.0
      %1891 = vmatprep.subr.mxu0 0.0
      %1892 = vmatpush1.msra.mxu0 0.0
      %1893 = vmatprep.subr.mxu0 0.0
      %1894 = vmatpush1.msra.mxu0 0.0
      %1895 = vmatprep.subr.mxu0 0.0
      %1896 = vmatpush1.msra.mxu0 0.0
      %1897 = vmatprep.subr.mxu0 0.0
      %1898 = vmatpush1.msra.mxu0 0.0
      %1899 = vmatprep.subr.mxu0 0.0
      %1900 = vmatpush1.msra.mxu0 0.0
      %1901 = vmatprep.subr.mxu0 0.0
      %1902 = vmatpush1.msra.mxu0 0.0
      %1903 = vmatprep.subr.mxu0 0.0
      %1904 = vmatpush1.msra.mxu0 0.0
      %1905 = vmatprep.subr.mxu0 0.0
      %1906 = vmatpush1.msra.mxu0 0.0
      %1907 = vmatprep.subr.mxu0 0.0
      %v1908 = vand.u32 %v1846, 4294901760
      %1909 = vmatpush1.msra.mxu0 %v1908
      %1910 = vmatprep.subr.mxu0 0.0
      %v1911 = vand.u32 %v1845, 4294901760
      %1912 = vmatpush1.msra.mxu0 %v1911
      %1913 = vmatprep.subr.mxu0 0.0
      %v1914 = vand.u32 %v1844, 4294901760
      %1915 = vmatpush1.msra.mxu0 %v1914
      %1916 = vmatprep.subr.mxu0 0.0
      %v1917 = vand.u32 %v1843, 4294901760
      %1918 = vmatpush1.msra.mxu0 %v1917
      %1919 = vmatprep.subr.mxu0 0.0
      %1920 = vmatpush2.msra.mxu0 0.0
      %1921 = vmatprep.subr.mxu0 0.0
      %1922 = vmatpush2.msra.mxu0 0.0
      %1923 = vmatprep.subr.mxu0 0.0
      %1924 = vmatpush2.msra.mxu0 0.0
      %1925 = vmatprep.subr.mxu0 0.0
      %1926 = vmatpush2.msra.mxu0 0.0
      %1927 = vmatprep.subr.mxu0 0.0
      %1928 = vmatpush2.msra.mxu0 0.0
      %1929 = vmatprep.subr.mxu0 0.0
      %1930 = vmatpush2.msra.mxu0 0.0
      %1931 = vmatprep.subr.mxu0 0.0
      %1932 = vmatpush2.msra.mxu0 0.0
      %1933 = vmatprep.subr.mxu0 0.0
      %1934 = vmatpush2.msra.mxu0 0.0
      %1935 = vmatprep.subr.mxu0 0.0
      %1936 = vmatpush2.msra.mxu0 0.0
      %1937 = vmatprep.subr.mxu0 0.0
      %1938 = vmatpush2.msra.mxu0 0.0
      %1939 = vmatprep.subr.mxu0 0.0
      %1940 = vmatpush2.msra.mxu0 0.0
      %1941 = vmatprep.subr.mxu0 0.0
      %1942 = vmatpush2.msra.mxu0 0.0
      %1943 = vmatprep.subr.mxu0 0.0
      %1944 = vmatpush2.msra.mxu0 0.0
      %1945 = vmatprep.subr.mxu0 0.0
      %1946 = vmatpush2.msra.mxu0 0.0
      %1947 = vmatprep.subr.mxu0 0.0
      %1948 = vmatpush2.msra.mxu0 0.0
      %1949 = vmatprep.subr.mxu0 0.0
      %1950 = vmatpush2.msra.mxu0 0.0
      %1951 = vmatprep.mubr.f32.mxu0 0.0
      %v1952 = vand.u32 %v1872, 4294901760
      %v1953 = vsub.f32 %v1872, %v1952
      %v1954 = vand.u32 %v1953, 4294901760
      %v1955 = vsub.f32 %v1953, %v1954
      %v1956 = vand.u32 %v1955, 4294901760
      %1957 = vmatmul.mubr.f32.gmra.mxu0 %v1956
      %v1958 = vpop.f32.mrf.mxu0
      %v1959 = vadd.f32 %v1854, %v1958
      %v1960 = vpop.f32.mrf.mxu0
      %1961 = vmatprep.mubr.f32.mxu0 0.0
      %v1962 = vand.u32 %v1875, 4294901760
      %v1963 = vsub.f32 %v1875, %v1962
      %v1964 = vand.u32 %v1963, 4294901760
      %v1965 = vsub.f32 %v1963, %v1964
      %v1966 = vand.u32 %v1965, 4294901760
      %1967 = vmatmul.mubr.f32.gmra.mxu0 %v1966
      %v1968 = vpop.f32.mrf.mxu0
      %v1969 = vadd.f32 %v1859, %v1968
      %v1970 = vpop.f32.mrf.mxu0
      %1971 = vmatprep.mubr.f32.mxu0 0.0
      %v1972 = vand.u32 %v1878, 4294901760
      %v1973 = vsub.f32 %v1878, %v1972
      %v1974 = vand.u32 %v1973, 4294901760
      %v1975 = vsub.f32 %v1973, %v1974
      %v1976 = vand.u32 %v1975, 4294901760
      %1977 = vmatmul.mubr.f32.gmra.mxu0 %v1976
      %v1978 = vpop.f32.mrf.mxu0
      %v1979 = vadd.f32 %v1864, %v1978
      %v1980 = vpop.f32.mrf.mxu0
      %1981 = vmatprep.mubr.f32.mxu0 0.0
      %v1982 = vand.u32 %v1881, 4294901760
      %v1983 = vsub.f32 %v1881, %v1982
      %v1984 = vand.u32 %v1983, 4294901760
      %v1985 = vsub.f32 %v1983, %v1984
      %v1986 = vand.u32 %v1985, 4294901760
      %1987 = vmatmul.mubr.f32.gmra.mxu0 %v1986
      %v1988 = vpop.f32.mrf.mxu0
      %v1989 = vadd.f32 %v1869, %v1988
      %v1990 = vpop.f32.mrf.mxu0
      %1991 = vdwg.mxu0
      %1992 = vmatprep.subr.mxu0 0.0
      %1993 = vmatpush1.msra.mxu0 0.0
      %1994 = vmatprep.subr.mxu0 0.0
      %1995 = vmatpush1.msra.mxu0 0.0
      %1996 = vmatprep.subr.mxu0 0.0
      %1997 = vmatpush1.msra.mxu0 0.0
      %1998 = vmatprep.subr.mxu0 0.0
      %1999 = vmatpush1.msra.mxu0 0.0
      %2000 = vmatprep.subr.mxu0 0.0
      %2001 = vmatpush1.msra.mxu0 0.0
      %2002 = vmatprep.subr.mxu0 0.0
      %2003 = vmatpush1.msra.mxu0 0.0
      %2004 = vmatprep.subr.mxu0 0.0
      %2005 = vmatpush1.msra.mxu0 0.0
      %2006 = vmatprep.subr.mxu0 0.0
      %2007 = vmatpush1.msra.mxu0 0.0
      %2008 = vmatprep.subr.mxu0 0.0
      %2009 = vmatpush1.msra.mxu0 0.0
      %2010 = vmatprep.subr.mxu0 0.0
      %2011 = vmatpush1.msra.mxu0 0.0
      %2012 = vmatprep.subr.mxu0 0.0
      %2013 = vmatpush1.msra.mxu0 0.0
      %2014 = vmatprep.subr.mxu0 0.0
      %2015 = vmatpush1.msra.mxu0 0.0
      %2016 = vmatprep.subr.mxu0 0.0
      %v2017 = vand.u32 %v1846, 4294901760
      %v2018 = vsub.f32 %v1846, %v2017
      %v2019 = vand.u32 %v2018, 4294901760
      %v2020 = vsub.f32 %v2018, %v2019
      %v2021 = vand.u32 %v2020, 4294901760
      %2022 = vmatpush1.msra.mxu0 %v2021
      %2023 = vmatprep.subr.mxu0 0.0
      %v2024 = vand.u32 %v1845, 4294901760
      %v2025 = vsub.f32 %v1845, %v2024
      %v2026 = vand.u32 %v2025, 4294901760
      %v2027 = vsub.f32 %v2025, %v2026
      %v2028 = vand.u32 %v2027, 4294901760
      %2029 = vmatpush1.msra.mxu0 %v2028
      %2030 = vmatprep.subr.mxu0 0.0
      %v2031 = vand.u32 %v1844, 4294901760
      %v2032 = vsub.f32 %v1844, %v2031
      %v2033 = vand.u32 %v2032, 4294901760
      %v2034 = vsub.f32 %v2032, %v2033
      %v2035 = vand.u32 %v2034, 4294901760
      %2036 = vmatpush1.msra.mxu0 %v2035
      %2037 = vmatprep.subr.mxu0 0.0
      %v2038 = vand.u32 %v1843, 4294901760
      %v2039 = vsub.f32 %v1843, %v2038
      %v2040 = vand.u32 %v2039, 4294901760
      %v2041 = vsub.f32 %v2039, %v2040
      %v2042 = vand.u32 %v2041, 4294901760
      %2043 = vmatpush1.msra.mxu0 %v2042
      %2044 = vmatprep.subr.mxu0 0.0
      %2045 = vmatpush2.msra.mxu0 0.0
      %2046 = vmatprep.subr.mxu0 0.0
      %2047 = vmatpush2.msra.mxu0 0.0
      %2048 = vmatprep.subr.mxu0 0.0
      %2049 = vmatpush2.msra.mxu0 0.0
      %2050 = vmatprep.subr.mxu0 0.0
      %2051 = vmatpush2.msra.mxu0 0.0
      %2052 = vmatprep.subr.mxu0 0.0
      %2053 = vmatpush2.msra.mxu0 0.0
      %2054 = vmatprep.subr.mxu0 0.0
      %2055 = vmatpush2.msra.mxu0 0.0
      %2056 = vmatprep.subr.mxu0 0.0
      %2057 = vmatpush2.msra.mxu0 0.0
      %2058 = vmatprep.subr.mxu0 0.0
      %2059 = vmatpush2.msra.mxu0 0.0
      %2060 = vmatprep.subr.mxu0 0.0
      %2061 = vmatpush2.msra.mxu0 0.0
      %2062 = vmatprep.subr.mxu0 0.0
      %2063 = vmatpush2.msra.mxu0 0.0
      %2064 = vmatprep.subr.mxu0 0.0
      %2065 = vmatpush2.msra.mxu0 0.0
      %2066 = vmatprep.subr.mxu0 0.0
      %2067 = vmatpush2.msra.mxu0 0.0
      %2068 = vmatprep.subr.mxu0 0.0
      %2069 = vmatpush2.msra.mxu0 0.0
      %2070 = vmatprep.subr.mxu0 0.0
      %2071 = vmatpush2.msra.mxu0 0.0
      %2072 = vmatprep.subr.mxu0 0.0
      %2073 = vmatpush2.msra.mxu0 0.0
      %2074 = vmatprep.subr.mxu0 0.0
      %2075 = vmatpush2.msra.mxu0 0.0
      %2076 = vmatprep.mubr.f32.mxu0 0.0
      %v2077 = vand.u32 %v1872, 4294901760
      %2078 = vmatmul.mubr.f32.gmra.mxu0 %v2077
      %v2079 = vpop.f32.mrf.mxu0
      %v2080 = vadd.f32 %v1959, %v2079
      %v2081 = vpop.f32.mrf.mxu0
      %2082 = vmatprep.mubr.f32.mxu0 0.0
      %v2083 = vand.u32 %v1875, 4294901760
      %2084 = vmatmul.mubr.f32.gmra.mxu0 %v2083
      %v2085 = vpop.f32.mrf.mxu0
      %v2086 = vadd.f32 %v1969, %v2085
      %v2087 = vpop.f32.mrf.mxu0
      %2088 = vmatprep.mubr.f32.mxu0 0.0
      %v2089 = vand.u32 %v1878, 4294901760
      %2090 = vmatmul.mubr.f32.gmra.mxu0 %v2089
      %v2091 = vpop.f32.mrf.mxu0
      %v2092 = vadd.f32 %v1979, %v2091
      %v2093 = vpop.f32.mrf.mxu0
      %2094 = vmatprep.mubr.f32.mxu0 0.0
      %v2095 = vand.u32 %v1881, 4294901760
      %2096 = vmatmul.mubr.f32.gmra.mxu0 %v2095
      %v2097 = vpop.f32.mrf.mxu0
      %v2098 = vadd.f32 %v1989, %v2097
      %v2099 = vpop.f32.mrf.mxu0
      %2100 = vdwg.mxu0
      %2101 = vmatprep.subr.mxu0 0.0
      %2102 = vmatpush1.msra.mxu0 0.0
      %2103 = vmatprep.subr.mxu0 0.0
      %2104 = vmatpush1.msra.mxu0 0.0
      %2105 = vmatprep.subr.mxu0 0.0
      %2106 = vmatpush1.msra.mxu0 0.0
      %2107 = vmatprep.subr.mxu0 0.0
      %2108 = vmatpush1.msra.mxu0 0.0
      %2109 = vmatprep.subr.mxu0 0.0
      %2110 = vmatpush1.msra.mxu0 0.0
      %2111 = vmatprep.subr.mxu0 0.0
      %2112 = vmatpush1.msra.mxu0 0.0
      %2113 = vmatprep.subr.mxu0 0.0
      %2114 = vmatpush1.msra.mxu0 0.0
      %2115 = vmatprep.subr.mxu0 0.0
      %2116 = vmatpush1.msra.mxu0 0.0
      %2117 = vmatprep.subr.mxu0 0.0
      %2118 = vmatpush1.msra.mxu0 0.0
      %2119 = vmatprep.subr.mxu0 0.0
      %2120 = vmatpush1.msra.mxu0 0.0
      %2121 = vmatprep.subr.mxu0 0.0
      %2122 = vmatpush1.msra.mxu0 0.0
      %2123 = vmatprep.subr.mxu0 0.0
      %2124 = vmatpush1.msra.mxu0 0.0
      %2125 = vmatprep.subr.mxu0 0.0
      %v2126 = vand.u32 %v1846, 4294901760
      %v2127 = vsub.f32 %v1846, %v2126
      %2128 = vmatpush1.msra.mxu0 %v2127
      %2129 = vmatprep.subr.mxu0 0.0
      %v2130 = vand.u32 %v1845, 4294901760
      %v2131 = vsub.f32 %v1845, %v2130
      %2132 = vmatpush1.msra.mxu0 %v2131
      %2133 = vmatprep.subr.mxu0 0.0
      %v2134 = vand.u32 %v1844, 4294901760
      %v2135 = vsub.f32 %v1844, %v2134
      %2136 = vmatpush1.msra.mxu0 %v2135
      %2137 = vmatprep.subr.mxu0 0.0
      %v2138 = vand.u32 %v1843, 4294901760
      %v2139 = vsub.f32 %v1843, %v2138
      %2140 = vmatpush1.msra.mxu0 %v2139
      %2141 = vmatprep.subr.mxu0 0.0
      %2142 = vmatpush2.msra.mxu0 0.0
      %2143 = vmatprep.subr.mxu0 0.0
      %2144 = vmatpush2.msra.mxu0 0.0
      %2145 = vmatprep.subr.mxu0 0.0
      %2146 = vmatpush2.msra.mxu0 0.0
      %2147 = vmatprep.subr.mxu0 0.0
      %2148 = vmatpush2.msra.mxu0 0.0
      %2149 = vmatprep.subr.mxu0 0.0
      %2150 = vmatpush2.msra.mxu0 0.0
      %2151 = vmatprep.subr.mxu0 0.0
      %2152 = vmatpush2.msra.mxu0 0.0
      %2153 = vmatprep.subr.mxu0 0.0
      %2154 = vmatpush2.msra.mxu0 0.0
      %2155 = vmatprep.subr.mxu0 0.0
      %2156 = vmatpush2.msra.mxu0 0.0
      %2157 = vmatprep.subr.mxu0 0.0
      %2158 = vmatpush2.msra.mxu0 0.0
      %2159 = vmatprep.subr.mxu0 0.0
      %2160 = vmatpush2.msra.mxu0 0.0
      %2161 = vmatprep.subr.mxu0 0.0
      %2162 = vmatpush2.msra.mxu0 0.0
      %2163 = vmatprep.subr.mxu0 0.0
      %2164 = vmatpush2.msra.mxu0 0.0
      %2165 = vmatprep.subr.mxu0 0.0
      %2166 = vmatpush2.msra.mxu0 0.0
      %2167 = vmatprep.subr.mxu0 0.0
      %2168 = vmatpush2.msra.mxu0 0.0
      %2169 = vmatprep.subr.mxu0 0.0
      %2170 = vmatpush2.msra.mxu0 0.0
      %2171 = vmatprep.subr.mxu0 0.0
      %2172 = vmatpush2.msra.mxu0 0.0
      %2173 = vmatprep.mubr.f32.mxu0 0.0
      %v2174 = vand.u32 %v1872, 4294901760
      %v2175 = vsub.f32 %v1872, %v2174
      %2176 = vmatmul.mubr.f32.gmra.mxu0 %v2175
      %v2177 = vpop.f32.mrf.mxu0
      %v2178 = vadd.f32 %v2080, %v2177
      %v2179 = vpop.f32.mrf.mxu0
      %2180 = vmatprep.mubr.f32.mxu0 0.0
      %v2181 = vand.u32 %v1875, 4294901760
      %v2182 = vsub.f32 %v1875, %v2181
      %2183 = vmatmul.mubr.f32.gmra.mxu0 %v2182
      %v2184 = vpop.f32.mrf.mxu0
      %v2185 = vadd.f32 %v2086, %v2184
      %v2186 = vpop.f32.mrf.mxu0
      %2187 = vmatprep.mubr.f32.mxu0 0.0
      %v2188 = vand.u32 %v1878, 4294901760
      %v2189 = vsub.f32 %v1878, %v2188
      %2190 = vmatmul.mubr.f32.gmra.mxu0 %v2189
      %v2191 = vpop.f32.mrf.mxu0
      %v2192 = vadd.f32 %v2092, %v2191
      %v2193 = vpop.f32.mrf.mxu0
      %2194 = vmatprep.mubr.f32.mxu0 0.0
      %v2195 = vand.u32 %v1881, 4294901760
      %v2196 = vsub.f32 %v1881, %v2195
      %2197 = vmatmul.mubr.f32.gmra.mxu0 %v2196
      %v2198 = vpop.f32.mrf.mxu0
      %v2199 = vadd.f32 %v2098, %v2198
      %v2200 = vpop.f32.mrf.mxu0
      %2201 = vdwg.mxu0
      %2202 = vmatprep.subr.mxu0 0.0
      %2203 = vmatpush1.msra.mxu0 0.0
      %2204 = vmatprep.subr.mxu0 0.0
      %2205 = vmatpush1.msra.mxu0 0.0
      %2206 = vmatprep.subr.mxu0 0.0
      %2207 = vmatpush1.msra.mxu0 0.0
      %2208 = vmatprep.subr.mxu0 0.0
      %2209 = vmatpush1.msra.mxu0 0.0
      %2210 = vmatprep.subr.mxu0 0.0
      %2211 = vmatpush1.msra.mxu0 0.0
      %2212 = vmatprep.subr.mxu0 0.0
      %2213 = vmatpush1.msra.mxu0 0.0
      %2214 = vmatprep.subr.mxu0 0.0
      %2215 = vmatpush1.msra.mxu0 0.0
      %2216 = vmatprep.subr.mxu0 0.0
      %2217 = vmatpush1.msra.mxu0 0.0
      %2218 = vmatprep.subr.mxu0 0.0
      %2219 = vmatpush1.msra.mxu0 0.0
      %2220 = vmatprep.subr.mxu0 0.0
      %2221 = vmatpush1.msra.mxu0 0.0
      %2222 = vmatprep.subr.mxu0 0.0
      %2223 = vmatpush1.msra.mxu0 0.0
      %2224 = vmatprep.subr.mxu0 0.0
      %2225 = vmatpush1.msra.mxu0 0.0
      %2226 = vmatprep.subr.mxu0 0.0
      %v2227 = vand.u32 %v1846, 4294901760
      %2228 = vmatpush1.msra.mxu0 %v2227
      %2229 = vmatprep.subr.mxu0 0.0
      %v2230 = vand.u32 %v1845, 4294901760
      %2231 = vmatpush1.msra.mxu0 %v2230
      %2232 = vmatprep.subr.mxu0 0.0
      %v2233 = vand.u32 %v1844, 4294901760
      %2234 = vmatpush1.msra.mxu0 %v2233
      %2235 = vmatprep.subr.mxu0 0.0
      %v2236 = vand.u32 %v1843, 4294901760
      %2237 = vmatpush1.msra.mxu0 %v2236
      %2238 = vmatprep.subr.mxu0 0.0
      %2239 = vmatpush2.msra.mxu0 0.0
      %2240 = vmatprep.subr.mxu0 0.0
      %2241 = vmatpush2.msra.mxu0 0.0
      %2242 = vmatprep.subr.mxu0 0.0
      %2243 = vmatpush2.msra.mxu0 0.0
      %2244 = vmatprep.subr.mxu0 0.0
      %2245 = vmatpush2.msra.mxu0 0.0
      %2246 = vmatprep.subr.mxu0 0.0
      %2247 = vmatpush2.msra.mxu0 0.0
      %2248 = vmatprep.subr.mxu0 0.0
      %2249 = vmatpush2.msra.mxu0 0.0
      %2250 = vmatprep.subr.mxu0 0.0
      %2251 = vmatpush2.msra.mxu0 0.0
      %2252 = vmatprep.subr.mxu0 0.0
      %2253 = vmatpush2.msra.mxu0 0.0
      %2254 = vmatprep.subr.mxu0 0.0
      %2255 = vmatpush2.msra.mxu0 0.0
      %2256 = vmatprep.subr.mxu0 0.0
      %2257 = vmatpush2.msra.mxu0 0.0
      %2258 = vmatprep.subr.mxu0 0.0
      %2259 = vmatpush2.msra.mxu0 0.0
      %2260 = vmatprep.subr.mxu0 0.0
      %2261 = vmatpush2.msra.mxu0 0.0
      %2262 = vmatprep.subr.mxu0 0.0
      %2263 = vmatpush2.msra.mxu0 0.0
      %2264 = vmatprep.subr.mxu0 0.0
      %2265 = vmatpush2.msra.mxu0 0.0
      %2266 = vmatprep.subr.mxu0 0.0
      %2267 = vmatpush2.msra.mxu0 0.0
      %2268 = vmatprep.subr.mxu0 0.0
      %2269 = vmatpush2.msra.mxu0 0.0
      %2270 = vmatprep.mubr.f32.mxu0 0.0
      %v2271 = vand.u32 %v1872, 4294901760
      %v2272 = vsub.f32 %v1872, %v2271
      %v2273 = vand.u32 %v2272, 4294901760
      %2274 = vmatmul.mubr.f32.gmra.mxu0 %v2273
      %v2275 = vpop.f32.mrf.mxu0
      %v2276 = vadd.f32 %v2178, %v2275
      %v2277 = vpop.f32.mrf.mxu0
      %2278 = vmatprep.mubr.f32.mxu0 0.0
      %v2279 = vand.u32 %v1875, 4294901760
      %v2280 = vsub.f32 %v1875, %v2279
      %v2281 = vand.u32 %v2280, 4294901760
      %2282 = vmatmul.mubr.f32.gmra.mxu0 %v2281
      %v2283 = vpop.f32.mrf.mxu0
      %v2284 = vadd.f32 %v2185, %v2283
      %v2285 = vpop.f32.mrf.mxu0
      %2286 = vmatprep.mubr.f32.mxu0 0.0
      %v2287 = vand.u32 %v1878, 4294901760
      %v2288 = vsub.f32 %v1878, %v2287
      %v2289 = vand.u32 %v2288, 4294901760
      %2290 = vmatmul.mubr.f32.gmra.mxu0 %v2289
      %v2291 = vpop.f32.mrf.mxu0
      %v2292 = vadd.f32 %v2192, %v2291
      %v2293 = vpop.f32.mrf.mxu0
      %2294 = vmatprep.mubr.f32.mxu0 0.0
      %v2295 = vand.u32 %v1881, 4294901760
      %v2296 = vsub.f32 %v1881, %v2295
      %v2297 = vand.u32 %v2296, 4294901760
      %2298 = vmatmul.mubr.f32.gmra.mxu0 %v2297
      %v2299 = vpop.f32.mrf.mxu0
      %v2300 = vadd.f32 %v2199, %v2299
      %v2301 = vpop.f32.mrf.mxu0
      %2302 = vdwg.mxu0
      %2303 = vmatprep.subr.mxu0 0.0
      %2304 = vmatpush1.msra.mxu0 0.0
      %2305 = vmatprep.subr.mxu0 0.0
      %2306 = vmatpush1.msra.mxu0 0.0
      %2307 = vmatprep.subr.mxu0 0.0
      %2308 = vmatpush1.msra.mxu0 0.0
      %2309 = vmatprep.subr.mxu0 0.0
      %2310 = vmatpush1.msra.mxu0 0.0
      %2311 = vmatprep.subr.mxu0 0.0
      %2312 = vmatpush1.msra.mxu0 0.0
      %2313 = vmatprep.subr.mxu0 0.0
      %2314 = vmatpush1.msra.mxu0 0.0
      %2315 = vmatprep.subr.mxu0 0.0
      %2316 = vmatpush1.msra.mxu0 0.0
      %2317 = vmatprep.subr.mxu0 0.0
      %2318 = vmatpush1.msra.mxu0 0.0
      %2319 = vmatprep.subr.mxu0 0.0
      %2320 = vmatpush1.msra.mxu0 0.0
      %2321 = vmatprep.subr.mxu0 0.0
      %2322 = vmatpush1.msra.mxu0 0.0
      %2323 = vmatprep.subr.mxu0 0.0
      %2324 = vmatpush1.msra.mxu0 0.0
      %2325 = vmatprep.subr.mxu0 0.0
      %2326 = vmatpush1.msra.mxu0 0.0
      %2327 = vmatprep.subr.mxu0 0.0
      %v2328 = vand.u32 %v1846, 4294901760
      %v2329 = vsub.f32 %v1846, %v2328
      %v2330 = vand.u32 %v2329, 4294901760
      %2331 = vmatpush1.msra.mxu0 %v2330
      %2332 = vmatprep.subr.mxu0 0.0
      %v2333 = vand.u32 %v1845, 4294901760
      %v2334 = vsub.f32 %v1845, %v2333
      %v2335 = vand.u32 %v2334, 4294901760
      %2336 = vmatpush1.msra.mxu0 %v2335
      %2337 = vmatprep.subr.mxu0 0.0
      %v2338 = vand.u32 %v1844, 4294901760
      %v2339 = vsub.f32 %v1844, %v2338
      %v2340 = vand.u32 %v2339, 4294901760
      %2341 = vmatpush1.msra.mxu0 %v2340
      %2342 = vmatprep.subr.mxu0 0.0
      %v2343 = vand.u32 %v1843, 4294901760
      %v2344 = vsub.f32 %v1843, %v2343
      %v2345 = vand.u32 %v2344, 4294901760
      %2346 = vmatpush1.msra.mxu0 %v2345
      %2347 = vmatprep.subr.mxu0 0.0
      %2348 = vmatpush2.msra.mxu0 0.0
      %2349 = vmatprep.subr.mxu0 0.0
      %2350 = vmatpush2.msra.mxu0 0.0
      %2351 = vmatprep.subr.mxu0 0.0
      %2352 = vmatpush2.msra.mxu0 0.0
      %2353 = vmatprep.subr.mxu0 0.0
      %2354 = vmatpush2.msra.mxu0 0.0
      %2355 = vmatprep.subr.mxu0 0.0
      %2356 = vmatpush2.msra.mxu0 0.0
      %2357 = vmatprep.subr.mxu0 0.0
      %2358 = vmatpush2.msra.mxu0 0.0
      %2359 = vmatprep.subr.mxu0 0.0
      %2360 = vmatpush2.msra.mxu0 0.0
      %2361 = vmatprep.subr.mxu0 0.0
      %2362 = vmatpush2.msra.mxu0 0.0
      %2363 = vmatprep.subr.mxu0 0.0
      %2364 = vmatpush2.msra.mxu0 0.0
      %2365 = vmatprep.subr.mxu0 0.0
      %2366 = vmatpush2.msra.mxu0 0.0
      %2367 = vmatprep.subr.mxu0 0.0
      %2368 = vmatpush2.msra.mxu0 0.0
      %2369 = vmatprep.subr.mxu0 0.0
      %2370 = vmatpush2.msra.mxu0 0.0
      %2371 = vmatprep.subr.mxu0 0.0
      %2372 = vmatpush2.msra.mxu0 0.0
      %2373 = vmatprep.subr.mxu0 0.0
      %2374 = vmatpush2.msra.mxu0 0.0
      %2375 = vmatprep.subr.mxu0 0.0
      %2376 = vmatpush2.msra.mxu0 0.0
      %2377 = vmatprep.subr.mxu0 0.0
      %2378 = vmatpush2.msra.mxu0 0.0
      %2379 = vmatprep.mubr.f32.mxu0 0.0
      %v2380 = vand.u32 %v1872, 4294901760
      %2381 = vmatmul.mubr.f32.gmra.mxu0 %v2380
      %v2382 = vpop.f32.mrf.mxu0
      %v2383 = vadd.f32 %v2276, %v2382
      %v2384 = vpop.f32.mrf.mxu0
      %2385 = vmatprep.mubr.f32.mxu0 0.0
      %v2386 = vand.u32 %v1875, 4294901760
      %2387 = vmatmul.mubr.f32.gmra.mxu0 %v2386
      %v2388 = vpop.f32.mrf.mxu0
      %v2389 = vadd.f32 %v2284, %v2388
      %v2390 = vpop.f32.mrf.mxu0
      %2391 = vmatprep.mubr.f32.mxu0 0.0
      %v2392 = vand.u32 %v1878, 4294901760
      %2393 = vmatmul.mubr.f32.gmra.mxu0 %v2392
      %v2394 = vpop.f32.mrf.mxu0
      %v2395 = vadd.f32 %v2292, %v2394
      %v2396 = vpop.f32.mrf.mxu0
      %2397 = vmatprep.mubr.f32.mxu0 0.0
      %v2398 = vand.u32 %v1881, 4294901760
      %2399 = vmatmul.mubr.f32.gmra.mxu0 %v2398
      %v2400 = vpop.f32.mrf.mxu0
      %v2401 = vadd.f32 %v2300, %v2400
      %v2402 = vpop.f32.mrf.mxu0
      %2403 = vdwg.mxu0
      %2404 = vmatprep.subr.mxu0 0.0
      %2405 = vmatpush1.msra.mxu0 0.0
      %2406 = vmatprep.subr.mxu0 0.0
      %2407 = vmatpush1.msra.mxu0 0.0
      %2408 = vmatprep.subr.mxu0 0.0
      %2409 = vmatpush1.msra.mxu0 0.0
      %2410 = vmatprep.subr.mxu0 0.0
      %2411 = vmatpush1.msra.mxu0 0.0
      %2412 = vmatprep.subr.mxu0 0.0
      %2413 = vmatpush1.msra.mxu0 0.0
      %2414 = vmatprep.subr.mxu0 0.0
      %2415 = vmatpush1.msra.mxu0 0.0
      %2416 = vmatprep.subr.mxu0 0.0
      %2417 = vmatpush1.msra.mxu0 0.0
      %2418 = vmatprep.subr.mxu0 0.0
      %2419 = vmatpush1.msra.mxu0 0.0
      %2420 = vmatprep.subr.mxu0 0.0
      %2421 = vmatpush1.msra.mxu0 0.0
      %2422 = vmatprep.subr.mxu0 0.0
      %2423 = vmatpush1.msra.mxu0 0.0
      %2424 = vmatprep.subr.mxu0 0.0
      %2425 = vmatpush1.msra.mxu0 0.0
      %2426 = vmatprep.subr.mxu0 0.0
      %2427 = vmatpush1.msra.mxu0 0.0
      %2428 = vmatprep.subr.mxu0 0.0
      %v2429 = vand.u32 %v1846, 4294901760
      %2430 = vmatpush1.msra.mxu0 %v2429
      %2431 = vmatprep.subr.mxu0 0.0
      %v2432 = vand.u32 %v1845, 4294901760
      %2433 = vmatpush1.msra.mxu0 %v2432
      %2434 = vmatprep.subr.mxu0 0.0
      %v2435 = vand.u32 %v1844, 4294901760
      %2436 = vmatpush1.msra.mxu0 %v2435
      %2437 = vmatprep.subr.mxu0 0.0
      %v2438 = vand.u32 %v1843, 4294901760
      %2439 = vmatpush1.msra.mxu0 %v2438
      %2440 = vmatprep.subr.mxu0 0.0
      %2441 = vmatpush2.msra.mxu0 0.0
      %2442 = vmatprep.subr.mxu0 0.0
      %2443 = vmatpush2.msra.mxu0 0.0
      %2444 = vmatprep.subr.mxu0 0.0
      %2445 = vmatpush2.msra.mxu0 0.0
      %2446 = vmatprep.subr.mxu0 0.0
      %2447 = vmatpush2.msra.mxu0 0.0
      %2448 = vmatprep.subr.mxu0 0.0
      %2449 = vmatpush2.msra.mxu0 0.0
      %2450 = vmatprep.subr.mxu0 0.0
      %2451 = vmatpush2.msra.mxu0 0.0
      %2452 = vmatprep.subr.mxu0 0.0
      %2453 = vmatpush2.msra.mxu0 0.0
      %2454 = vmatprep.subr.mxu0 0.0
      %2455 = vmatpush2.msra.mxu0 0.0
      %2456 = vmatprep.subr.mxu0 0.0
      %2457 = vmatpush2.msra.mxu0 0.0
      %2458 = vmatprep.subr.mxu0 0.0
      %2459 = vmatpush2.msra.mxu0 0.0
      %2460 = vmatprep.subr.mxu0 0.0
      %2461 = vmatpush2.msra.mxu0 0.0
      %2462 = vmatprep.subr.mxu0 0.0
      %2463 = vmatpush2.msra.mxu0 0.0
      %2464 = vmatprep.subr.mxu0 0.0
      %2465 = vmatpush2.msra.mxu0 0.0
      %2466 = vmatprep.subr.mxu0 0.0
      %2467 = vmatpush2.msra.mxu0 0.0
      %2468 = vmatprep.subr.mxu0 0.0
      %2469 = vmatpush2.msra.mxu0 0.0
      %2470 = vmatprep.subr.mxu0 0.0
      %2471 = vmatpush2.msra.mxu0 0.0
      %2472 = vmatprep.mubr.f32.mxu0 0.0
      %v2473 = vand.u32 %v1872, 4294901760
      %2474 = vmatmul.mubr.f32.gmra.mxu0 %v2473
      %v2475 = vpop.f32.mrf.mxu0
      %v2476 = vadd.f32 %v2383, %v2475
      %v2477 = vpop.f32.mrf.mxu0
      %2478 = vmatprep.mubr.f32.mxu0 0.0
      %v2479 = vand.u32 %v1875, 4294901760
      %2480 = vmatmul.mubr.f32.gmra.mxu0 %v2479
      %v2481 = vpop.f32.mrf.mxu0
      %v2482 = vadd.f32 %v2389, %v2481
      %v2483 = vpop.f32.mrf.mxu0
      %2484 = vmatprep.mubr.f32.mxu0 0.0
      %v2485 = vand.u32 %v1878, 4294901760
      %2486 = vmatmul.mubr.f32.gmra.mxu0 %v2485
      %v2487 = vpop.f32.mrf.mxu0
      %v2488 = vadd.f32 %v2395, %v2487
      %v2489 = vpop.f32.mrf.mxu0
      %2490 = vmatprep.mubr.f32.mxu0 0.0
      %v2491 = vand.u32 %v1881, 4294901760
      %2492 = vmatmul.mubr.f32.gmra.mxu0 %v2491
      %v2493 = vpop.f32.mrf.mxu0
      %v2494 = vadd.f32 %v2401, %v2493
      %v2495 = vpop.f32.mrf.mxu0
      %2496 = vdwg.mxu0
      %v2497 = vld [vmem:[%s4 + $0x140] sm:$0xff]
      %v2498 = vld [vmem:[%s4 + $0x148] sm:$0xff]
      %v2499 = vld [vmem:[%s4 + $0x150] sm:$0xff]
      %v2500 = vld [vmem:[%s4 + $0x158] sm:$0xff]
      %v2501 = vmax.f32 %v2476, 0.0
      %v2502 = vmax.f32 %v2482, 0.0
      %v2503 = vmax.f32 %v2488, 0.0
      %v2504 = vmax.f32 %v2494, 0.0
      %v2505 = vld [vmem:[%s5 + $0xa0] sm:$0xff]
      %v2506 = vld [vmem:[%s5 + $0xa8] sm:$0xff]
      %v2507 = vld [vmem:[%s5 + $0xb0] sm:$0xff]
      %v2508 = vld [vmem:[%s5 + $0xb8] sm:$0xff]
      %2510 = vset.pattern.permute.xlu0 0
      %2511 = vperm.xlu0 %2510, %v2505
      %v2512 = vpop.permute.xlu0 %2511
      %2515 = vset.pattern.permute.xlu0 0
      %2516 = vperm.xlu0 %2515, %v2506
      %v2517 = vpop.permute.xlu0 %2516
      %2520 = vset.pattern.permute.xlu0 0
      %2521 = vperm.xlu0 %2520, %v2507
      %v2522 = vpop.permute.xlu0 %2521
      %2525 = vset.pattern.permute.xlu0 0
      %2526 = vperm.xlu0 %2525, %v2508
      %v2527 = vpop.permute.xlu0 %2526
      %v2530 = vsel %vm1184, %v2497, 0
      %v2533 = vsel %vm1184, %v2498, 0
      %v2536 = vsel %vm1184, %v2499, 0
      %v2539 = vsel %vm1184, %v2500, 0
      %2541 = vmatprep.subr.mxu0 0.0
      %2542 = vmatpush1.msra.mxu0 0.0
      %2543 = vmatprep.subr.mxu0 0.0
      %2544 = vmatpush1.msra.mxu0 0.0
      %2545 = vmatprep.subr.mxu0 0.0
      %2546 = vmatpush1.msra.mxu0 0.0
      %2547 = vmatprep.subr.mxu0 0.0
      %2548 = vmatpush1.msra.mxu0 0.0
      %2549 = vmatprep.subr.mxu0 0.0
      %2550 = vmatpush1.msra.mxu0 0.0
      %2551 = vmatprep.subr.mxu0 0.0
      %2552 = vmatpush1.msra.mxu0 0.0
      %2553 = vmatprep.subr.mxu0 0.0
      %2554 = vmatpush1.msra.mxu0 0.0
      %2555 = vmatprep.subr.mxu0 0.0
      %2556 = vmatpush1.msra.mxu0 0.0
      %2557 = vmatprep.subr.mxu0 0.0
      %2558 = vmatpush1.msra.mxu0 0.0
      %2559 = vmatprep.subr.mxu0 0.0
      %2560 = vmatpush1.msra.mxu0 0.0
      %2561 = vmatprep.subr.mxu0 0.0
      %2562 = vmatpush1.msra.mxu0 0.0
      %2563 = vmatprep.subr.mxu0 0.0
      %2564 = vmatpush1.msra.mxu0 0.0
      %2565 = vmatprep.subr.mxu0 0.0
      %v2566 = vand.u32 %v2504, 4294901760
      %2567 = vmatpush1.msra.mxu0 %v2566
      %2568 = vmatprep.subr.mxu0 0.0
      %v2569 = vand.u32 %v2503, 4294901760
      %2570 = vmatpush1.msra.mxu0 %v2569
      %2571 = vmatprep.subr.mxu0 0.0
      %v2572 = vand.u32 %v2502, 4294901760
      %2573 = vmatpush1.msra.mxu0 %v2572
      %2574 = vmatprep.subr.mxu0 0.0
      %v2575 = vand.u32 %v2501, 4294901760
      %2576 = vmatpush1.msra.mxu0 %v2575
      %2577 = vmatprep.subr.mxu0 0.0
      %2578 = vmatpush2.msra.mxu0 0.0
      %2579 = vmatprep.subr.mxu0 0.0
      %2580 = vmatpush2.msra.mxu0 0.0
      %2581 = vmatprep.subr.mxu0 0.0
      %2582 = vmatpush2.msra.mxu0 0.0
      %2583 = vmatprep.subr.mxu0 0.0
      %2584 = vmatpush2.msra.mxu0 0.0
      %2585 = vmatprep.subr.mxu0 0.0
      %2586 = vmatpush2.msra.mxu0 0.0
      %2587 = vmatprep.subr.mxu0 0.0
      %2588 = vmatpush2.msra.mxu0 0.0
      %2589 = vmatprep.subr.mxu0 0.0
      %2590 = vmatpush2.msra.mxu0 0.0
      %2591 = vmatprep.subr.mxu0 0.0
      %2592 = vmatpush2.msra.mxu0 0.0
      %2593 = vmatprep.subr.mxu0 0.0
      %2594 = vmatpush2.msra.mxu0 0.0
      %2595 = vmatprep.subr.mxu0 0.0
      %2596 = vmatpush2.msra.mxu0 0.0
      %2597 = vmatprep.subr.mxu0 0.0
      %2598 = vmatpush2.msra.mxu0 0.0
      %2599 = vmatprep.subr.mxu0 0.0
      %2600 = vmatpush2.msra.mxu0 0.0
      %2601 = vmatprep.subr.mxu0 0.0
      %2602 = vmatpush2.msra.mxu0 0.0
      %2603 = vmatprep.subr.mxu0 0.0
      %2604 = vmatpush2.msra.mxu0 0.0
      %2605 = vmatprep.subr.mxu0 0.0
      %2606 = vmatpush2.msra.mxu0 0.0
      %2607 = vmatprep.subr.mxu0 0.0
      %2608 = vmatpush2.msra.mxu0 0.0
      %2609 = vmatprep.mubr.f32.mxu0 0.0
      %v2610 = vand.u32 %v2530, 4294901760
      %v2611 = vsub.f32 %v2530, %v2610
      %v2612 = vand.u32 %v2611, 4294901760
      %v2613 = vsub.f32 %v2611, %v2612
      %v2614 = vand.u32 %v2613, 4294901760
      %2615 = vmatmul.mubr.f32.gmra.mxu0 %v2614
      %v2616 = vpop.f32.mrf.mxu0
      %v2617 = vadd.f32 %v2512, %v2616
      %v2618 = vpop.f32.mrf.mxu0
      %2619 = vmatprep.mubr.f32.mxu0 0.0
      %v2620 = vand.u32 %v2533, 4294901760
      %v2621 = vsub.f32 %v2533, %v2620
      %v2622 = vand.u32 %v2621, 4294901760
      %v2623 = vsub.f32 %v2621, %v2622
      %v2624 = vand.u32 %v2623, 4294901760
      %2625 = vmatmul.mubr.f32.gmra.mxu0 %v2624
      %v2626 = vpop.f32.mrf.mxu0
      %v2627 = vadd.f32 %v2517, %v2626
      %v2628 = vpop.f32.mrf.mxu0
      %2629 = vmatprep.mubr.f32.mxu0 0.0
      %v2630 = vand.u32 %v2536, 4294901760
      %v2631 = vsub.f32 %v2536, %v2630
      %v2632 = vand.u32 %v2631, 4294901760
      %v2633 = vsub.f32 %v2631, %v2632
      %v2634 = vand.u32 %v2633, 4294901760
      %2635 = vmatmul.mubr.f32.gmra.mxu0 %v2634
      %v2636 = vpop.f32.mrf.mxu0
      %v2637 = vadd.f32 %v2522, %v2636
      %v2638 = vpop.f32.mrf.mxu0
      %2639 = vmatprep.mubr.f32.mxu0 0.0
      %v2640 = vand.u32 %v2539, 4294901760
      %v2641 = vsub.f32 %v2539, %v2640
      %v2642 = vand.u32 %v2641, 4294901760
      %v2643 = vsub.f32 %v2641, %v2642
      %v2644 = vand.u32 %v2643, 4294901760
      %2645 = vmatmul.mubr.f32.gmra.mxu0 %v2644
      %v2646 = vpop.f32.mrf.mxu0
      %v2647 = vadd.f32 %v2527, %v2646
      %v2648 = vpop.f32.mrf.mxu0
      %2649 = vdwg.mxu0
      %2650 = vmatprep.subr.mxu0 0.0
      %2651 = vmatpush1.msra.mxu0 0.0
      %2652 = vmatprep.subr.mxu0 0.0
      %2653 = vmatpush1.msra.mxu0 0.0
      %2654 = vmatprep.subr.mxu0 0.0
      %2655 = vmatpush1.msra.mxu0 0.0
      %2656 = vmatprep.subr.mxu0 0.0
      %2657 = vmatpush1.msra.mxu0 0.0
      %2658 = vmatprep.subr.mxu0 0.0
      %2659 = vmatpush1.msra.mxu0 0.0
      %2660 = vmatprep.subr.mxu0 0.0
      %2661 = vmatpush1.msra.mxu0 0.0
      %2662 = vmatprep.subr.mxu0 0.0
      %2663 = vmatpush1.msra.mxu0 0.0
      %2664 = vmatprep.subr.mxu0 0.0
      %2665 = vmatpush1.msra.mxu0 0.0
      %2666 = vmatprep.subr.mxu0 0.0
      %2667 = vmatpush1.msra.mxu0 0.0
      %2668 = vmatprep.subr.mxu0 0.0
      %2669 = vmatpush1.msra.mxu0 0.0
      %2670 = vmatprep.subr.mxu0 0.0
      %2671 = vmatpush1.msra.mxu0 0.0
      %2672 = vmatprep.subr.mxu0 0.0
      %2673 = vmatpush1.msra.mxu0 0.0
      %2674 = vmatprep.subr.mxu0 0.0
      %v2675 = vand.u32 %v2504, 4294901760
      %v2676 = vsub.f32 %v2504, %v2675
      %v2677 = vand.u32 %v2676, 4294901760
      %v2678 = vsub.f32 %v2676, %v2677
      %v2679 = vand.u32 %v2678, 4294901760
      %2680 = vmatpush1.msra.mxu0 %v2679
      %2681 = vmatprep.subr.mxu0 0.0
      %v2682 = vand.u32 %v2503, 4294901760
      %v2683 = vsub.f32 %v2503, %v2682
      %v2684 = vand.u32 %v2683, 4294901760
      %v2685 = vsub.f32 %v2683, %v2684
      %v2686 = vand.u32 %v2685, 4294901760
      %2687 = vmatpush1.msra.mxu0 %v2686
      %2688 = vmatprep.subr.mxu0 0.0
      %v2689 = vand.u32 %v2502, 4294901760
      %v2690 = vsub.f32 %v2502, %v2689
      %v2691 = vand.u32 %v2690, 4294901760
      %v2692 = vsub.f32 %v2690, %v2691
      %v2693 = vand.u32 %v2692, 4294901760
      %2694 = vmatpush1.msra.mxu0 %v2693
      %2695 = vmatprep.subr.mxu0 0.0
      %v2696 = vand.u32 %v2501, 4294901760
      %v2697 = vsub.f32 %v2501, %v2696
      %v2698 = vand.u32 %v2697, 4294901760
      %v2699 = vsub.f32 %v2697, %v2698
      %v2700 = vand.u32 %v2699, 4294901760
      %2701 = vmatpush1.msra.mxu0 %v2700
      %2702 = vmatprep.subr.mxu0 0.0
      %2703 = vmatpush2.msra.mxu0 0.0
      %2704 = vmatprep.subr.mxu0 0.0
      %2705 = vmatpush2.msra.mxu0 0.0
      %2706 = vmatprep.subr.mxu0 0.0
      %2707 = vmatpush2.msra.mxu0 0.0
      %2708 = vmatprep.subr.mxu0 0.0
      %2709 = vmatpush2.msra.mxu0 0.0
      %2710 = vmatprep.subr.mxu0 0.0
      %2711 = vmatpush2.msra.mxu0 0.0
      %2712 = vmatprep.subr.mxu0 0.0
      %2713 = vmatpush2.msra.mxu0 0.0
      %2714 = vmatprep.subr.mxu0 0.0
      %2715 = vmatpush2.msra.mxu0 0.0
      %2716 = vmatprep.subr.mxu0 0.0
      %2717 = vmatpush2.msra.mxu0 0.0
      %2718 = vmatprep.subr.mxu0 0.0
      %2719 = vmatpush2.msra.mxu0 0.0
      %2720 = vmatprep.subr.mxu0 0.0
      %2721 = vmatpush2.msra.mxu0 0.0
      %2722 = vmatprep.subr.mxu0 0.0
      %2723 = vmatpush2.msra.mxu0 0.0
      %2724 = vmatprep.subr.mxu0 0.0
      %2725 = vmatpush2.msra.mxu0 0.0
      %2726 = vmatprep.subr.mxu0 0.0
      %2727 = vmatpush2.msra.mxu0 0.0
      %2728 = vmatprep.subr.mxu0 0.0
      %2729 = vmatpush2.msra.mxu0 0.0
      %2730 = vmatprep.subr.mxu0 0.0
      %2731 = vmatpush2.msra.mxu0 0.0
      %2732 = vmatprep.subr.mxu0 0.0
      %2733 = vmatpush2.msra.mxu0 0.0
      %2734 = vmatprep.mubr.f32.mxu0 0.0
      %v2735 = vand.u32 %v2530, 4294901760
      %2736 = vmatmul.mubr.f32.gmra.mxu0 %v2735
      %v2737 = vpop.f32.mrf.mxu0
      %v2738 = vadd.f32 %v2617, %v2737
      %v2739 = vpop.f32.mrf.mxu0
      %2740 = vmatprep.mubr.f32.mxu0 0.0
      %v2741 = vand.u32 %v2533, 4294901760
      %2742 = vmatmul.mubr.f32.gmra.mxu0 %v2741
      %v2743 = vpop.f32.mrf.mxu0
      %v2744 = vadd.f32 %v2627, %v2743
      %v2745 = vpop.f32.mrf.mxu0
      %2746 = vmatprep.mubr.f32.mxu0 0.0
      %v2747 = vand.u32 %v2536, 4294901760
      %2748 = vmatmul.mubr.f32.gmra.mxu0 %v2747
      %v2749 = vpop.f32.mrf.mxu0
      %v2750 = vadd.f32 %v2637, %v2749
      %v2751 = vpop.f32.mrf.mxu0
      %2752 = vmatprep.mubr.f32.mxu0 0.0
      %v2753 = vand.u32 %v2539, 4294901760
      %2754 = vmatmul.mubr.f32.gmra.mxu0 %v2753
      %v2755 = vpop.f32.mrf.mxu0
      %v2756 = vadd.f32 %v2647, %v2755
      %v2757 = vpop.f32.mrf.mxu0
      %2758 = vdwg.mxu0
      %2759 = vmatprep.subr.mxu0 0.0
      %2760 = vmatpush1.msra.mxu0 0.0
      %2761 = vmatprep.subr.mxu0 0.0
      %2762 = vmatpush1.msra.mxu0 0.0
      %2763 = vmatprep.subr.mxu0 0.0
      %2764 = vmatpush1.msra.mxu0 0.0
      %2765 = vmatprep.subr.mxu0 0.0
      %2766 = vmatpush1.msra.mxu0 0.0
      %2767 = vmatprep.subr.mxu0 0.0
      %2768 = vmatpush1.msra.mxu0 0.0
      %2769 = vmatprep.subr.mxu0 0.0
      %2770 = vmatpush1.msra.mxu0 0.0
      %2771 = vmatprep.subr.mxu0 0.0
      %2772 = vmatpush1.msra.mxu0 0.0
      %2773 = vmatprep.subr.mxu0 0.0
      %2774 = vmatpush1.msra.mxu0 0.0
      %2775 = vmatprep.subr.mxu0 0.0
      %2776 = vmatpush1.msra.mxu0 0.0
      %2777 = vmatprep.subr.mxu0 0.0
      %2778 = vmatpush1.msra.mxu0 0.0
      %2779 = vmatprep.subr.mxu0 0.0
      %2780 = vmatpush1.msra.mxu0 0.0
      %2781 = vmatprep.subr.mxu0 0.0
      %2782 = vmatpush1.msra.mxu0 0.0
      %2783 = vmatprep.subr.mxu0 0.0
      %v2784 = vand.u32 %v2504, 4294901760
      %v2785 = vsub.f32 %v2504, %v2784
      %2786 = vmatpush1.msra.mxu0 %v2785
      %2787 = vmatprep.subr.mxu0 0.0
      %v2788 = vand.u32 %v2503, 4294901760
      %v2789 = vsub.f32 %v2503, %v2788
      %2790 = vmatpush1.msra.mxu0 %v2789
      %2791 = vmatprep.subr.mxu0 0.0
      %v2792 = vand.u32 %v2502, 4294901760
      %v2793 = vsub.f32 %v2502, %v2792
      %2794 = vmatpush1.msra.mxu0 %v2793
      %2795 = vmatprep.subr.mxu0 0.0
      %v2796 = vand.u32 %v2501, 4294901760
      %v2797 = vsub.f32 %v2501, %v2796
      %2798 = vmatpush1.msra.mxu0 %v2797
      %2799 = vmatprep.subr.mxu0 0.0
      %2800 = vmatpush2.msra.mxu0 0.0
      %2801 = vmatprep.subr.mxu0 0.0
      %2802 = vmatpush2.msra.mxu0 0.0
      %2803 = vmatprep.subr.mxu0 0.0
      %2804 = vmatpush2.msra.mxu0 0.0
      %2805 = vmatprep.subr.mxu0 0.0
      %2806 = vmatpush2.msra.mxu0 0.0
      %2807 = vmatprep.subr.mxu0 0.0
      %2808 = vmatpush2.msra.mxu0 0.0
      %2809 = vmatprep.subr.mxu0 0.0
      %2810 = vmatpush2.msra.mxu0 0.0
      %2811 = vmatprep.subr.mxu0 0.0
      %2812 = vmatpush2.msra.mxu0 0.0
      %2813 = vmatprep.subr.mxu0 0.0
      %2814 = vmatpush2.msra.mxu0 0.0
      %2815 = vmatprep.subr.mxu0 0.0
      %2816 = vmatpush2.msra.mxu0 0.0
      %2817 = vmatprep.subr.mxu0 0.0
      %2818 = vmatpush2.msra.mxu0 0.0
      %2819 = vmatprep.subr.mxu0 0.0
      %2820 = vmatpush2.msra.mxu0 0.0
      %2821 = vmatprep.subr.mxu0 0.0
      %2822 = vmatpush2.msra.mxu0 0.0
      %2823 = vmatprep.subr.mxu0 0.0
      %2824 = vmatpush2.msra.mxu0 0.0
      %2825 = vmatprep.subr.mxu0 0.0
      %2826 = vmatpush2.msra.mxu0 0.0
      %2827 = vmatprep.subr.mxu0 0.0
      %2828 = vmatpush2.msra.mxu0 0.0
      %2829 = vmatprep.subr.mxu0 0.0
      %2830 = vmatpush2.msra.mxu0 0.0
      %2831 = vmatprep.mubr.f32.mxu0 0.0
      %v2832 = vand.u32 %v2530, 4294901760
      %v2833 = vsub.f32 %v2530, %v2832
      %2834 = vmatmul.mubr.f32.gmra.mxu0 %v2833
      %v2835 = vpop.f32.mrf.mxu0
      %v2836 = vadd.f32 %v2738, %v2835
      %v2837 = vpop.f32.mrf.mxu0
      %2838 = vmatprep.mubr.f32.mxu0 0.0
      %v2839 = vand.u32 %v2533, 4294901760
      %v2840 = vsub.f32 %v2533, %v2839
      %2841 = vmatmul.mubr.f32.gmra.mxu0 %v2840
      %v2842 = vpop.f32.mrf.mxu0
      %v2843 = vadd.f32 %v2744, %v2842
      %v2844 = vpop.f32.mrf.mxu0
      %2845 = vmatprep.mubr.f32.mxu0 0.0
      %v2846 = vand.u32 %v2536, 4294901760
      %v2847 = vsub.f32 %v2536, %v2846
      %2848 = vmatmul.mubr.f32.gmra.mxu0 %v2847
      %v2849 = vpop.f32.mrf.mxu0
      %v2850 = vadd.f32 %v2750, %v2849
      %v2851 = vpop.f32.mrf.mxu0
      %2852 = vmatprep.mubr.f32.mxu0 0.0
      %v2853 = vand.u32 %v2539, 4294901760
      %v2854 = vsub.f32 %v2539, %v2853
      %2855 = vmatmul.mubr.f32.gmra.mxu0 %v2854
      %v2856 = vpop.f32.mrf.mxu0
      %v2857 = vadd.f32 %v2756, %v2856
      %v2858 = vpop.f32.mrf.mxu0
      %2859 = vdwg.mxu0
      %2860 = vmatprep.subr.mxu0 0.0
      %2861 = vmatpush1.msra.mxu0 0.0
      %2862 = vmatprep.subr.mxu0 0.0
      %2863 = vmatpush1.msra.mxu0 0.0
      %2864 = vmatprep.subr.mxu0 0.0
      %2865 = vmatpush1.msra.mxu0 0.0
      %2866 = vmatprep.subr.mxu0 0.0
      %2867 = vmatpush1.msra.mxu0 0.0
      %2868 = vmatprep.subr.mxu0 0.0
      %2869 = vmatpush1.msra.mxu0 0.0
      %2870 = vmatprep.subr.mxu0 0.0
      %2871 = vmatpush1.msra.mxu0 0.0
      %2872 = vmatprep.subr.mxu0 0.0
      %2873 = vmatpush1.msra.mxu0 0.0
      %2874 = vmatprep.subr.mxu0 0.0
      %2875 = vmatpush1.msra.mxu0 0.0
      %2876 = vmatprep.subr.mxu0 0.0
      %2877 = vmatpush1.msra.mxu0 0.0
      %2878 = vmatprep.subr.mxu0 0.0
      %2879 = vmatpush1.msra.mxu0 0.0
      %2880 = vmatprep.subr.mxu0 0.0
      %2881 = vmatpush1.msra.mxu0 0.0
      %2882 = vmatprep.subr.mxu0 0.0
      %2883 = vmatpush1.msra.mxu0 0.0
      %2884 = vmatprep.subr.mxu0 0.0
      %v2885 = vand.u32 %v2504, 4294901760
      %2886 = vmatpush1.msra.mxu0 %v2885
      %2887 = vmatprep.subr.mxu0 0.0
      %v2888 = vand.u32 %v2503, 4294901760
      %2889 = vmatpush1.msra.mxu0 %v2888
      %2890 = vmatprep.subr.mxu0 0.0
      %v2891 = vand.u32 %v2502, 4294901760
      %2892 = vmatpush1.msra.mxu0 %v2891
      %2893 = vmatprep.subr.mxu0 0.0
      %v2894 = vand.u32 %v2501, 4294901760
      %2895 = vmatpush1.msra.mxu0 %v2894
      %2896 = vmatprep.subr.mxu0 0.0
      %2897 = vmatpush2.msra.mxu0 0.0
      %2898 = vmatprep.subr.mxu0 0.0
      %2899 = vmatpush2.msra.mxu0 0.0
      %2900 = vmatprep.subr.mxu0 0.0
      %2901 = vmatpush2.msra.mxu0 0.0
      %2902 = vmatprep.subr.mxu0 0.0
      %2903 = vmatpush2.msra.mxu0 0.0
      %2904 = vmatprep.subr.mxu0 0.0
      %2905 = vmatpush2.msra.mxu0 0.0
      %2906 = vmatprep.subr.mxu0 0.0
      %2907 = vmatpush2.msra.mxu0 0.0
      %2908 = vmatprep.subr.mxu0 0.0
      %2909 = vmatpush2.msra.mxu0 0.0
      %2910 = vmatprep.subr.mxu0 0.0
      %2911 = vmatpush2.msra.mxu0 0.0
      %2912 = vmatprep.subr.mxu0 0.0
      %2913 = vmatpush2.msra.mxu0 0.0
      %2914 = vmatprep.subr.mxu0 0.0
      %2915 = vmatpush2.msra.mxu0 0.0
      %2916 = vmatprep.subr.mxu0 0.0
      %2917 = vmatpush2.msra.mxu0 0.0
      %2918 = vmatprep.subr.mxu0 0.0
      %2919 = vmatpush2.msra.mxu0 0.0
      %2920 = vmatprep.subr.mxu0 0.0
      %2921 = vmatpush2.msra.mxu0 0.0
      %2922 = vmatprep.subr.mxu0 0.0
      %2923 = vmatpush2.msra.mxu0 0.0
      %2924 = vmatprep.subr.mxu0 0.0
      %2925 = vmatpush2.msra.mxu0 0.0
      %2926 = vmatprep.subr.mxu0 0.0
      %2927 = vmatpush2.msra.mxu0 0.0
      %2928 = vmatprep.mubr.f32.mxu0 0.0
      %v2929 = vand.u32 %v2530, 4294901760
      %v2930 = vsub.f32 %v2530, %v2929
      %v2931 = vand.u32 %v2930, 4294901760
      %2932 = vmatmul.mubr.f32.gmra.mxu0 %v2931
      %v2933 = vpop.f32.mrf.mxu0
      %v2934 = vadd.f32 %v2836, %v2933
      %v2935 = vpop.f32.mrf.mxu0
      %2936 = vmatprep.mubr.f32.mxu0 0.0
      %v2937 = vand.u32 %v2533, 4294901760
      %v2938 = vsub.f32 %v2533, %v2937
      %v2939 = vand.u32 %v2938, 4294901760
      %2940 = vmatmul.mubr.f32.gmra.mxu0 %v2939
      %v2941 = vpop.f32.mrf.mxu0
      %v2942 = vadd.f32 %v2843, %v2941
      %v2943 = vpop.f32.mrf.mxu0
      %2944 = vmatprep.mubr.f32.mxu0 0.0
      %v2945 = vand.u32 %v2536, 4294901760
      %v2946 = vsub.f32 %v2536, %v2945
      %v2947 = vand.u32 %v2946, 4294901760
      %2948 = vmatmul.mubr.f32.gmra.mxu0 %v2947
      %v2949 = vpop.f32.mrf.mxu0
      %v2950 = vadd.f32 %v2850, %v2949
      %v2951 = vpop.f32.mrf.mxu0
      %2952 = vmatprep.mubr.f32.mxu0 0.0
      %v2953 = vand.u32 %v2539, 4294901760
      %v2954 = vsub.f32 %v2539, %v2953
      %v2955 = vand.u32 %v2954, 4294901760
      %2956 = vmatmul.mubr.f32.gmra.mxu0 %v2955
      %v2957 = vpop.f32.mrf.mxu0
      %v2958 = vadd.f32 %v2857, %v2957
      %v2959 = vpop.f32.mrf.mxu0
      %2960 = vdwg.mxu0
      %2961 = vmatprep.subr.mxu0 0.0
      %2962 = vmatpush1.msra.mxu0 0.0
      %2963 = vmatprep.subr.mxu0 0.0
      %2964 = vmatpush1.msra.mxu0 0.0
      %2965 = vmatprep.subr.mxu0 0.0
      %2966 = vmatpush1.msra.mxu0 0.0
      %2967 = vmatprep.subr.mxu0 0.0
      %2968 = vmatpush1.msra.mxu0 0.0
      %2969 = vmatprep.subr.mxu0 0.0
      %2970 = vmatpush1.msra.mxu0 0.0
      %2971 = vmatprep.subr.mxu0 0.0
      %2972 = vmatpush1.msra.mxu0 0.0
      %2973 = vmatprep.subr.mxu0 0.0
      %2974 = vmatpush1.msra.mxu0 0.0
      %2975 = vmatprep.subr.mxu0 0.0
      %2976 = vmatpush1.msra.mxu0 0.0
      %2977 = vmatprep.subr.mxu0 0.0
      %2978 = vmatpush1.msra.mxu0 0.0
      %2979 = vmatprep.subr.mxu0 0.0
      %2980 = vmatpush1.msra.mxu0 0.0
      %2981 = vmatprep.subr.mxu0 0.0
      %2982 = vmatpush1.msra.mxu0 0.0
      %2983 = vmatprep.subr.mxu0 0.0
      %2984 = vmatpush1.msra.mxu0 0.0
      %2985 = vmatprep.subr.mxu0 0.0
      %v2986 = vand.u32 %v2504, 4294901760
      %v2987 = vsub.f32 %v2504, %v2986
      %v2988 = vand.u32 %v2987, 4294901760
      %2989 = vmatpush1.msra.mxu0 %v2988
      %2990 = vmatprep.subr.mxu0 0.0
      %v2991 = vand.u32 %v2503, 4294901760
      %v2992 = vsub.f32 %v2503, %v2991
      %v2993 = vand.u32 %v2992, 4294901760
      %2994 = vmatpush1.msra.mxu0 %v2993
      %2995 = vmatprep.subr.mxu0 0.0
      %v2996 = vand.u32 %v2502, 4294901760
      %v2997 = vsub.f32 %v2502, %v2996
      %v2998 = vand.u32 %v2997, 4294901760
      %2999 = vmatpush1.msra.mxu0 %v2998
      %3000 = vmatprep.subr.mxu0 0.0
      %v3001 = vand.u32 %v2501, 4294901760
      %v3002 = vsub.f32 %v2501, %v3001
      %v3003 = vand.u32 %v3002, 4294901760
      %3004 = vmatpush1.msra.mxu0 %v3003
      %3005 = vmatprep.subr.mxu0 0.0
      %3006 = vmatpush2.msra.mxu0 0.0
      %3007 = vmatprep.subr.mxu0 0.0
      %3008 = vmatpush2.msra.mxu0 0.0
      %3009 = vmatprep.subr.mxu0 0.0
      %3010 = vmatpush2.msra.mxu0 0.0
      %3011 = vmatprep.subr.mxu0 0.0
      %3012 = vmatpush2.msra.mxu0 0.0
      %3013 = vmatprep.subr.mxu0 0.0
      %3014 = vmatpush2.msra.mxu0 0.0
      %3015 = vmatprep.subr.mxu0 0.0
      %3016 = vmatpush2.msra.mxu0 0.0
      %3017 = vmatprep.subr.mxu0 0.0
      %3018 = vmatpush2.msra.mxu0 0.0
      %3019 = vmatprep.subr.mxu0 0.0
      %3020 = vmatpush2.msra.mxu0 0.0
      %3021 = vmatprep.subr.mxu0 0.0
      %3022 = vmatpush2.msra.mxu0 0.0
      %3023 = vmatprep.subr.mxu0 0.0
      %3024 = vmatpush2.msra.mxu0 0.0
      %3025 = vmatprep.subr.mxu0 0.0
      %3026 = vmatpush2.msra.mxu0 0.0
      %3027 = vmatprep.subr.mxu0 0.0
      %3028 = vmatpush2.msra.mxu0 0.0
      %3029 = vmatprep.subr.mxu0 0.0
      %3030 = vmatpush2.msra.mxu0 0.0
      %3031 = vmatprep.subr.mxu0 0.0
      %3032 = vmatpush2.msra.mxu0 0.0
      %3033 = vmatprep.subr.mxu0 0.0
      %3034 = vmatpush2.msra.mxu0 0.0
      %3035 = vmatprep.subr.mxu0 0.0
      %3036 = vmatpush2.msra.mxu0 0.0
      %3037 = vmatprep.mubr.f32.mxu0 0.0
      %v3038 = vand.u32 %v2530, 4294901760
      %3039 = vmatmul.mubr.f32.gmra.mxu0 %v3038
      %v3040 = vpop.f32.mrf.mxu0
      %v3041 = vadd.f32 %v2934, %v3040
      %v3042 = vpop.f32.mrf.mxu0
      %3043 = vmatprep.mubr.f32.mxu0 0.0
      %v3044 = vand.u32 %v2533, 4294901760
      %3045 = vmatmul.mubr.f32.gmra.mxu0 %v3044
      %v3046 = vpop.f32.mrf.mxu0
      %v3047 = vadd.f32 %v2942, %v3046
      %v3048 = vpop.f32.mrf.mxu0
      %3049 = vmatprep.mubr.f32.mxu0 0.0
      %v3050 = vand.u32 %v2536, 4294901760
      %3051 = vmatmul.mubr.f32.gmra.mxu0 %v3050
      %v3052 = vpop.f32.mrf.mxu0
      %v3053 = vadd.f32 %v2950, %v3052
      %v3054 = vpop.f32.mrf.mxu0
      %3055 = vmatprep.mubr.f32.mxu0 0.0
      %v3056 = vand.u32 %v2539, 4294901760
      %3057 = vmatmul.mubr.f32.gmra.mxu0 %v3056
      %v3058 = vpop.f32.mrf.mxu0
      %v3059 = vadd.f32 %v2958, %v3058
      %v3060 = vpop.f32.mrf.mxu0
      %3061 = vdwg.mxu0
      %3062 = vmatprep.subr.mxu0 0.0
      %3063 = vmatpush1.msra.mxu0 0.0
      %3064 = vmatprep.subr.mxu0 0.0
      %3065 = vmatpush1.msra.mxu0 0.0
      %3066 = vmatprep.subr.mxu0 0.0
      %3067 = vmatpush1.msra.mxu0 0.0
      %3068 = vmatprep.subr.mxu0 0.0
      %3069 = vmatpush1.msra.mxu0 0.0
      %3070 = vmatprep.subr.mxu0 0.0
      %3071 = vmatpush1.msra.mxu0 0.0
      %3072 = vmatprep.subr.mxu0 0.0
      %3073 = vmatpush1.msra.mxu0 0.0
      %3074 = vmatprep.subr.mxu0 0.0
      %3075 = vmatpush1.msra.mxu0 0.0
      %3076 = vmatprep.subr.mxu0 0.0
      %3077 = vmatpush1.msra.mxu0 0.0
      %3078 = vmatprep.subr.mxu0 0.0
      %3079 = vmatpush1.msra.mxu0 0.0
      %3080 = vmatprep.subr.mxu0 0.0
      %3081 = vmatpush1.msra.mxu0 0.0
      %3082 = vmatprep.subr.mxu0 0.0
      %3083 = vmatpush1.msra.mxu0 0.0
      %3084 = vmatprep.subr.mxu0 0.0
      %3085 = vmatpush1.msra.mxu0 0.0
      %3086 = vmatprep.subr.mxu0 0.0
      %v3087 = vand.u32 %v2504, 4294901760
      %3088 = vmatpush1.msra.mxu0 %v3087
      %3089 = vmatprep.subr.mxu0 0.0
      %v3090 = vand.u32 %v2503, 4294901760
      %3091 = vmatpush1.msra.mxu0 %v3090
      %3092 = vmatprep.subr.mxu0 0.0
      %v3093 = vand.u32 %v2502, 4294901760
      %3094 = vmatpush1.msra.mxu0 %v3093
      %3095 = vmatprep.subr.mxu0 0.0
      %v3096 = vand.u32 %v2501, 4294901760
      %3097 = vmatpush1.msra.mxu0 %v3096
      %3098 = vmatprep.subr.mxu0 0.0
      %3099 = vmatpush2.msra.mxu0 0.0
      %3100 = vmatprep.subr.mxu0 0.0
      %3101 = vmatpush2.msra.mxu0 0.0
      %3102 = vmatprep.subr.mxu0 0.0
      %3103 = vmatpush2.msra.mxu0 0.0
      %3104 = vmatprep.subr.mxu0 0.0
      %3105 = vmatpush2.msra.mxu0 0.0
      %3106 = vmatprep.subr.mxu0 0.0
      %3107 = vmatpush2.msra.mxu0 0.0
      %3108 = vmatprep.subr.mxu0 0.0
      %3109 = vmatpush2.msra.mxu0 0.0
      %3110 = vmatprep.subr.mxu0 0.0
      %3111 = vmatpush2.msra.mxu0 0.0
      %3112 = vmatprep.subr.mxu0 0.0
      %3113 = vmatpush2.msra.mxu0 0.0
      %3114 = vmatprep.subr.mxu0 0.0
      %3115 = vmatpush2.msra.mxu0 0.0
      %3116 = vmatprep.subr.mxu0 0.0
      %3117 = vmatpush2.msra.mxu0 0.0
      %3118 = vmatprep.subr.mxu0 0.0
      %3119 = vmatpush2.msra.mxu0 0.0
      %3120 = vmatprep.subr.mxu0 0.0
      %3121 = vmatpush2.msra.mxu0 0.0
      %3122 = vmatprep.subr.mxu0 0.0
      %3123 = vmatpush2.msra.mxu0 0.0
      %3124 = vmatprep.subr.mxu0 0.0
      %3125 = vmatpush2.msra.mxu0 0.0
      %3126 = vmatprep.subr.mxu0 0.0
      %3127 = vmatpush2.msra.mxu0 0.0
      %3128 = vmatprep.subr.mxu0 0.0
      %3129 = vmatpush2.msra.mxu0 0.0
      %3130 = vmatprep.mubr.f32.mxu0 0.0
      %v3131 = vand.u32 %v2530, 4294901760
      %3132 = vmatmul.mubr.f32.gmra.mxu0 %v3131
      %v3133 = vpop.f32.mrf.mxu0
      %v3134 = vadd.f32 %v3041, %v3133
      %v3135 = vpop.f32.mrf.mxu0
      %3136 = vmatprep.mubr.f32.mxu0 0.0
      %v3137 = vand.u32 %v2533, 4294901760
      %3138 = vmatmul.mubr.f32.gmra.mxu0 %v3137
      %v3139 = vpop.f32.mrf.mxu0
      %v3140 = vadd.f32 %v3047, %v3139
      %v3141 = vpop.f32.mrf.mxu0
      %3142 = vmatprep.mubr.f32.mxu0 0.0
      %v3143 = vand.u32 %v2536, 4294901760
      %3144 = vmatmul.mubr.f32.gmra.mxu0 %v3143
      %v3145 = vpop.f32.mrf.mxu0
      %v3146 = vadd.f32 %v3053, %v3145
      %v3147 = vpop.f32.mrf.mxu0
      %3148 = vmatprep.mubr.f32.mxu0 0.0
      %v3149 = vand.u32 %v2539, 4294901760
      %3150 = vmatmul.mubr.f32.gmra.mxu0 %v3149
      %v3151 = vpop.f32.mrf.mxu0
      %v3152 = vadd.f32 %v3059, %v3151
      %v3153 = vpop.f32.mrf.mxu0
      %3154 = vdwg.mxu0
      %v3155 = vadd.f32 %v1835, %v3134
      %v3156 = vadd.f32 %v1836, %v3140
      %v3157 = vadd.f32 %v1837, %v3146
      %v3158 = vadd.f32 %v1838, %v3152
      %v3159 = vld [vmem:[%s4 + $0x20] sm:$0xff]
      %v3160 = vld [vmem:[%s4 + $0x28] sm:$0xff]
      %v3161 = vld [vmem:[%s4 + $0x30] sm:$0xff]
      %v3162 = vld [vmem:[%s4 + $0x38] sm:$0xff]
      %v3164 = vsel %vm1184, %v3159, 0
      %v3167 = vsel %vm1184, %v3160, 0
      %v3170 = vsel %vm1184, %v3161, 0
      %v3173 = vsel %vm1184, %v3162, 0
      %3175 = vmatprep.subr.mxu0 0.0
      %3176 = vmatpush1.msra.mxu0 0.0
      %3177 = vmatprep.subr.mxu0 0.0
      %3178 = vmatpush1.msra.mxu0 0.0
      %3179 = vmatprep.subr.mxu0 0.0
      %3180 = vmatpush1.msra.mxu0 0.0
      %3181 = vmatprep.subr.mxu0 0.0
      %3182 = vmatpush1.msra.mxu0 0.0
      %3183 = vmatprep.subr.mxu0 0.0
      %3184 = vmatpush1.msra.mxu0 0.0
      %3185 = vmatprep.subr.mxu0 0.0
      %3186 = vmatpush1.msra.mxu0 0.0
      %3187 = vmatprep.subr.mxu0 0.0
      %3188 = vmatpush1.msra.mxu0 0.0
      %3189 = vmatprep.subr.mxu0 0.0
      %3190 = vmatpush1.msra.mxu0 0.0
      %3191 = vmatprep.subr.mxu0 0.0
      %3192 = vmatpush1.msra.mxu0 0.0
      %3193 = vmatprep.subr.mxu0 0.0
      %3194 = vmatpush1.msra.mxu0 0.0
      %3195 = vmatprep.subr.mxu0 0.0
      %3196 = vmatpush1.msra.mxu0 0.0
      %3197 = vmatprep.subr.mxu0 0.0
      %3198 = vmatpush1.msra.mxu0 0.0
      %3199 = vmatprep.subr.mxu0 0.0
      %v3200 = vand.u32 %v1159, 4294901760
      %3201 = vmatpush1.msra.mxu0 %v3200
      %3202 = vmatprep.subr.mxu0 0.0
      %v3203 = vand.u32 %v1158, 4294901760
      %3204 = vmatpush1.msra.mxu0 %v3203
      %3205 = vmatprep.subr.mxu0 0.0
      %v3206 = vand.u32 %v1157, 4294901760
      %3207 = vmatpush1.msra.mxu0 %v3206
      %3208 = vmatprep.subr.mxu0 0.0
      %v3209 = vand.u32 %v1156, 4294901760
      %3210 = vmatpush1.msra.mxu0 %v3209
      %3211 = vmatprep.subr.mxu0 0.0
      %3212 = vmatpush2.msra.mxu0 0.0
      %3213 = vmatprep.subr.mxu0 0.0
      %3214 = vmatpush2.msra.mxu0 0.0
      %3215 = vmatprep.subr.mxu0 0.0
      %3216 = vmatpush2.msra.mxu0 0.0
      %3217 = vmatprep.subr.mxu0 0.0
      %3218 = vmatpush2.msra.mxu0 0.0
      %3219 = vmatprep.subr.mxu0 0.0
      %3220 = vmatpush2.msra.mxu0 0.0
      %3221 = vmatprep.subr.mxu0 0.0
      %3222 = vmatpush2.msra.mxu0 0.0
      %3223 = vmatprep.subr.mxu0 0.0
      %3224 = vmatpush2.msra.mxu0 0.0
      %3225 = vmatprep.subr.mxu0 0.0
      %3226 = vmatpush2.msra.mxu0 0.0
      %3227 = vmatprep.subr.mxu0 0.0
      %3228 = vmatpush2.msra.mxu0 0.0
      %3229 = vmatprep.subr.mxu0 0.0
      %3230 = vmatpush2.msra.mxu0 0.0
      %3231 = vmatprep.subr.mxu0 0.0
      %3232 = vmatpush2.msra.mxu0 0.0
      %3233 = vmatprep.subr.mxu0 0.0
      %3234 = vmatpush2.msra.mxu0 0.0
      %3235 = vmatprep.subr.mxu0 0.0
      %3236 = vmatpush2.msra.mxu0 0.0
      %3237 = vmatprep.subr.mxu0 0.0
      %3238 = vmatpush2.msra.mxu0 0.0
      %3239 = vmatprep.subr.mxu0 0.0
      %3240 = vmatpush2.msra.mxu0 0.0
      %3241 = vmatprep.subr.mxu0 0.0
      %3242 = vmatpush2.msra.mxu0 0.0
      %3243 = vmatprep.mubr.f32.mxu0 0.0
      %v3244 = vand.u32 %v3164, 4294901760
      %v3245 = vsub.f32 %v3164, %v3244
      %v3246 = vand.u32 %v3245, 4294901760
      %v3247 = vsub.f32 %v3245, %v3246
      %v3248 = vand.u32 %v3247, 4294901760
      %3249 = vmatmul.mubr.f32.gmra.mxu0 %v3248
      %v3250 = vpop.f32.mrf.mxu0
      %v3251 = vadd.f32 0.0, %v3250
      %v3252 = vpop.f32.mrf.mxu0
      %3253 = vmatprep.mubr.f32.mxu0 0.0
      %v3254 = vand.u32 %v3167, 4294901760
      %v3255 = vsub.f32 %v3167, %v3254
      %v3256 = vand.u32 %v3255, 4294901760
      %v3257 = vsub.f32 %v3255, %v3256
      %v3258 = vand.u32 %v3257, 4294901760
      %3259 = vmatmul.mubr.f32.gmra.mxu0 %v3258
      %v3260 = vpop.f32.mrf.mxu0
      %v3261 = vadd.f32 0.0, %v3260
      %v3262 = vpop.f32.mrf.mxu0
      %3263 = vmatprep.mubr.f32.mxu0 0.0
      %v3264 = vand.u32 %v3170, 4294901760
      %v3265 = vsub.f32 %v3170, %v3264
      %v3266 = vand.u32 %v3265, 4294901760
      %v3267 = vsub.f32 %v3265, %v3266
      %v3268 = vand.u32 %v3267, 4294901760
      %3269 = vmatmul.mubr.f32.gmra.mxu0 %v3268
      %v3270 = vpop.f32.mrf.mxu0
      %v3271 = vadd.f32 0.0, %v3270
      %v3272 = vpop.f32.mrf.mxu0
      %3273 = vmatprep.mubr.f32.mxu0 0.0
      %v3274 = vand.u32 %v3173, 4294901760
      %v3275 = vsub.f32 %v3173, %v3274
      %v3276 = vand.u32 %v3275, 4294901760
      %v3277 = vsub.f32 %v3275, %v3276
      %v3278 = vand.u32 %v3277, 4294901760
      %3279 = vmatmul.mubr.f32.gmra.mxu0 %v3278
      %v3280 = vpop.f32.mrf.mxu0
      %v3281 = vadd.f32 0.0, %v3280
      %v3282 = vpop.f32.mrf.mxu0
      %3283 = vdwg.mxu0
      %3284 = vmatprep.subr.mxu0 0.0
      %3285 = vmatpush1.msra.mxu0 0.0
      %3286 = vmatprep.subr.mxu0 0.0
      %3287 = vmatpush1.msra.mxu0 0.0
      %3288 = vmatprep.subr.mxu0 0.0
      %3289 = vmatpush1.msra.mxu0 0.0
      %3290 = vmatprep.subr.mxu0 0.0
      %3291 = vmatpush1.msra.mxu0 0.0
      %3292 = vmatprep.subr.mxu0 0.0
      %3293 = vmatpush1.msra.mxu0 0.0
      %3294 = vmatprep.subr.mxu0 0.0
      %3295 = vmatpush1.msra.mxu0 0.0
      %3296 = vmatprep.subr.mxu0 0.0
      %3297 = vmatpush1.msra.mxu0 0.0
      %3298 = vmatprep.subr.mxu0 0.0
      %3299 = vmatpush1.msra.mxu0 0.0
      %3300 = vmatprep.subr.mxu0 0.0
      %3301 = vmatpush1.msra.mxu0 0.0
      %3302 = vmatprep.subr.mxu0 0.0
      %3303 = vmatpush1.msra.mxu0 0.0
      %3304 = vmatprep.subr.mxu0 0.0
      %3305 = vmatpush1.msra.mxu0 0.0
      %3306 = vmatprep.subr.mxu0 0.0
      %3307 = vmatpush1.msra.mxu0 0.0
      %3308 = vmatprep.subr.mxu0 0.0
      %v3309 = vand.u32 %v1159, 4294901760
      %v3310 = vsub.f32 %v1159, %v3309
      %v3311 = vand.u32 %v3310, 4294901760
      %v3312 = vsub.f32 %v3310, %v3311
      %v3313 = vand.u32 %v3312, 4294901760
      %3314 = vmatpush1.msra.mxu0 %v3313
      %3315 = vmatprep.subr.mxu0 0.0
      %v3316 = vand.u32 %v1158, 4294901760
      %v3317 = vsub.f32 %v1158, %v3316
      %v3318 = vand.u32 %v3317, 4294901760
      %v3319 = vsub.f32 %v3317, %v3318
      %v3320 = vand.u32 %v3319, 4294901760
      %3321 = vmatpush1.msra.mxu0 %v3320
      %3322 = vmatprep.subr.mxu0 0.0
      %v3323 = vand.u32 %v1157, 4294901760
      %v3324 = vsub.f32 %v1157, %v3323
      %v3325 = vand.u32 %v3324, 4294901760
      %v3326 = vsub.f32 %v3324, %v3325
      %v3327 = vand.u32 %v3326, 4294901760
      %3328 = vmatpush1.msra.mxu0 %v3327
      %3329 = vmatprep.subr.mxu0 0.0
      %v3330 = vand.u32 %v1156, 4294901760
      %v3331 = vsub.f32 %v1156, %v3330
      %v3332 = vand.u32 %v3331, 4294901760
      %v3333 = vsub.f32 %v3331, %v3332
      %v3334 = vand.u32 %v3333, 4294901760
      %3335 = vmatpush1.msra.mxu0 %v3334
      %3336 = vmatprep.subr.mxu0 0.0
      %3337 = vmatpush2.msra.mxu0 0.0
      %3338 = vmatprep.subr.mxu0 0.0
      %3339 = vmatpush2.msra.mxu0 0.0
      %3340 = vmatprep.subr.mxu0 0.0
      %3341 = vmatpush2.msra.mxu0 0.0
      %3342 = vmatprep.subr.mxu0 0.0
      %3343 = vmatpush2.msra.mxu0 0.0
      %3344 = vmatprep.subr.mxu0 0.0
      %3345 = vmatpush2.msra.mxu0 0.0
      %3346 = vmatprep.subr.mxu0 0.0
      %3347 = vmatpush2.msra.mxu0 0.0
      %3348 = vmatprep.subr.mxu0 0.0
      %3349 = vmatpush2.msra.mxu0 0.0
      %3350 = vmatprep.subr.mxu0 0.0
      %3351 = vmatpush2.msra.mxu0 0.0
      %3352 = vmatprep.subr.mxu0 0.0
      %3353 = vmatpush2.msra.mxu0 0.0
      %3354 = vmatprep.subr.mxu0 0.0
      %3355 = vmatpush2.msra.mxu0 0.0
      %3356 = vmatprep.subr.mxu0 0.0
      %3357 = vmatpush2.msra.mxu0 0.0
      %3358 = vmatprep.subr.mxu0 0.0
      %3359 = vmatpush2.msra.mxu0 0.0
      %3360 = vmatprep.subr.mxu0 0.0
      %3361 = vmatpush2.msra.mxu0 0.0
      %3362 = vmatprep.subr.mxu0 0.0
      %3363 = vmatpush2.msra.mxu0 0.0
      %3364 = vmatprep.subr.mxu0 0.0
      %3365 = vmatpush2.msra.mxu0 0.0
      %3366 = vmatprep.subr.mxu0 0.0
      %3367 = vmatpush2.msra.mxu0 0.0
      %3368 = vmatprep.mubr.f32.mxu0 0.0
      %v3369 = vand.u32 %v3164, 4294901760
      %3370 = vmatmul.mubr.f32.gmra.mxu0 %v3369
      %v3371 = vpop.f32.mrf.mxu0
      %v3372 = vadd.f32 %v3251, %v3371
      %v3373 = vpop.f32.mrf.mxu0
      %3374 = vmatprep.mubr.f32.mxu0 0.0
      %v3375 = vand.u32 %v3167, 4294901760
      %3376 = vmatmul.mubr.f32.gmra.mxu0 %v3375
      %v3377 = vpop.f32.mrf.mxu0
      %v3378 = vadd.f32 %v3261, %v3377
      %v3379 = vpop.f32.mrf.mxu0
      %3380 = vmatprep.mubr.f32.mxu0 0.0
      %v3381 = vand.u32 %v3170, 4294901760
      %3382 = vmatmul.mubr.f32.gmra.mxu0 %v3381
      %v3383 = vpop.f32.mrf.mxu0
      %v3384 = vadd.f32 %v3271, %v3383
      %v3385 = vpop.f32.mrf.mxu0
      %3386 = vmatprep.mubr.f32.mxu0 0.0
      %v3387 = vand.u32 %v3173, 4294901760
      %3388 = vmatmul.mubr.f32.gmra.mxu0 %v3387
      %v3389 = vpop.f32.mrf.mxu0
      %v3390 = vadd.f32 %v3281, %v3389
      %v3391 = vpop.f32.mrf.mxu0
      %3392 = vdwg.mxu0
      %3393 = vmatprep.subr.mxu0 0.0
      %3394 = vmatpush1.msra.mxu0 0.0
      %3395 = vmatprep.subr.mxu0 0.0
      %3396 = vmatpush1.msra.mxu0 0.0
      %3397 = vmatprep.subr.mxu0 0.0
      %3398 = vmatpush1.msra.mxu0 0.0
      %3399 = vmatprep.subr.mxu0 0.0
      %3400 = vmatpush1.msra.mxu0 0.0
      %3401 = vmatprep.subr.mxu0 0.0
      %3402 = vmatpush1.msra.mxu0 0.0
      %3403 = vmatprep.subr.mxu0 0.0
      %3404 = vmatpush1.msra.mxu0 0.0
      %3405 = vmatprep.subr.mxu0 0.0
      %3406 = vmatpush1.msra.mxu0 0.0
      %3407 = vmatprep.subr.mxu0 0.0
      %3408 = vmatpush1.msra.mxu0 0.0
      %3409 = vmatprep.subr.mxu0 0.0
      %3410 = vmatpush1.msra.mxu0 0.0
      %3411 = vmatprep.subr.mxu0 0.0
      %3412 = vmatpush1.msra.mxu0 0.0
      %3413 = vmatprep.subr.mxu0 0.0
      %3414 = vmatpush1.msra.mxu0 0.0
      %3415 = vmatprep.subr.mxu0 0.0
      %3416 = vmatpush1.msra.mxu0 0.0
      %3417 = vmatprep.subr.mxu0 0.0
      %v3418 = vand.u32 %v1159, 4294901760
      %v3419 = vsub.f32 %v1159, %v3418
      %3420 = vmatpush1.msra.mxu0 %v3419
      %3421 = vmatprep.subr.mxu0 0.0
      %v3422 = vand.u32 %v1158, 4294901760
      %v3423 = vsub.f32 %v1158, %v3422
      %3424 = vmatpush1.msra.mxu0 %v3423
      %3425 = vmatprep.subr.mxu0 0.0
      %v3426 = vand.u32 %v1157, 4294901760
      %v3427 = vsub.f32 %v1157, %v3426
      %3428 = vmatpush1.msra.mxu0 %v3427
      %3429 = vmatprep.subr.mxu0 0.0
      %v3430 = vand.u32 %v1156, 4294901760
      %v3431 = vsub.f32 %v1156, %v3430
      %3432 = vmatpush1.msra.mxu0 %v3431
      %3433 = vmatprep.subr.mxu0 0.0
      %3434 = vmatpush2.msra.mxu0 0.0
      %3435 = vmatprep.subr.mxu0 0.0
      %3436 = vmatpush2.msra.mxu0 0.0
      %3437 = vmatprep.subr.mxu0 0.0
      %3438 = vmatpush2.msra.mxu0 0.0
      %3439 = vmatprep.subr.mxu0 0.0
      %3440 = vmatpush2.msra.mxu0 0.0
      %3441 = vmatprep.subr.mxu0 0.0
      %3442 = vmatpush2.msra.mxu0 0.0
      %3443 = vmatprep.subr.mxu0 0.0
      %3444 = vmatpush2.msra.mxu0 0.0
      %3445 = vmatprep.subr.mxu0 0.0
      %3446 = vmatpush2.msra.mxu0 0.0
      %3447 = vmatprep.subr.mxu0 0.0
      %3448 = vmatpush2.msra.mxu0 0.0
      %3449 = vmatprep.subr.mxu0 0.0
      %3450 = vmatpush2.msra.mxu0 0.0
      %3451 = vmatprep.subr.mxu0 0.0
      %3452 = vmatpush2.msra.mxu0 0.0
      %3453 = vmatprep.subr.mxu0 0.0
      %3454 = vmatpush2.msra.mxu0 0.0
      %3455 = vmatprep.subr.mxu0 0.0
      %3456 = vmatpush2.msra.mxu0 0.0
      %3457 = vmatprep.subr.mxu0 0.0
      %3458 = vmatpush2.msra.mxu0 0.0
      %3459 = vmatprep.subr.mxu0 0.0
      %3460 = vmatpush2.msra.mxu0 0.0
      %3461 = vmatprep.subr.mxu0 0.0
      %3462 = vmatpush2.msra.mxu0 0.0
      %3463 = vmatprep.subr.mxu0 0.0
      %3464 = vmatpush2.msra.mxu0 0.0
      %3465 = vmatprep.mubr.f32.mxu0 0.0
      %v3466 = vand.u32 %v3164, 4294901760
      %v3467 = vsub.f32 %v3164, %v3466
      %3468 = vmatmul.mubr.f32.gmra.mxu0 %v3467
      %v3469 = vpop.f32.mrf.mxu0
      %v3470 = vadd.f32 %v3372, %v3469
      %v3471 = vpop.f32.mrf.mxu0
      %3472 = vmatprep.mubr.f32.mxu0 0.0
      %v3473 = vand.u32 %v3167, 4294901760
      %v3474 = vsub.f32 %v3167, %v3473
      %3475 = vmatmul.mubr.f32.gmra.mxu0 %v3474
      %v3476 = vpop.f32.mrf.mxu0
      %v3477 = vadd.f32 %v3378, %v3476
      %v3478 = vpop.f32.mrf.mxu0
      %3479 = vmatprep.mubr.f32.mxu0 0.0
      %v3480 = vand.u32 %v3170, 4294901760
      %v3481 = vsub.f32 %v3170, %v3480
      %3482 = vmatmul.mubr.f32.gmra.mxu0 %v3481
      %v3483 = vpop.f32.mrf.mxu0
      %v3484 = vadd.f32 %v3384, %v3483
      %v3485 = vpop.f32.mrf.mxu0
      %3486 = vmatprep.mubr.f32.mxu0 0.0
      %v3487 = vand.u32 %v3173, 4294901760
      %v3488 = vsub.f32 %v3173, %v3487
      %3489 = vmatmul.mubr.f32.gmra.mxu0 %v3488
      %v3490 = vpop.f32.mrf.mxu0
      %v3491 = vadd.f32 %v3390, %v3490
      %v3492 = vpop.f32.mrf.mxu0
      %3493 = vdwg.mxu0
      %3494 = vmatprep.subr.mxu0 0.0
      %3495 = vmatpush1.msra.mxu0 0.0
      %3496 = vmatprep.subr.mxu0 0.0
      %3497 = vmatpush1.msra.mxu0 0.0
      %3498 = vmatprep.subr.mxu0 0.0
      %3499 = vmatpush1.msra.mxu0 0.0
      %3500 = vmatprep.subr.mxu0 0.0
      %3501 = vmatpush1.msra.mxu0 0.0
      %3502 = vmatprep.subr.mxu0 0.0
      %3503 = vmatpush1.msra.mxu0 0.0
      %3504 = vmatprep.subr.mxu0 0.0
      %3505 = vmatpush1.msra.mxu0 0.0
      %3506 = vmatprep.subr.mxu0 0.0
      %3507 = vmatpush1.msra.mxu0 0.0
      %3508 = vmatprep.subr.mxu0 0.0
      %3509 = vmatpush1.msra.mxu0 0.0
      %3510 = vmatprep.subr.mxu0 0.0
      %3511 = vmatpush1.msra.mxu0 0.0
      %3512 = vmatprep.subr.mxu0 0.0
      %3513 = vmatpush1.msra.mxu0 0.0
      %3514 = vmatprep.subr.mxu0 0.0
      %3515 = vmatpush1.msra.mxu0 0.0
      %3516 = vmatprep.subr.mxu0 0.0
      %3517 = vmatpush1.msra.mxu0 0.0
      %3518 = vmatprep.subr.mxu0 0.0
      %v3519 = vand.u32 %v1159, 4294901760
      %3520 = vmatpush1.msra.mxu0 %v3519
      %3521 = vmatprep.subr.mxu0 0.0
      %v3522 = vand.u32 %v1158, 4294901760
      %3523 = vmatpush1.msra.mxu0 %v3522
      %3524 = vmatprep.subr.mxu0 0.0
      %v3525 = vand.u32 %v1157, 4294901760
      %3526 = vmatpush1.msra.mxu0 %v3525
      %3527 = vmatprep.subr.mxu0 0.0
      %v3528 = vand.u32 %v1156, 4294901760
      %3529 = vmatpush1.msra.mxu0 %v3528
      %3530 = vmatprep.subr.mxu0 0.0
      %3531 = vmatpush2.msra.mxu0 0.0
      %3532 = vmatprep.subr.mxu0 0.0
      %3533 = vmatpush2.msra.mxu0 0.0
      %3534 = vmatprep.subr.mxu0 0.0
      %3535 = vmatpush2.msra.mxu0 0.0
      %3536 = vmatprep.subr.mxu0 0.0
      %3537 = vmatpush2.msra.mxu0 0.0
      %3538 = vmatprep.subr.mxu0 0.0
      %3539 = vmatpush2.msra.mxu0 0.0
      %3540 = vmatprep.subr.mxu0 0.0
      %3541 = vmatpush2.msra.mxu0 0.0
      %3542 = vmatprep.subr.mxu0 0.0
      %3543 = vmatpush2.msra.mxu0 0.0
      %3544 = vmatprep.subr.mxu0 0.0
      %3545 = vmatpush2.msra.mxu0 0.0
      %3546 = vmatprep.subr.mxu0 0.0
      %3547 = vmatpush2.msra.mxu0 0.0
      %3548 = vmatprep.subr.mxu0 0.0
      %3549 = vmatpush2.msra.mxu0 0.0
      %3550 = vmatprep.subr.mxu0 0.0
      %3551 = vmatpush2.msra.mxu0 0.0
      %3552 = vmatprep.subr.mxu0 0.0
      %3553 = vmatpush2.msra.mxu0 0.0
      %3554 = vmatprep.subr.mxu0 0.0
      %3555 = vmatpush2.msra.mxu0 0.0
      %3556 = vmatprep.subr.mxu0 0.0
      %3557 = vmatpush2.msra.mxu0 0.0
      %3558 = vmatprep.subr.mxu0 0.0
      %3559 = vmatpush2.msra.mxu0 0.0
      %3560 = vmatprep.subr.mxu0 0.0
      %3561 = vmatpush2.msra.mxu0 0.0
      %3562 = vmatprep.mubr.f32.mxu0 0.0
      %v3563 = vand.u32 %v3164, 4294901760
      %v3564 = vsub.f32 %v3164, %v3563
      %v3565 = vand.u32 %v3564, 4294901760
      %3566 = vmatmul.mubr.f32.gmra.mxu0 %v3565
      %v3567 = vpop.f32.mrf.mxu0
      %v3568 = vadd.f32 %v3470, %v3567
      %v3569 = vpop.f32.mrf.mxu0
      %3570 = vmatprep.mubr.f32.mxu0 0.0
      %v3571 = vand.u32 %v3167, 4294901760
      %v3572 = vsub.f32 %v3167, %v3571
      %v3573 = vand.u32 %v3572, 4294901760
      %3574 = vmatmul.mubr.f32.gmra.mxu0 %v3573
      %v3575 = vpop.f32.mrf.mxu0
      %v3576 = vadd.f32 %v3477, %v3575
      %v3577 = vpop.f32.mrf.mxu0
      %3578 = vmatprep.mubr.f32.mxu0 0.0
      %v3579 = vand.u32 %v3170, 4294901760
      %v3580 = vsub.f32 %v3170, %v3579
      %v3581 = vand.u32 %v3580, 4294901760
      %3582 = vmatmul.mubr.f32.gmra.mxu0 %v3581
      %v3583 = vpop.f32.mrf.mxu0
      %v3584 = vadd.f32 %v3484, %v3583
      %v3585 = vpop.f32.mrf.mxu0
      %3586 = vmatprep.mubr.f32.mxu0 0.0
      %v3587 = vand.u32 %v3173, 4294901760
      %v3588 = vsub.f32 %v3173, %v3587
      %v3589 = vand.u32 %v3588, 4294901760
      %3590 = vmatmul.mubr.f32.gmra.mxu0 %v3589
      %v3591 = vpop.f32.mrf.mxu0
      %v3592 = vadd.f32 %v3491, %v3591
      %v3593 = vpop.f32.mrf.mxu0
      %3594 = vdwg.mxu0
      %3595 = vmatprep.subr.mxu0 0.0
      %3596 = vmatpush1.msra.mxu0 0.0
      %3597 = vmatprep.subr.mxu0 0.0
      %3598 = vmatpush1.msra.mxu0 0.0
      %3599 = vmatprep.subr.mxu0 0.0
      %3600 = vmatpush1.msra.mxu0 0.0
      %3601 = vmatprep.subr.mxu0 0.0
      %3602 = vmatpush1.msra.mxu0 0.0
      %3603 = vmatprep.subr.mxu0 0.0
      %3604 = vmatpush1.msra.mxu0 0.0
      %3605 = vmatprep.subr.mxu0 0.0
      %3606 = vmatpush1.msra.mxu0 0.0
      %3607 = vmatprep.subr.mxu0 0.0
      %3608 = vmatpush1.msra.mxu0 0.0
      %3609 = vmatprep.subr.mxu0 0.0
      %3610 = vmatpush1.msra.mxu0 0.0
      %3611 = vmatprep.subr.mxu0 0.0
      %3612 = vmatpush1.msra.mxu0 0.0
      %3613 = vmatprep.subr.mxu0 0.0
      %3614 = vmatpush1.msra.mxu0 0.0
      %3615 = vmatprep.subr.mxu0 0.0
      %3616 = vmatpush1.msra.mxu0 0.0
      %3617 = vmatprep.subr.mxu0 0.0
      %3618 = vmatpush1.msra.mxu0 0.0
      %3619 = vmatprep.subr.mxu0 0.0
      %v3620 = vand.u32 %v1159, 4294901760
      %v3621 = vsub.f32 %v1159, %v3620
      %v3622 = vand.u32 %v3621, 4294901760
      %3623 = vmatpush1.msra.mxu0 %v3622
      %3624 = vmatprep.subr.mxu0 0.0
      %v3625 = vand.u32 %v1158, 4294901760
      %v3626 = vsub.f32 %v1158, %v3625
      %v3627 = vand.u32 %v3626, 4294901760
      %3628 = vmatpush1.msra.mxu0 %v3627
      %3629 = vmatprep.subr.mxu0 0.0
      %v3630 = vand.u32 %v1157, 4294901760
      %v3631 = vsub.f32 %v1157, %v3630
      %v3632 = vand.u32 %v3631, 4294901760
      %3633 = vmatpush1.msra.mxu0 %v3632
      %3634 = vmatprep.subr.mxu0 0.0
      %v3635 = vand.u32 %v1156, 4294901760
      %v3636 = vsub.f32 %v1156, %v3635
      %v3637 = vand.u32 %v3636, 4294901760
      %3638 = vmatpush1.msra.mxu0 %v3637
      %3639 = vmatprep.subr.mxu0 0.0
      %3640 = vmatpush2.msra.mxu0 0.0
      %3641 = vmatprep.subr.mxu0 0.0
      %3642 = vmatpush2.msra.mxu0 0.0
      %3643 = vmatprep.subr.mxu0 0.0
      %3644 = vmatpush2.msra.mxu0 0.0
      %3645 = vmatprep.subr.mxu0 0.0
      %3646 = vmatpush2.msra.mxu0 0.0
      %3647 = vmatprep.subr.mxu0 0.0
      %3648 = vmatpush2.msra.mxu0 0.0
      %3649 = vmatprep.subr.mxu0 0.0
      %3650 = vmatpush2.msra.mxu0 0.0
      %3651 = vmatprep.subr.mxu0 0.0
      %3652 = vmatpush2.msra.mxu0 0.0
      %3653 = vmatprep.subr.mxu0 0.0
      %3654 = vmatpush2.msra.mxu0 0.0
      %3655 = vmatprep.subr.mxu0 0.0
      %3656 = vmatpush2.msra.mxu0 0.0
      %3657 = vmatprep.subr.mxu0 0.0
      %3658 = vmatpush2.msra.mxu0 0.0
      %3659 = vmatprep.subr.mxu0 0.0
      %3660 = vmatpush2.msra.mxu0 0.0
      %3661 = vmatprep.subr.mxu0 0.0
      %3662 = vmatpush2.msra.mxu0 0.0
      %3663 = vmatprep.subr.mxu0 0.0
      %3664 = vmatpush2.msra.mxu0 0.0
      %3665 = vmatprep.subr.mxu0 0.0
      %3666 = vmatpush2.msra.mxu0 0.0
      %3667 = vmatprep.subr.mxu0 0.0
      %3668 = vmatpush2.msra.mxu0 0.0
      %3669 = vmatprep.subr.mxu0 0.0
      %3670 = vmatpush2.msra.mxu0 0.0
      %3671 = vmatprep.mubr.f32.mxu0 0.0
      %v3672 = vand.u32 %v3164, 4294901760
      %3673 = vmatmul.mubr.f32.gmra.mxu0 %v3672
      %v3674 = vpop.f32.mrf.mxu0
      %v3675 = vadd.f32 %v3568, %v3674
      %v3676 = vpop.f32.mrf.mxu0
      %3677 = vmatprep.mubr.f32.mxu0 0.0
      %v3678 = vand.u32 %v3167, 4294901760
      %3679 = vmatmul.mubr.f32.gmra.mxu0 %v3678
      %v3680 = vpop.f32.mrf.mxu0
      %v3681 = vadd.f32 %v3576, %v3680
      %v3682 = vpop.f32.mrf.mxu0
      %3683 = vmatprep.mubr.f32.mxu0 0.0
      %v3684 = vand.u32 %v3170, 4294901760
      %3685 = vmatmul.mubr.f32.gmra.mxu0 %v3684
      %v3686 = vpop.f32.mrf.mxu0
      %v3687 = vadd.f32 %v3584, %v3686
      %v3688 = vpop.f32.mrf.mxu0
      %3689 = vmatprep.mubr.f32.mxu0 0.0
      %v3690 = vand.u32 %v3173, 4294901760
      %3691 = vmatmul.mubr.f32.gmra.mxu0 %v3690
      %v3692 = vpop.f32.mrf.mxu0
      %v3693 = vadd.f32 %v3592, %v3692
      %v3694 = vpop.f32.mrf.mxu0
      %3695 = vdwg.mxu0
      %3696 = vmatprep.subr.mxu0 0.0
      %3697 = vmatpush1.msra.mxu0 0.0
      %3698 = vmatprep.subr.mxu0 0.0
      %3699 = vmatpush1.msra.mxu0 0.0
      %3700 = vmatprep.subr.mxu0 0.0
      %3701 = vmatpush1.msra.mxu0 0.0
      %3702 = vmatprep.subr.mxu0 0.0
      %3703 = vmatpush1.msra.mxu0 0.0
      %3704 = vmatprep.subr.mxu0 0.0
      %3705 = vmatpush1.msra.mxu0 0.0
      %3706 = vmatprep.subr.mxu0 0.0
      %3707 = vmatpush1.msra.mxu0 0.0
      %3708 = vmatprep.subr.mxu0 0.0
      %3709 = vmatpush1.msra.mxu0 0.0
      %3710 = vmatprep.subr.mxu0 0.0
      %3711 = vmatpush1.msra.mxu0 0.0
      %3712 = vmatprep.subr.mxu0 0.0
      %3713 = vmatpush1.msra.mxu0 0.0
      %3714 = vmatprep.subr.mxu0 0.0
      %3715 = vmatpush1.msra.mxu0 0.0
      %3716 = vmatprep.subr.mxu0 0.0
      %3717 = vmatpush1.msra.mxu0 0.0
      %3718 = vmatprep.subr.mxu0 0.0
      %3719 = vmatpush1.msra.mxu0 0.0
      %3720 = vmatprep.subr.mxu0 0.0
      %v3721 = vand.u32 %v1159, 4294901760
      %3722 = vmatpush1.msra.mxu0 %v3721
      %3723 = vmatprep.subr.mxu0 0.0
      %v3724 = vand.u32 %v1158, 4294901760
      %3725 = vmatpush1.msra.mxu0 %v3724
      %3726 = vmatprep.subr.mxu0 0.0
      %v3727 = vand.u32 %v1157, 4294901760
      %3728 = vmatpush1.msra.mxu0 %v3727
      %3729 = vmatprep.subr.mxu0 0.0
      %v3730 = vand.u32 %v1156, 4294901760
      %3731 = vmatpush1.msra.mxu0 %v3730
      %3732 = vmatprep.subr.mxu0 0.0
      %3733 = vmatpush2.msra.mxu0 0.0
      %3734 = vmatprep.subr.mxu0 0.0
      %3735 = vmatpush2.msra.mxu0 0.0
      %3736 = vmatprep.subr.mxu0 0.0
      %3737 = vmatpush2.msra.mxu0 0.0
      %3738 = vmatprep.subr.mxu0 0.0
      %3739 = vmatpush2.msra.mxu0 0.0
      %3740 = vmatprep.subr.mxu0 0.0
      %3741 = vmatpush2.msra.mxu0 0.0
      %3742 = vmatprep.subr.mxu0 0.0
      %3743 = vmatpush2.msra.mxu0 0.0
      %3744 = vmatprep.subr.mxu0 0.0
      %3745 = vmatpush2.msra.mxu0 0.0
      %3746 = vmatprep.subr.mxu0 0.0
      %3747 = vmatpush2.msra.mxu0 0.0
      %3748 = vmatprep.subr.mxu0 0.0
      %3749 = vmatpush2.msra.mxu0 0.0
      %3750 = vmatprep.subr.mxu0 0.0
      %3751 = vmatpush2.msra.mxu0 0.0
      %3752 = vmatprep.subr.mxu0 0.0
      %3753 = vmatpush2.msra.mxu0 0.0
      %3754 = vmatprep.subr.mxu0 0.0
      %3755 = vmatpush2.msra.mxu0 0.0
      %3756 = vmatprep.subr.mxu0 0.0
      %3757 = vmatpush2.msra.mxu0 0.0
      %3758 = vmatprep.subr.mxu0 0.0
      %3759 = vmatpush2.msra.mxu0 0.0
      %3760 = vmatprep.subr.mxu0 0.0
      %3761 = vmatpush2.msra.mxu0 0.0
      %3762 = vmatprep.subr.mxu0 0.0
      %3763 = vmatpush2.msra.mxu0 0.0
      %3764 = vmatprep.mubr.f32.mxu0 0.0
      %v3765 = vand.u32 %v3164, 4294901760
      %3766 = vmatmul.mubr.f32.gmra.mxu0 %v3765
      %v3767 = vpop.f32.mrf.mxu0
      %v3768 = vadd.f32 %v3675, %v3767
      %v3769 = vpop.f32.mrf.mxu0
      %3770 = vmatprep.mubr.f32.mxu0 0.0
      %v3771 = vand.u32 %v3167, 4294901760
      %3772 = vmatmul.mubr.f32.gmra.mxu0 %v3771
      %v3773 = vpop.f32.mrf.mxu0
      %v3774 = vadd.f32 %v3681, %v3773
      %v3775 = vpop.f32.mrf.mxu0
      %3776 = vmatprep.mubr.f32.mxu0 0.0
      %v3777 = vand.u32 %v3170, 4294901760
      %3778 = vmatmul.mubr.f32.gmra.mxu0 %v3777
      %v3779 = vpop.f32.mrf.mxu0
      %v3780 = vadd.f32 %v3687, %v3779
      %v3781 = vpop.f32.mrf.mxu0
      %3782 = vmatprep.mubr.f32.mxu0 0.0
      %v3783 = vand.u32 %v3173, 4294901760
      %3784 = vmatmul.mubr.f32.gmra.mxu0 %v3783
      %v3785 = vpop.f32.mrf.mxu0
      %v3786 = vadd.f32 %v3693, %v3785
      %v3787 = vpop.f32.mrf.mxu0
      %3788 = vdwg.mxu0
      %v3789 = vadd.f32 %v3155, %v3768
      %v3790 = vadd.f32 %v3156, %v3774
      %v3791 = vadd.f32 %v3157, %v3780
      %v3792 = vadd.f32 %v3158, %v3786
      %3794 = vset.pattern.permute.xlu0 0
      %3795 = vperm.xlu0 %3794, %v1164
      %v3796 = vpop.permute.xlu0 %3795
      %3799 = vset.pattern.permute.xlu0 0
      %3800 = vperm.xlu0 %3799, %v1165
      %v3801 = vpop.permute.xlu0 %3800
      %3804 = vset.pattern.permute.xlu0 0
      %3805 = vperm.xlu0 %3804, %v1166
      %v3806 = vpop.permute.xlu0 %3805
      %3809 = vset.pattern.permute.xlu0 0
      %3810 = vperm.xlu0 %3809, %v1167
      %v3811 = vpop.permute.xlu0 %3810
      %v3813 = vadd.f32 %v3789, %v3796
      %v3814 = vadd.f32 %v3790, %v3801
      %v3815 = vadd.f32 %v3791, %v3806
      %v3816 = vadd.f32 %v3792, %v3811
      %v3817 = vld [vmem:[%s4 + $0xc0] sm:$0xff]
      %v3818 = vld [vmem:[%s4 + $0xc8] sm:$0xff]
      %v3819 = vld [vmem:[%s4 + $0xd0] sm:$0xff]
      %v3820 = vld [vmem:[%s4 + $0xd8] sm:$0xff]
      %v3821 = vmax.f32 %v3813, 0.0
      %v3822 = vmax.f32 %v3814, 0.0
      %v3823 = vmax.f32 %v3815, 0.0
      %v3824 = vmax.f32 %v3816, 0.0
      %v3825 = vld [vmem:[%s5 + $0x20] sm:$0xff]
      %v3826 = vld [vmem:[%s5 + $0x28] sm:$0xff]
      %v3827 = vld [vmem:[%s5 + $0x30] sm:$0xff]
      %v3828 = vld [vmem:[%s5 + $0x38] sm:$0xff]
      %3830 = vset.pattern.permute.xlu0 0
      %3831 = vperm.xlu0 %3830, %v3825
      %v3832 = vpop.permute.xlu0 %3831
      %3835 = vset.pattern.permute.xlu0 0
      %3836 = vperm.xlu0 %3835, %v3826
      %v3837 = vpop.permute.xlu0 %3836
      %3840 = vset.pattern.permute.xlu0 0
      %3841 = vperm.xlu0 %3840, %v3827
      %v3842 = vpop.permute.xlu0 %3841
      %3845 = vset.pattern.permute.xlu0 0
      %3846 = vperm.xlu0 %3845, %v3828
      %v3847 = vpop.permute.xlu0 %3846
      %v3850 = vsel %vm1184, %v3817, 0
      %v3853 = vsel %vm1184, %v3818, 0
      %v3856 = vsel %vm1184, %v3819, 0
      %v3859 = vsel %vm1184, %v3820, 0
      %3861 = vmatprep.subr.mxu0 0.0
      %3862 = vmatpush1.msra.mxu0 0.0
      %3863 = vmatprep.subr.mxu0 0.0
      %3864 = vmatpush1.msra.mxu0 0.0
      %3865 = vmatprep.subr.mxu0 0.0
      %3866 = vmatpush1.msra.mxu0 0.0
      %3867 = vmatprep.subr.mxu0 0.0
      %3868 = vmatpush1.msra.mxu0 0.0
      %3869 = vmatprep.subr.mxu0 0.0
      %3870 = vmatpush1.msra.mxu0 0.0
      %3871 = vmatprep.subr.mxu0 0.0
      %3872 = vmatpush1.msra.mxu0 0.0
      %3873 = vmatprep.subr.mxu0 0.0
      %3874 = vmatpush1.msra.mxu0 0.0
      %3875 = vmatprep.subr.mxu0 0.0
      %3876 = vmatpush1.msra.mxu0 0.0
      %3877 = vmatprep.subr.mxu0 0.0
      %3878 = vmatpush1.msra.mxu0 0.0
      %3879 = vmatprep.subr.mxu0 0.0
      %3880 = vmatpush1.msra.mxu0 0.0
      %3881 = vmatprep.subr.mxu0 0.0
      %3882 = vmatpush1.msra.mxu0 0.0
      %3883 = vmatprep.subr.mxu0 0.0
      %3884 = vmatpush1.msra.mxu0 0.0
      %3885 = vmatprep.subr.mxu0 0.0
      %v3886 = vand.u32 %v3824, 4294901760
      %3887 = vmatpush1.msra.mxu0 %v3886
      %3888 = vmatprep.subr.mxu0 0.0
      %v3889 = vand.u32 %v3823, 4294901760
      %3890 = vmatpush1.msra.mxu0 %v3889
      %3891 = vmatprep.subr.mxu0 0.0
      %v3892 = vand.u32 %v3822, 4294901760
      %3893 = vmatpush1.msra.mxu0 %v3892
      %3894 = vmatprep.subr.mxu0 0.0
      %v3895 = vand.u32 %v3821, 4294901760
      %3896 = vmatpush1.msra.mxu0 %v3895
      %3897 = vmatprep.subr.mxu0 0.0
      %3898 = vmatpush2.msra.mxu0 0.0
      %3899 = vmatprep.subr.mxu0 0.0
      %3900 = vmatpush2.msra.mxu0 0.0
      %3901 = vmatprep.subr.mxu0 0.0
      %3902 = vmatpush2.msra.mxu0 0.0
      %3903 = vmatprep.subr.mxu0 0.0
      %3904 = vmatpush2.msra.mxu0 0.0
      %3905 = vmatprep.subr.mxu0 0.0
      %3906 = vmatpush2.msra.mxu0 0.0
      %3907 = vmatprep.subr.mxu0 0.0
      %3908 = vmatpush2.msra.mxu0 0.0
      %3909 = vmatprep.subr.mxu0 0.0
      %3910 = vmatpush2.msra.mxu0 0.0
      %3911 = vmatprep.subr.mxu0 0.0
      %3912 = vmatpush2.msra.mxu0 0.0
      %3913 = vmatprep.subr.mxu0 0.0
      %3914 = vmatpush2.msra.mxu0 0.0
      %3915 = vmatprep.subr.mxu0 0.0
      %3916 = vmatpush2.msra.mxu0 0.0
      %3917 = vmatprep.subr.mxu0 0.0
      %3918 = vmatpush2.msra.mxu0 0.0
      %3919 = vmatprep.subr.mxu0 0.0
      %3920 = vmatpush2.msra.mxu0 0.0
      %3921 = vmatprep.subr.mxu0 0.0
      %3922 = vmatpush2.msra.mxu0 0.0
      %3923 = vmatprep.subr.mxu0 0.0
      %3924 = vmatpush2.msra.mxu0 0.0
      %3925 = vmatprep.subr.mxu0 0.0
      %3926 = vmatpush2.msra.mxu0 0.0
      %3927 = vmatprep.subr.mxu0 0.0
      %3928 = vmatpush2.msra.mxu0 0.0
      %3929 = vmatprep.mubr.f32.mxu0 0.0
      %v3930 = vand.u32 %v3850, 4294901760
      %v3931 = vsub.f32 %v3850, %v3930
      %v3932 = vand.u32 %v3931, 4294901760
      %v3933 = vsub.f32 %v3931, %v3932
      %v3934 = vand.u32 %v3933, 4294901760
      %3935 = vmatmul.mubr.f32.gmra.mxu0 %v3934
      %v3936 = vpop.f32.mrf.mxu0
      %v3937 = vadd.f32 %v3832, %v3936
      %v3938 = vpop.f32.mrf.mxu0
      %3939 = vmatprep.mubr.f32.mxu0 0.0
      %v3940 = vand.u32 %v3853, 4294901760
      %v3941 = vsub.f32 %v3853, %v3940
      %v3942 = vand.u32 %v3941, 4294901760
      %v3943 = vsub.f32 %v3941, %v3942
      %v3944 = vand.u32 %v3943, 4294901760
      %3945 = vmatmul.mubr.f32.gmra.mxu0 %v3944
      %v3946 = vpop.f32.mrf.mxu0
      %v3947 = vadd.f32 %v3837, %v3946
      %v3948 = vpop.f32.mrf.mxu0
      %3949 = vmatprep.mubr.f32.mxu0 0.0
      %v3950 = vand.u32 %v3856, 4294901760
      %v3951 = vsub.f32 %v3856, %v3950
      %v3952 = vand.u32 %v3951, 4294901760
      %v3953 = vsub.f32 %v3951, %v3952
      %v3954 = vand.u32 %v3953, 4294901760
      %3955 = vmatmul.mubr.f32.gmra.mxu0 %v3954
      %v3956 = vpop.f32.mrf.mxu0
      %v3957 = vadd.f32 %v3842, %v3956
      %v3958 = vpop.f32.mrf.mxu0
      %3959 = vmatprep.mubr.f32.mxu0 0.0
      %v3960 = vand.u32 %v3859, 4294901760
      %v3961 = vsub.f32 %v3859, %v3960
      %v3962 = vand.u32 %v3961, 4294901760
      %v3963 = vsub.f32 %v3961, %v3962
      %v3964 = vand.u32 %v3963, 4294901760
      %3965 = vmatmul.mubr.f32.gmra.mxu0 %v3964
      %v3966 = vpop.f32.mrf.mxu0
      %v3967 = vadd.f32 %v3847, %v3966
      %v3968 = vpop.f32.mrf.mxu0
      %3969 = vdwg.mxu0
      %3970 = vmatprep.subr.mxu0 0.0
      %3971 = vmatpush1.msra.mxu0 0.0
      %3972 = vmatprep.subr.mxu0 0.0
      %3973 = vmatpush1.msra.mxu0 0.0
      %3974 = vmatprep.subr.mxu0 0.0
      %3975 = vmatpush1.msra.mxu0 0.0
      %3976 = vmatprep.subr.mxu0 0.0
      %3977 = vmatpush1.msra.mxu0 0.0
      %3978 = vmatprep.subr.mxu0 0.0
      %3979 = vmatpush1.msra.mxu0 0.0
      %3980 = vmatprep.subr.mxu0 0.0
      %3981 = vmatpush1.msra.mxu0 0.0
      %3982 = vmatprep.subr.mxu0 0.0
      %3983 = vmatpush1.msra.mxu0 0.0
      %3984 = vmatprep.subr.mxu0 0.0
      %3985 = vmatpush1.msra.mxu0 0.0
      %3986 = vmatprep.subr.mxu0 0.0
      %3987 = vmatpush1.msra.mxu0 0.0
      %3988 = vmatprep.subr.mxu0 0.0
      %3989 = vmatpush1.msra.mxu0 0.0
      %3990 = vmatprep.subr.mxu0 0.0
      %3991 = vmatpush1.msra.mxu0 0.0
      %3992 = vmatprep.subr.mxu0 0.0
      %3993 = vmatpush1.msra.mxu0 0.0
      %3994 = vmatprep.subr.mxu0 0.0
      %v3995 = vand.u32 %v3824, 4294901760
      %v3996 = vsub.f32 %v3824, %v3995
      %v3997 = vand.u32 %v3996, 4294901760
      %v3998 = vsub.f32 %v3996, %v3997
      %v3999 = vand.u32 %v3998, 4294901760
      %4000 = vmatpush1.msra.mxu0 %v3999
      %4001 = vmatprep.subr.mxu0 0.0
      %v4002 = vand.u32 %v3823, 4294901760
      %v4003 = vsub.f32 %v3823, %v4002
      %v4004 = vand.u32 %v4003, 4294901760
      %v4005 = vsub.f32 %v4003, %v4004
      %v4006 = vand.u32 %v4005, 4294901760
      %4007 = vmatpush1.msra.mxu0 %v4006
      %4008 = vmatprep.subr.mxu0 0.0
      %v4009 = vand.u32 %v3822, 4294901760
      %v4010 = vsub.f32 %v3822, %v4009
      %v4011 = vand.u32 %v4010, 4294901760
      %v4012 = vsub.f32 %v4010, %v4011
      %v4013 = vand.u32 %v4012, 4294901760
      %4014 = vmatpush1.msra.mxu0 %v4013
      %4015 = vmatprep.subr.mxu0 0.0
      %v4016 = vand.u32 %v3821, 4294901760
      %v4017 = vsub.f32 %v3821, %v4016
      %v4018 = vand.u32 %v4017, 4294901760
      %v4019 = vsub.f32 %v4017, %v4018
      %v4020 = vand.u32 %v4019, 4294901760
      %4021 = vmatpush1.msra.mxu0 %v4020
      %4022 = vmatprep.subr.mxu0 0.0
      %4023 = vmatpush2.msra.mxu0 0.0
      %4024 = vmatprep.subr.mxu0 0.0
      %4025 = vmatpush2.msra.mxu0 0.0
      %4026 = vmatprep.subr.mxu0 0.0
      %4027 = vmatpush2.msra.mxu0 0.0
      %4028 = vmatprep.subr.mxu0 0.0
      %4029 = vmatpush2.msra.mxu0 0.0
      %4030 = vmatprep.subr.mxu0 0.0
      %4031 = vmatpush2.msra.mxu0 0.0
      %4032 = vmatprep.subr.mxu0 0.0
      %4033 = vmatpush2.msra.mxu0 0.0
      %4034 = vmatprep.subr.mxu0 0.0
      %4035 = vmatpush2.msra.mxu0 0.0
      %4036 = vmatprep.subr.mxu0 0.0
      %4037 = vmatpush2.msra.mxu0 0.0
      %4038 = vmatprep.subr.mxu0 0.0
      %4039 = vmatpush2.msra.mxu0 0.0
      %4040 = vmatprep.subr.mxu0 0.0
      %4041 = vmatpush2.msra.mxu0 0.0
      %4042 = vmatprep.subr.mxu0 0.0
      %4043 = vmatpush2.msra.mxu0 0.0
      %4044 = vmatprep.subr.mxu0 0.0
      %4045 = vmatpush2.msra.mxu0 0.0
      %4046 = vmatprep.subr.mxu0 0.0
      %4047 = vmatpush2.msra.mxu0 0.0
      %4048 = vmatprep.subr.mxu0 0.0
      %4049 = vmatpush2.msra.mxu0 0.0
      %4050 = vmatprep.subr.mxu0 0.0
      %4051 = vmatpush2.msra.mxu0 0.0
      %4052 = vmatprep.subr.mxu0 0.0
      %4053 = vmatpush2.msra.mxu0 0.0
      %4054 = vmatprep.mubr.f32.mxu0 0.0
      %v4055 = vand.u32 %v3850, 4294901760
      %4056 = vmatmul.mubr.f32.gmra.mxu0 %v4055
      %v4057 = vpop.f32.mrf.mxu0
      %v4058 = vadd.f32 %v3937, %v4057
      %v4059 = vpop.f32.mrf.mxu0
      %4060 = vmatprep.mubr.f32.mxu0 0.0
      %v4061 = vand.u32 %v3853, 4294901760
      %4062 = vmatmul.mubr.f32.gmra.mxu0 %v4061
      %v4063 = vpop.f32.mrf.mxu0
      %v4064 = vadd.f32 %v3947, %v4063
      %v4065 = vpop.f32.mrf.mxu0
      %4066 = vmatprep.mubr.f32.mxu0 0.0
      %v4067 = vand.u32 %v3856, 4294901760
      %4068 = vmatmul.mubr.f32.gmra.mxu0 %v4067
      %v4069 = vpop.f32.mrf.mxu0
      %v4070 = vadd.f32 %v3957, %v4069
      %v4071 = vpop.f32.mrf.mxu0
      %4072 = vmatprep.mubr.f32.mxu0 0.0
      %v4073 = vand.u32 %v3859, 4294901760
      %4074 = vmatmul.mubr.f32.gmra.mxu0 %v4073
      %v4075 = vpop.f32.mrf.mxu0
      %v4076 = vadd.f32 %v3967, %v4075
      %v4077 = vpop.f32.mrf.mxu0
      %4078 = vdwg.mxu0
      %4079 = vmatprep.subr.mxu0 0.0
      %4080 = vmatpush1.msra.mxu0 0.0
      %4081 = vmatprep.subr.mxu0 0.0
      %4082 = vmatpush1.msra.mxu0 0.0
      %4083 = vmatprep.subr.mxu0 0.0
      %4084 = vmatpush1.msra.mxu0 0.0
      %4085 = vmatprep.subr.mxu0 0.0
      %4086 = vmatpush1.msra.mxu0 0.0
      %4087 = vmatprep.subr.mxu0 0.0
      %4088 = vmatpush1.msra.mxu0 0.0
      %4089 = vmatprep.subr.mxu0 0.0
      %4090 = vmatpush1.msra.mxu0 0.0
      %4091 = vmatprep.subr.mxu0 0.0
      %4092 = vmatpush1.msra.mxu0 0.0
      %4093 = vmatprep.subr.mxu0 0.0
      %4094 = vmatpush1.msra.mxu0 0.0
      %4095 = vmatprep.subr.mxu0 0.0
      %4096 = vmatpush1.msra.mxu0 0.0
      %4097 = vmatprep.subr.mxu0 0.0
      %4098 = vmatpush1.msra.mxu0 0.0
      %4099 = vmatprep.subr.mxu0 0.0
      %4100 = vmatpush1.msra.mxu0 0.0
      %4101 = vmatprep.subr.mxu0 0.0
      %4102 = vmatpush1.msra.mxu0 0.0
      %4103 = vmatprep.subr.mxu0 0.0
      %v4104 = vand.u32 %v3824, 4294901760
      %v4105 = vsub.f32 %v3824, %v4104
      %4106 = vmatpush1.msra.mxu0 %v4105
      %4107 = vmatprep.subr.mxu0 0.0
      %v4108 = vand.u32 %v3823, 4294901760
      %v4109 = vsub.f32 %v3823, %v4108
      %4110 = vmatpush1.msra.mxu0 %v4109
      %4111 = vmatprep.subr.mxu0 0.0
      %v4112 = vand.u32 %v3822, 4294901760
      %v4113 = vsub.f32 %v3822, %v4112
      %4114 = vmatpush1.msra.mxu0 %v4113
      %4115 = vmatprep.subr.mxu0 0.0
      %v4116 = vand.u32 %v3821, 4294901760
      %v4117 = vsub.f32 %v3821, %v4116
      %4118 = vmatpush1.msra.mxu0 %v4117
      %4119 = vmatprep.subr.mxu0 0.0
      %4120 = vmatpush2.msra.mxu0 0.0
      %4121 = vmatprep.subr.mxu0 0.0
      %4122 = vmatpush2.msra.mxu0 0.0
      %4123 = vmatprep.subr.mxu0 0.0
      %4124 = vmatpush2.msra.mxu0 0.0
      %4125 = vmatprep.subr.mxu0 0.0
      %4126 = vmatpush2.msra.mxu0 0.0
      %4127 = vmatprep.subr.mxu0 0.0
      %4128 = vmatpush2.msra.mxu0 0.0
      %4129 = vmatprep.subr.mxu0 0.0
      %4130 = vmatpush2.msra.mxu0 0.0
      %4131 = vmatprep.subr.mxu0 0.0
      %4132 = vmatpush2.msra.mxu0 0.0
      %4133 = vmatprep.subr.mxu0 0.0
      %4134 = vmatpush2.msra.mxu0 0.0
      %4135 = vmatprep.subr.mxu0 0.0
      %4136 = vmatpush2.msra.mxu0 0.0
      %4137 = vmatprep.subr.mxu0 0.0
      %4138 = vmatpush2.msra.mxu0 0.0
      %4139 = vmatprep.subr.mxu0 0.0
      %4140 = vmatpush2.msra.mxu0 0.0
      %4141 = vmatprep.subr.mxu0 0.0
      %4142 = vmatpush2.msra.mxu0 0.0
      %4143 = vmatprep.subr.mxu0 0.0
      %4144 = vmatpush2.msra.mxu0 0.0
      %4145 = vmatprep.subr.mxu0 0.0
      %4146 = vmatpush2.msra.mxu0 0.0
      %4147 = vmatprep.subr.mxu0 0.0
      %4148 = vmatpush2.msra.mxu0 0.0
      %4149 = vmatprep.subr.mxu0 0.0
      %4150 = vmatpush2.msra.mxu0 0.0
      %4151 = vmatprep.mubr.f32.mxu0 0.0
      %v4152 = vand.u32 %v3850, 4294901760
      %v4153 = vsub.f32 %v3850, %v4152
      %4154 = vmatmul.mubr.f32.gmra.mxu0 %v4153
      %v4155 = vpop.f32.mrf.mxu0
      %v4156 = vadd.f32 %v4058, %v4155
      %v4157 = vpop.f32.mrf.mxu0
      %4158 = vmatprep.mubr.f32.mxu0 0.0
      %v4159 = vand.u32 %v3853, 4294901760
      %v4160 = vsub.f32 %v3853, %v4159
      %4161 = vmatmul.mubr.f32.gmra.mxu0 %v4160
      %v4162 = vpop.f32.mrf.mxu0
      %v4163 = vadd.f32 %v4064, %v4162
      %v4164 = vpop.f32.mrf.mxu0
      %4165 = vmatprep.mubr.f32.mxu0 0.0
      %v4166 = vand.u32 %v3856, 4294901760
      %v4167 = vsub.f32 %v3856, %v4166
      %4168 = vmatmul.mubr.f32.gmra.mxu0 %v4167
      %v4169 = vpop.f32.mrf.mxu0
      %v4170 = vadd.f32 %v4070, %v4169
      %v4171 = vpop.f32.mrf.mxu0
      %4172 = vmatprep.mubr.f32.mxu0 0.0
      %v4173 = vand.u32 %v3859, 4294901760
      %v4174 = vsub.f32 %v3859, %v4173
      %4175 = vmatmul.mubr.f32.gmra.mxu0 %v4174
      %v4176 = vpop.f32.mrf.mxu0
      %v4177 = vadd.f32 %v4076, %v4176
      %v4178 = vpop.f32.mrf.mxu0
      %4179 = vdwg.mxu0
      %4180 = vmatprep.subr.mxu0 0.0
      %4181 = vmatpush1.msra.mxu0 0.0
      %4182 = vmatprep.subr.mxu0 0.0
      %4183 = vmatpush1.msra.mxu0 0.0
      %4184 = vmatprep.subr.mxu0 0.0
      %4185 = vmatpush1.msra.mxu0 0.0
      %4186 = vmatprep.subr.mxu0 0.0
      %4187 = vmatpush1.msra.mxu0 0.0
      %4188 = vmatprep.subr.mxu0 0.0
      %4189 = vmatpush1.msra.mxu0 0.0
      %4190 = vmatprep.subr.mxu0 0.0
      %4191 = vmatpush1.msra.mxu0 0.0
      %4192 = vmatprep.subr.mxu0 0.0
      %4193 = vmatpush1.msra.mxu0 0.0
      %4194 = vmatprep.subr.mxu0 0.0
      %4195 = vmatpush1.msra.mxu0 0.0
      %4196 = vmatprep.subr.mxu0 0.0
      %4197 = vmatpush1.msra.mxu0 0.0
      %4198 = vmatprep.subr.mxu0 0.0
      %4199 = vmatpush1.msra.mxu0 0.0
      %4200 = vmatprep.subr.mxu0 0.0
      %4201 = vmatpush1.msra.mxu0 0.0
      %4202 = vmatprep.subr.mxu0 0.0
      %4203 = vmatpush1.msra.mxu0 0.0
      %4204 = vmatprep.subr.mxu0 0.0
      %v4205 = vand.u32 %v3824, 4294901760
      %4206 = vmatpush1.msra.mxu0 %v4205
      %4207 = vmatprep.subr.mxu0 0.0
      %v4208 = vand.u32 %v3823, 4294901760
      %4209 = vmatpush1.msra.mxu0 %v4208
      %4210 = vmatprep.subr.mxu0 0.0
      %v4211 = vand.u32 %v3822, 4294901760
      %4212 = vmatpush1.msra.mxu0 %v4211
      %4213 = vmatprep.subr.mxu0 0.0
      %v4214 = vand.u32 %v3821, 4294901760
      %4215 = vmatpush1.msra.mxu0 %v4214
      %4216 = vmatprep.subr.mxu0 0.0
      %4217 = vmatpush2.msra.mxu0 0.0
      %4218 = vmatprep.subr.mxu0 0.0
      %4219 = vmatpush2.msra.mxu0 0.0
      %4220 = vmatprep.subr.mxu0 0.0
      %4221 = vmatpush2.msra.mxu0 0.0
      %4222 = vmatprep.subr.mxu0 0.0
      %4223 = vmatpush2.msra.mxu0 0.0
      %4224 = vmatprep.subr.mxu0 0.0
      %4225 = vmatpush2.msra.mxu0 0.0
      %4226 = vmatprep.subr.mxu0 0.0
      %4227 = vmatpush2.msra.mxu0 0.0
      %4228 = vmatprep.subr.mxu0 0.0
      %4229 = vmatpush2.msra.mxu0 0.0
      %4230 = vmatprep.subr.mxu0 0.0
      %4231 = vmatpush2.msra.mxu0 0.0
      %4232 = vmatprep.subr.mxu0 0.0
      %4233 = vmatpush2.msra.mxu0 0.0
      %4234 = vmatprep.subr.mxu0 0.0
      %4235 = vmatpush2.msra.mxu0 0.0
      %4236 = vmatprep.subr.mxu0 0.0
      %4237 = vmatpush2.msra.mxu0 0.0
      %4238 = vmatprep.subr.mxu0 0.0
      %4239 = vmatpush2.msra.mxu0 0.0
      %4240 = vmatprep.subr.mxu0 0.0
      %4241 = vmatpush2.msra.mxu0 0.0
      %4242 = vmatprep.subr.mxu0 0.0
      %4243 = vmatpush2.msra.mxu0 0.0
      %4244 = vmatprep.subr.mxu0 0.0
      %4245 = vmatpush2.msra.mxu0 0.0
      %4246 = vmatprep.subr.mxu0 0.0
      %4247 = vmatpush2.msra.mxu0 0.0
      %4248 = vmatprep.mubr.f32.mxu0 0.0
      %v4249 = vand.u32 %v3850, 4294901760
      %v4250 = vsub.f32 %v3850, %v4249
      %v4251 = vand.u32 %v4250, 4294901760
      %4252 = vmatmul.mubr.f32.gmra.mxu0 %v4251
      %v4253 = vpop.f32.mrf.mxu0
      %v4254 = vadd.f32 %v4156, %v4253
      %v4255 = vpop.f32.mrf.mxu0
      %4256 = vmatprep.mubr.f32.mxu0 0.0
      %v4257 = vand.u32 %v3853, 4294901760
      %v4258 = vsub.f32 %v3853, %v4257
      %v4259 = vand.u32 %v4258, 4294901760
      %4260 = vmatmul.mubr.f32.gmra.mxu0 %v4259
      %v4261 = vpop.f32.mrf.mxu0
      %v4262 = vadd.f32 %v4163, %v4261
      %v4263 = vpop.f32.mrf.mxu0
      %4264 = vmatprep.mubr.f32.mxu0 0.0
      %v4265 = vand.u32 %v3856, 4294901760
      %v4266 = vsub.f32 %v3856, %v4265
      %v4267 = vand.u32 %v4266, 4294901760
      %4268 = vmatmul.mubr.f32.gmra.mxu0 %v4267
      %v4269 = vpop.f32.mrf.mxu0
      %v4270 = vadd.f32 %v4170, %v4269
      %v4271 = vpop.f32.mrf.mxu0
      %4272 = vmatprep.mubr.f32.mxu0 0.0
      %v4273 = vand.u32 %v3859, 4294901760
      %v4274 = vsub.f32 %v3859, %v4273
      %v4275 = vand.u32 %v4274, 4294901760
      %4276 = vmatmul.mubr.f32.gmra.mxu0 %v4275
      %v4277 = vpop.f32.mrf.mxu0
      %v4278 = vadd.f32 %v4177, %v4277
      %v4279 = vpop.f32.mrf.mxu0
      %4280 = vdwg.mxu0
      %4281 = vmatprep.subr.mxu0 0.0
      %4282 = vmatpush1.msra.mxu0 0.0
      %4283 = vmatprep.subr.mxu0 0.0
      %4284 = vmatpush1.msra.mxu0 0.0
      %4285 = vmatprep.subr.mxu0 0.0
      %4286 = vmatpush1.msra.mxu0 0.0
      %4287 = vmatprep.subr.mxu0 0.0
      %4288 = vmatpush1.msra.mxu0 0.0
      %4289 = vmatprep.subr.mxu0 0.0
      %4290 = vmatpush1.msra.mxu0 0.0
      %4291 = vmatprep.subr.mxu0 0.0
      %4292 = vmatpush1.msra.mxu0 0.0
      %4293 = vmatprep.subr.mxu0 0.0
      %4294 = vmatpush1.msra.mxu0 0.0
      %4295 = vmatprep.subr.mxu0 0.0
      %4296 = vmatpush1.msra.mxu0 0.0
      %4297 = vmatprep.subr.mxu0 0.0
      %4298 = vmatpush1.msra.mxu0 0.0
      %4299 = vmatprep.subr.mxu0 0.0
      %4300 = vmatpush1.msra.mxu0 0.0
      %4301 = vmatprep.subr.mxu0 0.0
      %4302 = vmatpush1.msra.mxu0 0.0
      %4303 = vmatprep.subr.mxu0 0.0
      %4304 = vmatpush1.msra.mxu0 0.0
      %4305 = vmatprep.subr.mxu0 0.0
      %v4306 = vand.u32 %v3824, 4294901760
      %v4307 = vsub.f32 %v3824, %v4306
      %v4308 = vand.u32 %v4307, 4294901760
      %4309 = vmatpush1.msra.mxu0 %v4308
      %4310 = vmatprep.subr.mxu0 0.0
      %v4311 = vand.u32 %v3823, 4294901760
      %v4312 = vsub.f32 %v3823, %v4311
      %v4313 = vand.u32 %v4312, 4294901760
      %4314 = vmatpush1.msra.mxu0 %v4313
      %4315 = vmatprep.subr.mxu0 0.0
      %v4316 = vand.u32 %v3822, 4294901760
      %v4317 = vsub.f32 %v3822, %v4316
      %v4318 = vand.u32 %v4317, 4294901760
      %4319 = vmatpush1.msra.mxu0 %v4318
      %4320 = vmatprep.subr.mxu0 0.0
      %v4321 = vand.u32 %v3821, 4294901760
      %v4322 = vsub.f32 %v3821, %v4321
      %v4323 = vand.u32 %v4322, 4294901760
      %4324 = vmatpush1.msra.mxu0 %v4323
      %4325 = vmatprep.subr.mxu0 0.0
      %4326 = vmatpush2.msra.mxu0 0.0
      %4327 = vmatprep.subr.mxu0 0.0
      %4328 = vmatpush2.msra.mxu0 0.0
      %4329 = vmatprep.subr.mxu0 0.0
      %4330 = vmatpush2.msra.mxu0 0.0
      %4331 = vmatprep.subr.mxu0 0.0
      %4332 = vmatpush2.msra.mxu0 0.0
      %4333 = vmatprep.subr.mxu0 0.0
      %4334 = vmatpush2.msra.mxu0 0.0
      %4335 = vmatprep.subr.mxu0 0.0
      %4336 = vmatpush2.msra.mxu0 0.0
      %4337 = vmatprep.subr.mxu0 0.0
      %4338 = vmatpush2.msra.mxu0 0.0
      %4339 = vmatprep.subr.mxu0 0.0
      %4340 = vmatpush2.msra.mxu0 0.0
      %4341 = vmatprep.subr.mxu0 0.0
      %4342 = vmatpush2.msra.mxu0 0.0
      %4343 = vmatprep.subr.mxu0 0.0
      %4344 = vmatpush2.msra.mxu0 0.0
      %4345 = vmatprep.subr.mxu0 0.0
      %4346 = vmatpush2.msra.mxu0 0.0
      %4347 = vmatprep.subr.mxu0 0.0
      %4348 = vmatpush2.msra.mxu0 0.0
      %4349 = vmatprep.subr.mxu0 0.0
      %4350 = vmatpush2.msra.mxu0 0.0
      %4351 = vmatprep.subr.mxu0 0.0
      %4352 = vmatpush2.msra.mxu0 0.0
      %4353 = vmatprep.subr.mxu0 0.0
      %4354 = vmatpush2.msra.mxu0 0.0
      %4355 = vmatprep.subr.mxu0 0.0
      %4356 = vmatpush2.msra.mxu0 0.0
      %4357 = vmatprep.mubr.f32.mxu0 0.0
      %v4358 = vand.u32 %v3850, 4294901760
      %4359 = vmatmul.mubr.f32.gmra.mxu0 %v4358
      %v4360 = vpop.f32.mrf.mxu0
      %v4361 = vadd.f32 %v4254, %v4360
      %v4362 = vpop.f32.mrf.mxu0
      %4363 = vmatprep.mubr.f32.mxu0 0.0
      %v4364 = vand.u32 %v3853, 4294901760
      %4365 = vmatmul.mubr.f32.gmra.mxu0 %v4364
      %v4366 = vpop.f32.mrf.mxu0
      %v4367 = vadd.f32 %v4262, %v4366
      %v4368 = vpop.f32.mrf.mxu0
      %4369 = vmatprep.mubr.f32.mxu0 0.0
      %v4370 = vand.u32 %v3856, 4294901760
      %4371 = vmatmul.mubr.f32.gmra.mxu0 %v4370
      %v4372 = vpop.f32.mrf.mxu0
      %v4373 = vadd.f32 %v4270, %v4372
      %v4374 = vpop.f32.mrf.mxu0
      %4375 = vmatprep.mubr.f32.mxu0 0.0
      %v4376 = vand.u32 %v3859, 4294901760
      %4377 = vmatmul.mubr.f32.gmra.mxu0 %v4376
      %v4378 = vpop.f32.mrf.mxu0
      %v4379 = vadd.f32 %v4278, %v4378
      %v4380 = vpop.f32.mrf.mxu0
      %4381 = vdwg.mxu0
      %4382 = vmatprep.subr.mxu0 0.0
      %4383 = vmatpush1.msra.mxu0 0.0
      %4384 = vmatprep.subr.mxu0 0.0
      %4385 = vmatpush1.msra.mxu0 0.0
      %4386 = vmatprep.subr.mxu0 0.0
      %4387 = vmatpush1.msra.mxu0 0.0
      %4388 = vmatprep.subr.mxu0 0.0
      %4389 = vmatpush1.msra.mxu0 0.0
      %4390 = vmatprep.subr.mxu0 0.0
      %4391 = vmatpush1.msra.mxu0 0.0
      %4392 = vmatprep.subr.mxu0 0.0
      %4393 = vmatpush1.msra.mxu0 0.0
      %4394 = vmatprep.subr.mxu0 0.0
      %4395 = vmatpush1.msra.mxu0 0.0
      %4396 = vmatprep.subr.mxu0 0.0
      %4397 = vmatpush1.msra.mxu0 0.0
      %4398 = vmatprep.subr.mxu0 0.0
      %4399 = vmatpush1.msra.mxu0 0.0
      %4400 = vmatprep.subr.mxu0 0.0
      %4401 = vmatpush1.msra.mxu0 0.0
      %4402 = vmatprep.subr.mxu0 0.0
      %4403 = vmatpush1.msra.mxu0 0.0
      %4404 = vmatprep.subr.mxu0 0.0
      %4405 = vmatpush1.msra.mxu0 0.0
      %4406 = vmatprep.subr.mxu0 0.0
      %v4407 = vand.u32 %v3824, 4294901760
      %4408 = vmatpush1.msra.mxu0 %v4407
      %4409 = vmatprep.subr.mxu0 0.0
      %v4410 = vand.u32 %v3823, 4294901760
      %4411 = vmatpush1.msra.mxu0 %v4410
      %4412 = vmatprep.subr.mxu0 0.0
      %v4413 = vand.u32 %v3822, 4294901760
      %4414 = vmatpush1.msra.mxu0 %v4413
      %4415 = vmatprep.subr.mxu0 0.0
      %v4416 = vand.u32 %v3821, 4294901760
      %4417 = vmatpush1.msra.mxu0 %v4416
      %4418 = vmatprep.subr.mxu0 0.0
      %4419 = vmatpush2.msra.mxu0 0.0
      %4420 = vmatprep.subr.mxu0 0.0
      %4421 = vmatpush2.msra.mxu0 0.0
      %4422 = vmatprep.subr.mxu0 0.0
      %4423 = vmatpush2.msra.mxu0 0.0
      %4424 = vmatprep.subr.mxu0 0.0
      %4425 = vmatpush2.msra.mxu0 0.0
      %4426 = vmatprep.subr.mxu0 0.0
      %4427 = vmatpush2.msra.mxu0 0.0
      %4428 = vmatprep.subr.mxu0 0.0
      %4429 = vmatpush2.msra.mxu0 0.0
      %4430 = vmatprep.subr.mxu0 0.0
      %4431 = vmatpush2.msra.mxu0 0.0
      %4432 = vmatprep.subr.mxu0 0.0
      %4433 = vmatpush2.msra.mxu0 0.0
      %4434 = vmatprep.subr.mxu0 0.0
      %4435 = vmatpush2.msra.mxu0 0.0
      %4436 = vmatprep.subr.mxu0 0.0
      %4437 = vmatpush2.msra.mxu0 0.0
      %4438 = vmatprep.subr.mxu0 0.0
      %4439 = vmatpush2.msra.mxu0 0.0
      %4440 = vmatprep.subr.mxu0 0.0
      %4441 = vmatpush2.msra.mxu0 0.0
      %4442 = vmatprep.subr.mxu0 0.0
      %4443 = vmatpush2.msra.mxu0 0.0
      %4444 = vmatprep.subr.mxu0 0.0
      %4445 = vmatpush2.msra.mxu0 0.0
      %4446 = vmatprep.subr.mxu0 0.0
      %4447 = vmatpush2.msra.mxu0 0.0
      %4448 = vmatprep.subr.mxu0 0.0
      %4449 = vmatpush2.msra.mxu0 0.0
      %4450 = vmatprep.mubr.f32.mxu0 0.0
      %v4451 = vand.u32 %v3850, 4294901760
      %4452 = vmatmul.mubr.f32.gmra.mxu0 %v4451
      %v4453 = vpop.f32.mrf.mxu0
      %v4454 = vadd.f32 %v4361, %v4453
      %v4455 = vpop.f32.mrf.mxu0
      %4456 = vmatprep.mubr.f32.mxu0 0.0
      %v4457 = vand.u32 %v3853, 4294901760
      %4458 = vmatmul.mubr.f32.gmra.mxu0 %v4457
      %v4459 = vpop.f32.mrf.mxu0
      %v4460 = vadd.f32 %v4367, %v4459
      %v4461 = vpop.f32.mrf.mxu0
      %4462 = vmatprep.mubr.f32.mxu0 0.0
      %v4463 = vand.u32 %v3856, 4294901760
      %4464 = vmatmul.mubr.f32.gmra.mxu0 %v4463
      %v4465 = vpop.f32.mrf.mxu0
      %v4466 = vadd.f32 %v4373, %v4465
      %v4467 = vpop.f32.mrf.mxu0
      %4468 = vmatprep.mubr.f32.mxu0 0.0
      %v4469 = vand.u32 %v3859, 4294901760
      %4470 = vmatmul.mubr.f32.gmra.mxu0 %v4469
      %v4471 = vpop.f32.mrf.mxu0
      %v4472 = vadd.f32 %v4379, %v4471
      %v4473 = vpop.f32.mrf.mxu0
      %4474 = vdwg.mxu0
      %v4475 = vld [vmem:[%s4 + $0x160] sm:$0xff]
      %v4476 = vld [vmem:[%s4 + $0x168] sm:$0xff]
      %v4477 = vld [vmem:[%s4 + $0x170] sm:$0xff]
      %v4478 = vld [vmem:[%s4 + $0x178] sm:$0xff]
      %v4479 = vmax.f32 %v4454, 0.0
      %v4480 = vmax.f32 %v4460, 0.0
      %v4481 = vmax.f32 %v4466, 0.0
      %v4482 = vmax.f32 %v4472, 0.0
      %v4483 = vld [vmem:[%s5 + $0xc0] sm:$0xff]
      %v4484 = vld [vmem:[%s5 + $0xc8] sm:$0xff]
      %v4485 = vld [vmem:[%s5 + $0xd0] sm:$0xff]
      %v4486 = vld [vmem:[%s5 + $0xd8] sm:$0xff]
      %4488 = vset.pattern.permute.xlu0 0
      %4489 = vperm.xlu0 %4488, %v4483
      %v4490 = vpop.permute.xlu0 %4489
      %4493 = vset.pattern.permute.xlu0 0
      %4494 = vperm.xlu0 %4493, %v4484
      %v4495 = vpop.permute.xlu0 %4494
      %4498 = vset.pattern.permute.xlu0 0
      %4499 = vperm.xlu0 %4498, %v4485
      %v4500 = vpop.permute.xlu0 %4499
      %4503 = vset.pattern.permute.xlu0 0
      %4504 = vperm.xlu0 %4503, %v4486
      %v4505 = vpop.permute.xlu0 %4504
      %v4508 = vsel %vm1184, %v4475, 0
      %v4511 = vsel %vm1184, %v4476, 0
      %v4514 = vsel %vm1184, %v4477, 0
      %v4517 = vsel %vm1184, %v4478, 0
      %4519 = vmatprep.subr.mxu0 0.0
      %4520 = vmatpush1.msra.mxu0 0.0
      %4521 = vmatprep.subr.mxu0 0.0
      %4522 = vmatpush1.msra.mxu0 0.0
      %4523 = vmatprep.subr.mxu0 0.0
      %4524 = vmatpush1.msra.mxu0 0.0
      %4525 = vmatprep.subr.mxu0 0.0
      %4526 = vmatpush1.msra.mxu0 0.0
      %4527 = vmatprep.subr.mxu0 0.0
      %4528 = vmatpush1.msra.mxu0 0.0
      %4529 = vmatprep.subr.mxu0 0.0
      %4530 = vmatpush1.msra.mxu0 0.0
      %4531 = vmatprep.subr.mxu0 0.0
      %4532 = vmatpush1.msra.mxu0 0.0
      %4533 = vmatprep.subr.mxu0 0.0
      %4534 = vmatpush1.msra.mxu0 0.0
      %4535 = vmatprep.subr.mxu0 0.0
      %4536 = vmatpush1.msra.mxu0 0.0
      %4537 = vmatprep.subr.mxu0 0.0
      %4538 = vmatpush1.msra.mxu0 0.0
      %4539 = vmatprep.subr.mxu0 0.0
      %4540 = vmatpush1.msra.mxu0 0.0
      %4541 = vmatprep.subr.mxu0 0.0
      %4542 = vmatpush1.msra.mxu0 0.0
      %4543 = vmatprep.subr.mxu0 0.0
      %v4544 = vand.u32 %v4482, 4294901760
      %4545 = vmatpush1.msra.mxu0 %v4544
      %4546 = vmatprep.subr.mxu0 0.0
      %v4547 = vand.u32 %v4481, 4294901760
      %4548 = vmatpush1.msra.mxu0 %v4547
      %4549 = vmatprep.subr.mxu0 0.0
      %v4550 = vand.u32 %v4480, 4294901760
      %4551 = vmatpush1.msra.mxu0 %v4550
      %4552 = vmatprep.subr.mxu0 0.0
      %v4553 = vand.u32 %v4479, 4294901760
      %4554 = vmatpush1.msra.mxu0 %v4553
      %4555 = vmatprep.subr.mxu0 0.0
      %4556 = vmatpush2.msra.mxu0 0.0
      %4557 = vmatprep.subr.mxu0 0.0
      %4558 = vmatpush2.msra.mxu0 0.0
      %4559 = vmatprep.subr.mxu0 0.0
      %4560 = vmatpush2.msra.mxu0 0.0
      %4561 = vmatprep.subr.mxu0 0.0
      %4562 = vmatpush2.msra.mxu0 0.0
      %4563 = vmatprep.subr.mxu0 0.0
      %4564 = vmatpush2.msra.mxu0 0.0
      %4565 = vmatprep.subr.mxu0 0.0
      %4566 = vmatpush2.msra.mxu0 0.0
      %4567 = vmatprep.subr.mxu0 0.0
      %4568 = vmatpush2.msra.mxu0 0.0
      %4569 = vmatprep.subr.mxu0 0.0
      %4570 = vmatpush2.msra.mxu0 0.0
      %4571 = vmatprep.subr.mxu0 0.0
      %4572 = vmatpush2.msra.mxu0 0.0
      %4573 = vmatprep.subr.mxu0 0.0
      %4574 = vmatpush2.msra.mxu0 0.0
      %4575 = vmatprep.subr.mxu0 0.0
      %4576 = vmatpush2.msra.mxu0 0.0
      %4577 = vmatprep.subr.mxu0 0.0
      %4578 = vmatpush2.msra.mxu0 0.0
      %4579 = vmatprep.subr.mxu0 0.0
      %4580 = vmatpush2.msra.mxu0 0.0
      %4581 = vmatprep.subr.mxu0 0.0
      %4582 = vmatpush2.msra.mxu0 0.0
      %4583 = vmatprep.subr.mxu0 0.0
      %4584 = vmatpush2.msra.mxu0 0.0
      %4585 = vmatprep.subr.mxu0 0.0
      %4586 = vmatpush2.msra.mxu0 0.0
      %4587 = vmatprep.mubr.f32.mxu0 0.0
      %v4588 = vand.u32 %v4508, 4294901760
      %v4589 = vsub.f32 %v4508, %v4588
      %v4590 = vand.u32 %v4589, 4294901760
      %v4591 = vsub.f32 %v4589, %v4590
      %v4592 = vand.u32 %v4591, 4294901760
      %4593 = vmatmul.mubr.f32.gmra.mxu0 %v4592
      %v4594 = vpop.f32.mrf.mxu0
      %v4595 = vadd.f32 %v4490, %v4594
      %v4596 = vpop.f32.mrf.mxu0
      %4597 = vmatprep.mubr.f32.mxu0 0.0
      %v4598 = vand.u32 %v4511, 4294901760
      %v4599 = vsub.f32 %v4511, %v4598
      %v4600 = vand.u32 %v4599, 4294901760
      %v4601 = vsub.f32 %v4599, %v4600
      %v4602 = vand.u32 %v4601, 4294901760
      %4603 = vmatmul.mubr.f32.gmra.mxu0 %v4602
      %v4604 = vpop.f32.mrf.mxu0
      %v4605 = vadd.f32 %v4495, %v4604
      %v4606 = vpop.f32.mrf.mxu0
      %4607 = vmatprep.mubr.f32.mxu0 0.0
      %v4608 = vand.u32 %v4514, 4294901760
      %v4609 = vsub.f32 %v4514, %v4608
      %v4610 = vand.u32 %v4609, 4294901760
      %v4611 = vsub.f32 %v4609, %v4610
      %v4612 = vand.u32 %v4611, 4294901760
      %4613 = vmatmul.mubr.f32.gmra.mxu0 %v4612
      %v4614 = vpop.f32.mrf.mxu0
      %v4615 = vadd.f32 %v4500, %v4614
      %v4616 = vpop.f32.mrf.mxu0
      %4617 = vmatprep.mubr.f32.mxu0 0.0
      %v4618 = vand.u32 %v4517, 4294901760
      %v4619 = vsub.f32 %v4517, %v4618
      %v4620 = vand.u32 %v4619, 4294901760
      %v4621 = vsub.f32 %v4619, %v4620
      %v4622 = vand.u32 %v4621, 4294901760
      %4623 = vmatmul.mubr.f32.gmra.mxu0 %v4622
      %v4624 = vpop.f32.mrf.mxu0
      %v4625 = vadd.f32 %v4505, %v4624
      %v4626 = vpop.f32.mrf.mxu0
      %4627 = vdwg.mxu0
      %4628 = vmatprep.subr.mxu0 0.0
      %4629 = vmatpush1.msra.mxu0 0.0
      %4630 = vmatprep.subr.mxu0 0.0
      %4631 = vmatpush1.msra.mxu0 0.0
      %4632 = vmatprep.subr.mxu0 0.0
      %4633 = vmatpush1.msra.mxu0 0.0
      %4634 = vmatprep.subr.mxu0 0.0
      %4635 = vmatpush1.msra.mxu0 0.0
      %4636 = vmatprep.subr.mxu0 0.0
      %4637 = vmatpush1.msra.mxu0 0.0
      %4638 = vmatprep.subr.mxu0 0.0
      %4639 = vmatpush1.msra.mxu0 0.0
      %4640 = vmatprep.subr.mxu0 0.0
      %4641 = vmatpush1.msra.mxu0 0.0
      %4642 = vmatprep.subr.mxu0 0.0
      %4643 = vmatpush1.msra.mxu0 0.0
      %4644 = vmatprep.subr.mxu0 0.0
      %4645 = vmatpush1.msra.mxu0 0.0
      %4646 = vmatprep.subr.mxu0 0.0
      %4647 = vmatpush1.msra.mxu0 0.0
      %4648 = vmatprep.subr.mxu0 0.0
      %4649 = vmatpush1.msra.mxu0 0.0
      %4650 = vmatprep.subr.mxu0 0.0
      %4651 = vmatpush1.msra.mxu0 0.0
      %4652 = vmatprep.subr.mxu0 0.0
      %v4653 = vand.u32 %v4482, 4294901760
      %v4654 = vsub.f32 %v4482, %v4653
      %v4655 = vand.u32 %v4654, 4294901760
      %v4656 = vsub.f32 %v4654, %v4655
      %v4657 = vand.u32 %v4656, 4294901760
      %4658 = vmatpush1.msra.mxu0 %v4657
      %4659 = vmatprep.subr.mxu0 0.0
      %v4660 = vand.u32 %v4481, 4294901760
      %v4661 = vsub.f32 %v4481, %v4660
      %v4662 = vand.u32 %v4661, 4294901760
      %v4663 = vsub.f32 %v4661, %v4662
      %v4664 = vand.u32 %v4663, 4294901760
      %4665 = vmatpush1.msra.mxu0 %v4664
      %4666 = vmatprep.subr.mxu0 0.0
      %v4667 = vand.u32 %v4480, 4294901760
      %v4668 = vsub.f32 %v4480, %v4667
      %v4669 = vand.u32 %v4668, 4294901760
      %v4670 = vsub.f32 %v4668, %v4669
      %v4671 = vand.u32 %v4670, 4294901760
      %4672 = vmatpush1.msra.mxu0 %v4671
      %4673 = vmatprep.subr.mxu0 0.0
      %v4674 = vand.u32 %v4479, 4294901760
      %v4675 = vsub.f32 %v4479, %v4674
      %v4676 = vand.u32 %v4675, 4294901760
      %v4677 = vsub.f32 %v4675, %v4676
      %v4678 = vand.u32 %v4677, 4294901760
      %4679 = vmatpush1.msra.mxu0 %v4678
      %4680 = vmatprep.subr.mxu0 0.0
      %4681 = vmatpush2.msra.mxu0 0.0
      %4682 = vmatprep.subr.mxu0 0.0
      %4683 = vmatpush2.msra.mxu0 0.0
      %4684 = vmatprep.subr.mxu0 0.0
      %4685 = vmatpush2.msra.mxu0 0.0
      %4686 = vmatprep.subr.mxu0 0.0
      %4687 = vmatpush2.msra.mxu0 0.0
      %4688 = vmatprep.subr.mxu0 0.0
      %4689 = vmatpush2.msra.mxu0 0.0
      %4690 = vmatprep.subr.mxu0 0.0
      %4691 = vmatpush2.msra.mxu0 0.0
      %4692 = vmatprep.subr.mxu0 0.0
      %4693 = vmatpush2.msra.mxu0 0.0
      %4694 = vmatprep.subr.mxu0 0.0
      %4695 = vmatpush2.msra.mxu0 0.0
      %4696 = vmatprep.subr.mxu0 0.0
      %4697 = vmatpush2.msra.mxu0 0.0
      %4698 = vmatprep.subr.mxu0 0.0
      %4699 = vmatpush2.msra.mxu0 0.0
      %4700 = vmatprep.subr.mxu0 0.0
      %4701 = vmatpush2.msra.mxu0 0.0
      %4702 = vmatprep.subr.mxu0 0.0
      %4703 = vmatpush2.msra.mxu0 0.0
      %4704 = vmatprep.subr.mxu0 0.0
      %4705 = vmatpush2.msra.mxu0 0.0
      %4706 = vmatprep.subr.mxu0 0.0
      %4707 = vmatpush2.msra.mxu0 0.0
      %4708 = vmatprep.subr.mxu0 0.0
      %4709 = vmatpush2.msra.mxu0 0.0
      %4710 = vmatprep.subr.mxu0 0.0
      %4711 = vmatpush2.msra.mxu0 0.0
      %4712 = vmatprep.mubr.f32.mxu0 0.0
      %v4713 = vand.u32 %v4508, 4294901760
      %4714 = vmatmul.mubr.f32.gmra.mxu0 %v4713
      %v4715 = vpop.f32.mrf.mxu0
      %v4716 = vadd.f32 %v4595, %v4715
      %v4717 = vpop.f32.mrf.mxu0
      %4718 = vmatprep.mubr.f32.mxu0 0.0
      %v4719 = vand.u32 %v4511, 4294901760
      %4720 = vmatmul.mubr.f32.gmra.mxu0 %v4719
      %v4721 = vpop.f32.mrf.mxu0
      %v4722 = vadd.f32 %v4605, %v4721
      %v4723 = vpop.f32.mrf.mxu0
      %4724 = vmatprep.mubr.f32.mxu0 0.0
      %v4725 = vand.u32 %v4514, 4294901760
      %4726 = vmatmul.mubr.f32.gmra.mxu0 %v4725
      %v4727 = vpop.f32.mrf.mxu0
      %v4728 = vadd.f32 %v4615, %v4727
      %v4729 = vpop.f32.mrf.mxu0
      %4730 = vmatprep.mubr.f32.mxu0 0.0
      %v4731 = vand.u32 %v4517, 4294901760
      %4732 = vmatmul.mubr.f32.gmra.mxu0 %v4731
      %v4733 = vpop.f32.mrf.mxu0
      %v4734 = vadd.f32 %v4625, %v4733
      %v4735 = vpop.f32.mrf.mxu0
      %4736 = vdwg.mxu0
      %4737 = vmatprep.subr.mxu0 0.0
      %4738 = vmatpush1.msra.mxu0 0.0
      %4739 = vmatprep.subr.mxu0 0.0
      %4740 = vmatpush1.msra.mxu0 0.0
      %4741 = vmatprep.subr.mxu0 0.0
      %4742 = vmatpush1.msra.mxu0 0.0
      %4743 = vmatprep.subr.mxu0 0.0
      %4744 = vmatpush1.msra.mxu0 0.0
      %4745 = vmatprep.subr.mxu0 0.0
      %4746 = vmatpush1.msra.mxu0 0.0
      %4747 = vmatprep.subr.mxu0 0.0
      %4748 = vmatpush1.msra.mxu0 0.0
      %4749 = vmatprep.subr.mxu0 0.0
      %4750 = vmatpush1.msra.mxu0 0.0
      %4751 = vmatprep.subr.mxu0 0.0
      %4752 = vmatpush1.msra.mxu0 0.0
      %4753 = vmatprep.subr.mxu0 0.0
      %4754 = vmatpush1.msra.mxu0 0.0
      %4755 = vmatprep.subr.mxu0 0.0
      %4756 = vmatpush1.msra.mxu0 0.0
      %4757 = vmatprep.subr.mxu0 0.0
      %4758 = vmatpush1.msra.mxu0 0.0
      %4759 = vmatprep.subr.mxu0 0.0
      %4760 = vmatpush1.msra.mxu0 0.0
      %4761 = vmatprep.subr.mxu0 0.0
      %v4762 = vand.u32 %v4482, 4294901760
      %v4763 = vsub.f32 %v4482, %v4762
      %4764 = vmatpush1.msra.mxu0 %v4763
      %4765 = vmatprep.subr.mxu0 0.0
      %v4766 = vand.u32 %v4481, 4294901760
      %v4767 = vsub.f32 %v4481, %v4766
      %4768 = vmatpush1.msra.mxu0 %v4767
      %4769 = vmatprep.subr.mxu0 0.0
      %v4770 = vand.u32 %v4480, 4294901760
      %v4771 = vsub.f32 %v4480, %v4770
      %4772 = vmatpush1.msra.mxu0 %v4771
      %4773 = vmatprep.subr.mxu0 0.0
      %v4774 = vand.u32 %v4479, 4294901760
      %v4775 = vsub.f32 %v4479, %v4774
      %4776 = vmatpush1.msra.mxu0 %v4775
      %4777 = vmatprep.subr.mxu0 0.0
      %4778 = vmatpush2.msra.mxu0 0.0
      %4779 = vmatprep.subr.mxu0 0.0
      %4780 = vmatpush2.msra.mxu0 0.0
      %4781 = vmatprep.subr.mxu0 0.0
      %4782 = vmatpush2.msra.mxu0 0.0
      %4783 = vmatprep.subr.mxu0 0.0
      %4784 = vmatpush2.msra.mxu0 0.0
      %4785 = vmatprep.subr.mxu0 0.0
      %4786 = vmatpush2.msra.mxu0 0.0
      %4787 = vmatprep.subr.mxu0 0.0
      %4788 = vmatpush2.msra.mxu0 0.0
      %4789 = vmatprep.subr.mxu0 0.0
      %4790 = vmatpush2.msra.mxu0 0.0
      %4791 = vmatprep.subr.mxu0 0.0
      %4792 = vmatpush2.msra.mxu0 0.0
      %4793 = vmatprep.subr.mxu0 0.0
      %4794 = vmatpush2.msra.mxu0 0.0
      %4795 = vmatprep.subr.mxu0 0.0
      %4796 = vmatpush2.msra.mxu0 0.0
      %4797 = vmatprep.subr.mxu0 0.0
      %4798 = vmatpush2.msra.mxu0 0.0
      %4799 = vmatprep.subr.mxu0 0.0
      %4800 = vmatpush2.msra.mxu0 0.0
      %4801 = vmatprep.subr.mxu0 0.0
      %4802 = vmatpush2.msra.mxu0 0.0
      %4803 = vmatprep.subr.mxu0 0.0
      %4804 = vmatpush2.msra.mxu0 0.0
      %4805 = vmatprep.subr.mxu0 0.0
      %4806 = vmatpush2.msra.mxu0 0.0
      %4807 = vmatprep.subr.mxu0 0.0
      %4808 = vmatpush2.msra.mxu0 0.0
      %4809 = vmatprep.mubr.f32.mxu0 0.0
      %v4810 = vand.u32 %v4508, 4294901760
      %v4811 = vsub.f32 %v4508, %v4810
      %4812 = vmatmul.mubr.f32.gmra.mxu0 %v4811
      %v4813 = vpop.f32.mrf.mxu0
      %v4814 = vadd.f32 %v4716, %v4813
      %v4815 = vpop.f32.mrf.mxu0
      %4816 = vmatprep.mubr.f32.mxu0 0.0
      %v4817 = vand.u32 %v4511, 4294901760
      %v4818 = vsub.f32 %v4511, %v4817
      %4819 = vmatmul.mubr.f32.gmra.mxu0 %v4818
      %v4820 = vpop.f32.mrf.mxu0
      %v4821 = vadd.f32 %v4722, %v4820
      %v4822 = vpop.f32.mrf.mxu0
      %4823 = vmatprep.mubr.f32.mxu0 0.0
      %v4824 = vand.u32 %v4514, 4294901760
      %v4825 = vsub.f32 %v4514, %v4824
      %4826 = vmatmul.mubr.f32.gmra.mxu0 %v4825
      %v4827 = vpop.f32.mrf.mxu0
      %v4828 = vadd.f32 %v4728, %v4827
      %v4829 = vpop.f32.mrf.mxu0
      %4830 = vmatprep.mubr.f32.mxu0 0.0
      %v4831 = vand.u32 %v4517, 4294901760
      %v4832 = vsub.f32 %v4517, %v4831
      %4833 = vmatmul.mubr.f32.gmra.mxu0 %v4832
      %v4834 = vpop.f32.mrf.mxu0
      %v4835 = vadd.f32 %v4734, %v4834
      %v4836 = vpop.f32.mrf.mxu0
      %4837 = vdwg.mxu0
      %4838 = vmatprep.subr.mxu0 0.0
      %4839 = vmatpush1.msra.mxu0 0.0
      %4840 = vmatprep.subr.mxu0 0.0
      %4841 = vmatpush1.msra.mxu0 0.0
      %4842 = vmatprep.subr.mxu0 0.0
      %4843 = vmatpush1.msra.mxu0 0.0
      %4844 = vmatprep.subr.mxu0 0.0
      %4845 = vmatpush1.msra.mxu0 0.0
      %4846 = vmatprep.subr.mxu0 0.0
      %4847 = vmatpush1.msra.mxu0 0.0
      %4848 = vmatprep.subr.mxu0 0.0
      %4849 = vmatpush1.msra.mxu0 0.0
      %4850 = vmatprep.subr.mxu0 0.0
      %4851 = vmatpush1.msra.mxu0 0.0
      %4852 = vmatprep.subr.mxu0 0.0
      %4853 = vmatpush1.msra.mxu0 0.0
      %4854 = vmatprep.subr.mxu0 0.0
      %4855 = vmatpush1.msra.mxu0 0.0
      %4856 = vmatprep.subr.mxu0 0.0
      %4857 = vmatpush1.msra.mxu0 0.0
      %4858 = vmatprep.subr.mxu0 0.0
      %4859 = vmatpush1.msra.mxu0 0.0
      %4860 = vmatprep.subr.mxu0 0.0
      %4861 = vmatpush1.msra.mxu0 0.0
      %4862 = vmatprep.subr.mxu0 0.0
      %v4863 = vand.u32 %v4482, 4294901760
      %4864 = vmatpush1.msra.mxu0 %v4863
      %4865 = vmatprep.subr.mxu0 0.0
      %v4866 = vand.u32 %v4481, 4294901760
      %4867 = vmatpush1.msra.mxu0 %v4866
      %4868 = vmatprep.subr.mxu0 0.0
      %v4869 = vand.u32 %v4480, 4294901760
      %4870 = vmatpush1.msra.mxu0 %v4869
      %4871 = vmatprep.subr.mxu0 0.0
      %v4872 = vand.u32 %v4479, 4294901760
      %4873 = vmatpush1.msra.mxu0 %v4872
      %4874 = vmatprep.subr.mxu0 0.0
      %4875 = vmatpush2.msra.mxu0 0.0
      %4876 = vmatprep.subr.mxu0 0.0
      %4877 = vmatpush2.msra.mxu0 0.0
      %4878 = vmatprep.subr.mxu0 0.0
      %4879 = vmatpush2.msra.mxu0 0.0
      %4880 = vmatprep.subr.mxu0 0.0
      %4881 = vmatpush2.msra.mxu0 0.0
      %4882 = vmatprep.subr.mxu0 0.0
      %4883 = vmatpush2.msra.mxu0 0.0
      %4884 = vmatprep.subr.mxu0 0.0
      %4885 = vmatpush2.msra.mxu0 0.0
      %4886 = vmatprep.subr.mxu0 0.0
      %4887 = vmatpush2.msra.mxu0 0.0
      %4888 = vmatprep.subr.mxu0 0.0
      %4889 = vmatpush2.msra.mxu0 0.0
      %4890 = vmatprep.subr.mxu0 0.0
      %4891 = vmatpush2.msra.mxu0 0.0
      %4892 = vmatprep.subr.mxu0 0.0
      %4893 = vmatpush2.msra.mxu0 0.0
      %4894 = vmatprep.subr.mxu0 0.0
      %4895 = vmatpush2.msra.mxu0 0.0
      %4896 = vmatprep.subr.mxu0 0.0
      %4897 = vmatpush2.msra.mxu0 0.0
      %4898 = vmatprep.subr.mxu0 0.0
      %4899 = vmatpush2.msra.mxu0 0.0
      %4900 = vmatprep.subr.mxu0 0.0
      %4901 = vmatpush2.msra.mxu0 0.0
      %4902 = vmatprep.subr.mxu0 0.0
      %4903 = vmatpush2.msra.mxu0 0.0
      %4904 = vmatprep.subr.mxu0 0.0
      %4905 = vmatpush2.msra.mxu0 0.0
      %4906 = vmatprep.mubr.f32.mxu0 0.0
      %v4907 = vand.u32 %v4508, 4294901760
      %v4908 = vsub.f32 %v4508, %v4907
      %v4909 = vand.u32 %v4908, 4294901760
      %4910 = vmatmul.mubr.f32.gmra.mxu0 %v4909
      %v4911 = vpop.f32.mrf.mxu0
      %v4912 = vadd.f32 %v4814, %v4911
      %v4913 = vpop.f32.mrf.mxu0
      %4914 = vmatprep.mubr.f32.mxu0 0.0
      %v4915 = vand.u32 %v4511, 4294901760
      %v4916 = vsub.f32 %v4511, %v4915
      %v4917 = vand.u32 %v4916, 4294901760
      %4918 = vmatmul.mubr.f32.gmra.mxu0 %v4917
      %v4919 = vpop.f32.mrf.mxu0
      %v4920 = vadd.f32 %v4821, %v4919
      %v4921 = vpop.f32.mrf.mxu0
      %4922 = vmatprep.mubr.f32.mxu0 0.0
      %v4923 = vand.u32 %v4514, 4294901760
      %v4924 = vsub.f32 %v4514, %v4923
      %v4925 = vand.u32 %v4924, 4294901760
      %4926 = vmatmul.mubr.f32.gmra.mxu0 %v4925
      %v4927 = vpop.f32.mrf.mxu0
      %v4928 = vadd.f32 %v4828, %v4927
      %v4929 = vpop.f32.mrf.mxu0
      %4930 = vmatprep.mubr.f32.mxu0 0.0
      %v4931 = vand.u32 %v4517, 4294901760
      %v4932 = vsub.f32 %v4517, %v4931
      %v4933 = vand.u32 %v4932, 4294901760
      %4934 = vmatmul.mubr.f32.gmra.mxu0 %v4933
      %v4935 = vpop.f32.mrf.mxu0
      %v4936 = vadd.f32 %v4835, %v4935
      %v4937 = vpop.f32.mrf.mxu0
      %4938 = vdwg.mxu0
      %4939 = vmatprep.subr.mxu0 0.0
      %4940 = vmatpush1.msra.mxu0 0.0
      %4941 = vmatprep.subr.mxu0 0.0
      %4942 = vmatpush1.msra.mxu0 0.0
      %4943 = vmatprep.subr.mxu0 0.0
      %4944 = vmatpush1.msra.mxu0 0.0
      %4945 = vmatprep.subr.mxu0 0.0
      %4946 = vmatpush1.msra.mxu0 0.0
      %4947 = vmatprep.subr.mxu0 0.0
      %4948 = vmatpush1.msra.mxu0 0.0
      %4949 = vmatprep.subr.mxu0 0.0
      %4950 = vmatpush1.msra.mxu0 0.0
      %4951 = vmatprep.subr.mxu0 0.0
      %4952 = vmatpush1.msra.mxu0 0.0
      %4953 = vmatprep.subr.mxu0 0.0
      %4954 = vmatpush1.msra.mxu0 0.0
      %4955 = vmatprep.subr.mxu0 0.0
      %4956 = vmatpush1.msra.mxu0 0.0
      %4957 = vmatprep.subr.mxu0 0.0
      %4958 = vmatpush1.msra.mxu0 0.0
      %4959 = vmatprep.subr.mxu0 0.0
      %4960 = vmatpush1.msra.mxu0 0.0
      %4961 = vmatprep.subr.mxu0 0.0
      %4962 = vmatpush1.msra.mxu0 0.0
      %4963 = vmatprep.subr.mxu0 0.0
      %v4964 = vand.u32 %v4482, 4294901760
      %v4965 = vsub.f32 %v4482, %v4964
      %v4966 = vand.u32 %v4965, 4294901760
      %4967 = vmatpush1.msra.mxu0 %v4966
      %4968 = vmatprep.subr.mxu0 0.0
      %v4969 = vand.u32 %v4481, 4294901760
      %v4970 = vsub.f32 %v4481, %v4969
      %v4971 = vand.u32 %v4970, 4294901760
      %4972 = vmatpush1.msra.mxu0 %v4971
      %4973 = vmatprep.subr.mxu0 0.0
      %v4974 = vand.u32 %v4480, 4294901760
      %v4975 = vsub.f32 %v4480, %v4974
      %v4976 = vand.u32 %v4975, 4294901760
      %4977 = vmatpush1.msra.mxu0 %v4976
      %4978 = vmatprep.subr.mxu0 0.0
      %v4979 = vand.u32 %v4479, 4294901760
      %v4980 = vsub.f32 %v4479, %v4979
      %v4981 = vand.u32 %v4980, 4294901760
      %4982 = vmatpush1.msra.mxu0 %v4981
      %4983 = vmatprep.subr.mxu0 0.0
      %4984 = vmatpush2.msra.mxu0 0.0
      %4985 = vmatprep.subr.mxu0 0.0
      %4986 = vmatpush2.msra.mxu0 0.0
      %4987 = vmatprep.subr.mxu0 0.0
      %4988 = vmatpush2.msra.mxu0 0.0
      %4989 = vmatprep.subr.mxu0 0.0
      %4990 = vmatpush2.msra.mxu0 0.0
      %4991 = vmatprep.subr.mxu0 0.0
      %4992 = vmatpush2.msra.mxu0 0.0
      %4993 = vmatprep.subr.mxu0 0.0
      %4994 = vmatpush2.msra.mxu0 0.0
      %4995 = vmatprep.subr.mxu0 0.0
      %4996 = vmatpush2.msra.mxu0 0.0
      %4997 = vmatprep.subr.mxu0 0.0
      %4998 = vmatpush2.msra.mxu0 0.0
      %4999 = vmatprep.subr.mxu0 0.0
      %5000 = vmatpush2.msra.mxu0 0.0
      %5001 = vmatprep.subr.mxu0 0.0
      %5002 = vmatpush2.msra.mxu0 0.0
      %5003 = vmatprep.subr.mxu0 0.0
      %5004 = vmatpush2.msra.mxu0 0.0
      %5005 = vmatprep.subr.mxu0 0.0
      %5006 = vmatpush2.msra.mxu0 0.0
      %5007 = vmatprep.subr.mxu0 0.0
      %5008 = vmatpush2.msra.mxu0 0.0
      %5009 = vmatprep.subr.mxu0 0.0
      %5010 = vmatpush2.msra.mxu0 0.0
      %5011 = vmatprep.subr.mxu0 0.0
      %5012 = vmatpush2.msra.mxu0 0.0
      %5013 = vmatprep.subr.mxu0 0.0
      %5014 = vmatpush2.msra.mxu0 0.0
      %5015 = vmatprep.mubr.f32.mxu0 0.0
      %v5016 = vand.u32 %v4508, 4294901760
      %5017 = vmatmul.mubr.f32.gmra.mxu0 %v5016
      %v5018 = vpop.f32.mrf.mxu0
      %v5019 = vadd.f32 %v4912, %v5018
      %v5020 = vpop.f32.mrf.mxu0
      %5021 = vmatprep.mubr.f32.mxu0 0.0
      %v5022 = vand.u32 %v4511, 4294901760
      %5023 = vmatmul.mubr.f32.gmra.mxu0 %v5022
      %v5024 = vpop.f32.mrf.mxu0
      %v5025 = vadd.f32 %v4920, %v5024
      %v5026 = vpop.f32.mrf.mxu0
      %5027 = vmatprep.mubr.f32.mxu0 0.0
      %v5028 = vand.u32 %v4514, 4294901760
      %5029 = vmatmul.mubr.f32.gmra.mxu0 %v5028
      %v5030 = vpop.f32.mrf.mxu0
      %v5031 = vadd.f32 %v4928, %v5030
      %v5032 = vpop.f32.mrf.mxu0
      %5033 = vmatprep.mubr.f32.mxu0 0.0
      %v5034 = vand.u32 %v4517, 4294901760
      %5035 = vmatmul.mubr.f32.gmra.mxu0 %v5034
      %v5036 = vpop.f32.mrf.mxu0
      %v5037 = vadd.f32 %v4936, %v5036
      %v5038 = vpop.f32.mrf.mxu0
      %5039 = vdwg.mxu0
      %5040 = vmatprep.subr.mxu0 0.0
      %5041 = vmatpush1.msra.mxu0 0.0
      %5042 = vmatprep.subr.mxu0 0.0
      %5043 = vmatpush1.msra.mxu0 0.0
      %5044 = vmatprep.subr.mxu0 0.0
      %5045 = vmatpush1.msra.mxu0 0.0
      %5046 = vmatprep.subr.mxu0 0.0
      %5047 = vmatpush1.msra.mxu0 0.0
      %5048 = vmatprep.subr.mxu0 0.0
      %5049 = vmatpush1.msra.mxu0 0.0
      %5050 = vmatprep.subr.mxu0 0.0
      %5051 = vmatpush1.msra.mxu0 0.0
      %5052 = vmatprep.subr.mxu0 0.0
      %5053 = vmatpush1.msra.mxu0 0.0
      %5054 = vmatprep.subr.mxu0 0.0
      %5055 = vmatpush1.msra.mxu0 0.0
      %5056 = vmatprep.subr.mxu0 0.0
      %5057 = vmatpush1.msra.mxu0 0.0
      %5058 = vmatprep.subr.mxu0 0.0
      %5059 = vmatpush1.msra.mxu0 0.0
      %5060 = vmatprep.subr.mxu0 0.0
      %5061 = vmatpush1.msra.mxu0 0.0
      %5062 = vmatprep.subr.mxu0 0.0
      %5063 = vmatpush1.msra.mxu0 0.0
      %5064 = vmatprep.subr.mxu0 0.0
      %v5065 = vand.u32 %v4482, 4294901760
      %5066 = vmatpush1.msra.mxu0 %v5065
      %5067 = vmatprep.subr.mxu0 0.0
      %v5068 = vand.u32 %v4481, 4294901760
      %5069 = vmatpush1.msra.mxu0 %v5068
      %5070 = vmatprep.subr.mxu0 0.0
      %v5071 = vand.u32 %v4480, 4294901760
      %5072 = vmatpush1.msra.mxu0 %v5071
      %5073 = vmatprep.subr.mxu0 0.0
      %v5074 = vand.u32 %v4479, 4294901760
      %5075 = vmatpush1.msra.mxu0 %v5074
      %5076 = vmatprep.subr.mxu0 0.0
      %5077 = vmatpush2.msra.mxu0 0.0
      %5078 = vmatprep.subr.mxu0 0.0
      %5079 = vmatpush2.msra.mxu0 0.0
      %5080 = vmatprep.subr.mxu0 0.0
      %5081 = vmatpush2.msra.mxu0 0.0
      %5082 = vmatprep.subr.mxu0 0.0
      %5083 = vmatpush2.msra.mxu0 0.0
      %5084 = vmatprep.subr.mxu0 0.0
      %5085 = vmatpush2.msra.mxu0 0.0
      %5086 = vmatprep.subr.mxu0 0.0
      %5087 = vmatpush2.msra.mxu0 0.0
      %5088 = vmatprep.subr.mxu0 0.0
      %5089 = vmatpush2.msra.mxu0 0.0
      %5090 = vmatprep.subr.mxu0 0.0
      %5091 = vmatpush2.msra.mxu0 0.0
      %5092 = vmatprep.subr.mxu0 0.0
      %5093 = vmatpush2.msra.mxu0 0.0
      %5094 = vmatprep.subr.mxu0 0.0
      %5095 = vmatpush2.msra.mxu0 0.0
      %5096 = vmatprep.subr.mxu0 0.0
      %5097 = vmatpush2.msra.mxu0 0.0
      %5098 = vmatprep.subr.mxu0 0.0
      %5099 = vmatpush2.msra.mxu0 0.0
      %5100 = vmatprep.subr.mxu0 0.0
      %5101 = vmatpush2.msra.mxu0 0.0
      %5102 = vmatprep.subr.mxu0 0.0
      %5103 = vmatpush2.msra.mxu0 0.0
      %5104 = vmatprep.subr.mxu0 0.0
      %5105 = vmatpush2.msra.mxu0 0.0
      %5106 = vmatprep.subr.mxu0 0.0
      %5107 = vmatpush2.msra.mxu0 0.0
      %5108 = vmatprep.mubr.f32.mxu0 0.0
      %v5109 = vand.u32 %v4508, 4294901760
      %5110 = vmatmul.mubr.f32.gmra.mxu0 %v5109
      %v5111 = vpop.f32.mrf.mxu0
      %v5112 = vadd.f32 %v5019, %v5111
      %v5113 = vpop.f32.mrf.mxu0
      %5114 = vmatprep.mubr.f32.mxu0 0.0
      %v5115 = vand.u32 %v4511, 4294901760
      %5116 = vmatmul.mubr.f32.gmra.mxu0 %v5115
      %v5117 = vpop.f32.mrf.mxu0
      %v5118 = vadd.f32 %v5025, %v5117
      %v5119 = vpop.f32.mrf.mxu0
      %5120 = vmatprep.mubr.f32.mxu0 0.0
      %v5121 = vand.u32 %v4514, 4294901760
      %5122 = vmatmul.mubr.f32.gmra.mxu0 %v5121
      %v5123 = vpop.f32.mrf.mxu0
      %v5124 = vadd.f32 %v5031, %v5123
      %v5125 = vpop.f32.mrf.mxu0
      %5126 = vmatprep.mubr.f32.mxu0 0.0
      %v5127 = vand.u32 %v4517, 4294901760
      %5128 = vmatmul.mubr.f32.gmra.mxu0 %v5127
      %v5129 = vpop.f32.mrf.mxu0
      %v5130 = vadd.f32 %v5037, %v5129
      %v5131 = vpop.f32.mrf.mxu0
      %5132 = vdwg.mxu0
      %v5133 = vadd.f32 %v3813, %v5112
      %v5134 = vadd.f32 %v3814, %v5118
      %v5135 = vadd.f32 %v3815, %v5124
      %v5136 = vadd.f32 %v3816, %v5130
      %v5137 = vld [vmem:[%s4 + $0x40] sm:$0xff]
      %v5138 = vld [vmem:[%s4 + $0x48] sm:$0xff]
      %v5139 = vld [vmem:[%s4 + $0x50] sm:$0xff]
      %v5140 = vld [vmem:[%s4 + $0x58] sm:$0xff]
      %v5142 = vsel %vm1184, %v5137, 0
      %v5145 = vsel %vm1184, %v5138, 0
      %v5148 = vsel %vm1184, %v5139, 0
      %v5151 = vsel %vm1184, %v5140, 0
      %5153 = vmatprep.subr.mxu0 0.0
      %5154 = vmatpush1.msra.mxu0 0.0
      %5155 = vmatprep.subr.mxu0 0.0
      %5156 = vmatpush1.msra.mxu0 0.0
      %5157 = vmatprep.subr.mxu0 0.0
      %5158 = vmatpush1.msra.mxu0 0.0
      %5159 = vmatprep.subr.mxu0 0.0
      %5160 = vmatpush1.msra.mxu0 0.0
      %5161 = vmatprep.subr.mxu0 0.0
      %5162 = vmatpush1.msra.mxu0 0.0
      %5163 = vmatprep.subr.mxu0 0.0
      %5164 = vmatpush1.msra.mxu0 0.0
      %5165 = vmatprep.subr.mxu0 0.0
      %5166 = vmatpush1.msra.mxu0 0.0
      %5167 = vmatprep.subr.mxu0 0.0
      %5168 = vmatpush1.msra.mxu0 0.0
      %5169 = vmatprep.subr.mxu0 0.0
      %5170 = vmatpush1.msra.mxu0 0.0
      %5171 = vmatprep.subr.mxu0 0.0
      %5172 = vmatpush1.msra.mxu0 0.0
      %5173 = vmatprep.subr.mxu0 0.0
      %5174 = vmatpush1.msra.mxu0 0.0
      %5175 = vmatprep.subr.mxu0 0.0
      %5176 = vmatpush1.msra.mxu0 0.0
      %5177 = vmatprep.subr.mxu0 0.0
      %v5178 = vand.u32 %v1159, 4294901760
      %5179 = vmatpush1.msra.mxu0 %v5178
      %5180 = vmatprep.subr.mxu0 0.0
      %v5181 = vand.u32 %v1158, 4294901760
      %5182 = vmatpush1.msra.mxu0 %v5181
      %5183 = vmatprep.subr.mxu0 0.0
      %v5184 = vand.u32 %v1157, 4294901760
      %5185 = vmatpush1.msra.mxu0 %v5184
      %5186 = vmatprep.subr.mxu0 0.0
      %v5187 = vand.u32 %v1156, 4294901760
      %5188 = vmatpush1.msra.mxu0 %v5187
      %5189 = vmatprep.subr.mxu0 0.0
      %5190 = vmatpush2.msra.mxu0 0.0
      %5191 = vmatprep.subr.mxu0 0.0
      %5192 = vmatpush2.msra.mxu0 0.0
      %5193 = vmatprep.subr.mxu0 0.0
      %5194 = vmatpush2.msra.mxu0 0.0
      %5195 = vmatprep.subr.mxu0 0.0
      %5196 = vmatpush2.msra.mxu0 0.0
      %5197 = vmatprep.subr.mxu0 0.0
      %5198 = vmatpush2.msra.mxu0 0.0
      %5199 = vmatprep.subr.mxu0 0.0
      %5200 = vmatpush2.msra.mxu0 0.0
      %5201 = vmatprep.subr.mxu0 0.0
      %5202 = vmatpush2.msra.mxu0 0.0
      %5203 = vmatprep.subr.mxu0 0.0
      %5204 = vmatpush2.msra.mxu0 0.0
      %5205 = vmatprep.subr.mxu0 0.0
      %5206 = vmatpush2.msra.mxu0 0.0
      %5207 = vmatprep.subr.mxu0 0.0
      %5208 = vmatpush2.msra.mxu0 0.0
      %5209 = vmatprep.subr.mxu0 0.0
      %5210 = vmatpush2.msra.mxu0 0.0
      %5211 = vmatprep.subr.mxu0 0.0
      %5212 = vmatpush2.msra.mxu0 0.0
      %5213 = vmatprep.subr.mxu0 0.0
      %5214 = vmatpush2.msra.mxu0 0.0
      %5215 = vmatprep.subr.mxu0 0.0
      %5216 = vmatpush2.msra.mxu0 0.0
      %5217 = vmatprep.subr.mxu0 0.0
      %5218 = vmatpush2.msra.mxu0 0.0
      %5219 = vmatprep.subr.mxu0 0.0
      %5220 = vmatpush2.msra.mxu0 0.0
      %5221 = vmatprep.mubr.f32.mxu0 0.0
      %v5222 = vand.u32 %v5142, 4294901760
      %v5223 = vsub.f32 %v5142, %v5222
      %v5224 = vand.u32 %v5223, 4294901760
      %v5225 = vsub.f32 %v5223, %v5224
      %v5226 = vand.u32 %v5225, 4294901760
      %5227 = vmatmul.mubr.f32.gmra.mxu0 %v5226
      %v5228 = vpop.f32.mrf.mxu0
      %v5229 = vadd.f32 0.0, %v5228
      %v5230 = vpop.f32.mrf.mxu0
      %5231 = vmatprep.mubr.f32.mxu0 0.0
      %v5232 = vand.u32 %v5145, 4294901760
      %v5233 = vsub.f32 %v5145, %v5232
      %v5234 = vand.u32 %v5233, 4294901760
      %v5235 = vsub.f32 %v5233, %v5234
      %v5236 = vand.u32 %v5235, 4294901760
      %5237 = vmatmul.mubr.f32.gmra.mxu0 %v5236
      %v5238 = vpop.f32.mrf.mxu0
      %v5239 = vadd.f32 0.0, %v5238
      %v5240 = vpop.f32.mrf.mxu0
      %5241 = vmatprep.mubr.f32.mxu0 0.0
      %v5242 = vand.u32 %v5148, 4294901760
      %v5243 = vsub.f32 %v5148, %v5242
      %v5244 = vand.u32 %v5243, 4294901760
      %v5245 = vsub.f32 %v5243, %v5244
      %v5246 = vand.u32 %v5245, 4294901760
      %5247 = vmatmul.mubr.f32.gmra.mxu0 %v5246
      %v5248 = vpop.f32.mrf.mxu0
      %v5249 = vadd.f32 0.0, %v5248
      %v5250 = vpop.f32.mrf.mxu0
      %5251 = vmatprep.mubr.f32.mxu0 0.0
      %v5252 = vand.u32 %v5151, 4294901760
      %v5253 = vsub.f32 %v5151, %v5252
      %v5254 = vand.u32 %v5253, 4294901760
      %v5255 = vsub.f32 %v5253, %v5254
      %v5256 = vand.u32 %v5255, 4294901760
      %5257 = vmatmul.mubr.f32.gmra.mxu0 %v5256
      %v5258 = vpop.f32.mrf.mxu0
      %v5259 = vadd.f32 0.0, %v5258
      %v5260 = vpop.f32.mrf.mxu0
      %5261 = vdwg.mxu0
      %5262 = vmatprep.subr.mxu0 0.0
      %5263 = vmatpush1.msra.mxu0 0.0
      %5264 = vmatprep.subr.mxu0 0.0
      %5265 = vmatpush1.msra.mxu0 0.0
      %5266 = vmatprep.subr.mxu0 0.0
      %5267 = vmatpush1.msra.mxu0 0.0
      %5268 = vmatprep.subr.mxu0 0.0
      %5269 = vmatpush1.msra.mxu0 0.0
      %5270 = vmatprep.subr.mxu0 0.0
      %5271 = vmatpush1.msra.mxu0 0.0
      %5272 = vmatprep.subr.mxu0 0.0
      %5273 = vmatpush1.msra.mxu0 0.0
      %5274 = vmatprep.subr.mxu0 0.0
      %5275 = vmatpush1.msra.mxu0 0.0
      %5276 = vmatprep.subr.mxu0 0.0
      %5277 = vmatpush1.msra.mxu0 0.0
      %5278 = vmatprep.subr.mxu0 0.0
      %5279 = vmatpush1.msra.mxu0 0.0
      %5280 = vmatprep.subr.mxu0 0.0
      %5281 = vmatpush1.msra.mxu0 0.0
      %5282 = vmatprep.subr.mxu0 0.0
      %5283 = vmatpush1.msra.mxu0 0.0
      %5284 = vmatprep.subr.mxu0 0.0
      %5285 = vmatpush1.msra.mxu0 0.0
      %5286 = vmatprep.subr.mxu0 0.0
      %v5287 = vand.u32 %v1159, 4294901760
      %v5288 = vsub.f32 %v1159, %v5287
      %v5289 = vand.u32 %v5288, 4294901760
      %v5290 = vsub.f32 %v5288, %v5289
      %v5291 = vand.u32 %v5290, 4294901760
      %5292 = vmatpush1.msra.mxu0 %v5291
      %5293 = vmatprep.subr.mxu0 0.0
      %v5294 = vand.u32 %v1158, 4294901760
      %v5295 = vsub.f32 %v1158, %v5294
      %v5296 = vand.u32 %v5295, 4294901760
      %v5297 = vsub.f32 %v5295, %v5296
      %v5298 = vand.u32 %v5297, 4294901760
      %5299 = vmatpush1.msra.mxu0 %v5298
      %5300 = vmatprep.subr.mxu0 0.0
      %v5301 = vand.u32 %v1157, 4294901760
      %v5302 = vsub.f32 %v1157, %v5301
      %v5303 = vand.u32 %v5302, 4294901760
      %v5304 = vsub.f32 %v5302, %v5303
      %v5305 = vand.u32 %v5304, 4294901760
      %5306 = vmatpush1.msra.mxu0 %v5305
      %5307 = vmatprep.subr.mxu0 0.0
      %v5308 = vand.u32 %v1156, 4294901760
      %v5309 = vsub.f32 %v1156, %v5308
      %v5310 = vand.u32 %v5309, 4294901760
      %v5311 = vsub.f32 %v5309, %v5310
      %v5312 = vand.u32 %v5311, 4294901760
      %5313 = vmatpush1.msra.mxu0 %v5312
      %5314 = vmatprep.subr.mxu0 0.0
      %5315 = vmatpush2.msra.mxu0 0.0
      %5316 = vmatprep.subr.mxu0 0.0
      %5317 = vmatpush2.msra.mxu0 0.0
      %5318 = vmatprep.subr.mxu0 0.0
      %5319 = vmatpush2.msra.mxu0 0.0
      %5320 = vmatprep.subr.mxu0 0.0
      %5321 = vmatpush2.msra.mxu0 0.0
      %5322 = vmatprep.subr.mxu0 0.0
      %5323 = vmatpush2.msra.mxu0 0.0
      %5324 = vmatprep.subr.mxu0 0.0
      %5325 = vmatpush2.msra.mxu0 0.0
      %5326 = vmatprep.subr.mxu0 0.0
      %5327 = vmatpush2.msra.mxu0 0.0
      %5328 = vmatprep.subr.mxu0 0.0
      %5329 = vmatpush2.msra.mxu0 0.0
      %5330 = vmatprep.subr.mxu0 0.0
      %5331 = vmatpush2.msra.mxu0 0.0
      %5332 = vmatprep.subr.mxu0 0.0
      %5333 = vmatpush2.msra.mxu0 0.0
      %5334 = vmatprep.subr.mxu0 0.0
      %5335 = vmatpush2.msra.mxu0 0.0
      %5336 = vmatprep.subr.mxu0 0.0
      %5337 = vmatpush2.msra.mxu0 0.0
      %5338 = vmatprep.subr.mxu0 0.0
      %5339 = vmatpush2.msra.mxu0 0.0
      %5340 = vmatprep.subr.mxu0 0.0
      %5341 = vmatpush2.msra.mxu0 0.0
      %5342 = vmatprep.subr.mxu0 0.0
      %5343 = vmatpush2.msra.mxu0 0.0
      %5344 = vmatprep.subr.mxu0 0.0
      %5345 = vmatpush2.msra.mxu0 0.0
      %5346 = vmatprep.mubr.f32.mxu0 0.0
      %v5347 = vand.u32 %v5142, 4294901760
      %5348 = vmatmul.mubr.f32.gmra.mxu0 %v5347
      %v5349 = vpop.f32.mrf.mxu0
      %v5350 = vadd.f32 %v5229, %v5349
      %v5351 = vpop.f32.mrf.mxu0
      %5352 = vmatprep.mubr.f32.mxu0 0.0
      %v5353 = vand.u32 %v5145, 4294901760
      %5354 = vmatmul.mubr.f32.gmra.mxu0 %v5353
      %v5355 = vpop.f32.mrf.mxu0
      %v5356 = vadd.f32 %v5239, %v5355
      %v5357 = vpop.f32.mrf.mxu0
      %5358 = vmatprep.mubr.f32.mxu0 0.0
      %v5359 = vand.u32 %v5148, 4294901760
      %5360 = vmatmul.mubr.f32.gmra.mxu0 %v5359
      %v5361 = vpop.f32.mrf.mxu0
      %v5362 = vadd.f32 %v5249, %v5361
      %v5363 = vpop.f32.mrf.mxu0
      %5364 = vmatprep.mubr.f32.mxu0 0.0
      %v5365 = vand.u32 %v5151, 4294901760
      %5366 = vmatmul.mubr.f32.gmra.mxu0 %v5365
      %v5367 = vpop.f32.mrf.mxu0
      %v5368 = vadd.f32 %v5259, %v5367
      %v5369 = vpop.f32.mrf.mxu0
      %5370 = vdwg.mxu0
      %5371 = vmatprep.subr.mxu0 0.0
      %5372 = vmatpush1.msra.mxu0 0.0
      %5373 = vmatprep.subr.mxu0 0.0
      %5374 = vmatpush1.msra.mxu0 0.0
      %5375 = vmatprep.subr.mxu0 0.0
      %5376 = vmatpush1.msra.mxu0 0.0
      %5377 = vmatprep.subr.mxu0 0.0
      %5378 = vmatpush1.msra.mxu0 0.0
      %5379 = vmatprep.subr.mxu0 0.0
      %5380 = vmatpush1.msra.mxu0 0.0
      %5381 = vmatprep.subr.mxu0 0.0
      %5382 = vmatpush1.msra.mxu0 0.0
      %5383 = vmatprep.subr.mxu0 0.0
      %5384 = vmatpush1.msra.mxu0 0.0
      %5385 = vmatprep.subr.mxu0 0.0
      %5386 = vmatpush1.msra.mxu0 0.0
      %5387 = vmatprep.subr.mxu0 0.0
      %5388 = vmatpush1.msra.mxu0 0.0
      %5389 = vmatprep.subr.mxu0 0.0
      %5390 = vmatpush1.msra.mxu0 0.0
      %5391 = vmatprep.subr.mxu0 0.0
      %5392 = vmatpush1.msra.mxu0 0.0
      %5393 = vmatprep.subr.mxu0 0.0
      %5394 = vmatpush1.msra.mxu0 0.0
      %5395 = vmatprep.subr.mxu0 0.0
      %v5396 = vand.u32 %v1159, 4294901760
      %v5397 = vsub.f32 %v1159, %v5396
      %5398 = vmatpush1.msra.mxu0 %v5397
      %5399 = vmatprep.subr.mxu0 0.0
      %v5400 = vand.u32 %v1158, 4294901760
      %v5401 = vsub.f32 %v1158, %v5400
      %5402 = vmatpush1.msra.mxu0 %v5401
      %5403 = vmatprep.subr.mxu0 0.0
      %v5404 = vand.u32 %v1157, 4294901760
      %v5405 = vsub.f32 %v1157, %v5404
      %5406 = vmatpush1.msra.mxu0 %v5405
      %5407 = vmatprep.subr.mxu0 0.0
      %v5408 = vand.u32 %v1156, 4294901760
      %v5409 = vsub.f32 %v1156, %v5408
      %5410 = vmatpush1.msra.mxu0 %v5409
      %5411 = vmatprep.subr.mxu0 0.0
      %5412 = vmatpush2.msra.mxu0 0.0
      %5413 = vmatprep.subr.mxu0 0.0
      %5414 = vmatpush2.msra.mxu0 0.0
      %5415 = vmatprep.subr.mxu0 0.0
      %5416 = vmatpush2.msra.mxu0 0.0
      %5417 = vmatprep.subr.mxu0 0.0
      %5418 = vmatpush2.msra.mxu0 0.0
      %5419 = vmatprep.subr.mxu0 0.0
      %5420 = vmatpush2.msra.mxu0 0.0
      %5421 = vmatprep.subr.mxu0 0.0
      %5422 = vmatpush2.msra.mxu0 0.0
      %5423 = vmatprep.subr.mxu0 0.0
      %5424 = vmatpush2.msra.mxu0 0.0
      %5425 = vmatprep.subr.mxu0 0.0
      %5426 = vmatpush2.msra.mxu0 0.0
      %5427 = vmatprep.subr.mxu0 0.0
      %5428 = vmatpush2.msra.mxu0 0.0
      %5429 = vmatprep.subr.mxu0 0.0
      %5430 = vmatpush2.msra.mxu0 0.0
      %5431 = vmatprep.subr.mxu0 0.0
      %5432 = vmatpush2.msra.mxu0 0.0
      %5433 = vmatprep.subr.mxu0 0.0
      %5434 = vmatpush2.msra.mxu0 0.0
      %5435 = vmatprep.subr.mxu0 0.0
      %5436 = vmatpush2.msra.mxu0 0.0
      %5437 = vmatprep.subr.mxu0 0.0
      %5438 = vmatpush2.msra.mxu0 0.0
      %5439 = vmatprep.subr.mxu0 0.0
      %5440 = vmatpush2.msra.mxu0 0.0
      %5441 = vmatprep.subr.mxu0 0.0
      %5442 = vmatpush2.msra.mxu0 0.0
      %5443 = vmatprep.mubr.f32.mxu0 0.0
      %v5444 = vand.u32 %v5142, 4294901760
      %v5445 = vsub.f32 %v5142, %v5444
      %5446 = vmatmul.mubr.f32.gmra.mxu0 %v5445
      %v5447 = vpop.f32.mrf.mxu0
      %v5448 = vadd.f32 %v5350, %v5447
      %v5449 = vpop.f32.mrf.mxu0
      %5450 = vmatprep.mubr.f32.mxu0 0.0
      %v5451 = vand.u32 %v5145, 4294901760
      %v5452 = vsub.f32 %v5145, %v5451
      %5453 = vmatmul.mubr.f32.gmra.mxu0 %v5452
      %v5454 = vpop.f32.mrf.mxu0
      %v5455 = vadd.f32 %v5356, %v5454
      %v5456 = vpop.f32.mrf.mxu0
      %5457 = vmatprep.mubr.f32.mxu0 0.0
      %v5458 = vand.u32 %v5148, 4294901760
      %v5459 = vsub.f32 %v5148, %v5458
      %5460 = vmatmul.mubr.f32.gmra.mxu0 %v5459
      %v5461 = vpop.f32.mrf.mxu0
      %v5462 = vadd.f32 %v5362, %v5461
      %v5463 = vpop.f32.mrf.mxu0
      %5464 = vmatprep.mubr.f32.mxu0 0.0
      %v5465 = vand.u32 %v5151, 4294901760
      %v5466 = vsub.f32 %v5151, %v5465
      %5467 = vmatmul.mubr.f32.gmra.mxu0 %v5466
      %v5468 = vpop.f32.mrf.mxu0
      %v5469 = vadd.f32 %v5368, %v5468
      %v5470 = vpop.f32.mrf.mxu0
      %5471 = vdwg.mxu0
      %5472 = vmatprep.subr.mxu0 0.0
      %5473 = vmatpush1.msra.mxu0 0.0
      %5474 = vmatprep.subr.mxu0 0.0
      %5475 = vmatpush1.msra.mxu0 0.0
      %5476 = vmatprep.subr.mxu0 0.0
      %5477 = vmatpush1.msra.mxu0 0.0
      %5478 = vmatprep.subr.mxu0 0.0
      %5479 = vmatpush1.msra.mxu0 0.0
      %5480 = vmatprep.subr.mxu0 0.0
      %5481 = vmatpush1.msra.mxu0 0.0
      %5482 = vmatprep.subr.mxu0 0.0
      %5483 = vmatpush1.msra.mxu0 0.0
      %5484 = vmatprep.subr.mxu0 0.0
      %5485 = vmatpush1.msra.mxu0 0.0
      %5486 = vmatprep.subr.mxu0 0.0
      %5487 = vmatpush1.msra.mxu0 0.0
      %5488 = vmatprep.subr.mxu0 0.0
      %5489 = vmatpush1.msra.mxu0 0.0
      %5490 = vmatprep.subr.mxu0 0.0
      %5491 = vmatpush1.msra.mxu0 0.0
      %5492 = vmatprep.subr.mxu0 0.0
      %5493 = vmatpush1.msra.mxu0 0.0
      %5494 = vmatprep.subr.mxu0 0.0
      %5495 = vmatpush1.msra.mxu0 0.0
      %5496 = vmatprep.subr.mxu0 0.0
      %v5497 = vand.u32 %v1159, 4294901760
      %5498 = vmatpush1.msra.mxu0 %v5497
      %5499 = vmatprep.subr.mxu0 0.0
      %v5500 = vand.u32 %v1158, 4294901760
      %5501 = vmatpush1.msra.mxu0 %v5500
      %5502 = vmatprep.subr.mxu0 0.0
      %v5503 = vand.u32 %v1157, 4294901760
      %5504 = vmatpush1.msra.mxu0 %v5503
      %5505 = vmatprep.subr.mxu0 0.0
      %v5506 = vand.u32 %v1156, 4294901760
      %5507 = vmatpush1.msra.mxu0 %v5506
      %5508 = vmatprep.subr.mxu0 0.0
      %5509 = vmatpush2.msra.mxu0 0.0
      %5510 = vmatprep.subr.mxu0 0.0
      %5511 = vmatpush2.msra.mxu0 0.0
      %5512 = vmatprep.subr.mxu0 0.0
      %5513 = vmatpush2.msra.mxu0 0.0
      %5514 = vmatprep.subr.mxu0 0.0
      %5515 = vmatpush2.msra.mxu0 0.0
      %5516 = vmatprep.subr.mxu0 0.0
      %5517 = vmatpush2.msra.mxu0 0.0
      %5518 = vmatprep.subr.mxu0 0.0
      %5519 = vmatpush2.msra.mxu0 0.0
      %5520 = vmatprep.subr.mxu0 0.0
      %5521 = vmatpush2.msra.mxu0 0.0
      %5522 = vmatprep.subr.mxu0 0.0
      %5523 = vmatpush2.msra.mxu0 0.0
      %5524 = vmatprep.subr.mxu0 0.0
      %5525 = vmatpush2.msra.mxu0 0.0
      %5526 = vmatprep.subr.mxu0 0.0
      %5527 = vmatpush2.msra.mxu0 0.0
      %5528 = vmatprep.subr.mxu0 0.0
      %5529 = vmatpush2.msra.mxu0 0.0
      %5530 = vmatprep.subr.mxu0 0.0
      %5531 = vmatpush2.msra.mxu0 0.0
      %5532 = vmatprep.subr.mxu0 0.0
      %5533 = vmatpush2.msra.mxu0 0.0
      %5534 = vmatprep.subr.mxu0 0.0
      %5535 = vmatpush2.msra.mxu0 0.0
      %5536 = vmatprep.subr.mxu0 0.0
      %5537 = vmatpush2.msra.mxu0 0.0
      %5538 = vmatprep.subr.mxu0 0.0
      %5539 = vmatpush2.msra.mxu0 0.0
      %5540 = vmatprep.mubr.f32.mxu0 0.0
      %v5541 = vand.u32 %v5142, 4294901760
      %v5542 = vsub.f32 %v5142, %v5541
      %v5543 = vand.u32 %v5542, 4294901760
      %5544 = vmatmul.mubr.f32.gmra.mxu0 %v5543
      %v5545 = vpop.f32.mrf.mxu0
      %v5546 = vadd.f32 %v5448, %v5545
      %v5547 = vpop.f32.mrf.mxu0
      %5548 = vmatprep.mubr.f32.mxu0 0.0
      %v5549 = vand.u32 %v5145, 4294901760
      %v5550 = vsub.f32 %v5145, %v5549
      %v5551 = vand.u32 %v5550, 4294901760
      %5552 = vmatmul.mubr.f32.gmra.mxu0 %v5551
      %v5553 = vpop.f32.mrf.mxu0
      %v5554 = vadd.f32 %v5455, %v5553
      %v5555 = vpop.f32.mrf.mxu0
      %5556 = vmatprep.mubr.f32.mxu0 0.0
      %v5557 = vand.u32 %v5148, 4294901760
      %v5558 = vsub.f32 %v5148, %v5557
      %v5559 = vand.u32 %v5558, 4294901760
      %5560 = vmatmul.mubr.f32.gmra.mxu0 %v5559
      %v5561 = vpop.f32.mrf.mxu0
      %v5562 = vadd.f32 %v5462, %v5561
      %v5563 = vpop.f32.mrf.mxu0
      %5564 = vmatprep.mubr.f32.mxu0 0.0
      %v5565 = vand.u32 %v5151, 4294901760
      %v5566 = vsub.f32 %v5151, %v5565
      %v5567 = vand.u32 %v5566, 4294901760
      %5568 = vmatmul.mubr.f32.gmra.mxu0 %v5567
      %v5569 = vpop.f32.mrf.mxu0
      %v5570 = vadd.f32 %v5469, %v5569
      %v5571 = vpop.f32.mrf.mxu0
      %5572 = vdwg.mxu0
      %5573 = vmatprep.subr.mxu0 0.0
      %5574 = vmatpush1.msra.mxu0 0.0
      %5575 = vmatprep.subr.mxu0 0.0
      %5576 = vmatpush1.msra.mxu0 0.0
      %5577 = vmatprep.subr.mxu0 0.0
      %5578 = vmatpush1.msra.mxu0 0.0
      %5579 = vmatprep.subr.mxu0 0.0
      %5580 = vmatpush1.msra.mxu0 0.0
      %5581 = vmatprep.subr.mxu0 0.0
      %5582 = vmatpush1.msra.mxu0 0.0
      %5583 = vmatprep.subr.mxu0 0.0
      %5584 = vmatpush1.msra.mxu0 0.0
      %5585 = vmatprep.subr.mxu0 0.0
      %5586 = vmatpush1.msra.mxu0 0.0
      %5587 = vmatprep.subr.mxu0 0.0
      %5588 = vmatpush1.msra.mxu0 0.0
      %5589 = vmatprep.subr.mxu0 0.0
      %5590 = vmatpush1.msra.mxu0 0.0
      %5591 = vmatprep.subr.mxu0 0.0
      %5592 = vmatpush1.msra.mxu0 0.0
      %5593 = vmatprep.subr.mxu0 0.0
      %5594 = vmatpush1.msra.mxu0 0.0
      %5595 = vmatprep.subr.mxu0 0.0
      %5596 = vmatpush1.msra.mxu0 0.0
      %5597 = vmatprep.subr.mxu0 0.0
      %v5598 = vand.u32 %v1159, 4294901760
      %v5599 = vsub.f32 %v1159, %v5598
      %v5600 = vand.u32 %v5599, 4294901760
      %5601 = vmatpush1.msra.mxu0 %v5600
      %5602 = vmatprep.subr.mxu0 0.0
      %v5603 = vand.u32 %v1158, 4294901760
      %v5604 = vsub.f32 %v1158, %v5603
      %v5605 = vand.u32 %v5604, 4294901760
      %5606 = vmatpush1.msra.mxu0 %v5605
      %5607 = vmatprep.subr.mxu0 0.0
      %v5608 = vand.u32 %v1157, 4294901760
      %v5609 = vsub.f32 %v1157, %v5608
      %v5610 = vand.u32 %v5609, 4294901760
      %5611 = vmatpush1.msra.mxu0 %v5610
      %5612 = vmatprep.subr.mxu0 0.0
      %v5613 = vand.u32 %v1156, 4294901760
      %v5614 = vsub.f32 %v1156, %v5613
      %v5615 = vand.u32 %v5614, 4294901760
      %5616 = vmatpush1.msra.mxu0 %v5615
      %5617 = vmatprep.subr.mxu0 0.0
      %5618 = vmatpush2.msra.mxu0 0.0
      %5619 = vmatprep.subr.mxu0 0.0
      %5620 = vmatpush2.msra.mxu0 0.0
      %5621 = vmatprep.subr.mxu0 0.0
      %5622 = vmatpush2.msra.mxu0 0.0
      %5623 = vmatprep.subr.mxu0 0.0
      %5624 = vmatpush2.msra.mxu0 0.0
      %5625 = vmatprep.subr.mxu0 0.0
      %5626 = vmatpush2.msra.mxu0 0.0
      %5627 = vmatprep.subr.mxu0 0.0
      %5628 = vmatpush2.msra.mxu0 0.0
      %5629 = vmatprep.subr.mxu0 0.0
      %5630 = vmatpush2.msra.mxu0 0.0
      %5631 = vmatprep.subr.mxu0 0.0
      %5632 = vmatpush2.msra.mxu0 0.0
      %5633 = vmatprep.subr.mxu0 0.0
      %5634 = vmatpush2.msra.mxu0 0.0
      %5635 = vmatprep.subr.mxu0 0.0
      %5636 = vmatpush2.msra.mxu0 0.0
      %5637 = vmatprep.subr.mxu0 0.0
      %5638 = vmatpush2.msra.mxu0 0.0
      %5639 = vmatprep.subr.mxu0 0.0
      %5640 = vmatpush2.msra.mxu0 0.0
      %5641 = vmatprep.subr.mxu0 0.0
      %5642 = vmatpush2.msra.mxu0 0.0
      %5643 = vmatprep.subr.mxu0 0.0
      %5644 = vmatpush2.msra.mxu0 0.0
      %5645 = vmatprep.subr.mxu0 0.0
      %5646 = vmatpush2.msra.mxu0 0.0
      %5647 = vmatprep.subr.mxu0 0.0
      %5648 = vmatpush2.msra.mxu0 0.0
      %5649 = vmatprep.mubr.f32.mxu0 0.0
      %v5650 = vand.u32 %v5142, 4294901760
      %5651 = vmatmul.mubr.f32.gmra.mxu0 %v5650
      %v5652 = vpop.f32.mrf.mxu0
      %v5653 = vadd.f32 %v5546, %v5652
      %v5654 = vpop.f32.mrf.mxu0
      %5655 = vmatprep.mubr.f32.mxu0 0.0
      %v5656 = vand.u32 %v5145, 4294901760
      %5657 = vmatmul.mubr.f32.gmra.mxu0 %v5656
      %v5658 = vpop.f32.mrf.mxu0
      %v5659 = vadd.f32 %v5554, %v5658
      %v5660 = vpop.f32.mrf.mxu0
      %5661 = vmatprep.mubr.f32.mxu0 0.0
      %v5662 = vand.u32 %v5148, 4294901760
      %5663 = vmatmul.mubr.f32.gmra.mxu0 %v5662
      %v5664 = vpop.f32.mrf.mxu0
      %v5665 = vadd.f32 %v5562, %v5664
      %v5666 = vpop.f32.mrf.mxu0
      %5667 = vmatprep.mubr.f32.mxu0 0.0
      %v5668 = vand.u32 %v5151, 4294901760
      %5669 = vmatmul.mubr.f32.gmra.mxu0 %v5668
      %v5670 = vpop.f32.mrf.mxu0
      %v5671 = vadd.f32 %v5570, %v5670
      %v5672 = vpop.f32.mrf.mxu0
      %5673 = vdwg.mxu0
      %5674 = vmatprep.subr.mxu0 0.0
      %5675 = vmatpush1.msra.mxu0 0.0
      %5676 = vmatprep.subr.mxu0 0.0
      %5677 = vmatpush1.msra.mxu0 0.0
      %5678 = vmatprep.subr.mxu0 0.0
      %5679 = vmatpush1.msra.mxu0 0.0
      %5680 = vmatprep.subr.mxu0 0.0
      %5681 = vmatpush1.msra.mxu0 0.0
      %5682 = vmatprep.subr.mxu0 0.0
      %5683 = vmatpush1.msra.mxu0 0.0
      %5684 = vmatprep.subr.mxu0 0.0
      %5685 = vmatpush1.msra.mxu0 0.0
      %5686 = vmatprep.subr.mxu0 0.0
      %5687 = vmatpush1.msra.mxu0 0.0
      %5688 = vmatprep.subr.mxu0 0.0
      %5689 = vmatpush1.msra.mxu0 0.0
      %5690 = vmatprep.subr.mxu0 0.0
      %5691 = vmatpush1.msra.mxu0 0.0
      %5692 = vmatprep.subr.mxu0 0.0
      %5693 = vmatpush1.msra.mxu0 0.0
      %5694 = vmatprep.subr.mxu0 0.0
      %5695 = vmatpush1.msra.mxu0 0.0
      %5696 = vmatprep.subr.mxu0 0.0
      %5697 = vmatpush1.msra.mxu0 0.0
      %5698 = vmatprep.subr.mxu0 0.0
      %v5699 = vand.u32 %v1159, 4294901760
      %5700 = vmatpush1.msra.mxu0 %v5699
      %5701 = vmatprep.subr.mxu0 0.0
      %v5702 = vand.u32 %v1158, 4294901760
      %5703 = vmatpush1.msra.mxu0 %v5702
      %5704 = vmatprep.subr.mxu0 0.0
      %v5705 = vand.u32 %v1157, 4294901760
      %5706 = vmatpush1.msra.mxu0 %v5705
      %5707 = vmatprep.subr.mxu0 0.0
      %v5708 = vand.u32 %v1156, 4294901760
      %5709 = vmatpush1.msra.mxu0 %v5708
      %5710 = vmatprep.subr.mxu0 0.0
      %5711 = vmatpush2.msra.mxu0 0.0
      %5712 = vmatprep.subr.mxu0 0.0
      %5713 = vmatpush2.msra.mxu0 0.0
      %5714 = vmatprep.subr.mxu0 0.0
      %5715 = vmatpush2.msra.mxu0 0.0
      %5716 = vmatprep.subr.mxu0 0.0
      %5717 = vmatpush2.msra.mxu0 0.0
      %5718 = vmatprep.subr.mxu0 0.0
      %5719 = vmatpush2.msra.mxu0 0.0
      %5720 = vmatprep.subr.mxu0 0.0
      %5721 = vmatpush2.msra.mxu0 0.0
      %5722 = vmatprep.subr.mxu0 0.0
      %5723 = vmatpush2.msra.mxu0 0.0
      %5724 = vmatprep.subr.mxu0 0.0
      %5725 = vmatpush2.msra.mxu0 0.0
      %5726 = vmatprep.subr.mxu0 0.0
      %5727 = vmatpush2.msra.mxu0 0.0
      %5728 = vmatprep.subr.mxu0 0.0
      %5729 = vmatpush2.msra.mxu0 0.0
      %5730 = vmatprep.subr.mxu0 0.0
      %5731 = vmatpush2.msra.mxu0 0.0
      %5732 = vmatprep.subr.mxu0 0.0
      %5733 = vmatpush2.msra.mxu0 0.0
      %5734 = vmatprep.subr.mxu0 0.0
      %5735 = vmatpush2.msra.mxu0 0.0
      %5736 = vmatprep.subr.mxu0 0.0
      %5737 = vmatpush2.msra.mxu0 0.0
      %5738 = vmatprep.subr.mxu0 0.0
      %5739 = vmatpush2.msra.mxu0 0.0
      %5740 = vmatprep.subr.mxu0 0.0
      %5741 = vmatpush2.msra.mxu0 0.0
      %5742 = vmatprep.mubr.f32.mxu0 0.0
      %v5743 = vand.u32 %v5142, 4294901760
      %5744 = vmatmul.mubr.f32.gmra.mxu0 %v5743
      %v5745 = vpop.f32.mrf.mxu0
      %v5746 = vadd.f32 %v5653, %v5745
      %v5747 = vpop.f32.mrf.mxu0
      %5748 = vmatprep.mubr.f32.mxu0 0.0
      %v5749 = vand.u32 %v5145, 4294901760
      %5750 = vmatmul.mubr.f32.gmra.mxu0 %v5749
      %v5751 = vpop.f32.mrf.mxu0
      %v5752 = vadd.f32 %v5659, %v5751
      %v5753 = vpop.f32.mrf.mxu0
      %5754 = vmatprep.mubr.f32.mxu0 0.0
      %v5755 = vand.u32 %v5148, 4294901760
      %5756 = vmatmul.mubr.f32.gmra.mxu0 %v5755
      %v5757 = vpop.f32.mrf.mxu0
      %v5758 = vadd.f32 %v5665, %v5757
      %v5759 = vpop.f32.mrf.mxu0
      %5760 = vmatprep.mubr.f32.mxu0 0.0
      %v5761 = vand.u32 %v5151, 4294901760
      %5762 = vmatmul.mubr.f32.gmra.mxu0 %v5761
      %v5763 = vpop.f32.mrf.mxu0
      %v5764 = vadd.f32 %v5671, %v5763
      %v5765 = vpop.f32.mrf.mxu0
      %5766 = vdwg.mxu0
      %v5767 = vadd.f32 %v5133, %v5746
      %v5768 = vadd.f32 %v5134, %v5752
      %v5769 = vadd.f32 %v5135, %v5758
      %v5770 = vadd.f32 %v5136, %v5764
      %5772 = vset.pattern.permute.xlu0 0
      %5773 = vperm.xlu0 %5772, %v1168
      %v5774 = vpop.permute.xlu0 %5773
      %5777 = vset.pattern.permute.xlu0 0
      %5778 = vperm.xlu0 %5777, %v1169
      %v5779 = vpop.permute.xlu0 %5778
      %5782 = vset.pattern.permute.xlu0 0
      %5783 = vperm.xlu0 %5782, %v1170
      %v5784 = vpop.permute.xlu0 %5783
      %5787 = vset.pattern.permute.xlu0 0
      %5788 = vperm.xlu0 %5787, %v1171
      %v5789 = vpop.permute.xlu0 %5788
      %v5791 = vadd.f32 %v5767, %v5774
      %v5792 = vadd.f32 %v5768, %v5779
      %v5793 = vadd.f32 %v5769, %v5784
      %v5794 = vadd.f32 %v5770, %v5789
      %v5795 = vld [vmem:[%s4 + $0xe0] sm:$0xff]
      %v5796 = vld [vmem:[%s4 + $0xe8] sm:$0xff]
      %v5797 = vld [vmem:[%s4 + $0xf0] sm:$0xff]
      %v5798 = vld [vmem:[%s4 + $0xf8] sm:$0xff]
      %v5799 = vmax.f32 %v5791, 0.0
      %v5800 = vmax.f32 %v5792, 0.0
      %v5801 = vmax.f32 %v5793, 0.0
      %v5802 = vmax.f32 %v5794, 0.0
      %v5803 = vld [vmem:[%s5 + $0x40] sm:$0xff]
      %v5804 = vld [vmem:[%s5 + $0x48] sm:$0xff]
      %v5805 = vld [vmem:[%s5 + $0x50] sm:$0xff]
      %v5806 = vld [vmem:[%s5 + $0x58] sm:$0xff]
      %5808 = vset.pattern.permute.xlu0 0
      %5809 = vperm.xlu0 %5808, %v5803
      %v5810 = vpop.permute.xlu0 %5809
      %5813 = vset.pattern.permute.xlu0 0
      %5814 = vperm.xlu0 %5813, %v5804
      %v5815 = vpop.permute.xlu0 %5814
      %5818 = vset.pattern.permute.xlu0 0
      %5819 = vperm.xlu0 %5818, %v5805
      %v5820 = vpop.permute.xlu0 %5819
      %5823 = vset.pattern.permute.xlu0 0
      %5824 = vperm.xlu0 %5823, %v5806
      %v5825 = vpop.permute.xlu0 %5824
      %v5828 = vsel %vm1184, %v5795, 0
      %v5831 = vsel %vm1184, %v5796, 0
      %v5834 = vsel %vm1184, %v5797, 0
      %v5837 = vsel %vm1184, %v5798, 0
      %5839 = vmatprep.subr.mxu0 0.0
      %5840 = vmatpush1.msra.mxu0 0.0
      %5841 = vmatprep.subr.mxu0 0.0
      %5842 = vmatpush1.msra.mxu0 0.0
      %5843 = vmatprep.subr.mxu0 0.0
      %5844 = vmatpush1.msra.mxu0 0.0
      %5845 = vmatprep.subr.mxu0 0.0
      %5846 = vmatpush1.msra.mxu0 0.0
      %5847 = vmatprep.subr.mxu0 0.0
      %5848 = vmatpush1.msra.mxu0 0.0
      %5849 = vmatprep.subr.mxu0 0.0
      %5850 = vmatpush1.msra.mxu0 0.0
      %5851 = vmatprep.subr.mxu0 0.0
      %5852 = vmatpush1.msra.mxu0 0.0
      %5853 = vmatprep.subr.mxu0 0.0
      %5854 = vmatpush1.msra.mxu0 0.0
      %5855 = vmatprep.subr.mxu0 0.0
      %5856 = vmatpush1.msra.mxu0 0.0
      %5857 = vmatprep.subr.mxu0 0.0
      %5858 = vmatpush1.msra.mxu0 0.0
      %5859 = vmatprep.subr.mxu0 0.0
      %5860 = vmatpush1.msra.mxu0 0.0
      %5861 = vmatprep.subr.mxu0 0.0
      %5862 = vmatpush1.msra.mxu0 0.0
      %5863 = vmatprep.subr.mxu0 0.0
      %v5864 = vand.u32 %v5802, 4294901760
      %5865 = vmatpush1.msra.mxu0 %v5864
      %5866 = vmatprep.subr.mxu0 0.0
      %v5867 = vand.u32 %v5801, 4294901760
      %5868 = vmatpush1.msra.mxu0 %v5867
      %5869 = vmatprep.subr.mxu0 0.0
      %v5870 = vand.u32 %v5800, 4294901760
      %5871 = vmatpush1.msra.mxu0 %v5870
      %5872 = vmatprep.subr.mxu0 0.0
      %v5873 = vand.u32 %v5799, 4294901760
      %5874 = vmatpush1.msra.mxu0 %v5873
      %5875 = vmatprep.subr.mxu0 0.0
      %5876 = vmatpush2.msra.mxu0 0.0
      %5877 = vmatprep.subr.mxu0 0.0
      %5878 = vmatpush2.msra.mxu0 0.0
      %5879 = vmatprep.subr.mxu0 0.0
      %5880 = vmatpush2.msra.mxu0 0.0
      %5881 = vmatprep.subr.mxu0 0.0
      %5882 = vmatpush2.msra.mxu0 0.0
      %5883 = vmatprep.subr.mxu0 0.0
      %5884 = vmatpush2.msra.mxu0 0.0
      %5885 = vmatprep.subr.mxu0 0.0
      %5886 = vmatpush2.msra.mxu0 0.0
      %5887 = vmatprep.subr.mxu0 0.0
      %5888 = vmatpush2.msra.mxu0 0.0
      %5889 = vmatprep.subr.mxu0 0.0
      %5890 = vmatpush2.msra.mxu0 0.0
      %5891 = vmatprep.subr.mxu0 0.0
      %5892 = vmatpush2.msra.mxu0 0.0
      %5893 = vmatprep.subr.mxu0 0.0
      %5894 = vmatpush2.msra.mxu0 0.0
      %5895 = vmatprep.subr.mxu0 0.0
      %5896 = vmatpush2.msra.mxu0 0.0
      %5897 = vmatprep.subr.mxu0 0.0
      %5898 = vmatpush2.msra.mxu0 0.0
      %5899 = vmatprep.subr.mxu0 0.0
      %5900 = vmatpush2.msra.mxu0 0.0
      %5901 = vmatprep.subr.mxu0 0.0
      %5902 = vmatpush2.msra.mxu0 0.0
      %5903 = vmatprep.subr.mxu0 0.0
      %5904 = vmatpush2.msra.mxu0 0.0
      %5905 = vmatprep.subr.mxu0 0.0
      %5906 = vmatpush2.msra.mxu0 0.0
      %5907 = vmatprep.mubr.f32.mxu0 0.0
      %v5908 = vand.u32 %v5828, 4294901760
      %v5909 = vsub.f32 %v5828, %v5908
      %v5910 = vand.u32 %v5909, 4294901760
      %v5911 = vsub.f32 %v5909, %v5910
      %v5912 = vand.u32 %v5911, 4294901760
      %5913 = vmatmul.mubr.f32.gmra.mxu0 %v5912
      %v5914 = vpop.f32.mrf.mxu0
      %v5915 = vadd.f32 %v5810, %v5914
      %v5916 = vpop.f32.mrf.mxu0
      %5917 = vmatprep.mubr.f32.mxu0 0.0
      %v5918 = vand.u32 %v5831, 4294901760
      %v5919 = vsub.f32 %v5831, %v5918
      %v5920 = vand.u32 %v5919, 4294901760
      %v5921 = vsub.f32 %v5919, %v5920
      %v5922 = vand.u32 %v5921, 4294901760
      %5923 = vmatmul.mubr.f32.gmra.mxu0 %v5922
      %v5924 = vpop.f32.mrf.mxu0
      %v5925 = vadd.f32 %v5815, %v5924
      %v5926 = vpop.f32.mrf.mxu0
      %5927 = vmatprep.mubr.f32.mxu0 0.0
      %v5928 = vand.u32 %v5834, 4294901760
      %v5929 = vsub.f32 %v5834, %v5928
      %v5930 = vand.u32 %v5929, 4294901760
      %v5931 = vsub.f32 %v5929, %v5930
      %v5932 = vand.u32 %v5931, 4294901760
      %5933 = vmatmul.mubr.f32.gmra.mxu0 %v5932
      %v5934 = vpop.f32.mrf.mxu0
      %v5935 = vadd.f32 %v5820, %v5934
      %v5936 = vpop.f32.mrf.mxu0
      %5937 = vmatprep.mubr.f32.mxu0 0.0
      %v5938 = vand.u32 %v5837, 4294901760
      %v5939 = vsub.f32 %v5837, %v5938
      %v5940 = vand.u32 %v5939, 4294901760
      %v5941 = vsub.f32 %v5939, %v5940
      %v5942 = vand.u32 %v5941, 4294901760
      %5943 = vmatmul.mubr.f32.gmra.mxu0 %v5942
      %v5944 = vpop.f32.mrf.mxu0
      %v5945 = vadd.f32 %v5825, %v5944
      %v5946 = vpop.f32.mrf.mxu0
      %5947 = vdwg.mxu0
      %5948 = vmatprep.subr.mxu0 0.0
      %5949 = vmatpush1.msra.mxu0 0.0
      %5950 = vmatprep.subr.mxu0 0.0
      %5951 = vmatpush1.msra.mxu0 0.0
      %5952 = vmatprep.subr.mxu0 0.0
      %5953 = vmatpush1.msra.mxu0 0.0
      %5954 = vmatprep.subr.mxu0 0.0
      %5955 = vmatpush1.msra.mxu0 0.0
      %5956 = vmatprep.subr.mxu0 0.0
      %5957 = vmatpush1.msra.mxu0 0.0
      %5958 = vmatprep.subr.mxu0 0.0
      %5959 = vmatpush1.msra.mxu0 0.0
      %5960 = vmatprep.subr.mxu0 0.0
      %5961 = vmatpush1.msra.mxu0 0.0
      %5962 = vmatprep.subr.mxu0 0.0
      %5963 = vmatpush1.msra.mxu0 0.0
      %5964 = vmatprep.subr.mxu0 0.0
      %5965 = vmatpush1.msra.mxu0 0.0
      %5966 = vmatprep.subr.mxu0 0.0
      %5967 = vmatpush1.msra.mxu0 0.0
      %5968 = vmatprep.subr.mxu0 0.0
      %5969 = vmatpush1.msra.mxu0 0.0
      %5970 = vmatprep.subr.mxu0 0.0
      %5971 = vmatpush1.msra.mxu0 0.0
      %5972 = vmatprep.subr.mxu0 0.0
      %v5973 = vand.u32 %v5802, 4294901760
      %v5974 = vsub.f32 %v5802, %v5973
      %v5975 = vand.u32 %v5974, 4294901760
      %v5976 = vsub.f32 %v5974, %v5975
      %v5977 = vand.u32 %v5976, 4294901760
      %5978 = vmatpush1.msra.mxu0 %v5977
      %5979 = vmatprep.subr.mxu0 0.0
      %v5980 = vand.u32 %v5801, 4294901760
      %v5981 = vsub.f32 %v5801, %v5980
      %v5982 = vand.u32 %v5981, 4294901760
      %v5983 = vsub.f32 %v5981, %v5982
      %v5984 = vand.u32 %v5983, 4294901760
      %5985 = vmatpush1.msra.mxu0 %v5984
      %5986 = vmatprep.subr.mxu0 0.0
      %v5987 = vand.u32 %v5800, 4294901760
      %v5988 = vsub.f32 %v5800, %v5987
      %v5989 = vand.u32 %v5988, 4294901760
      %v5990 = vsub.f32 %v5988, %v5989
      %v5991 = vand.u32 %v5990, 4294901760
      %5992 = vmatpush1.msra.mxu0 %v5991
      %5993 = vmatprep.subr.mxu0 0.0
      %v5994 = vand.u32 %v5799, 4294901760
      %v5995 = vsub.f32 %v5799, %v5994
      %v5996 = vand.u32 %v5995, 4294901760
      %v5997 = vsub.f32 %v5995, %v5996
      %v5998 = vand.u32 %v5997, 4294901760
      %5999 = vmatpush1.msra.mxu0 %v5998
      %6000 = vmatprep.subr.mxu0 0.0
      %6001 = vmatpush2.msra.mxu0 0.0
      %6002 = vmatprep.subr.mxu0 0.0
      %6003 = vmatpush2.msra.mxu0 0.0
      %6004 = vmatprep.subr.mxu0 0.0
      %6005 = vmatpush2.msra.mxu0 0.0
      %6006 = vmatprep.subr.mxu0 0.0
      %6007 = vmatpush2.msra.mxu0 0.0
      %6008 = vmatprep.subr.mxu0 0.0
      %6009 = vmatpush2.msra.mxu0 0.0
      %6010 = vmatprep.subr.mxu0 0.0
      %6011 = vmatpush2.msra.mxu0 0.0
      %6012 = vmatprep.subr.mxu0 0.0
      %6013 = vmatpush2.msra.mxu0 0.0
      %6014 = vmatprep.subr.mxu0 0.0
      %6015 = vmatpush2.msra.mxu0 0.0
      %6016 = vmatprep.subr.mxu0 0.0
      %6017 = vmatpush2.msra.mxu0 0.0
      %6018 = vmatprep.subr.mxu0 0.0
      %6019 = vmatpush2.msra.mxu0 0.0
      %6020 = vmatprep.subr.mxu0 0.0
      %6021 = vmatpush2.msra.mxu0 0.0
      %6022 = vmatprep.subr.mxu0 0.0
      %6023 = vmatpush2.msra.mxu0 0.0
      %6024 = vmatprep.subr.mxu0 0.0
      %6025 = vmatpush2.msra.mxu0 0.0
      %6026 = vmatprep.subr.mxu0 0.0
      %6027 = vmatpush2.msra.mxu0 0.0
      %6028 = vmatprep.subr.mxu0 0.0
      %6029 = vmatpush2.msra.mxu0 0.0
      %6030 = vmatprep.subr.mxu0 0.0
      %6031 = vmatpush2.msra.mxu0 0.0
      %6032 = vmatprep.mubr.f32.mxu0 0.0
      %v6033 = vand.u32 %v5828, 4294901760
      %6034 = vmatmul.mubr.f32.gmra.mxu0 %v6033
      %v6035 = vpop.f32.mrf.mxu0
      %v6036 = vadd.f32 %v5915, %v6035
      %v6037 = vpop.f32.mrf.mxu0
      %6038 = vmatprep.mubr.f32.mxu0 0.0
      %v6039 = vand.u32 %v5831, 4294901760
      %6040 = vmatmul.mubr.f32.gmra.mxu0 %v6039
      %v6041 = vpop.f32.mrf.mxu0
      %v6042 = vadd.f32 %v5925, %v6041
      %v6043 = vpop.f32.mrf.mxu0
      %6044 = vmatprep.mubr.f32.mxu0 0.0
      %v6045 = vand.u32 %v5834, 4294901760
      %6046 = vmatmul.mubr.f32.gmra.mxu0 %v6045
      %v6047 = vpop.f32.mrf.mxu0
      %v6048 = vadd.f32 %v5935, %v6047
      %v6049 = vpop.f32.mrf.mxu0
      %6050 = vmatprep.mubr.f32.mxu0 0.0
      %v6051 = vand.u32 %v5837, 4294901760
      %6052 = vmatmul.mubr.f32.gmra.mxu0 %v6051
      %v6053 = vpop.f32.mrf.mxu0
      %v6054 = vadd.f32 %v5945, %v6053
      %v6055 = vpop.f32.mrf.mxu0
      %6056 = vdwg.mxu0
      %6057 = vmatprep.subr.mxu0 0.0
      %6058 = vmatpush1.msra.mxu0 0.0
      %6059 = vmatprep.subr.mxu0 0.0
      %6060 = vmatpush1.msra.mxu0 0.0
      %6061 = vmatprep.subr.mxu0 0.0
      %6062 = vmatpush1.msra.mxu0 0.0
      %6063 = vmatprep.subr.mxu0 0.0
      %6064 = vmatpush1.msra.mxu0 0.0
      %6065 = vmatprep.subr.mxu0 0.0
      %6066 = vmatpush1.msra.mxu0 0.0
      %6067 = vmatprep.subr.mxu0 0.0
      %6068 = vmatpush1.msra.mxu0 0.0
      %6069 = vmatprep.subr.mxu0 0.0
      %6070 = vmatpush1.msra.mxu0 0.0
      %6071 = vmatprep.subr.mxu0 0.0
      %6072 = vmatpush1.msra.mxu0 0.0
      %6073 = vmatprep.subr.mxu0 0.0
      %6074 = vmatpush1.msra.mxu0 0.0
      %6075 = vmatprep.subr.mxu0 0.0
      %6076 = vmatpush1.msra.mxu0 0.0
      %6077 = vmatprep.subr.mxu0 0.0
      %6078 = vmatpush1.msra.mxu0 0.0
      %6079 = vmatprep.subr.mxu0 0.0
      %6080 = vmatpush1.msra.mxu0 0.0
      %6081 = vmatprep.subr.mxu0 0.0
      %v6082 = vand.u32 %v5802, 4294901760
      %v6083 = vsub.f32 %v5802, %v6082
      %6084 = vmatpush1.msra.mxu0 %v6083
      %6085 = vmatprep.subr.mxu0 0.0
      %v6086 = vand.u32 %v5801, 4294901760
      %v6087 = vsub.f32 %v5801, %v6086
      %6088 = vmatpush1.msra.mxu0 %v6087
      %6089 = vmatprep.subr.mxu0 0.0
      %v6090 = vand.u32 %v5800, 4294901760
      %v6091 = vsub.f32 %v5800, %v6090
      %6092 = vmatpush1.msra.mxu0 %v6091
      %6093 = vmatprep.subr.mxu0 0.0
      %v6094 = vand.u32 %v5799, 4294901760
      %v6095 = vsub.f32 %v5799, %v6094
      %6096 = vmatpush1.msra.mxu0 %v6095
      %6097 = vmatprep.subr.mxu0 0.0
      %6098 = vmatpush2.msra.mxu0 0.0
      %6099 = vmatprep.subr.mxu0 0.0
      %6100 = vmatpush2.msra.mxu0 0.0
      %6101 = vmatprep.subr.mxu0 0.0
      %6102 = vmatpush2.msra.mxu0 0.0
      %6103 = vmatprep.subr.mxu0 0.0
      %6104 = vmatpush2.msra.mxu0 0.0
      %6105 = vmatprep.subr.mxu0 0.0
      %6106 = vmatpush2.msra.mxu0 0.0
      %6107 = vmatprep.subr.mxu0 0.0
      %6108 = vmatpush2.msra.mxu0 0.0
      %6109 = vmatprep.subr.mxu0 0.0
      %6110 = vmatpush2.msra.mxu0 0.0
      %6111 = vmatprep.subr.mxu0 0.0
      %6112 = vmatpush2.msra.mxu0 0.0
      %6113 = vmatprep.subr.mxu0 0.0
      %6114 = vmatpush2.msra.mxu0 0.0
      %6115 = vmatprep.subr.mxu0 0.0
      %6116 = vmatpush2.msra.mxu0 0.0
      %6117 = vmatprep.subr.mxu0 0.0
      %6118 = vmatpush2.msra.mxu0 0.0
      %6119 = vmatprep.subr.mxu0 0.0
      %6120 = vmatpush2.msra.mxu0 0.0
      %6121 = vmatprep.subr.mxu0 0.0
      %6122 = vmatpush2.msra.mxu0 0.0
      %6123 = vmatprep.subr.mxu0 0.0
      %6124 = vmatpush2.msra.mxu0 0.0
      %6125 = vmatprep.subr.mxu0 0.0
      %6126 = vmatpush2.msra.mxu0 0.0
      %6127 = vmatprep.subr.mxu0 0.0
      %6128 = vmatpush2.msra.mxu0 0.0
      %6129 = vmatprep.mubr.f32.mxu0 0.0
      %v6130 = vand.u32 %v5828, 4294901760
      %v6131 = vsub.f32 %v5828, %v6130
      %6132 = vmatmul.mubr.f32.gmra.mxu0 %v6131
      %v6133 = vpop.f32.mrf.mxu0
      %v6134 = vadd.f32 %v6036, %v6133
      %v6135 = vpop.f32.mrf.mxu0
      %6136 = vmatprep.mubr.f32.mxu0 0.0
      %v6137 = vand.u32 %v5831, 4294901760
      %v6138 = vsub.f32 %v5831, %v6137
      %6139 = vmatmul.mubr.f32.gmra.mxu0 %v6138
      %v6140 = vpop.f32.mrf.mxu0
      %v6141 = vadd.f32 %v6042, %v6140
      %v6142 = vpop.f32.mrf.mxu0
      %6143 = vmatprep.mubr.f32.mxu0 0.0
      %v6144 = vand.u32 %v5834, 4294901760
      %v6145 = vsub.f32 %v5834, %v6144
      %6146 = vmatmul.mubr.f32.gmra.mxu0 %v6145
      %v6147 = vpop.f32.mrf.mxu0
      %v6148 = vadd.f32 %v6048, %v6147
      %v6149 = vpop.f32.mrf.mxu0
      %6150 = vmatprep.mubr.f32.mxu0 0.0
      %v6151 = vand.u32 %v5837, 4294901760
      %v6152 = vsub.f32 %v5837, %v6151
      %6153 = vmatmul.mubr.f32.gmra.mxu0 %v6152
      %v6154 = vpop.f32.mrf.mxu0
      %v6155 = vadd.f32 %v6054, %v6154
      %v6156 = vpop.f32.mrf.mxu0
      %6157 = vdwg.mxu0
      %6158 = vmatprep.subr.mxu0 0.0
      %6159 = vmatpush1.msra.mxu0 0.0
      %6160 = vmatprep.subr.mxu0 0.0
      %6161 = vmatpush1.msra.mxu0 0.0
      %6162 = vmatprep.subr.mxu0 0.0
      %6163 = vmatpush1.msra.mxu0 0.0
      %6164 = vmatprep.subr.mxu0 0.0
      %6165 = vmatpush1.msra.mxu0 0.0
      %6166 = vmatprep.subr.mxu0 0.0
      %6167 = vmatpush1.msra.mxu0 0.0
      %6168 = vmatprep.subr.mxu0 0.0
      %6169 = vmatpush1.msra.mxu0 0.0
      %6170 = vmatprep.subr.mxu0 0.0
      %6171 = vmatpush1.msra.mxu0 0.0
      %6172 = vmatprep.subr.mxu0 0.0
      %6173 = vmatpush1.msra.mxu0 0.0
      %6174 = vmatprep.subr.mxu0 0.0
      %6175 = vmatpush1.msra.mxu0 0.0
      %6176 = vmatprep.subr.mxu0 0.0
      %6177 = vmatpush1.msra.mxu0 0.0
      %6178 = vmatprep.subr.mxu0 0.0
      %6179 = vmatpush1.msra.mxu0 0.0
      %6180 = vmatprep.subr.mxu0 0.0
      %6181 = vmatpush1.msra.mxu0 0.0
      %6182 = vmatprep.subr.mxu0 0.0
      %v6183 = vand.u32 %v5802, 4294901760
      %6184 = vmatpush1.msra.mxu0 %v6183
      %6185 = vmatprep.subr.mxu0 0.0
      %v6186 = vand.u32 %v5801, 4294901760
      %6187 = vmatpush1.msra.mxu0 %v6186
      %6188 = vmatprep.subr.mxu0 0.0
      %v6189 = vand.u32 %v5800, 4294901760
      %6190 = vmatpush1.msra.mxu0 %v6189
      %6191 = vmatprep.subr.mxu0 0.0
      %v6192 = vand.u32 %v5799, 4294901760
      %6193 = vmatpush1.msra.mxu0 %v6192
      %6194 = vmatprep.subr.mxu0 0.0
      %6195 = vmatpush2.msra.mxu0 0.0
      %6196 = vmatprep.subr.mxu0 0.0
      %6197 = vmatpush2.msra.mxu0 0.0
      %6198 = vmatprep.subr.mxu0 0.0
      %6199 = vmatpush2.msra.mxu0 0.0
      %6200 = vmatprep.subr.mxu0 0.0
      %6201 = vmatpush2.msra.mxu0 0.0
      %6202 = vmatprep.subr.mxu0 0.0
      %6203 = vmatpush2.msra.mxu0 0.0
      %6204 = vmatprep.subr.mxu0 0.0
      %6205 = vmatpush2.msra.mxu0 0.0
      %6206 = vmatprep.subr.mxu0 0.0
      %6207 = vmatpush2.msra.mxu0 0.0
      %6208 = vmatprep.subr.mxu0 0.0
      %6209 = vmatpush2.msra.mxu0 0.0
      %6210 = vmatprep.subr.mxu0 0.0
      %6211 = vmatpush2.msra.mxu0 0.0
      %6212 = vmatprep.subr.mxu0 0.0
      %6213 = vmatpush2.msra.mxu0 0.0
      %6214 = vmatprep.subr.mxu0 0.0
      %6215 = vmatpush2.msra.mxu0 0.0
      %6216 = vmatprep.subr.mxu0 0.0
      %6217 = vmatpush2.msra.mxu0 0.0
      %6218 = vmatprep.subr.mxu0 0.0
      %6219 = vmatpush2.msra.mxu0 0.0
      %6220 = vmatprep.subr.mxu0 0.0
      %6221 = vmatpush2.msra.mxu0 0.0
      %6222 = vmatprep.subr.mxu0 0.0
      %6223 = vmatpush2.msra.mxu0 0.0
      %6224 = vmatprep.subr.mxu0 0.0
      %6225 = vmatpush2.msra.mxu0 0.0
      %6226 = vmatprep.mubr.f32.mxu0 0.0
      %v6227 = vand.u32 %v5828, 4294901760
      %v6228 = vsub.f32 %v5828, %v6227
      %v6229 = vand.u32 %v6228, 4294901760
      %6230 = vmatmul.mubr.f32.gmra.mxu0 %v6229
      %v6231 = vpop.f32.mrf.mxu0
      %v6232 = vadd.f32 %v6134, %v6231
      %v6233 = vpop.f32.mrf.mxu0
      %6234 = vmatprep.mubr.f32.mxu0 0.0
      %v6235 = vand.u32 %v5831, 4294901760
      %v6236 = vsub.f32 %v5831, %v6235
      %v6237 = vand.u32 %v6236, 4294901760
      %6238 = vmatmul.mubr.f32.gmra.mxu0 %v6237
      %v6239 = vpop.f32.mrf.mxu0
      %v6240 = vadd.f32 %v6141, %v6239
      %v6241 = vpop.f32.mrf.mxu0
      %6242 = vmatprep.mubr.f32.mxu0 0.0
      %v6243 = vand.u32 %v5834, 4294901760
      %v6244 = vsub.f32 %v5834, %v6243
      %v6245 = vand.u32 %v6244, 4294901760
      %6246 = vmatmul.mubr.f32.gmra.mxu0 %v6245
      %v6247 = vpop.f32.mrf.mxu0
      %v6248 = vadd.f32 %v6148, %v6247
      %v6249 = vpop.f32.mrf.mxu0
      %6250 = vmatprep.mubr.f32.mxu0 0.0
      %v6251 = vand.u32 %v5837, 4294901760
      %v6252 = vsub.f32 %v5837, %v6251
      %v6253 = vand.u32 %v6252, 4294901760
      %6254 = vmatmul.mubr.f32.gmra.mxu0 %v6253
      %v6255 = vpop.f32.mrf.mxu0
      %v6256 = vadd.f32 %v6155, %v6255
      %v6257 = vpop.f32.mrf.mxu0
      %6258 = vdwg.mxu0
      %6259 = vmatprep.subr.mxu0 0.0
      %6260 = vmatpush1.msra.mxu0 0.0
      %6261 = vmatprep.subr.mxu0 0.0
      %6262 = vmatpush1.msra.mxu0 0.0
      %6263 = vmatprep.subr.mxu0 0.0
      %6264 = vmatpush1.msra.mxu0 0.0
      %6265 = vmatprep.subr.mxu0 0.0
      %6266 = vmatpush1.msra.mxu0 0.0
      %6267 = vmatprep.subr.mxu0 0.0
      %6268 = vmatpush1.msra.mxu0 0.0
      %6269 = vmatprep.subr.mxu0 0.0
      %6270 = vmatpush1.msra.mxu0 0.0
      %6271 = vmatprep.subr.mxu0 0.0
      %6272 = vmatpush1.msra.mxu0 0.0
      %6273 = vmatprep.subr.mxu0 0.0
      %6274 = vmatpush1.msra.mxu0 0.0
      %6275 = vmatprep.subr.mxu0 0.0
      %6276 = vmatpush1.msra.mxu0 0.0
      %6277 = vmatprep.subr.mxu0 0.0
      %6278 = vmatpush1.msra.mxu0 0.0
      %6279 = vmatprep.subr.mxu0 0.0
      %6280 = vmatpush1.msra.mxu0 0.0
      %6281 = vmatprep.subr.mxu0 0.0
      %6282 = vmatpush1.msra.mxu0 0.0
      %6283 = vmatprep.subr.mxu0 0.0
      %v6284 = vand.u32 %v5802, 4294901760
      %v6285 = vsub.f32 %v5802, %v6284
      %v6286 = vand.u32 %v6285, 4294901760
      %6287 = vmatpush1.msra.mxu0 %v6286
      %6288 = vmatprep.subr.mxu0 0.0
      %v6289 = vand.u32 %v5801, 4294901760
      %v6290 = vsub.f32 %v5801, %v6289
      %v6291 = vand.u32 %v6290, 4294901760
      %6292 = vmatpush1.msra.mxu0 %v6291
      %6293 = vmatprep.subr.mxu0 0.0
      %v6294 = vand.u32 %v5800, 4294901760
      %v6295 = vsub.f32 %v5800, %v6294
      %v6296 = vand.u32 %v6295, 4294901760
      %6297 = vmatpush1.msra.mxu0 %v6296
      %6298 = vmatprep.subr.mxu0 0.0
      %v6299 = vand.u32 %v5799, 4294901760
      %v6300 = vsub.f32 %v5799, %v6299
      %v6301 = vand.u32 %v6300, 4294901760
      %6302 = vmatpush1.msra.mxu0 %v6301
      %6303 = vmatprep.subr.mxu0 0.0
      %6304 = vmatpush2.msra.mxu0 0.0
      %6305 = vmatprep.subr.mxu0 0.0
      %6306 = vmatpush2.msra.mxu0 0.0
      %6307 = vmatprep.subr.mxu0 0.0
      %6308 = vmatpush2.msra.mxu0 0.0
      %6309 = vmatprep.subr.mxu0 0.0
      %6310 = vmatpush2.msra.mxu0 0.0
      %6311 = vmatprep.subr.mxu0 0.0
      %6312 = vmatpush2.msra.mxu0 0.0
      %6313 = vmatprep.subr.mxu0 0.0
      %6314 = vmatpush2.msra.mxu0 0.0
      %6315 = vmatprep.subr.mxu0 0.0
      %6316 = vmatpush2.msra.mxu0 0.0
      %6317 = vmatprep.subr.mxu0 0.0
      %6318 = vmatpush2.msra.mxu0 0.0
      %6319 = vmatprep.subr.mxu0 0.0
      %6320 = vmatpush2.msra.mxu0 0.0
      %6321 = vmatprep.subr.mxu0 0.0
      %6322 = vmatpush2.msra.mxu0 0.0
      %6323 = vmatprep.subr.mxu0 0.0
      %6324 = vmatpush2.msra.mxu0 0.0
      %6325 = vmatprep.subr.mxu0 0.0
      %6326 = vmatpush2.msra.mxu0 0.0
      %6327 = vmatprep.subr.mxu0 0.0
      %6328 = vmatpush2.msra.mxu0 0.0
      %6329 = vmatprep.subr.mxu0 0.0
      %6330 = vmatpush2.msra.mxu0 0.0
      %6331 = vmatprep.subr.mxu0 0.0
      %6332 = vmatpush2.msra.mxu0 0.0
      %6333 = vmatprep.subr.mxu0 0.0
      %6334 = vmatpush2.msra.mxu0 0.0
      %6335 = vmatprep.mubr.f32.mxu0 0.0
      %v6336 = vand.u32 %v5828, 4294901760
      %6337 = vmatmul.mubr.f32.gmra.mxu0 %v6336
      %v6338 = vpop.f32.mrf.mxu0
      %v6339 = vadd.f32 %v6232, %v6338
      %v6340 = vpop.f32.mrf.mxu0
      %6341 = vmatprep.mubr.f32.mxu0 0.0
      %v6342 = vand.u32 %v5831, 4294901760
      %6343 = vmatmul.mubr.f32.gmra.mxu0 %v6342
      %v6344 = vpop.f32.mrf.mxu0
      %v6345 = vadd.f32 %v6240, %v6344
      %v6346 = vpop.f32.mrf.mxu0
      %6347 = vmatprep.mubr.f32.mxu0 0.0
      %v6348 = vand.u32 %v5834, 4294901760
      %6349 = vmatmul.mubr.f32.gmra.mxu0 %v6348
      %v6350 = vpop.f32.mrf.mxu0
      %v6351 = vadd.f32 %v6248, %v6350
      %v6352 = vpop.f32.mrf.mxu0
      %6353 = vmatprep.mubr.f32.mxu0 0.0
      %v6354 = vand.u32 %v5837, 4294901760
      %6355 = vmatmul.mubr.f32.gmra.mxu0 %v6354
      %v6356 = vpop.f32.mrf.mxu0
      %v6357 = vadd.f32 %v6256, %v6356
      %v6358 = vpop.f32.mrf.mxu0
      %6359 = vdwg.mxu0
      %6360 = vmatprep.subr.mxu0 0.0
      %6361 = vmatpush1.msra.mxu0 0.0
      %6362 = vmatprep.subr.mxu0 0.0
      %6363 = vmatpush1.msra.mxu0 0.0
      %6364 = vmatprep.subr.mxu0 0.0
      %6365 = vmatpush1.msra.mxu0 0.0
      %6366 = vmatprep.subr.mxu0 0.0
      %6367 = vmatpush1.msra.mxu0 0.0
      %6368 = vmatprep.subr.mxu0 0.0
      %6369 = vmatpush1.msra.mxu0 0.0
      %6370 = vmatprep.subr.mxu0 0.0
      %6371 = vmatpush1.msra.mxu0 0.0
      %6372 = vmatprep.subr.mxu0 0.0
      %6373 = vmatpush1.msra.mxu0 0.0
      %6374 = vmatprep.subr.mxu0 0.0
      %6375 = vmatpush1.msra.mxu0 0.0
      %6376 = vmatprep.subr.mxu0 0.0
      %6377 = vmatpush1.msra.mxu0 0.0
      %6378 = vmatprep.subr.mxu0 0.0
      %6379 = vmatpush1.msra.mxu0 0.0
      %6380 = vmatprep.subr.mxu0 0.0
      %6381 = vmatpush1.msra.mxu0 0.0
      %6382 = vmatprep.subr.mxu0 0.0
      %6383 = vmatpush1.msra.mxu0 0.0
      %6384 = vmatprep.subr.mxu0 0.0
      %v6385 = vand.u32 %v5802, 4294901760
      %6386 = vmatpush1.msra.mxu0 %v6385
      %6387 = vmatprep.subr.mxu0 0.0
      %v6388 = vand.u32 %v5801, 4294901760
      %6389 = vmatpush1.msra.mxu0 %v6388
      %6390 = vmatprep.subr.mxu0 0.0
      %v6391 = vand.u32 %v5800, 4294901760
      %6392 = vmatpush1.msra.mxu0 %v6391
      %6393 = vmatprep.subr.mxu0 0.0
      %v6394 = vand.u32 %v5799, 4294901760
      %6395 = vmatpush1.msra.mxu0 %v6394
      %6396 = vmatprep.subr.mxu0 0.0
      %6397 = vmatpush2.msra.mxu0 0.0
      %6398 = vmatprep.subr.mxu0 0.0
      %6399 = vmatpush2.msra.mxu0 0.0
      %6400 = vmatprep.subr.mxu0 0.0
      %6401 = vmatpush2.msra.mxu0 0.0
      %6402 = vmatprep.subr.mxu0 0.0
      %6403 = vmatpush2.msra.mxu0 0.0
      %6404 = vmatprep.subr.mxu0 0.0
      %6405 = vmatpush2.msra.mxu0 0.0
      %6406 = vmatprep.subr.mxu0 0.0
      %6407 = vmatpush2.msra.mxu0 0.0
      %6408 = vmatprep.subr.mxu0 0.0
      %6409 = vmatpush2.msra.mxu0 0.0
      %6410 = vmatprep.subr.mxu0 0.0
      %6411 = vmatpush2.msra.mxu0 0.0
      %6412 = vmatprep.subr.mxu0 0.0
      %6413 = vmatpush2.msra.mxu0 0.0
      %6414 = vmatprep.subr.mxu0 0.0
      %6415 = vmatpush2.msra.mxu0 0.0
      %6416 = vmatprep.subr.mxu0 0.0
      %6417 = vmatpush2.msra.mxu0 0.0
      %6418 = vmatprep.subr.mxu0 0.0
      %6419 = vmatpush2.msra.mxu0 0.0
      %6420 = vmatprep.subr.mxu0 0.0
      %6421 = vmatpush2.msra.mxu0 0.0
      %6422 = vmatprep.subr.mxu0 0.0
      %6423 = vmatpush2.msra.mxu0 0.0
      %6424 = vmatprep.subr.mxu0 0.0
      %6425 = vmatpush2.msra.mxu0 0.0
      %6426 = vmatprep.subr.mxu0 0.0
      %6427 = vmatpush2.msra.mxu0 0.0
      %6428 = vmatprep.mubr.f32.mxu0 0.0
      %v6429 = vand.u32 %v5828, 4294901760
      %6430 = vmatmul.mubr.f32.gmra.mxu0 %v6429
      %v6431 = vpop.f32.mrf.mxu0
      %v6432 = vadd.f32 %v6339, %v6431
      %v6433 = vpop.f32.mrf.mxu0
      %6434 = vmatprep.mubr.f32.mxu0 0.0
      %v6435 = vand.u32 %v5831, 4294901760
      %6436 = vmatmul.mubr.f32.gmra.mxu0 %v6435
      %v6437 = vpop.f32.mrf.mxu0
      %v6438 = vadd.f32 %v6345, %v6437
      %v6439 = vpop.f32.mrf.mxu0
      %6440 = vmatprep.mubr.f32.mxu0 0.0
      %v6441 = vand.u32 %v5834, 4294901760
      %6442 = vmatmul.mubr.f32.gmra.mxu0 %v6441
      %v6443 = vpop.f32.mrf.mxu0
      %v6444 = vadd.f32 %v6351, %v6443
      %v6445 = vpop.f32.mrf.mxu0
      %6446 = vmatprep.mubr.f32.mxu0 0.0
      %v6447 = vand.u32 %v5837, 4294901760
      %6448 = vmatmul.mubr.f32.gmra.mxu0 %v6447
      %v6449 = vpop.f32.mrf.mxu0
      %v6450 = vadd.f32 %v6357, %v6449
      %v6451 = vpop.f32.mrf.mxu0
      %6452 = vdwg.mxu0
      %v6453 = vld [vmem:[%s4 + $0x180] sm:$0xff]
      %v6454 = vld [vmem:[%s4 + $0x188] sm:$0xff]
      %v6455 = vld [vmem:[%s4 + $0x190] sm:$0xff]
      %v6456 = vld [vmem:[%s4 + $0x198] sm:$0xff]
      %v6457 = vmax.f32 %v6432, 0.0
      %v6458 = vmax.f32 %v6438, 0.0
      %v6459 = vmax.f32 %v6444, 0.0
      %v6460 = vmax.f32 %v6450, 0.0
      %v6461 = vld [vmem:[%s5 + $0xe0] sm:$0xff]
      %v6462 = vld [vmem:[%s5 + $0xe8] sm:$0xff]
      %v6463 = vld [vmem:[%s5 + $0xf0] sm:$0xff]
      %v6464 = vld [vmem:[%s5 + $0xf8] sm:$0xff]
      %6466 = vset.pattern.permute.xlu0 0
      %6467 = vperm.xlu0 %6466, %v6461
      %v6468 = vpop.permute.xlu0 %6467
      %6471 = vset.pattern.permute.xlu0 0
      %6472 = vperm.xlu0 %6471, %v6462
      %v6473 = vpop.permute.xlu0 %6472
      %6476 = vset.pattern.permute.xlu0 0
      %6477 = vperm.xlu0 %6476, %v6463
      %v6478 = vpop.permute.xlu0 %6477
      %6481 = vset.pattern.permute.xlu0 0
      %6482 = vperm.xlu0 %6481, %v6464
      %v6483 = vpop.permute.xlu0 %6482
      %v6486 = vsel %vm1184, %v6453, 0
      %v6489 = vsel %vm1184, %v6454, 0
      %v6492 = vsel %vm1184, %v6455, 0
      %v6495 = vsel %vm1184, %v6456, 0
      %6497 = vmatprep.subr.mxu0 0.0
      %6498 = vmatpush1.msra.mxu0 0.0
      %6499 = vmatprep.subr.mxu0 0.0
      %6500 = vmatpush1.msra.mxu0 0.0
      %6501 = vmatprep.subr.mxu0 0.0
      %6502 = vmatpush1.msra.mxu0 0.0
      %6503 = vmatprep.subr.mxu0 0.0
      %6504 = vmatpush1.msra.mxu0 0.0
      %6505 = vmatprep.subr.mxu0 0.0
      %6506 = vmatpush1.msra.mxu0 0.0
      %6507 = vmatprep.subr.mxu0 0.0
      %6508 = vmatpush1.msra.mxu0 0.0
      %6509 = vmatprep.subr.mxu0 0.0
      %6510 = vmatpush1.msra.mxu0 0.0
      %6511 = vmatprep.subr.mxu0 0.0
      %6512 = vmatpush1.msra.mxu0 0.0
      %6513 = vmatprep.subr.mxu0 0.0
      %6514 = vmatpush1.msra.mxu0 0.0
      %6515 = vmatprep.subr.mxu0 0.0
      %6516 = vmatpush1.msra.mxu0 0.0
      %6517 = vmatprep.subr.mxu0 0.0
      %6518 = vmatpush1.msra.mxu0 0.0
      %6519 = vmatprep.subr.mxu0 0.0
      %6520 = vmatpush1.msra.mxu0 0.0
      %6521 = vmatprep.subr.mxu0 0.0
      %v6522 = vand.u32 %v6460, 4294901760
      %6523 = vmatpush1.msra.mxu0 %v6522
      %6524 = vmatprep.subr.mxu0 0.0
      %v6525 = vand.u32 %v6459, 4294901760
      %6526 = vmatpush1.msra.mxu0 %v6525
      %6527 = vmatprep.subr.mxu0 0.0
      %v6528 = vand.u32 %v6458, 4294901760
      %6529 = vmatpush1.msra.mxu0 %v6528
      %6530 = vmatprep.subr.mxu0 0.0
      %v6531 = vand.u32 %v6457, 4294901760
      %6532 = vmatpush1.msra.mxu0 %v6531
      %6533 = vmatprep.subr.mxu0 0.0
      %6534 = vmatpush2.msra.mxu0 0.0
      %6535 = vmatprep.subr.mxu0 0.0
      %6536 = vmatpush2.msra.mxu0 0.0
      %6537 = vmatprep.subr.mxu0 0.0
      %6538 = vmatpush2.msra.mxu0 0.0
      %6539 = vmatprep.subr.mxu0 0.0
      %6540 = vmatpush2.msra.mxu0 0.0
      %6541 = vmatprep.subr.mxu0 0.0
      %6542 = vmatpush2.msra.mxu0 0.0
      %6543 = vmatprep.subr.mxu0 0.0
      %6544 = vmatpush2.msra.mxu0 0.0
      %6545 = vmatprep.subr.mxu0 0.0
      %6546 = vmatpush2.msra.mxu0 0.0
      %6547 = vmatprep.subr.mxu0 0.0
      %6548 = vmatpush2.msra.mxu0 0.0
      %6549 = vmatprep.subr.mxu0 0.0
      %6550 = vmatpush2.msra.mxu0 0.0
      %6551 = vmatprep.subr.mxu0 0.0
      %6552 = vmatpush2.msra.mxu0 0.0
      %6553 = vmatprep.subr.mxu0 0.0
      %6554 = vmatpush2.msra.mxu0 0.0
      %6555 = vmatprep.subr.mxu0 0.0
      %6556 = vmatpush2.msra.mxu0 0.0
      %6557 = vmatprep.subr.mxu0 0.0
      %6558 = vmatpush2.msra.mxu0 0.0
      %6559 = vmatprep.subr.mxu0 0.0
      %6560 = vmatpush2.msra.mxu0 0.0
      %6561 = vmatprep.subr.mxu0 0.0
      %6562 = vmatpush2.msra.mxu0 0.0
      %6563 = vmatprep.subr.mxu0 0.0
      %6564 = vmatpush2.msra.mxu0 0.0
      %6565 = vmatprep.mubr.f32.mxu0 0.0
      %v6566 = vand.u32 %v6486, 4294901760
      %v6567 = vsub.f32 %v6486, %v6566
      %v6568 = vand.u32 %v6567, 4294901760
      %v6569 = vsub.f32 %v6567, %v6568
      %v6570 = vand.u32 %v6569, 4294901760
      %6571 = vmatmul.mubr.f32.gmra.mxu0 %v6570
      %v6572 = vpop.f32.mrf.mxu0
      %v6573 = vadd.f32 %v6468, %v6572
      %v6574 = vpop.f32.mrf.mxu0
      %6575 = vmatprep.mubr.f32.mxu0 0.0
      %v6576 = vand.u32 %v6489, 4294901760
      %v6577 = vsub.f32 %v6489, %v6576
      %v6578 = vand.u32 %v6577, 4294901760
      %v6579 = vsub.f32 %v6577, %v6578
      %v6580 = vand.u32 %v6579, 4294901760
      %6581 = vmatmul.mubr.f32.gmra.mxu0 %v6580
      %v6582 = vpop.f32.mrf.mxu0
      %v6583 = vadd.f32 %v6473, %v6582
      %v6584 = vpop.f32.mrf.mxu0
      %6585 = vmatprep.mubr.f32.mxu0 0.0
      %v6586 = vand.u32 %v6492, 4294901760
      %v6587 = vsub.f32 %v6492, %v6586
      %v6588 = vand.u32 %v6587, 4294901760
      %v6589 = vsub.f32 %v6587, %v6588
      %v6590 = vand.u32 %v6589, 4294901760
      %6591 = vmatmul.mubr.f32.gmra.mxu0 %v6590
      %v6592 = vpop.f32.mrf.mxu0
      %v6593 = vadd.f32 %v6478, %v6592
      %v6594 = vpop.f32.mrf.mxu0
      %6595 = vmatprep.mubr.f32.mxu0 0.0
      %v6596 = vand.u32 %v6495, 4294901760
      %v6597 = vsub.f32 %v6495, %v6596
      %v6598 = vand.u32 %v6597, 4294901760
      %v6599 = vsub.f32 %v6597, %v6598
      %v6600 = vand.u32 %v6599, 4294901760
      %6601 = vmatmul.mubr.f32.gmra.mxu0 %v6600
      %v6602 = vpop.f32.mrf.mxu0
      %v6603 = vadd.f32 %v6483, %v6602
      %v6604 = vpop.f32.mrf.mxu0
      %6605 = vdwg.mxu0
      %6606 = vmatprep.subr.mxu0 0.0
      %6607 = vmatpush1.msra.mxu0 0.0
      %6608 = vmatprep.subr.mxu0 0.0
      %6609 = vmatpush1.msra.mxu0 0.0
      %6610 = vmatprep.subr.mxu0 0.0
      %6611 = vmatpush1.msra.mxu0 0.0
      %6612 = vmatprep.subr.mxu0 0.0
      %6613 = vmatpush1.msra.mxu0 0.0
      %6614 = vmatprep.subr.mxu0 0.0
      %6615 = vmatpush1.msra.mxu0 0.0
      %6616 = vmatprep.subr.mxu0 0.0
      %6617 = vmatpush1.msra.mxu0 0.0
      %6618 = vmatprep.subr.mxu0 0.0
      %6619 = vmatpush1.msra.mxu0 0.0
      %6620 = vmatprep.subr.mxu0 0.0
      %6621 = vmatpush1.msra.mxu0 0.0
      %6622 = vmatprep.subr.mxu0 0.0
      %6623 = vmatpush1.msra.mxu0 0.0
      %6624 = vmatprep.subr.mxu0 0.0
      %6625 = vmatpush1.msra.mxu0 0.0
      %6626 = vmatprep.subr.mxu0 0.0
      %6627 = vmatpush1.msra.mxu0 0.0
      %6628 = vmatprep.subr.mxu0 0.0
      %6629 = vmatpush1.msra.mxu0 0.0
      %6630 = vmatprep.subr.mxu0 0.0
      %v6631 = vand.u32 %v6460, 4294901760
      %v6632 = vsub.f32 %v6460, %v6631
      %v6633 = vand.u32 %v6632, 4294901760
      %v6634 = vsub.f32 %v6632, %v6633
      %v6635 = vand.u32 %v6634, 4294901760
      %6636 = vmatpush1.msra.mxu0 %v6635
      %6637 = vmatprep.subr.mxu0 0.0
      %v6638 = vand.u32 %v6459, 4294901760
      %v6639 = vsub.f32 %v6459, %v6638
      %v6640 = vand.u32 %v6639, 4294901760
      %v6641 = vsub.f32 %v6639, %v6640
      %v6642 = vand.u32 %v6641, 4294901760
      %6643 = vmatpush1.msra.mxu0 %v6642
      %6644 = vmatprep.subr.mxu0 0.0
      %v6645 = vand.u32 %v6458, 4294901760
      %v6646 = vsub.f32 %v6458, %v6645
      %v6647 = vand.u32 %v6646, 4294901760
      %v6648 = vsub.f32 %v6646, %v6647
      %v6649 = vand.u32 %v6648, 4294901760
      %6650 = vmatpush1.msra.mxu0 %v6649
      %6651 = vmatprep.subr.mxu0 0.0
      %v6652 = vand.u32 %v6457, 4294901760
      %v6653 = vsub.f32 %v6457, %v6652
      %v6654 = vand.u32 %v6653, 4294901760
      %v6655 = vsub.f32 %v6653, %v6654
      %v6656 = vand.u32 %v6655, 4294901760
      %6657 = vmatpush1.msra.mxu0 %v6656
      %6658 = vmatprep.subr.mxu0 0.0
      %6659 = vmatpush2.msra.mxu0 0.0
      %6660 = vmatprep.subr.mxu0 0.0
      %6661 = vmatpush2.msra.mxu0 0.0
      %6662 = vmatprep.subr.mxu0 0.0
      %6663 = vmatpush2.msra.mxu0 0.0
      %6664 = vmatprep.subr.mxu0 0.0
      %6665 = vmatpush2.msra.mxu0 0.0
      %6666 = vmatprep.subr.mxu0 0.0
      %6667 = vmatpush2.msra.mxu0 0.0
      %6668 = vmatprep.subr.mxu0 0.0
      %6669 = vmatpush2.msra.mxu0 0.0
      %6670 = vmatprep.subr.mxu0 0.0
      %6671 = vmatpush2.msra.mxu0 0.0
      %6672 = vmatprep.subr.mxu0 0.0
      %6673 = vmatpush2.msra.mxu0 0.0
      %6674 = vmatprep.subr.mxu0 0.0
      %6675 = vmatpush2.msra.mxu0 0.0
      %6676 = vmatprep.subr.mxu0 0.0
      %6677 = vmatpush2.msra.mxu0 0.0
      %6678 = vmatprep.subr.mxu0 0.0
      %6679 = vmatpush2.msra.mxu0 0.0
      %6680 = vmatprep.subr.mxu0 0.0
      %6681 = vmatpush2.msra.mxu0 0.0
      %6682 = vmatprep.subr.mxu0 0.0
      %6683 = vmatpush2.msra.mxu0 0.0
      %6684 = vmatprep.subr.mxu0 0.0
      %6685 = vmatpush2.msra.mxu0 0.0
      %6686 = vmatprep.subr.mxu0 0.0
      %6687 = vmatpush2.msra.mxu0 0.0
      %6688 = vmatprep.subr.mxu0 0.0
      %6689 = vmatpush2.msra.mxu0 0.0
      %6690 = vmatprep.mubr.f32.mxu0 0.0
      %v6691 = vand.u32 %v6486, 4294901760
      %6692 = vmatmul.mubr.f32.gmra.mxu0 %v6691
      %v6693 = vpop.f32.mrf.mxu0
      %v6694 = vadd.f32 %v6573, %v6693
      %v6695 = vpop.f32.mrf.mxu0
      %6696 = vmatprep.mubr.f32.mxu0 0.0
      %v6697 = vand.u32 %v6489, 4294901760
      %6698 = vmatmul.mubr.f32.gmra.mxu0 %v6697
      %v6699 = vpop.f32.mrf.mxu0
      %v6700 = vadd.f32 %v6583, %v6699
      %v6701 = vpop.f32.mrf.mxu0
      %6702 = vmatprep.mubr.f32.mxu0 0.0
      %v6703 = vand.u32 %v6492, 4294901760
      %6704 = vmatmul.mubr.f32.gmra.mxu0 %v6703
      %v6705 = vpop.f32.mrf.mxu0
      %v6706 = vadd.f32 %v6593, %v6705
      %v6707 = vpop.f32.mrf.mxu0
      %6708 = vmatprep.mubr.f32.mxu0 0.0
      %v6709 = vand.u32 %v6495, 4294901760
      %6710 = vmatmul.mubr.f32.gmra.mxu0 %v6709
      %v6711 = vpop.f32.mrf.mxu0
      %v6712 = vadd.f32 %v6603, %v6711
      %v6713 = vpop.f32.mrf.mxu0
      %6714 = vdwg.mxu0
      %6715 = vmatprep.subr.mxu0 0.0
      %6716 = vmatpush1.msra.mxu0 0.0
      %6717 = vmatprep.subr.mxu0 0.0
      %6718 = vmatpush1.msra.mxu0 0.0
      %6719 = vmatprep.subr.mxu0 0.0
      %6720 = vmatpush1.msra.mxu0 0.0
      %6721 = vmatprep.subr.mxu0 0.0
      %6722 = vmatpush1.msra.mxu0 0.0
      %6723 = vmatprep.subr.mxu0 0.0
      %6724 = vmatpush1.msra.mxu0 0.0
      %6725 = vmatprep.subr.mxu0 0.0
      %6726 = vmatpush1.msra.mxu0 0.0
      %6727 = vmatprep.subr.mxu0 0.0
      %6728 = vmatpush1.msra.mxu0 0.0
      %6729 = vmatprep.subr.mxu0 0.0
      %6730 = vmatpush1.msra.mxu0 0.0
      %6731 = vmatprep.subr.mxu0 0.0
      %6732 = vmatpush1.msra.mxu0 0.0
      %6733 = vmatprep.subr.mxu0 0.0
      %6734 = vmatpush1.msra.mxu0 0.0
      %6735 = vmatprep.subr.mxu0 0.0
      %6736 = vmatpush1.msra.mxu0 0.0
      %6737 = vmatprep.subr.mxu0 0.0
      %6738 = vmatpush1.msra.mxu0 0.0
      %6739 = vmatprep.subr.mxu0 0.0
      %v6740 = vand.u32 %v6460, 4294901760
      %v6741 = vsub.f32 %v6460, %v6740
      %6742 = vmatpush1.msra.mxu0 %v6741
      %6743 = vmatprep.subr.mxu0 0.0
      %v6744 = vand.u32 %v6459, 4294901760
      %v6745 = vsub.f32 %v6459, %v6744
      %6746 = vmatpush1.msra.mxu0 %v6745
      %6747 = vmatprep.subr.mxu0 0.0
      %v6748 = vand.u32 %v6458, 4294901760
      %v6749 = vsub.f32 %v6458, %v6748
      %6750 = vmatpush1.msra.mxu0 %v6749
      %6751 = vmatprep.subr.mxu0 0.0
      %v6752 = vand.u32 %v6457, 4294901760
      %v6753 = vsub.f32 %v6457, %v6752
      %6754 = vmatpush1.msra.mxu0 %v6753
      %6755 = vmatprep.subr.mxu0 0.0
      %6756 = vmatpush2.msra.mxu0 0.0
      %6757 = vmatprep.subr.mxu0 0.0
      %6758 = vmatpush2.msra.mxu0 0.0
      %6759 = vmatprep.subr.mxu0 0.0
      %6760 = vmatpush2.msra.mxu0 0.0
      %6761 = vmatprep.subr.mxu0 0.0
      %6762 = vmatpush2.msra.mxu0 0.0
      %6763 = vmatprep.subr.mxu0 0.0
      %6764 = vmatpush2.msra.mxu0 0.0
      %6765 = vmatprep.subr.mxu0 0.0
      %6766 = vmatpush2.msra.mxu0 0.0
      %6767 = vmatprep.subr.mxu0 0.0
      %6768 = vmatpush2.msra.mxu0 0.0
      %6769 = vmatprep.subr.mxu0 0.0
      %6770 = vmatpush2.msra.mxu0 0.0
      %6771 = vmatprep.subr.mxu0 0.0
      %6772 = vmatpush2.msra.mxu0 0.0
      %6773 = vmatprep.subr.mxu0 0.0
      %6774 = vmatpush2.msra.mxu0 0.0
      %6775 = vmatprep.subr.mxu0 0.0
      %6776 = vmatpush2.msra.mxu0 0.0
      %6777 = vmatprep.subr.mxu0 0.0
      %6778 = vmatpush2.msra.mxu0 0.0
      %6779 = vmatprep.subr.mxu0 0.0
      %6780 = vmatpush2.msra.mxu0 0.0
      %6781 = vmatprep.subr.mxu0 0.0
      %6782 = vmatpush2.msra.mxu0 0.0
      %6783 = vmatprep.subr.mxu0 0.0
      %6784 = vmatpush2.msra.mxu0 0.0
      %6785 = vmatprep.subr.mxu0 0.0
      %6786 = vmatpush2.msra.mxu0 0.0
      %6787 = vmatprep.mubr.f32.mxu0 0.0
      %v6788 = vand.u32 %v6486, 4294901760
      %v6789 = vsub.f32 %v6486, %v6788
      %6790 = vmatmul.mubr.f32.gmra.mxu0 %v6789
      %v6791 = vpop.f32.mrf.mxu0
      %v6792 = vadd.f32 %v6694, %v6791
      %v6793 = vpop.f32.mrf.mxu0
      %6794 = vmatprep.mubr.f32.mxu0 0.0
      %v6795 = vand.u32 %v6489, 4294901760
      %v6796 = vsub.f32 %v6489, %v6795
      %6797 = vmatmul.mubr.f32.gmra.mxu0 %v6796
      %v6798 = vpop.f32.mrf.mxu0
      %v6799 = vadd.f32 %v6700, %v6798
      %v6800 = vpop.f32.mrf.mxu0
      %6801 = vmatprep.mubr.f32.mxu0 0.0
      %v6802 = vand.u32 %v6492, 4294901760
      %v6803 = vsub.f32 %v6492, %v6802
      %6804 = vmatmul.mubr.f32.gmra.mxu0 %v6803
      %v6805 = vpop.f32.mrf.mxu0
      %v6806 = vadd.f32 %v6706, %v6805
      %v6807 = vpop.f32.mrf.mxu0
      %6808 = vmatprep.mubr.f32.mxu0 0.0
      %v6809 = vand.u32 %v6495, 4294901760
      %v6810 = vsub.f32 %v6495, %v6809
      %6811 = vmatmul.mubr.f32.gmra.mxu0 %v6810
      %v6812 = vpop.f32.mrf.mxu0
      %v6813 = vadd.f32 %v6712, %v6812
      %v6814 = vpop.f32.mrf.mxu0
      %6815 = vdwg.mxu0
      %6816 = vmatprep.subr.mxu0 0.0
      %6817 = vmatpush1.msra.mxu0 0.0
      %6818 = vmatprep.subr.mxu0 0.0
      %6819 = vmatpush1.msra.mxu0 0.0
      %6820 = vmatprep.subr.mxu0 0.0
      %6821 = vmatpush1.msra.mxu0 0.0
      %6822 = vmatprep.subr.mxu0 0.0
      %6823 = vmatpush1.msra.mxu0 0.0
      %6824 = vmatprep.subr.mxu0 0.0
      %6825 = vmatpush1.msra.mxu0 0.0
      %6826 = vmatprep.subr.mxu0 0.0
      %6827 = vmatpush1.msra.mxu0 0.0
      %6828 = vmatprep.subr.mxu0 0.0
      %6829 = vmatpush1.msra.mxu0 0.0
      %6830 = vmatprep.subr.mxu0 0.0
      %6831 = vmatpush1.msra.mxu0 0.0
      %6832 = vmatprep.subr.mxu0 0.0
      %6833 = vmatpush1.msra.mxu0 0.0
      %6834 = vmatprep.subr.mxu0 0.0
      %6835 = vmatpush1.msra.mxu0 0.0
      %6836 = vmatprep.subr.mxu0 0.0
      %6837 = vmatpush1.msra.mxu0 0.0
      %6838 = vmatprep.subr.mxu0 0.0
      %6839 = vmatpush1.msra.mxu0 0.0
      %6840 = vmatprep.subr.mxu0 0.0
      %v6841 = vand.u32 %v6460, 4294901760
      %6842 = vmatpush1.msra.mxu0 %v6841
      %6843 = vmatprep.subr.mxu0 0.0
      %v6844 = vand.u32 %v6459, 4294901760
      %6845 = vmatpush1.msra.mxu0 %v6844
      %6846 = vmatprep.subr.mxu0 0.0
      %v6847 = vand.u32 %v6458, 4294901760
      %6848 = vmatpush1.msra.mxu0 %v6847
      %6849 = vmatprep.subr.mxu0 0.0
      %v6850 = vand.u32 %v6457, 4294901760
      %6851 = vmatpush1.msra.mxu0 %v6850
      %6852 = vmatprep.subr.mxu0 0.0
      %6853 = vmatpush2.msra.mxu0 0.0
      %6854 = vmatprep.subr.mxu0 0.0
      %6855 = vmatpush2.msra.mxu0 0.0
      %6856 = vmatprep.subr.mxu0 0.0
      %6857 = vmatpush2.msra.mxu0 0.0
      %6858 = vmatprep.subr.mxu0 0.0
      %6859 = vmatpush2.msra.mxu0 0.0
      %6860 = vmatprep.subr.mxu0 0.0
      %6861 = vmatpush2.msra.mxu0 0.0
      %6862 = vmatprep.subr.mxu0 0.0
      %6863 = vmatpush2.msra.mxu0 0.0
      %6864 = vmatprep.subr.mxu0 0.0
      %6865 = vmatpush2.msra.mxu0 0.0
      %6866 = vmatprep.subr.mxu0 0.0
      %6867 = vmatpush2.msra.mxu0 0.0
      %6868 = vmatprep.subr.mxu0 0.0
      %6869 = vmatpush2.msra.mxu0 0.0
      %6870 = vmatprep.subr.mxu0 0.0
      %6871 = vmatpush2.msra.mxu0 0.0
      %6872 = vmatprep.subr.mxu0 0.0
      %6873 = vmatpush2.msra.mxu0 0.0
      %6874 = vmatprep.subr.mxu0 0.0
      %6875 = vmatpush2.msra.mxu0 0.0
      %6876 = vmatprep.subr.mxu0 0.0
      %6877 = vmatpush2.msra.mxu0 0.0
      %6878 = vmatprep.subr.mxu0 0.0
      %6879 = vmatpush2.msra.mxu0 0.0
      %6880 = vmatprep.subr.mxu0 0.0
      %6881 = vmatpush2.msra.mxu0 0.0
      %6882 = vmatprep.subr.mxu0 0.0
      %6883 = vmatpush2.msra.mxu0 0.0
      %6884 = vmatprep.mubr.f32.mxu0 0.0
      %v6885 = vand.u32 %v6486, 4294901760
      %v6886 = vsub.f32 %v6486, %v6885
      %v6887 = vand.u32 %v6886, 4294901760
      %6888 = vmatmul.mubr.f32.gmra.mxu0 %v6887
      %v6889 = vpop.f32.mrf.mxu0
      %v6890 = vadd.f32 %v6792, %v6889
      %v6891 = vpop.f32.mrf.mxu0
      %6892 = vmatprep.mubr.f32.mxu0 0.0
      %v6893 = vand.u32 %v6489, 4294901760
      %v6894 = vsub.f32 %v6489, %v6893
      %v6895 = vand.u32 %v6894, 4294901760
      %6896 = vmatmul.mubr.f32.gmra.mxu0 %v6895
      %v6897 = vpop.f32.mrf.mxu0
      %v6898 = vadd.f32 %v6799, %v6897
      %v6899 = vpop.f32.mrf.mxu0
      %6900 = vmatprep.mubr.f32.mxu0 0.0
      %v6901 = vand.u32 %v6492, 4294901760
      %v6902 = vsub.f32 %v6492, %v6901
      %v6903 = vand.u32 %v6902, 4294901760
      %6904 = vmatmul.mubr.f32.gmra.mxu0 %v6903
      %v6905 = vpop.f32.mrf.mxu0
      %v6906 = vadd.f32 %v6806, %v6905
      %v6907 = vpop.f32.mrf.mxu0
      %6908 = vmatprep.mubr.f32.mxu0 0.0
      %v6909 = vand.u32 %v6495, 4294901760
      %v6910 = vsub.f32 %v6495, %v6909
      %v6911 = vand.u32 %v6910, 4294901760
      %6912 = vmatmul.mubr.f32.gmra.mxu0 %v6911
      %v6913 = vpop.f32.mrf.mxu0
      %v6914 = vadd.f32 %v6813, %v6913
      %v6915 = vpop.f32.mrf.mxu0
      %6916 = vdwg.mxu0
      %6917 = vmatprep.subr.mxu0 0.0
      %6918 = vmatpush1.msra.mxu0 0.0
      %6919 = vmatprep.subr.mxu0 0.0
      %6920 = vmatpush1.msra.mxu0 0.0
      %6921 = vmatprep.subr.mxu0 0.0
      %6922 = vmatpush1.msra.mxu0 0.0
      %6923 = vmatprep.subr.mxu0 0.0
      %6924 = vmatpush1.msra.mxu0 0.0
      %6925 = vmatprep.subr.mxu0 0.0
      %6926 = vmatpush1.msra.mxu0 0.0
      %6927 = vmatprep.subr.mxu0 0.0
      %6928 = vmatpush1.msra.mxu0 0.0
      %6929 = vmatprep.subr.mxu0 0.0
      %6930 = vmatpush1.msra.mxu0 0.0
      %6931 = vmatprep.subr.mxu0 0.0
      %6932 = vmatpush1.msra.mxu0 0.0
      %6933 = vmatprep.subr.mxu0 0.0
      %6934 = vmatpush1.msra.mxu0 0.0
      %6935 = vmatprep.subr.mxu0 0.0
      %6936 = vmatpush1.msra.mxu0 0.0
      %6937 = vmatprep.subr.mxu0 0.0
      %6938 = vmatpush1.msra.mxu0 0.0
      %6939 = vmatprep.subr.mxu0 0.0
      %6940 = vmatpush1.msra.mxu0 0.0
      %6941 = vmatprep.subr.mxu0 0.0
      %v6942 = vand.u32 %v6460, 4294901760
      %v6943 = vsub.f32 %v6460, %v6942
      %v6944 = vand.u32 %v6943, 4294901760
      %6945 = vmatpush1.msra.mxu0 %v6944
      %6946 = vmatprep.subr.mxu0 0.0
      %v6947 = vand.u32 %v6459, 4294901760
      %v6948 = vsub.f32 %v6459, %v6947
      %v6949 = vand.u32 %v6948, 4294901760
      %6950 = vmatpush1.msra.mxu0 %v6949
      %6951 = vmatprep.subr.mxu0 0.0
      %v6952 = vand.u32 %v6458, 4294901760
      %v6953 = vsub.f32 %v6458, %v6952
      %v6954 = vand.u32 %v6953, 4294901760
      %6955 = vmatpush1.msra.mxu0 %v6954
      %6956 = vmatprep.subr.mxu0 0.0
      %v6957 = vand.u32 %v6457, 4294901760
      %v6958 = vsub.f32 %v6457, %v6957
      %v6959 = vand.u32 %v6958, 4294901760
      %6960 = vmatpush1.msra.mxu0 %v6959
      %6961 = vmatprep.subr.mxu0 0.0
      %6962 = vmatpush2.msra.mxu0 0.0
      %6963 = vmatprep.subr.mxu0 0.0
      %6964 = vmatpush2.msra.mxu0 0.0
      %6965 = vmatprep.subr.mxu0 0.0
      %6966 = vmatpush2.msra.mxu0 0.0
      %6967 = vmatprep.subr.mxu0 0.0
      %6968 = vmatpush2.msra.mxu0 0.0
      %6969 = vmatprep.subr.mxu0 0.0
      %6970 = vmatpush2.msra.mxu0 0.0
      %6971 = vmatprep.subr.mxu0 0.0
      %6972 = vmatpush2.msra.mxu0 0.0
      %6973 = vmatprep.subr.mxu0 0.0
      %6974 = vmatpush2.msra.mxu0 0.0
      %6975 = vmatprep.subr.mxu0 0.0
      %6976 = vmatpush2.msra.mxu0 0.0
      %6977 = vmatprep.subr.mxu0 0.0
      %6978 = vmatpush2.msra.mxu0 0.0
      %6979 = vmatprep.subr.mxu0 0.0
      %6980 = vmatpush2.msra.mxu0 0.0
      %6981 = vmatprep.subr.mxu0 0.0
      %6982 = vmatpush2.msra.mxu0 0.0
      %6983 = vmatprep.subr.mxu0 0.0
      %6984 = vmatpush2.msra.mxu0 0.0
      %6985 = vmatprep.subr.mxu0 0.0
      %6986 = vmatpush2.msra.mxu0 0.0
      %6987 = vmatprep.subr.mxu0 0.0
      %6988 = vmatpush2.msra.mxu0 0.0
      %6989 = vmatprep.subr.mxu0 0.0
      %6990 = vmatpush2.msra.mxu0 0.0
      %6991 = vmatprep.subr.mxu0 0.0
      %6992 = vmatpush2.msra.mxu0 0.0
      %6993 = vmatprep.mubr.f32.mxu0 0.0
      %v6994 = vand.u32 %v6486, 4294901760
      %6995 = vmatmul.mubr.f32.gmra.mxu0 %v6994
      %v6996 = vpop.f32.mrf.mxu0
      %v6997 = vadd.f32 %v6890, %v6996
      %v6998 = vpop.f32.mrf.mxu0
      %6999 = vmatprep.mubr.f32.mxu0 0.0
      %v7000 = vand.u32 %v6489, 4294901760
      %7001 = vmatmul.mubr.f32.gmra.mxu0 %v7000
      %v7002 = vpop.f32.mrf.mxu0
      %v7003 = vadd.f32 %v6898, %v7002
      %v7004 = vpop.f32.mrf.mxu0
      %7005 = vmatprep.mubr.f32.mxu0 0.0
      %v7006 = vand.u32 %v6492, 4294901760
      %7007 = vmatmul.mubr.f32.gmra.mxu0 %v7006
      %v7008 = vpop.f32.mrf.mxu0
      %v7009 = vadd.f32 %v6906, %v7008
      %v7010 = vpop.f32.mrf.mxu0
      %7011 = vmatprep.mubr.f32.mxu0 0.0
      %v7012 = vand.u32 %v6495, 4294901760
      %7013 = vmatmul.mubr.f32.gmra.mxu0 %v7012
      %v7014 = vpop.f32.mrf.mxu0
      %v7015 = vadd.f32 %v6914, %v7014
      %v7016 = vpop.f32.mrf.mxu0
      %7017 = vdwg.mxu0
      %7018 = vmatprep.subr.mxu0 0.0
      %7019 = vmatpush1.msra.mxu0 0.0
      %7020 = vmatprep.subr.mxu0 0.0
      %7021 = vmatpush1.msra.mxu0 0.0
      %7022 = vmatprep.subr.mxu0 0.0
      %7023 = vmatpush1.msra.mxu0 0.0
      %7024 = vmatprep.subr.mxu0 0.0
      %7025 = vmatpush1.msra.mxu0 0.0
      %7026 = vmatprep.subr.mxu0 0.0
      %7027 = vmatpush1.msra.mxu0 0.0
      %7028 = vmatprep.subr.mxu0 0.0
      %7029 = vmatpush1.msra.mxu0 0.0
      %7030 = vmatprep.subr.mxu0 0.0
      %7031 = vmatpush1.msra.mxu0 0.0
      %7032 = vmatprep.subr.mxu0 0.0
      %7033 = vmatpush1.msra.mxu0 0.0
      %7034 = vmatprep.subr.mxu0 0.0
      %7035 = vmatpush1.msra.mxu0 0.0
      %7036 = vmatprep.subr.mxu0 0.0
      %7037 = vmatpush1.msra.mxu0 0.0
      %7038 = vmatprep.subr.mxu0 0.0
      %7039 = vmatpush1.msra.mxu0 0.0
      %7040 = vmatprep.subr.mxu0 0.0
      %7041 = vmatpush1.msra.mxu0 0.0
      %7042 = vmatprep.subr.mxu0 0.0
      %v7043 = vand.u32 %v6460, 4294901760
      %7044 = vmatpush1.msra.mxu0 %v7043
      %7045 = vmatprep.subr.mxu0 0.0
      %v7046 = vand.u32 %v6459, 4294901760
      %7047 = vmatpush1.msra.mxu0 %v7046
      %7048 = vmatprep.subr.mxu0 0.0
      %v7049 = vand.u32 %v6458, 4294901760
      %7050 = vmatpush1.msra.mxu0 %v7049
      %7051 = vmatprep.subr.mxu0 0.0
      %v7052 = vand.u32 %v6457, 4294901760
      %7053 = vmatpush1.msra.mxu0 %v7052
      %7054 = vmatprep.subr.mxu0 0.0
      %7055 = vmatpush2.msra.mxu0 0.0
      %7056 = vmatprep.subr.mxu0 0.0
      %7057 = vmatpush2.msra.mxu0 0.0
      %7058 = vmatprep.subr.mxu0 0.0
      %7059 = vmatpush2.msra.mxu0 0.0
      %7060 = vmatprep.subr.mxu0 0.0
      %7061 = vmatpush2.msra.mxu0 0.0
      %7062 = vmatprep.subr.mxu0 0.0
      %7063 = vmatpush2.msra.mxu0 0.0
      %7064 = vmatprep.subr.mxu0 0.0
      %7065 = vmatpush2.msra.mxu0 0.0
      %7066 = vmatprep.subr.mxu0 0.0
      %7067 = vmatpush2.msra.mxu0 0.0
      %7068 = vmatprep.subr.mxu0 0.0
      %7069 = vmatpush2.msra.mxu0 0.0
      %7070 = vmatprep.subr.mxu0 0.0
      %7071 = vmatpush2.msra.mxu0 0.0
      %7072 = vmatprep.subr.mxu0 0.0
      %7073 = vmatpush2.msra.mxu0 0.0
      %7074 = vmatprep.subr.mxu0 0.0
      %7075 = vmatpush2.msra.mxu0 0.0
      %7076 = vmatprep.subr.mxu0 0.0
      %7077 = vmatpush2.msra.mxu0 0.0
      %7078 = vmatprep.subr.mxu0 0.0
      %7079 = vmatpush2.msra.mxu0 0.0
      %7080 = vmatprep.subr.mxu0 0.0
      %7081 = vmatpush2.msra.mxu0 0.0
      %7082 = vmatprep.subr.mxu0 0.0
      %7083 = vmatpush2.msra.mxu0 0.0
      %7084 = vmatprep.subr.mxu0 0.0
      %7085 = vmatpush2.msra.mxu0 0.0
      %7086 = vmatprep.mubr.f32.mxu0 0.0
      %v7087 = vand.u32 %v6486, 4294901760
      %7088 = vmatmul.mubr.f32.gmra.mxu0 %v7087
      %v7089 = vpop.f32.mrf.mxu0
      %v7090 = vadd.f32 %v6997, %v7089
      %v7091 = vpop.f32.mrf.mxu0
      %7092 = vmatprep.mubr.f32.mxu0 0.0
      %v7093 = vand.u32 %v6489, 4294901760
      %7094 = vmatmul.mubr.f32.gmra.mxu0 %v7093
      %v7095 = vpop.f32.mrf.mxu0
      %v7096 = vadd.f32 %v7003, %v7095
      %v7097 = vpop.f32.mrf.mxu0
      %7098 = vmatprep.mubr.f32.mxu0 0.0
      %v7099 = vand.u32 %v6492, 4294901760
      %7100 = vmatmul.mubr.f32.gmra.mxu0 %v7099
      %v7101 = vpop.f32.mrf.mxu0
      %v7102 = vadd.f32 %v7009, %v7101
      %v7103 = vpop.f32.mrf.mxu0
      %7104 = vmatprep.mubr.f32.mxu0 0.0
      %v7105 = vand.u32 %v6495, 4294901760
      %7106 = vmatmul.mubr.f32.gmra.mxu0 %v7105
      %v7107 = vpop.f32.mrf.mxu0
      %v7108 = vadd.f32 %v7015, %v7107
      %v7109 = vpop.f32.mrf.mxu0
      %7110 = vdwg.mxu0
      %v7111 = vadd.f32 %v5791, %v7090
      %v7112 = vadd.f32 %v5792, %v7096
      %v7113 = vadd.f32 %v5793, %v7102
      %v7114 = vadd.f32 %v5794, %v7108
      %v7115 = vld [vmem:[%s4 + $0x60] sm:$0xff]
      %v7116 = vld [vmem:[%s4 + $0x68] sm:$0xff]
      %v7117 = vld [vmem:[%s4 + $0x70] sm:$0xff]
      %v7118 = vld [vmem:[%s4 + $0x78] sm:$0xff]
      %v7120 = vsel %vm1184, %v7115, 0
      %v7123 = vsel %vm1184, %v7116, 0
      %v7126 = vsel %vm1184, %v7117, 0
      %v7129 = vsel %vm1184, %v7118, 0
      %7131 = vmatprep.subr.mxu0 0.0
      %7132 = vmatpush1.msra.mxu0 0.0
      %7133 = vmatprep.subr.mxu0 0.0
      %7134 = vmatpush1.msra.mxu0 0.0
      %7135 = vmatprep.subr.mxu0 0.0
      %7136 = vmatpush1.msra.mxu0 0.0
      %7137 = vmatprep.subr.mxu0 0.0
      %7138 = vmatpush1.msra.mxu0 0.0
      %7139 = vmatprep.subr.mxu0 0.0
      %7140 = vmatpush1.msra.mxu0 0.0
      %7141 = vmatprep.subr.mxu0 0.0
      %7142 = vmatpush1.msra.mxu0 0.0
      %7143 = vmatprep.subr.mxu0 0.0
      %7144 = vmatpush1.msra.mxu0 0.0
      %7145 = vmatprep.subr.mxu0 0.0
      %7146 = vmatpush1.msra.mxu0 0.0
      %7147 = vmatprep.subr.mxu0 0.0
      %7148 = vmatpush1.msra.mxu0 0.0
      %7149 = vmatprep.subr.mxu0 0.0
      %7150 = vmatpush1.msra.mxu0 0.0
      %7151 = vmatprep.subr.mxu0 0.0
      %7152 = vmatpush1.msra.mxu0 0.0
      %7153 = vmatprep.subr.mxu0 0.0
      %7154 = vmatpush1.msra.mxu0 0.0
      %7155 = vmatprep.subr.mxu0 0.0
      %v7156 = vand.u32 %v1159, 4294901760
      %7157 = vmatpush1.msra.mxu0 %v7156
      %7158 = vmatprep.subr.mxu0 0.0
      %v7159 = vand.u32 %v1158, 4294901760
      %7160 = vmatpush1.msra.mxu0 %v7159
      %7161 = vmatprep.subr.mxu0 0.0
      %v7162 = vand.u32 %v1157, 4294901760
      %7163 = vmatpush1.msra.mxu0 %v7162
      %7164 = vmatprep.subr.mxu0 0.0
      %v7165 = vand.u32 %v1156, 4294901760
      %7166 = vmatpush1.msra.mxu0 %v7165
      %7167 = vmatprep.subr.mxu0 0.0
      %7168 = vmatpush2.msra.mxu0 0.0
      %7169 = vmatprep.subr.mxu0 0.0
      %7170 = vmatpush2.msra.mxu0 0.0
      %7171 = vmatprep.subr.mxu0 0.0
      %7172 = vmatpush2.msra.mxu0 0.0
      %7173 = vmatprep.subr.mxu0 0.0
      %7174 = vmatpush2.msra.mxu0 0.0
      %7175 = vmatprep.subr.mxu0 0.0
      %7176 = vmatpush2.msra.mxu0 0.0
      %7177 = vmatprep.subr.mxu0 0.0
      %7178 = vmatpush2.msra.mxu0 0.0
      %7179 = vmatprep.subr.mxu0 0.0
      %7180 = vmatpush2.msra.mxu0 0.0
      %7181 = vmatprep.subr.mxu0 0.0
      %7182 = vmatpush2.msra.mxu0 0.0
      %7183 = vmatprep.subr.mxu0 0.0
      %7184 = vmatpush2.msra.mxu0 0.0
      %7185 = vmatprep.subr.mxu0 0.0
      %7186 = vmatpush2.msra.mxu0 0.0
      %7187 = vmatprep.subr.mxu0 0.0
      %7188 = vmatpush2.msra.mxu0 0.0
      %7189 = vmatprep.subr.mxu0 0.0
      %7190 = vmatpush2.msra.mxu0 0.0
      %7191 = vmatprep.subr.mxu0 0.0
      %7192 = vmatpush2.msra.mxu0 0.0
      %7193 = vmatprep.subr.mxu0 0.0
      %7194 = vmatpush2.msra.mxu0 0.0
      %7195 = vmatprep.subr.mxu0 0.0
      %7196 = vmatpush2.msra.mxu0 0.0
      %7197 = vmatprep.subr.mxu0 0.0
      %7198 = vmatpush2.msra.mxu0 0.0
      %7199 = vmatprep.mubr.f32.mxu0 0.0
      %v7200 = vand.u32 %v7120, 4294901760
      %v7201 = vsub.f32 %v7120, %v7200
      %v7202 = vand.u32 %v7201, 4294901760
      %v7203 = vsub.f32 %v7201, %v7202
      %v7204 = vand.u32 %v7203, 4294901760
      %7205 = vmatmul.mubr.f32.gmra.mxu0 %v7204
      %v7206 = vpop.f32.mrf.mxu0
      %v7207 = vadd.f32 0.0, %v7206
      %v7208 = vpop.f32.mrf.mxu0
      %7209 = vmatprep.mubr.f32.mxu0 0.0
      %v7210 = vand.u32 %v7123, 4294901760
      %v7211 = vsub.f32 %v7123, %v7210
      %v7212 = vand.u32 %v7211, 4294901760
      %v7213 = vsub.f32 %v7211, %v7212
      %v7214 = vand.u32 %v7213, 4294901760
      %7215 = vmatmul.mubr.f32.gmra.mxu0 %v7214
      %v7216 = vpop.f32.mrf.mxu0
      %v7217 = vadd.f32 0.0, %v7216
      %v7218 = vpop.f32.mrf.mxu0
      %7219 = vmatprep.mubr.f32.mxu0 0.0
      %v7220 = vand.u32 %v7126, 4294901760
      %v7221 = vsub.f32 %v7126, %v7220
      %v7222 = vand.u32 %v7221, 4294901760
      %v7223 = vsub.f32 %v7221, %v7222
      %v7224 = vand.u32 %v7223, 4294901760
      %7225 = vmatmul.mubr.f32.gmra.mxu0 %v7224
      %v7226 = vpop.f32.mrf.mxu0
      %v7227 = vadd.f32 0.0, %v7226
      %v7228 = vpop.f32.mrf.mxu0
      %7229 = vmatprep.mubr.f32.mxu0 0.0
      %v7230 = vand.u32 %v7129, 4294901760
      %v7231 = vsub.f32 %v7129, %v7230
      %v7232 = vand.u32 %v7231, 4294901760
      %v7233 = vsub.f32 %v7231, %v7232
      %v7234 = vand.u32 %v7233, 4294901760
      %7235 = vmatmul.mubr.f32.gmra.mxu0 %v7234
      %v7236 = vpop.f32.mrf.mxu0
      %v7237 = vadd.f32 0.0, %v7236
      %v7238 = vpop.f32.mrf.mxu0
      %7239 = vdwg.mxu0
      %7240 = vmatprep.subr.mxu0 0.0
      %7241 = vmatpush1.msra.mxu0 0.0
      %7242 = vmatprep.subr.mxu0 0.0
      %7243 = vmatpush1.msra.mxu0 0.0
      %7244 = vmatprep.subr.mxu0 0.0
      %7245 = vmatpush1.msra.mxu0 0.0
      %7246 = vmatprep.subr.mxu0 0.0
      %7247 = vmatpush1.msra.mxu0 0.0
      %7248 = vmatprep.subr.mxu0 0.0
      %7249 = vmatpush1.msra.mxu0 0.0
      %7250 = vmatprep.subr.mxu0 0.0
      %7251 = vmatpush1.msra.mxu0 0.0
      %7252 = vmatprep.subr.mxu0 0.0
      %7253 = vmatpush1.msra.mxu0 0.0
      %7254 = vmatprep.subr.mxu0 0.0
      %7255 = vmatpush1.msra.mxu0 0.0
      %7256 = vmatprep.subr.mxu0 0.0
      %7257 = vmatpush1.msra.mxu0 0.0
      %7258 = vmatprep.subr.mxu0 0.0
      %7259 = vmatpush1.msra.mxu0 0.0
      %7260 = vmatprep.subr.mxu0 0.0
      %7261 = vmatpush1.msra.mxu0 0.0
      %7262 = vmatprep.subr.mxu0 0.0
      %7263 = vmatpush1.msra.mxu0 0.0
      %7264 = vmatprep.subr.mxu0 0.0
      %v7265 = vand.u32 %v1159, 4294901760
      %v7266 = vsub.f32 %v1159, %v7265
      %v7267 = vand.u32 %v7266, 4294901760
      %v7268 = vsub.f32 %v7266, %v7267
      %v7269 = vand.u32 %v7268, 4294901760
      %7270 = vmatpush1.msra.mxu0 %v7269
      %7271 = vmatprep.subr.mxu0 0.0
      %v7272 = vand.u32 %v1158, 4294901760
      %v7273 = vsub.f32 %v1158, %v7272
      %v7274 = vand.u32 %v7273, 4294901760
      %v7275 = vsub.f32 %v7273, %v7274
      %v7276 = vand.u32 %v7275, 4294901760
      %7277 = vmatpush1.msra.mxu0 %v7276
      %7278 = vmatprep.subr.mxu0 0.0
      %v7279 = vand.u32 %v1157, 4294901760
      %v7280 = vsub.f32 %v1157, %v7279
      %v7281 = vand.u32 %v7280, 4294901760
      %v7282 = vsub.f32 %v7280, %v7281
      %v7283 = vand.u32 %v7282, 4294901760
      %7284 = vmatpush1.msra.mxu0 %v7283
      %7285 = vmatprep.subr.mxu0 0.0
      %v7286 = vand.u32 %v1156, 4294901760
      %v7287 = vsub.f32 %v1156, %v7286
      %v7288 = vand.u32 %v7287, 4294901760
      %v7289 = vsub.f32 %v7287, %v7288
      %v7290 = vand.u32 %v7289, 4294901760
      %7291 = vmatpush1.msra.mxu0 %v7290
      %7292 = vmatprep.subr.mxu0 0.0
      %7293 = vmatpush2.msra.mxu0 0.0
      %7294 = vmatprep.subr.mxu0 0.0
      %7295 = vmatpush2.msra.mxu0 0.0
      %7296 = vmatprep.subr.mxu0 0.0
      %7297 = vmatpush2.msra.mxu0 0.0
      %7298 = vmatprep.subr.mxu0 0.0
      %7299 = vmatpush2.msra.mxu0 0.0
      %7300 = vmatprep.subr.mxu0 0.0
      %7301 = vmatpush2.msra.mxu0 0.0
      %7302 = vmatprep.subr.mxu0 0.0
      %7303 = vmatpush2.msra.mxu0 0.0
      %7304 = vmatprep.subr.mxu0 0.0
      %7305 = vmatpush2.msra.mxu0 0.0
      %7306 = vmatprep.subr.mxu0 0.0
      %7307 = vmatpush2.msra.mxu0 0.0
      %7308 = vmatprep.subr.mxu0 0.0
      %7309 = vmatpush2.msra.mxu0 0.0
      %7310 = vmatprep.subr.mxu0 0.0
      %7311 = vmatpush2.msra.mxu0 0.0
      %7312 = vmatprep.subr.mxu0 0.0
      %7313 = vmatpush2.msra.mxu0 0.0
      %7314 = vmatprep.subr.mxu0 0.0
      %7315 = vmatpush2.msra.mxu0 0.0
      %7316 = vmatprep.subr.mxu0 0.0
      %7317 = vmatpush2.msra.mxu0 0.0
      %7318 = vmatprep.subr.mxu0 0.0
      %7319 = vmatpush2.msra.mxu0 0.0
      %7320 = vmatprep.subr.mxu0 0.0
      %7321 = vmatpush2.msra.mxu0 0.0
      %7322 = vmatprep.subr.mxu0 0.0
      %7323 = vmatpush2.msra.mxu0 0.0
      %7324 = vmatprep.mubr.f32.mxu0 0.0
      %v7325 = vand.u32 %v7120, 4294901760
      %7326 = vmatmul.mubr.f32.gmra.mxu0 %v7325
      %v7327 = vpop.f32.mrf.mxu0
      %v7328 = vadd.f32 %v7207, %v7327
      %v7329 = vpop.f32.mrf.mxu0
      %7330 = vmatprep.mubr.f32.mxu0 0.0
      %v7331 = vand.u32 %v7123, 4294901760
      %7332 = vmatmul.mubr.f32.gmra.mxu0 %v7331
      %v7333 = vpop.f32.mrf.mxu0
      %v7334 = vadd.f32 %v7217, %v7333
      %v7335 = vpop.f32.mrf.mxu0
      %7336 = vmatprep.mubr.f32.mxu0 0.0
      %v7337 = vand.u32 %v7126, 4294901760
      %7338 = vmatmul.mubr.f32.gmra.mxu0 %v7337
      %v7339 = vpop.f32.mrf.mxu0
      %v7340 = vadd.f32 %v7227, %v7339
      %v7341 = vpop.f32.mrf.mxu0
      %7342 = vmatprep.mubr.f32.mxu0 0.0
      %v7343 = vand.u32 %v7129, 4294901760
      %7344 = vmatmul.mubr.f32.gmra.mxu0 %v7343
      %v7345 = vpop.f32.mrf.mxu0
      %v7346 = vadd.f32 %v7237, %v7345
      %v7347 = vpop.f32.mrf.mxu0
      %7348 = vdwg.mxu0
      %7349 = vmatprep.subr.mxu0 0.0
      %7350 = vmatpush1.msra.mxu0 0.0
      %7351 = vmatprep.subr.mxu0 0.0
      %7352 = vmatpush1.msra.mxu0 0.0
      %7353 = vmatprep.subr.mxu0 0.0
      %7354 = vmatpush1.msra.mxu0 0.0
      %7355 = vmatprep.subr.mxu0 0.0
      %7356 = vmatpush1.msra.mxu0 0.0
      %7357 = vmatprep.subr.mxu0 0.0
      %7358 = vmatpush1.msra.mxu0 0.0
      %7359 = vmatprep.subr.mxu0 0.0
      %7360 = vmatpush1.msra.mxu0 0.0
      %7361 = vmatprep.subr.mxu0 0.0
      %7362 = vmatpush1.msra.mxu0 0.0
      %7363 = vmatprep.subr.mxu0 0.0
      %7364 = vmatpush1.msra.mxu0 0.0
      %7365 = vmatprep.subr.mxu0 0.0
      %7366 = vmatpush1.msra.mxu0 0.0
      %7367 = vmatprep.subr.mxu0 0.0
      %7368 = vmatpush1.msra.mxu0 0.0
      %7369 = vmatprep.subr.mxu0 0.0
      %7370 = vmatpush1.msra.mxu0 0.0
      %7371 = vmatprep.subr.mxu0 0.0
      %7372 = vmatpush1.msra.mxu0 0.0
      %7373 = vmatprep.subr.mxu0 0.0
      %v7374 = vand.u32 %v1159, 4294901760
      %v7375 = vsub.f32 %v1159, %v7374
      %7376 = vmatpush1.msra.mxu0 %v7375
      %7377 = vmatprep.subr.mxu0 0.0
      %v7378 = vand.u32 %v1158, 4294901760
      %v7379 = vsub.f32 %v1158, %v7378
      %7380 = vmatpush1.msra.mxu0 %v7379
      %7381 = vmatprep.subr.mxu0 0.0
      %v7382 = vand.u32 %v1157, 4294901760
      %v7383 = vsub.f32 %v1157, %v7382
      %7384 = vmatpush1.msra.mxu0 %v7383
      %7385 = vmatprep.subr.mxu0 0.0
      %v7386 = vand.u32 %v1156, 4294901760
      %v7387 = vsub.f32 %v1156, %v7386
      %7388 = vmatpush1.msra.mxu0 %v7387
      %7389 = vmatprep.subr.mxu0 0.0
      %7390 = vmatpush2.msra.mxu0 0.0
      %7391 = vmatprep.subr.mxu0 0.0
      %7392 = vmatpush2.msra.mxu0 0.0
      %7393 = vmatprep.subr.mxu0 0.0
      %7394 = vmatpush2.msra.mxu0 0.0
      %7395 = vmatprep.subr.mxu0 0.0
      %7396 = vmatpush2.msra.mxu0 0.0
      %7397 = vmatprep.subr.mxu0 0.0
      %7398 = vmatpush2.msra.mxu0 0.0
      %7399 = vmatprep.subr.mxu0 0.0
      %7400 = vmatpush2.msra.mxu0 0.0
      %7401 = vmatprep.subr.mxu0 0.0
      %7402 = vmatpush2.msra.mxu0 0.0
      %7403 = vmatprep.subr.mxu0 0.0
      %7404 = vmatpush2.msra.mxu0 0.0
      %7405 = vmatprep.subr.mxu0 0.0
      %7406 = vmatpush2.msra.mxu0 0.0
      %7407 = vmatprep.subr.mxu0 0.0
      %7408 = vmatpush2.msra.mxu0 0.0
      %7409 = vmatprep.subr.mxu0 0.0
      %7410 = vmatpush2.msra.mxu0 0.0
      %7411 = vmatprep.subr.mxu0 0.0
      %7412 = vmatpush2.msra.mxu0 0.0
      %7413 = vmatprep.subr.mxu0 0.0
      %7414 = vmatpush2.msra.mxu0 0.0
      %7415 = vmatprep.subr.mxu0 0.0
      %7416 = vmatpush2.msra.mxu0 0.0
      %7417 = vmatprep.subr.mxu0 0.0
      %7418 = vmatpush2.msra.mxu0 0.0
      %7419 = vmatprep.subr.mxu0 0.0
      %7420 = vmatpush2.msra.mxu0 0.0
      %7421 = vmatprep.mubr.f32.mxu0 0.0
      %v7422 = vand.u32 %v7120, 4294901760
      %v7423 = vsub.f32 %v7120, %v7422
      %7424 = vmatmul.mubr.f32.gmra.mxu0 %v7423
      %v7425 = vpop.f32.mrf.mxu0
      %v7426 = vadd.f32 %v7328, %v7425
      %v7427 = vpop.f32.mrf.mxu0
      %7428 = vmatprep.mubr.f32.mxu0 0.0
      %v7429 = vand.u32 %v7123, 4294901760
      %v7430 = vsub.f32 %v7123, %v7429
      %7431 = vmatmul.mubr.f32.gmra.mxu0 %v7430
      %v7432 = vpop.f32.mrf.mxu0
      %v7433 = vadd.f32 %v7334, %v7432
      %v7434 = vpop.f32.mrf.mxu0
      %7435 = vmatprep.mubr.f32.mxu0 0.0
      %v7436 = vand.u32 %v7126, 4294901760
      %v7437 = vsub.f32 %v7126, %v7436
      %7438 = vmatmul.mubr.f32.gmra.mxu0 %v7437
      %v7439 = vpop.f32.mrf.mxu0
      %v7440 = vadd.f32 %v7340, %v7439
      %v7441 = vpop.f32.mrf.mxu0
      %7442 = vmatprep.mubr.f32.mxu0 0.0
      %v7443 = vand.u32 %v7129, 4294901760
      %v7444 = vsub.f32 %v7129, %v7443
      %7445 = vmatmul.mubr.f32.gmra.mxu0 %v7444
      %v7446 = vpop.f32.mrf.mxu0
      %v7447 = vadd.f32 %v7346, %v7446
      %v7448 = vpop.f32.mrf.mxu0
      %7449 = vdwg.mxu0
      %7450 = vmatprep.subr.mxu0 0.0
      %7451 = vmatpush1.msra.mxu0 0.0
      %7452 = vmatprep.subr.mxu0 0.0
      %7453 = vmatpush1.msra.mxu0 0.0
      %7454 = vmatprep.subr.mxu0 0.0
      %7455 = vmatpush1.msra.mxu0 0.0
      %7456 = vmatprep.subr.mxu0 0.0
      %7457 = vmatpush1.msra.mxu0 0.0
      %7458 = vmatprep.subr.mxu0 0.0
      %7459 = vmatpush1.msra.mxu0 0.0
      %7460 = vmatprep.subr.mxu0 0.0
      %7461 = vmatpush1.msra.mxu0 0.0
      %7462 = vmatprep.subr.mxu0 0.0
      %7463 = vmatpush1.msra.mxu0 0.0
      %7464 = vmatprep.subr.mxu0 0.0
      %7465 = vmatpush1.msra.mxu0 0.0
      %7466 = vmatprep.subr.mxu0 0.0
      %7467 = vmatpush1.msra.mxu0 0.0
      %7468 = vmatprep.subr.mxu0 0.0
      %7469 = vmatpush1.msra.mxu0 0.0
      %7470 = vmatprep.subr.mxu0 0.0
      %7471 = vmatpush1.msra.mxu0 0.0
      %7472 = vmatprep.subr.mxu0 0.0
      %7473 = vmatpush1.msra.mxu0 0.0
      %7474 = vmatprep.subr.mxu0 0.0
      %v7475 = vand.u32 %v1159, 4294901760
      %7476 = vmatpush1.msra.mxu0 %v7475
      %7477 = vmatprep.subr.mxu0 0.0
      %v7478 = vand.u32 %v1158, 4294901760
      %7479 = vmatpush1.msra.mxu0 %v7478
      %7480 = vmatprep.subr.mxu0 0.0
      %v7481 = vand.u32 %v1157, 4294901760
      %7482 = vmatpush1.msra.mxu0 %v7481
      %7483 = vmatprep.subr.mxu0 0.0
      %v7484 = vand.u32 %v1156, 4294901760
      %7485 = vmatpush1.msra.mxu0 %v7484
      %7486 = vmatprep.subr.mxu0 0.0
      %7487 = vmatpush2.msra.mxu0 0.0
      %7488 = vmatprep.subr.mxu0 0.0
      %7489 = vmatpush2.msra.mxu0 0.0
      %7490 = vmatprep.subr.mxu0 0.0
      %7491 = vmatpush2.msra.mxu0 0.0
      %7492 = vmatprep.subr.mxu0 0.0
      %7493 = vmatpush2.msra.mxu0 0.0
      %7494 = vmatprep.subr.mxu0 0.0
      %7495 = vmatpush2.msra.mxu0 0.0
      %7496 = vmatprep.subr.mxu0 0.0
      %7497 = vmatpush2.msra.mxu0 0.0
      %7498 = vmatprep.subr.mxu0 0.0
      %7499 = vmatpush2.msra.mxu0 0.0
      %7500 = vmatprep.subr.mxu0 0.0
      %7501 = vmatpush2.msra.mxu0 0.0
      %7502 = vmatprep.subr.mxu0 0.0
      %7503 = vmatpush2.msra.mxu0 0.0
      %7504 = vmatprep.subr.mxu0 0.0
      %7505 = vmatpush2.msra.mxu0 0.0
      %7506 = vmatprep.subr.mxu0 0.0
      %7507 = vmatpush2.msra.mxu0 0.0
      %7508 = vmatprep.subr.mxu0 0.0
      %7509 = vmatpush2.msra.mxu0 0.0
      %7510 = vmatprep.subr.mxu0 0.0
      %7511 = vmatpush2.msra.mxu0 0.0
      %7512 = vmatprep.subr.mxu0 0.0
      %7513 = vmatpush2.msra.mxu0 0.0
      %7514 = vmatprep.subr.mxu0 0.0
      %7515 = vmatpush2.msra.mxu0 0.0
      %7516 = vmatprep.subr.mxu0 0.0
      %7517 = vmatpush2.msra.mxu0 0.0
      %7518 = vmatprep.mubr.f32.mxu0 0.0
      %v7519 = vand.u32 %v7120, 4294901760
      %v7520 = vsub.f32 %v7120, %v7519
      %v7521 = vand.u32 %v7520, 4294901760
      %7522 = vmatmul.mubr.f32.gmra.mxu0 %v7521
      %v7523 = vpop.f32.mrf.mxu0
      %v7524 = vadd.f32 %v7426, %v7523
      %v7525 = vpop.f32.mrf.mxu0
      %7526 = vmatprep.mubr.f32.mxu0 0.0
      %v7527 = vand.u32 %v7123, 4294901760
      %v7528 = vsub.f32 %v7123, %v7527
      %v7529 = vand.u32 %v7528, 4294901760
      %7530 = vmatmul.mubr.f32.gmra.mxu0 %v7529
      %v7531 = vpop.f32.mrf.mxu0
      %v7532 = vadd.f32 %v7433, %v7531
      %v7533 = vpop.f32.mrf.mxu0
      %7534 = vmatprep.mubr.f32.mxu0 0.0
      %v7535 = vand.u32 %v7126, 4294901760
      %v7536 = vsub.f32 %v7126, %v7535
      %v7537 = vand.u32 %v7536, 4294901760
      %7538 = vmatmul.mubr.f32.gmra.mxu0 %v7537
      %v7539 = vpop.f32.mrf.mxu0
      %v7540 = vadd.f32 %v7440, %v7539
      %v7541 = vpop.f32.mrf.mxu0
      %7542 = vmatprep.mubr.f32.mxu0 0.0
      %v7543 = vand.u32 %v7129, 4294901760
      %v7544 = vsub.f32 %v7129, %v7543
      %v7545 = vand.u32 %v7544, 4294901760
      %7546 = vmatmul.mubr.f32.gmra.mxu0 %v7545
      %v7547 = vpop.f32.mrf.mxu0
      %v7548 = vadd.f32 %v7447, %v7547
      %v7549 = vpop.f32.mrf.mxu0
      %7550 = vdwg.mxu0
      %7551 = vmatprep.subr.mxu0 0.0
      %7552 = vmatpush1.msra.mxu0 0.0
      %7553 = vmatprep.subr.mxu0 0.0
      %7554 = vmatpush1.msra.mxu0 0.0
      %7555 = vmatprep.subr.mxu0 0.0
      %7556 = vmatpush1.msra.mxu0 0.0
      %7557 = vmatprep.subr.mxu0 0.0
      %7558 = vmatpush1.msra.mxu0 0.0
      %7559 = vmatprep.subr.mxu0 0.0
      %7560 = vmatpush1.msra.mxu0 0.0
      %7561 = vmatprep.subr.mxu0 0.0
      %7562 = vmatpush1.msra.mxu0 0.0
      %7563 = vmatprep.subr.mxu0 0.0
      %7564 = vmatpush1.msra.mxu0 0.0
      %7565 = vmatprep.subr.mxu0 0.0
      %7566 = vmatpush1.msra.mxu0 0.0
      %7567 = vmatprep.subr.mxu0 0.0
      %7568 = vmatpush1.msra.mxu0 0.0
      %7569 = vmatprep.subr.mxu0 0.0
      %7570 = vmatpush1.msra.mxu0 0.0
      %7571 = vmatprep.subr.mxu0 0.0
      %7572 = vmatpush1.msra.mxu0 0.0
      %7573 = vmatprep.subr.mxu0 0.0
      %7574 = vmatpush1.msra.mxu0 0.0
      %7575 = vmatprep.subr.mxu0 0.0
      %v7576 = vand.u32 %v1159, 4294901760
      %v7577 = vsub.f32 %v1159, %v7576
      %v7578 = vand.u32 %v7577, 4294901760
      %7579 = vmatpush1.msra.mxu0 %v7578
      %7580 = vmatprep.subr.mxu0 0.0
      %v7581 = vand.u32 %v1158, 4294901760
      %v7582 = vsub.f32 %v1158, %v7581
      %v7583 = vand.u32 %v7582, 4294901760
      %7584 = vmatpush1.msra.mxu0 %v7583
      %7585 = vmatprep.subr.mxu0 0.0
      %v7586 = vand.u32 %v1157, 4294901760
      %v7587 = vsub.f32 %v1157, %v7586
      %v7588 = vand.u32 %v7587, 4294901760
      %7589 = vmatpush1.msra.mxu0 %v7588
      %7590 = vmatprep.subr.mxu0 0.0
      %v7591 = vand.u32 %v1156, 4294901760
      %v7592 = vsub.f32 %v1156, %v7591
      %v7593 = vand.u32 %v7592, 4294901760
      %7594 = vmatpush1.msra.mxu0 %v7593
      %7595 = vmatprep.subr.mxu0 0.0
      %7596 = vmatpush2.msra.mxu0 0.0
      %7597 = vmatprep.subr.mxu0 0.0
      %7598 = vmatpush2.msra.mxu0 0.0
      %7599 = vmatprep.subr.mxu0 0.0
      %7600 = vmatpush2.msra.mxu0 0.0
      %7601 = vmatprep.subr.mxu0 0.0
      %7602 = vmatpush2.msra.mxu0 0.0
      %7603 = vmatprep.subr.mxu0 0.0
      %7604 = vmatpush2.msra.mxu0 0.0
      %7605 = vmatprep.subr.mxu0 0.0
      %7606 = vmatpush2.msra.mxu0 0.0
      %7607 = vmatprep.subr.mxu0 0.0
      %7608 = vmatpush2.msra.mxu0 0.0
      %7609 = vmatprep.subr.mxu0 0.0
      %7610 = vmatpush2.msra.mxu0 0.0
      %7611 = vmatprep.subr.mxu0 0.0
      %7612 = vmatpush2.msra.mxu0 0.0
      %7613 = vmatprep.subr.mxu0 0.0
      %7614 = vmatpush2.msra.mxu0 0.0
      %7615 = vmatprep.subr.mxu0 0.0
      %7616 = vmatpush2.msra.mxu0 0.0
      %7617 = vmatprep.subr.mxu0 0.0
      %7618 = vmatpush2.msra.mxu0 0.0
      %7619 = vmatprep.subr.mxu0 0.0
      %7620 = vmatpush2.msra.mxu0 0.0
      %7621 = vmatprep.subr.mxu0 0.0
      %7622 = vmatpush2.msra.mxu0 0.0
      %7623 = vmatprep.subr.mxu0 0.0
      %7624 = vmatpush2.msra.mxu0 0.0
      %7625 = vmatprep.subr.mxu0 0.0
      %7626 = vmatpush2.msra.mxu0 0.0
      %7627 = vmatprep.mubr.f32.mxu0 0.0
      %v7628 = vand.u32 %v7120, 4294901760
      %7629 = vmatmul.mubr.f32.gmra.mxu0 %v7628
      %v7630 = vpop.f32.mrf.mxu0
      %v7631 = vadd.f32 %v7524, %v7630
      %v7632 = vpop.f32.mrf.mxu0
      %7633 = vmatprep.mubr.f32.mxu0 0.0
      %v7634 = vand.u32 %v7123, 4294901760
      %7635 = vmatmul.mubr.f32.gmra.mxu0 %v7634
      %v7636 = vpop.f32.mrf.mxu0
      %v7637 = vadd.f32 %v7532, %v7636
      %v7638 = vpop.f32.mrf.mxu0
      %7639 = vmatprep.mubr.f32.mxu0 0.0
      %v7640 = vand.u32 %v7126, 4294901760
      %7641 = vmatmul.mubr.f32.gmra.mxu0 %v7640
      %v7642 = vpop.f32.mrf.mxu0
      %v7643 = vadd.f32 %v7540, %v7642
      %v7644 = vpop.f32.mrf.mxu0
      %7645 = vmatprep.mubr.f32.mxu0 0.0
      %v7646 = vand.u32 %v7129, 4294901760
      %7647 = vmatmul.mubr.f32.gmra.mxu0 %v7646
      %v7648 = vpop.f32.mrf.mxu0
      %v7649 = vadd.f32 %v7548, %v7648
      %v7650 = vpop.f32.mrf.mxu0
      %7651 = vdwg.mxu0
      %7652 = vmatprep.subr.mxu0 0.0
      %7653 = vmatpush1.msra.mxu0 0.0
      %7654 = vmatprep.subr.mxu0 0.0
      %7655 = vmatpush1.msra.mxu0 0.0
      %7656 = vmatprep.subr.mxu0 0.0
      %7657 = vmatpush1.msra.mxu0 0.0
      %7658 = vmatprep.subr.mxu0 0.0
      %7659 = vmatpush1.msra.mxu0 0.0
      %7660 = vmatprep.subr.mxu0 0.0
      %7661 = vmatpush1.msra.mxu0 0.0
      %7662 = vmatprep.subr.mxu0 0.0
      %7663 = vmatpush1.msra.mxu0 0.0
      %7664 = vmatprep.subr.mxu0 0.0
      %7665 = vmatpush1.msra.mxu0 0.0
      %7666 = vmatprep.subr.mxu0 0.0
      %7667 = vmatpush1.msra.mxu0 0.0
      %7668 = vmatprep.subr.mxu0 0.0
      %7669 = vmatpush1.msra.mxu0 0.0
      %7670 = vmatprep.subr.mxu0 0.0
      %7671 = vmatpush1.msra.mxu0 0.0
      %7672 = vmatprep.subr.mxu0 0.0
      %7673 = vmatpush1.msra.mxu0 0.0
      %7674 = vmatprep.subr.mxu0 0.0
      %7675 = vmatpush1.msra.mxu0 0.0
      %7676 = vmatprep.subr.mxu0 0.0
      %v7677 = vand.u32 %v1159, 4294901760
      %7678 = vmatpush1.msra.mxu0 %v7677
      %7679 = vmatprep.subr.mxu0 0.0
      %v7680 = vand.u32 %v1158, 4294901760
      %7681 = vmatpush1.msra.mxu0 %v7680
      %7682 = vmatprep.subr.mxu0 0.0
      %v7683 = vand.u32 %v1157, 4294901760
      %7684 = vmatpush1.msra.mxu0 %v7683
      %7685 = vmatprep.subr.mxu0 0.0
      %v7686 = vand.u32 %v1156, 4294901760
      %7687 = vmatpush1.msra.mxu0 %v7686
      %7688 = vmatprep.subr.mxu0 0.0
      %7689 = vmatpush2.msra.mxu0 0.0
      %7690 = vmatprep.subr.mxu0 0.0
      %7691 = vmatpush2.msra.mxu0 0.0
      %7692 = vmatprep.subr.mxu0 0.0
      %7693 = vmatpush2.msra.mxu0 0.0
      %7694 = vmatprep.subr.mxu0 0.0
      %7695 = vmatpush2.msra.mxu0 0.0
      %7696 = vmatprep.subr.mxu0 0.0
      %7697 = vmatpush2.msra.mxu0 0.0
      %7698 = vmatprep.subr.mxu0 0.0
      %7699 = vmatpush2.msra.mxu0 0.0
      %7700 = vmatprep.subr.mxu0 0.0
      %7701 = vmatpush2.msra.mxu0 0.0
      %7702 = vmatprep.subr.mxu0 0.0
      %7703 = vmatpush2.msra.mxu0 0.0
      %7704 = vmatprep.subr.mxu0 0.0
      %7705 = vmatpush2.msra.mxu0 0.0
      %7706 = vmatprep.subr.mxu0 0.0
      %7707 = vmatpush2.msra.mxu0 0.0
      %7708 = vmatprep.subr.mxu0 0.0
      %7709 = vmatpush2.msra.mxu0 0.0
      %7710 = vmatprep.subr.mxu0 0.0
      %7711 = vmatpush2.msra.mxu0 0.0
      %7712 = vmatprep.subr.mxu0 0.0
      %7713 = vmatpush2.msra.mxu0 0.0
      %7714 = vmatprep.subr.mxu0 0.0
      %7715 = vmatpush2.msra.mxu0 0.0
      %7716 = vmatprep.subr.mxu0 0.0
      %7717 = vmatpush2.msra.mxu0 0.0
      %7718 = vmatprep.subr.mxu0 0.0
      %7719 = vmatpush2.msra.mxu0 0.0
      %7720 = vmatprep.mubr.f32.mxu0 0.0
      %v7721 = vand.u32 %v7120, 4294901760
      %7722 = vmatmul.mubr.f32.gmra.mxu0 %v7721
      %v7723 = vpop.f32.mrf.mxu0
      %v7724 = vadd.f32 %v7631, %v7723
      %v7725 = vpop.f32.mrf.mxu0
      %7726 = vmatprep.mubr.f32.mxu0 0.0
      %v7727 = vand.u32 %v7123, 4294901760
      %7728 = vmatmul.mubr.f32.gmra.mxu0 %v7727
      %v7729 = vpop.f32.mrf.mxu0
      %v7730 = vadd.f32 %v7637, %v7729
      %v7731 = vpop.f32.mrf.mxu0
      %7732 = vmatprep.mubr.f32.mxu0 0.0
      %v7733 = vand.u32 %v7126, 4294901760
      %7734 = vmatmul.mubr.f32.gmra.mxu0 %v7733
      %v7735 = vpop.f32.mrf.mxu0
      %v7736 = vadd.f32 %v7643, %v7735
      %v7737 = vpop.f32.mrf.mxu0
      %7738 = vmatprep.mubr.f32.mxu0 0.0
      %v7739 = vand.u32 %v7129, 4294901760
      %7740 = vmatmul.mubr.f32.gmra.mxu0 %v7739
      %v7741 = vpop.f32.mrf.mxu0
      %v7742 = vadd.f32 %v7649, %v7741
      %v7743 = vpop.f32.mrf.mxu0
      %7744 = vdwg.mxu0
      %v7745 = vadd.f32 %v7111, %v7724
      %v7746 = vadd.f32 %v7112, %v7730
      %v7747 = vadd.f32 %v7113, %v7736
      %v7748 = vadd.f32 %v7114, %v7742
      %7750 = vset.pattern.permute.xlu0 0
      %7751 = vperm.xlu0 %7750, %v1172
      %v7752 = vpop.permute.xlu0 %7751
      %7755 = vset.pattern.permute.xlu0 0
      %7756 = vperm.xlu0 %7755, %v1173
      %v7757 = vpop.permute.xlu0 %7756
      %7760 = vset.pattern.permute.xlu0 0
      %7761 = vperm.xlu0 %7760, %v1174
      %v7762 = vpop.permute.xlu0 %7761
      %7765 = vset.pattern.permute.xlu0 0
      %7766 = vperm.xlu0 %7765, %v1175
      %v7767 = vpop.permute.xlu0 %7766
      %v7769 = vadd.f32 %v7745, %v7752
      %v7770 = vadd.f32 %v7746, %v7757
      %v7771 = vadd.f32 %v7747, %v7762
      %v7772 = vadd.f32 %v7748, %v7767
      %v7773 = vld [vmem:[%s4 + $0x100] sm:$0xff]
      %v7774 = vld [vmem:[%s4 + $0x108] sm:$0xff]
      %v7775 = vld [vmem:[%s4 + $0x110] sm:$0xff]
      %v7776 = vld [vmem:[%s4 + $0x118] sm:$0xff]
      %v7777 = vmax.f32 %v7769, 0.0
      %v7778 = vmax.f32 %v7770, 0.0
      %v7779 = vmax.f32 %v7771, 0.0
      %v7780 = vmax.f32 %v7772, 0.0
      %v7781 = vld [vmem:[%s5 + $0x60] sm:$0xff]
      %v7782 = vld [vmem:[%s5 + $0x68] sm:$0xff]
      %v7783 = vld [vmem:[%s5 + $0x70] sm:$0xff]
      %v7784 = vld [vmem:[%s5 + $0x78] sm:$0xff]
      %7786 = vset.pattern.permute.xlu0 0
      %7787 = vperm.xlu0 %7786, %v7781
      %v7788 = vpop.permute.xlu0 %7787
      %7791 = vset.pattern.permute.xlu0 0
      %7792 = vperm.xlu0 %7791, %v7782
      %v7793 = vpop.permute.xlu0 %7792
      %7796 = vset.pattern.permute.xlu0 0
      %7797 = vperm.xlu0 %7796, %v7783
      %v7798 = vpop.permute.xlu0 %7797
      %7801 = vset.pattern.permute.xlu0 0
      %7802 = vperm.xlu0 %7801, %v7784
      %v7803 = vpop.permute.xlu0 %7802
      %v7806 = vsel %vm1184, %v7773, 0
      %v7809 = vsel %vm1184, %v7774, 0
      %v7812 = vsel %vm1184, %v7775, 0
      %v7815 = vsel %vm1184, %v7776, 0
      %7817 = vmatprep.subr.mxu0 0.0
      %7818 = vmatpush1.msra.mxu0 0.0
      %7819 = vmatprep.subr.mxu0 0.0
      %7820 = vmatpush1.msra.mxu0 0.0
      %7821 = vmatprep.subr.mxu0 0.0
      %7822 = vmatpush1.msra.mxu0 0.0
      %7823 = vmatprep.subr.mxu0 0.0
      %7824 = vmatpush1.msra.mxu0 0.0
      %7825 = vmatprep.subr.mxu0 0.0
      %7826 = vmatpush1.msra.mxu0 0.0
      %7827 = vmatprep.subr.mxu0 0.0
      %7828 = vmatpush1.msra.mxu0 0.0
      %7829 = vmatprep.subr.mxu0 0.0
      %7830 = vmatpush1.msra.mxu0 0.0
      %7831 = vmatprep.subr.mxu0 0.0
      %7832 = vmatpush1.msra.mxu0 0.0
      %7833 = vmatprep.subr.mxu0 0.0
      %7834 = vmatpush1.msra.mxu0 0.0
      %7835 = vmatprep.subr.mxu0 0.0
      %7836 = vmatpush1.msra.mxu0 0.0
      %7837 = vmatprep.subr.mxu0 0.0
      %7838 = vmatpush1.msra.mxu0 0.0
      %7839 = vmatprep.subr.mxu0 0.0
      %7840 = vmatpush1.msra.mxu0 0.0
      %7841 = vmatprep.subr.mxu0 0.0
      %v7842 = vand.u32 %v7780, 4294901760
      %7843 = vmatpush1.msra.mxu0 %v7842
      %7844 = vmatprep.subr.mxu0 0.0
      %v7845 = vand.u32 %v7779, 4294901760
      %7846 = vmatpush1.msra.mxu0 %v7845
      %7847 = vmatprep.subr.mxu0 0.0
      %v7848 = vand.u32 %v7778, 4294901760
      %7849 = vmatpush1.msra.mxu0 %v7848
      %7850 = vmatprep.subr.mxu0 0.0
      %v7851 = vand.u32 %v7777, 4294901760
      %7852 = vmatpush1.msra.mxu0 %v7851
      %7853 = vmatprep.subr.mxu0 0.0
      %7854 = vmatpush2.msra.mxu0 0.0
      %7855 = vmatprep.subr.mxu0 0.0
      %7856 = vmatpush2.msra.mxu0 0.0
      %7857 = vmatprep.subr.mxu0 0.0
      %7858 = vmatpush2.msra.mxu0 0.0
      %7859 = vmatprep.subr.mxu0 0.0
      %7860 = vmatpush2.msra.mxu0 0.0
      %7861 = vmatprep.subr.mxu0 0.0
      %7862 = vmatpush2.msra.mxu0 0.0
      %7863 = vmatprep.subr.mxu0 0.0
      %7864 = vmatpush2.msra.mxu0 0.0
      %7865 = vmatprep.subr.mxu0 0.0
      %7866 = vmatpush2.msra.mxu0 0.0
      %7867 = vmatprep.subr.mxu0 0.0
      %7868 = vmatpush2.msra.mxu0 0.0
      %7869 = vmatprep.subr.mxu0 0.0
      %7870 = vmatpush2.msra.mxu0 0.0
      %7871 = vmatprep.subr.mxu0 0.0
      %7872 = vmatpush2.msra.mxu0 0.0
      %7873 = vmatprep.subr.mxu0 0.0
      %7874 = vmatpush2.msra.mxu0 0.0
      %7875 = vmatprep.subr.mxu0 0.0
      %7876 = vmatpush2.msra.mxu0 0.0
      %7877 = vmatprep.subr.mxu0 0.0
      %7878 = vmatpush2.msra.mxu0 0.0
      %7879 = vmatprep.subr.mxu0 0.0
      %7880 = vmatpush2.msra.mxu0 0.0
      %7881 = vmatprep.subr.mxu0 0.0
      %7882 = vmatpush2.msra.mxu0 0.0
      %7883 = vmatprep.subr.mxu0 0.0
      %7884 = vmatpush2.msra.mxu0 0.0
      %7885 = vmatprep.mubr.f32.mxu0 0.0
      %v7886 = vand.u32 %v7806, 4294901760
      %v7887 = vsub.f32 %v7806, %v7886
      %v7888 = vand.u32 %v7887, 4294901760
      %v7889 = vsub.f32 %v7887, %v7888
      %v7890 = vand.u32 %v7889, 4294901760
      %7891 = vmatmul.mubr.f32.gmra.mxu0 %v7890
      %v7892 = vpop.f32.mrf.mxu0
      %v7893 = vadd.f32 %v7788, %v7892
      %v7894 = vpop.f32.mrf.mxu0
      %7895 = vmatprep.mubr.f32.mxu0 0.0
      %v7896 = vand.u32 %v7809, 4294901760
      %v7897 = vsub.f32 %v7809, %v7896
      %v7898 = vand.u32 %v7897, 4294901760
      %v7899 = vsub.f32 %v7897, %v7898
      %v7900 = vand.u32 %v7899, 4294901760
      %7901 = vmatmul.mubr.f32.gmra.mxu0 %v7900
      %v7902 = vpop.f32.mrf.mxu0
      %v7903 = vadd.f32 %v7793, %v7902
      %v7904 = vpop.f32.mrf.mxu0
      %7905 = vmatprep.mubr.f32.mxu0 0.0
      %v7906 = vand.u32 %v7812, 4294901760
      %v7907 = vsub.f32 %v7812, %v7906
      %v7908 = vand.u32 %v7907, 4294901760
      %v7909 = vsub.f32 %v7907, %v7908
      %v7910 = vand.u32 %v7909, 4294901760
      %7911 = vmatmul.mubr.f32.gmra.mxu0 %v7910
      %v7912 = vpop.f32.mrf.mxu0
      %v7913 = vadd.f32 %v7798, %v7912
      %v7914 = vpop.f32.mrf.mxu0
      %7915 = vmatprep.mubr.f32.mxu0 0.0
      %v7916 = vand.u32 %v7815, 4294901760
      %v7917 = vsub.f32 %v7815, %v7916
      %v7918 = vand.u32 %v7917, 4294901760
      %v7919 = vsub.f32 %v7917, %v7918
      %v7920 = vand.u32 %v7919, 4294901760
      %7921 = vmatmul.mubr.f32.gmra.mxu0 %v7920
      %v7922 = vpop.f32.mrf.mxu0
      %v7923 = vadd.f32 %v7803, %v7922
      %v7924 = vpop.f32.mrf.mxu0
      %7925 = vdwg.mxu0
      %7926 = vmatprep.subr.mxu0 0.0
      %7927 = vmatpush1.msra.mxu0 0.0
      %7928 = vmatprep.subr.mxu0 0.0
      %7929 = vmatpush1.msra.mxu0 0.0
      %7930 = vmatprep.subr.mxu0 0.0
      %7931 = vmatpush1.msra.mxu0 0.0
      %7932 = vmatprep.subr.mxu0 0.0
      %7933 = vmatpush1.msra.mxu0 0.0
      %7934 = vmatprep.subr.mxu0 0.0
      %7935 = vmatpush1.msra.mxu0 0.0
      %7936 = vmatprep.subr.mxu0 0.0
      %7937 = vmatpush1.msra.mxu0 0.0
      %7938 = vmatprep.subr.mxu0 0.0
      %7939 = vmatpush1.msra.mxu0 0.0
      %7940 = vmatprep.subr.mxu0 0.0
      %7941 = vmatpush1.msra.mxu0 0.0
      %7942 = vmatprep.subr.mxu0 0.0
      %7943 = vmatpush1.msra.mxu0 0.0
      %7944 = vmatprep.subr.mxu0 0.0
      %7945 = vmatpush1.msra.mxu0 0.0
      %7946 = vmatprep.subr.mxu0 0.0
      %7947 = vmatpush1.msra.mxu0 0.0
      %7948 = vmatprep.subr.mxu0 0.0
      %7949 = vmatpush1.msra.mxu0 0.0
      %7950 = vmatprep.subr.mxu0 0.0
      %v7951 = vand.u32 %v7780, 4294901760
      %v7952 = vsub.f32 %v7780, %v7951
      %v7953 = vand.u32 %v7952, 4294901760
      %v7954 = vsub.f32 %v7952, %v7953
      %v7955 = vand.u32 %v7954, 4294901760
      %7956 = vmatpush1.msra.mxu0 %v7955
      %7957 = vmatprep.subr.mxu0 0.0
      %v7958 = vand.u32 %v7779, 4294901760
      %v7959 = vsub.f32 %v7779, %v7958
      %v7960 = vand.u32 %v7959, 4294901760
      %v7961 = vsub.f32 %v7959, %v7960
      %v7962 = vand.u32 %v7961, 4294901760
      %7963 = vmatpush1.msra.mxu0 %v7962
      %7964 = vmatprep.subr.mxu0 0.0
      %v7965 = vand.u32 %v7778, 4294901760
      %v7966 = vsub.f32 %v7778, %v7965
      %v7967 = vand.u32 %v7966, 4294901760
      %v7968 = vsub.f32 %v7966, %v7967
      %v7969 = vand.u32 %v7968, 4294901760
      %7970 = vmatpush1.msra.mxu0 %v7969
      %7971 = vmatprep.subr.mxu0 0.0
      %v7972 = vand.u32 %v7777, 4294901760
      %v7973 = vsub.f32 %v7777, %v7972
      %v7974 = vand.u32 %v7973, 4294901760
      %v7975 = vsub.f32 %v7973, %v7974
      %v7976 = vand.u32 %v7975, 4294901760
      %7977 = vmatpush1.msra.mxu0 %v7976
      %7978 = vmatprep.subr.mxu0 0.0
      %7979 = vmatpush2.msra.mxu0 0.0
      %7980 = vmatprep.subr.mxu0 0.0
      %7981 = vmatpush2.msra.mxu0 0.0
      %7982 = vmatprep.subr.mxu0 0.0
      %7983 = vmatpush2.msra.mxu0 0.0
      %7984 = vmatprep.subr.mxu0 0.0
      %7985 = vmatpush2.msra.mxu0 0.0
      %7986 = vmatprep.subr.mxu0 0.0
      %7987 = vmatpush2.msra.mxu0 0.0
      %7988 = vmatprep.subr.mxu0 0.0
      %7989 = vmatpush2.msra.mxu0 0.0
      %7990 = vmatprep.subr.mxu0 0.0
      %7991 = vmatpush2.msra.mxu0 0.0
      %7992 = vmatprep.subr.mxu0 0.0
      %7993 = vmatpush2.msra.mxu0 0.0
      %7994 = vmatprep.subr.mxu0 0.0
      %7995 = vmatpush2.msra.mxu0 0.0
      %7996 = vmatprep.subr.mxu0 0.0
      %7997 = vmatpush2.msra.mxu0 0.0
      %7998 = vmatprep.subr.mxu0 0.0
      %7999 = vmatpush2.msra.mxu0 0.0
      %8000 = vmatprep.subr.mxu0 0.0
      %8001 = vmatpush2.msra.mxu0 0.0
      %8002 = vmatprep.subr.mxu0 0.0
      %8003 = vmatpush2.msra.mxu0 0.0
      %8004 = vmatprep.subr.mxu0 0.0
      %8005 = vmatpush2.msra.mxu0 0.0
      %8006 = vmatprep.subr.mxu0 0.0
      %8007 = vmatpush2.msra.mxu0 0.0
      %8008 = vmatprep.subr.mxu0 0.0
      %8009 = vmatpush2.msra.mxu0 0.0
      %8010 = vmatprep.mubr.f32.mxu0 0.0
      %v8011 = vand.u32 %v7806, 4294901760
      %8012 = vmatmul.mubr.f32.gmra.mxu0 %v8011
      %v8013 = vpop.f32.mrf.mxu0
      %v8014 = vadd.f32 %v7893, %v8013
      %v8015 = vpop.f32.mrf.mxu0
      %8016 = vmatprep.mubr.f32.mxu0 0.0
      %v8017 = vand.u32 %v7809, 4294901760
      %8018 = vmatmul.mubr.f32.gmra.mxu0 %v8017
      %v8019 = vpop.f32.mrf.mxu0
      %v8020 = vadd.f32 %v7903, %v8019
      %v8021 = vpop.f32.mrf.mxu0
      %8022 = vmatprep.mubr.f32.mxu0 0.0
      %v8023 = vand.u32 %v7812, 4294901760
      %8024 = vmatmul.mubr.f32.gmra.mxu0 %v8023
      %v8025 = vpop.f32.mrf.mxu0
      %v8026 = vadd.f32 %v7913, %v8025
      %v8027 = vpop.f32.mrf.mxu0
      %8028 = vmatprep.mubr.f32.mxu0 0.0
      %v8029 = vand.u32 %v7815, 4294901760
      %8030 = vmatmul.mubr.f32.gmra.mxu0 %v8029
      %v8031 = vpop.f32.mrf.mxu0
      %v8032 = vadd.f32 %v7923, %v8031
      %v8033 = vpop.f32.mrf.mxu0
      %8034 = vdwg.mxu0
      %8035 = vmatprep.subr.mxu0 0.0
      %8036 = vmatpush1.msra.mxu0 0.0
      %8037 = vmatprep.subr.mxu0 0.0
      %8038 = vmatpush1.msra.mxu0 0.0
      %8039 = vmatprep.subr.mxu0 0.0
      %8040 = vmatpush1.msra.mxu0 0.0
      %8041 = vmatprep.subr.mxu0 0.0
      %8042 = vmatpush1.msra.mxu0 0.0
      %8043 = vmatprep.subr.mxu0 0.0
      %8044 = vmatpush1.msra.mxu0 0.0
      %8045 = vmatprep.subr.mxu0 0.0
      %8046 = vmatpush1.msra.mxu0 0.0
      %8047 = vmatprep.subr.mxu0 0.0
      %8048 = vmatpush1.msra.mxu0 0.0
      %8049 = vmatprep.subr.mxu0 0.0
      %8050 = vmatpush1.msra.mxu0 0.0
      %8051 = vmatprep.subr.mxu0 0.0
      %8052 = vmatpush1.msra.mxu0 0.0
      %8053 = vmatprep.subr.mxu0 0.0
      %8054 = vmatpush1.msra.mxu0 0.0
      %8055 = vmatprep.subr.mxu0 0.0
      %8056 = vmatpush1.msra.mxu0 0.0
      %8057 = vmatprep.subr.mxu0 0.0
      %8058 = vmatpush1.msra.mxu0 0.0
      %8059 = vmatprep.subr.mxu0 0.0
      %v8060 = vand.u32 %v7780, 4294901760
      %v8061 = vsub.f32 %v7780, %v8060
      %8062 = vmatpush1.msra.mxu0 %v8061
      %8063 = vmatprep.subr.mxu0 0.0
      %v8064 = vand.u32 %v7779, 4294901760
      %v8065 = vsub.f32 %v7779, %v8064
      %8066 = vmatpush1.msra.mxu0 %v8065
      %8067 = vmatprep.subr.mxu0 0.0
      %v8068 = vand.u32 %v7778, 4294901760
      %v8069 = vsub.f32 %v7778, %v8068
      %8070 = vmatpush1.msra.mxu0 %v8069
      %8071 = vmatprep.subr.mxu0 0.0
      %v8072 = vand.u32 %v7777, 4294901760
      %v8073 = vsub.f32 %v7777, %v8072
      %8074 = vmatpush1.msra.mxu0 %v8073
      %8075 = vmatprep.subr.mxu0 0.0
      %8076 = vmatpush2.msra.mxu0 0.0
      %8077 = vmatprep.subr.mxu0 0.0
      %8078 = vmatpush2.msra.mxu0 0.0
      %8079 = vmatprep.subr.mxu0 0.0
      %8080 = vmatpush2.msra.mxu0 0.0
      %8081 = vmatprep.subr.mxu0 0.0
      %8082 = vmatpush2.msra.mxu0 0.0
      %8083 = vmatprep.subr.mxu0 0.0
      %8084 = vmatpush2.msra.mxu0 0.0
      %8085 = vmatprep.subr.mxu0 0.0
      %8086 = vmatpush2.msra.mxu0 0.0
      %8087 = vmatprep.subr.mxu0 0.0
      %8088 = vmatpush2.msra.mxu0 0.0
      %8089 = vmatprep.subr.mxu0 0.0
      %8090 = vmatpush2.msra.mxu0 0.0
      %8091 = vmatprep.subr.mxu0 0.0
      %8092 = vmatpush2.msra.mxu0 0.0
      %8093 = vmatprep.subr.mxu0 0.0
      %8094 = vmatpush2.msra.mxu0 0.0
      %8095 = vmatprep.subr.mxu0 0.0
      %8096 = vmatpush2.msra.mxu0 0.0
      %8097 = vmatprep.subr.mxu0 0.0
      %8098 = vmatpush2.msra.mxu0 0.0
      %8099 = vmatprep.subr.mxu0 0.0
      %8100 = vmatpush2.msra.mxu0 0.0
      %8101 = vmatprep.subr.mxu0 0.0
      %8102 = vmatpush2.msra.mxu0 0.0
      %8103 = vmatprep.subr.mxu0 0.0
      %8104 = vmatpush2.msra.mxu0 0.0
      %8105 = vmatprep.subr.mxu0 0.0
      %8106 = vmatpush2.msra.mxu0 0.0
      %8107 = vmatprep.mubr.f32.mxu0 0.0
      %v8108 = vand.u32 %v7806, 4294901760
      %v8109 = vsub.f32 %v7806, %v8108
      %8110 = vmatmul.mubr.f32.gmra.mxu0 %v8109
      %v8111 = vpop.f32.mrf.mxu0
      %v8112 = vadd.f32 %v8014, %v8111
      %v8113 = vpop.f32.mrf.mxu0
      %8114 = vmatprep.mubr.f32.mxu0 0.0
      %v8115 = vand.u32 %v7809, 4294901760
      %v8116 = vsub.f32 %v7809, %v8115
      %8117 = vmatmul.mubr.f32.gmra.mxu0 %v8116
      %v8118 = vpop.f32.mrf.mxu0
      %v8119 = vadd.f32 %v8020, %v8118
      %v8120 = vpop.f32.mrf.mxu0
      %8121 = vmatprep.mubr.f32.mxu0 0.0
      %v8122 = vand.u32 %v7812, 4294901760
      %v8123 = vsub.f32 %v7812, %v8122
      %8124 = vmatmul.mubr.f32.gmra.mxu0 %v8123
      %v8125 = vpop.f32.mrf.mxu0
      %v8126 = vadd.f32 %v8026, %v8125
      %v8127 = vpop.f32.mrf.mxu0
      %8128 = vmatprep.mubr.f32.mxu0 0.0
      %v8129 = vand.u32 %v7815, 4294901760
      %v8130 = vsub.f32 %v7815, %v8129
      %8131 = vmatmul.mubr.f32.gmra.mxu0 %v8130
      %v8132 = vpop.f32.mrf.mxu0
      %v8133 = vadd.f32 %v8032, %v8132
      %v8134 = vpop.f32.mrf.mxu0
      %8135 = vdwg.mxu0
      %8136 = vmatprep.subr.mxu0 0.0
      %8137 = vmatpush1.msra.mxu0 0.0
      %8138 = vmatprep.subr.mxu0 0.0
      %8139 = vmatpush1.msra.mxu0 0.0
      %8140 = vmatprep.subr.mxu0 0.0
      %8141 = vmatpush1.msra.mxu0 0.0
      %8142 = vmatprep.subr.mxu0 0.0
      %8143 = vmatpush1.msra.mxu0 0.0
      %8144 = vmatprep.subr.mxu0 0.0
      %8145 = vmatpush1.msra.mxu0 0.0
      %8146 = vmatprep.subr.mxu0 0.0
      %8147 = vmatpush1.msra.mxu0 0.0
      %8148 = vmatprep.subr.mxu0 0.0
      %8149 = vmatpush1.msra.mxu0 0.0
      %8150 = vmatprep.subr.mxu0 0.0
      %8151 = vmatpush1.msra.mxu0 0.0
      %8152 = vmatprep.subr.mxu0 0.0
      %8153 = vmatpush1.msra.mxu0 0.0
      %8154 = vmatprep.subr.mxu0 0.0
      %8155 = vmatpush1.msra.mxu0 0.0
      %8156 = vmatprep.subr.mxu0 0.0
      %8157 = vmatpush1.msra.mxu0 0.0
      %8158 = vmatprep.subr.mxu0 0.0
      %8159 = vmatpush1.msra.mxu0 0.0
      %8160 = vmatprep.subr.mxu0 0.0
      %v8161 = vand.u32 %v7780, 4294901760
      %8162 = vmatpush1.msra.mxu0 %v8161
      %8163 = vmatprep.subr.mxu0 0.0
      %v8164 = vand.u32 %v7779, 4294901760
      %8165 = vmatpush1.msra.mxu0 %v8164
      %8166 = vmatprep.subr.mxu0 0.0
      %v8167 = vand.u32 %v7778, 4294901760
      %8168 = vmatpush1.msra.mxu0 %v8167
      %8169 = vmatprep.subr.mxu0 0.0
      %v8170 = vand.u32 %v7777, 4294901760
      %8171 = vmatpush1.msra.mxu0 %v8170
      %8172 = vmatprep.subr.mxu0 0.0
      %8173 = vmatpush2.msra.mxu0 0.0
      %8174 = vmatprep.subr.mxu0 0.0
      %8175 = vmatpush2.msra.mxu0 0.0
      %8176 = vmatprep.subr.mxu0 0.0
      %8177 = vmatpush2.msra.mxu0 0.0
      %8178 = vmatprep.subr.mxu0 0.0
      %8179 = vmatpush2.msra.mxu0 0.0
      %8180 = vmatprep.subr.mxu0 0.0
      %8181 = vmatpush2.msra.mxu0 0.0
      %8182 = vmatprep.subr.mxu0 0.0
      %8183 = vmatpush2.msra.mxu0 0.0
      %8184 = vmatprep.subr.mxu0 0.0
      %8185 = vmatpush2.msra.mxu0 0.0
      %8186 = vmatprep.subr.mxu0 0.0
      %8187 = vmatpush2.msra.mxu0 0.0
      %8188 = vmatprep.subr.mxu0 0.0
      %8189 = vmatpush2.msra.mxu0 0.0
      %8190 = vmatprep.subr.mxu0 0.0
      %8191 = vmatpush2.msra.mxu0 0.0
      %8192 = vmatprep.subr.mxu0 0.0
      %8193 = vmatpush2.msra.mxu0 0.0
      %8194 = vmatprep.subr.mxu0 0.0
      %8195 = vmatpush2.msra.mxu0 0.0
      %8196 = vmatprep.subr.mxu0 0.0
      %8197 = vmatpush2.msra.mxu0 0.0
      %8198 = vmatprep.subr.mxu0 0.0
      %8199 = vmatpush2.msra.mxu0 0.0
      %8200 = vmatprep.subr.mxu0 0.0
      %8201 = vmatpush2.msra.mxu0 0.0
      %8202 = vmatprep.subr.mxu0 0.0
      %8203 = vmatpush2.msra.mxu0 0.0
      %8204 = vmatprep.mubr.f32.mxu0 0.0
      %v8205 = vand.u32 %v7806, 4294901760
      %v8206 = vsub.f32 %v7806, %v8205
      %v8207 = vand.u32 %v8206, 4294901760
      %8208 = vmatmul.mubr.f32.gmra.mxu0 %v8207
      %v8209 = vpop.f32.mrf.mxu0
      %v8210 = vadd.f32 %v8112, %v8209
      %v8211 = vpop.f32.mrf.mxu0
      %8212 = vmatprep.mubr.f32.mxu0 0.0
      %v8213 = vand.u32 %v7809, 4294901760
      %v8214 = vsub.f32 %v7809, %v8213
      %v8215 = vand.u32 %v8214, 4294901760
      %8216 = vmatmul.mubr.f32.gmra.mxu0 %v8215
      %v8217 = vpop.f32.mrf.mxu0
      %v8218 = vadd.f32 %v8119, %v8217
      %v8219 = vpop.f32.mrf.mxu0
      %8220 = vmatprep.mubr.f32.mxu0 0.0
      %v8221 = vand.u32 %v7812, 4294901760
      %v8222 = vsub.f32 %v7812, %v8221
      %v8223 = vand.u32 %v8222, 4294901760
      %8224 = vmatmul.mubr.f32.gmra.mxu0 %v8223
      %v8225 = vpop.f32.mrf.mxu0
      %v8226 = vadd.f32 %v8126, %v8225
      %v8227 = vpop.f32.mrf.mxu0
      %8228 = vmatprep.mubr.f32.mxu0 0.0
      %v8229 = vand.u32 %v7815, 4294901760
      %v8230 = vsub.f32 %v7815, %v8229
      %v8231 = vand.u32 %v8230, 4294901760
      %8232 = vmatmul.mubr.f32.gmra.mxu0 %v8231
      %v8233 = vpop.f32.mrf.mxu0
      %v8234 = vadd.f32 %v8133, %v8233
      %v8235 = vpop.f32.mrf.mxu0
      %8236 = vdwg.mxu0
      %8237 = vmatprep.subr.mxu0 0.0
      %8238 = vmatpush1.msra.mxu0 0.0
      %8239 = vmatprep.subr.mxu0 0.0
      %8240 = vmatpush1.msra.mxu0 0.0
      %8241 = vmatprep.subr.mxu0 0.0
      %8242 = vmatpush1.msra.mxu0 0.0
      %8243 = vmatprep.subr.mxu0 0.0
      %8244 = vmatpush1.msra.mxu0 0.0
      %8245 = vmatprep.subr.mxu0 0.0
      %8246 = vmatpush1.msra.mxu0 0.0
      %8247 = vmatprep.subr.mxu0 0.0
      %8248 = vmatpush1.msra.mxu0 0.0
      %8249 = vmatprep.subr.mxu0 0.0
      %8250 = vmatpush1.msra.mxu0 0.0
      %8251 = vmatprep.subr.mxu0 0.0
      %8252 = vmatpush1.msra.mxu0 0.0
      %8253 = vmatprep.subr.mxu0 0.0
      %8254 = vmatpush1.msra.mxu0 0.0
      %8255 = vmatprep.subr.mxu0 0.0
      %8256 = vmatpush1.msra.mxu0 0.0
      %8257 = vmatprep.subr.mxu0 0.0
      %8258 = vmatpush1.msra.mxu0 0.0
      %8259 = vmatprep.subr.mxu0 0.0
      %8260 = vmatpush1.msra.mxu0 0.0
      %8261 = vmatprep.subr.mxu0 0.0
      %v8262 = vand.u32 %v7780, 4294901760
      %v8263 = vsub.f32 %v7780, %v8262
      %v8264 = vand.u32 %v8263, 4294901760
      %8265 = vmatpush1.msra.mxu0 %v8264
      %8266 = vmatprep.subr.mxu0 0.0
      %v8267 = vand.u32 %v7779, 4294901760
      %v8268 = vsub.f32 %v7779, %v8267
      %v8269 = vand.u32 %v8268, 4294901760
      %8270 = vmatpush1.msra.mxu0 %v8269
      %8271 = vmatprep.subr.mxu0 0.0
      %v8272 = vand.u32 %v7778, 4294901760
      %v8273 = vsub.f32 %v7778, %v8272
      %v8274 = vand.u32 %v8273, 4294901760
      %8275 = vmatpush1.msra.mxu0 %v8274
      %8276 = vmatprep.subr.mxu0 0.0
      %v8277 = vand.u32 %v7777, 4294901760
      %v8278 = vsub.f32 %v7777, %v8277
      %v8279 = vand.u32 %v8278, 4294901760
      %8280 = vmatpush1.msra.mxu0 %v8279
      %8281 = vmatprep.subr.mxu0 0.0
      %8282 = vmatpush2.msra.mxu0 0.0
      %8283 = vmatprep.subr.mxu0 0.0
      %8284 = vmatpush2.msra.mxu0 0.0
      %8285 = vmatprep.subr.mxu0 0.0
      %8286 = vmatpush2.msra.mxu0 0.0
      %8287 = vmatprep.subr.mxu0 0.0
      %8288 = vmatpush2.msra.mxu0 0.0
      %8289 = vmatprep.subr.mxu0 0.0
      %8290 = vmatpush2.msra.mxu0 0.0
      %8291 = vmatprep.subr.mxu0 0.0
      %8292 = vmatpush2.msra.mxu0 0.0
      %8293 = vmatprep.subr.mxu0 0.0
      %8294 = vmatpush2.msra.mxu0 0.0
      %8295 = vmatprep.subr.mxu0 0.0
      %8296 = vmatpush2.msra.mxu0 0.0
      %8297 = vmatprep.subr.mxu0 0.0
      %8298 = vmatpush2.msra.mxu0 0.0
      %8299 = vmatprep.subr.mxu0 0.0
      %8300 = vmatpush2.msra.mxu0 0.0
      %8301 = vmatprep.subr.mxu0 0.0
      %8302 = vmatpush2.msra.mxu0 0.0
      %8303 = vmatprep.subr.mxu0 0.0
      %8304 = vmatpush2.msra.mxu0 0.0
      %8305 = vmatprep.subr.mxu0 0.0
      %8306 = vmatpush2.msra.mxu0 0.0
      %8307 = vmatprep.subr.mxu0 0.0
      %8308 = vmatpush2.msra.mxu0 0.0
      %8309 = vmatprep.subr.mxu0 0.0
      %8310 = vmatpush2.msra.mxu0 0.0
      %8311 = vmatprep.subr.mxu0 0.0
      %8312 = vmatpush2.msra.mxu0 0.0
      %8313 = vmatprep.mubr.f32.mxu0 0.0
      %v8314 = vand.u32 %v7806, 4294901760
      %8315 = vmatmul.mubr.f32.gmra.mxu0 %v8314
      %v8316 = vpop.f32.mrf.mxu0
      %v8317 = vadd.f32 %v8210, %v8316
      %v8318 = vpop.f32.mrf.mxu0
      %8319 = vmatprep.mubr.f32.mxu0 0.0
      %v8320 = vand.u32 %v7809, 4294901760
      %8321 = vmatmul.mubr.f32.gmra.mxu0 %v8320
      %v8322 = vpop.f32.mrf.mxu0
      %v8323 = vadd.f32 %v8218, %v8322
      %v8324 = vpop.f32.mrf.mxu0
      %8325 = vmatprep.mubr.f32.mxu0 0.0
      %v8326 = vand.u32 %v7812, 4294901760
      %8327 = vmatmul.mubr.f32.gmra.mxu0 %v8326
      %v8328 = vpop.f32.mrf.mxu0
      %v8329 = vadd.f32 %v8226, %v8328
      %v8330 = vpop.f32.mrf.mxu0
      %8331 = vmatprep.mubr.f32.mxu0 0.0
      %v8332 = vand.u32 %v7815, 4294901760
      %8333 = vmatmul.mubr.f32.gmra.mxu0 %v8332
      %v8334 = vpop.f32.mrf.mxu0
      %v8335 = vadd.f32 %v8234, %v8334
      %v8336 = vpop.f32.mrf.mxu0
      %8337 = vdwg.mxu0
      %8338 = vmatprep.subr.mxu0 0.0
      %8339 = vmatpush1.msra.mxu0 0.0
      %8340 = vmatprep.subr.mxu0 0.0
      %8341 = vmatpush1.msra.mxu0 0.0
      %8342 = vmatprep.subr.mxu0 0.0
      %8343 = vmatpush1.msra.mxu0 0.0
      %8344 = vmatprep.subr.mxu0 0.0
      %8345 = vmatpush1.msra.mxu0 0.0
      %8346 = vmatprep.subr.mxu0 0.0
      %8347 = vmatpush1.msra.mxu0 0.0
      %8348 = vmatprep.subr.mxu0 0.0
      %8349 = vmatpush1.msra.mxu0 0.0
      %8350 = vmatprep.subr.mxu0 0.0
      %8351 = vmatpush1.msra.mxu0 0.0
      %8352 = vmatprep.subr.mxu0 0.0
      %8353 = vmatpush1.msra.mxu0 0.0
      %8354 = vmatprep.subr.mxu0 0.0
      %8355 = vmatpush1.msra.mxu0 0.0
      %8356 = vmatprep.subr.mxu0 0.0
      %8357 = vmatpush1.msra.mxu0 0.0
      %8358 = vmatprep.subr.mxu0 0.0
      %8359 = vmatpush1.msra.mxu0 0.0
      %8360 = vmatprep.subr.mxu0 0.0
      %8361 = vmatpush1.msra.mxu0 0.0
      %8362 = vmatprep.subr.mxu0 0.0
      %v8363 = vand.u32 %v7780, 4294901760
      %8364 = vmatpush1.msra.mxu0 %v8363
      %8365 = vmatprep.subr.mxu0 0.0
      %v8366 = vand.u32 %v7779, 4294901760
      %8367 = vmatpush1.msra.mxu0 %v8366
      %8368 = vmatprep.subr.mxu0 0.0
      %v8369 = vand.u32 %v7778, 4294901760
      %8370 = vmatpush1.msra.mxu0 %v8369
      %8371 = vmatprep.subr.mxu0 0.0
      %v8372 = vand.u32 %v7777, 4294901760
      %8373 = vmatpush1.msra.mxu0 %v8372
      %8374 = vmatprep.subr.mxu0 0.0
      %8375 = vmatpush2.msra.mxu0 0.0
      %8376 = vmatprep.subr.mxu0 0.0
      %8377 = vmatpush2.msra.mxu0 0.0
      %8378 = vmatprep.subr.mxu0 0.0
      %8379 = vmatpush2.msra.mxu0 0.0
      %8380 = vmatprep.subr.mxu0 0.0
      %8381 = vmatpush2.msra.mxu0 0.0
      %8382 = vmatprep.subr.mxu0 0.0
      %8383 = vmatpush2.msra.mxu0 0.0
      %8384 = vmatprep.subr.mxu0 0.0
      %8385 = vmatpush2.msra.mxu0 0.0
      %8386 = vmatprep.subr.mxu0 0.0
      %8387 = vmatpush2.msra.mxu0 0.0
      %8388 = vmatprep.subr.mxu0 0.0
      %8389 = vmatpush2.msra.mxu0 0.0
      %8390 = vmatprep.subr.mxu0 0.0
      %8391 = vmatpush2.msra.mxu0 0.0
      %8392 = vmatprep.subr.mxu0 0.0
      %8393 = vmatpush2.msra.mxu0 0.0
      %8394 = vmatprep.subr.mxu0 0.0
      %8395 = vmatpush2.msra.mxu0 0.0
      %8396 = vmatprep.subr.mxu0 0.0
      %8397 = vmatpush2.msra.mxu0 0.0
      %8398 = vmatprep.subr.mxu0 0.0
      %8399 = vmatpush2.msra.mxu0 0.0
      %8400 = vmatprep.subr.mxu0 0.0
      %8401 = vmatpush2.msra.mxu0 0.0
      %8402 = vmatprep.subr.mxu0 0.0
      %8403 = vmatpush2.msra.mxu0 0.0
      %8404 = vmatprep.subr.mxu0 0.0
      %8405 = vmatpush2.msra.mxu0 0.0
      %8406 = vmatprep.mubr.f32.mxu0 0.0
      %v8407 = vand.u32 %v7806, 4294901760
      %8408 = vmatmul.mubr.f32.gmra.mxu0 %v8407
      %v8409 = vpop.f32.mrf.mxu0
      %v8410 = vadd.f32 %v8317, %v8409
      %v8411 = vpop.f32.mrf.mxu0
      %8412 = vmatprep.mubr.f32.mxu0 0.0
      %v8413 = vand.u32 %v7809, 4294901760
      %8414 = vmatmul.mubr.f32.gmra.mxu0 %v8413
      %v8415 = vpop.f32.mrf.mxu0
      %v8416 = vadd.f32 %v8323, %v8415
      %v8417 = vpop.f32.mrf.mxu0
      %8418 = vmatprep.mubr.f32.mxu0 0.0
      %v8419 = vand.u32 %v7812, 4294901760
      %8420 = vmatmul.mubr.f32.gmra.mxu0 %v8419
      %v8421 = vpop.f32.mrf.mxu0
      %v8422 = vadd.f32 %v8329, %v8421
      %v8423 = vpop.f32.mrf.mxu0
      %8424 = vmatprep.mubr.f32.mxu0 0.0
      %v8425 = vand.u32 %v7815, 4294901760
      %8426 = vmatmul.mubr.f32.gmra.mxu0 %v8425
      %v8427 = vpop.f32.mrf.mxu0
      %v8428 = vadd.f32 %v8335, %v8427
      %v8429 = vpop.f32.mrf.mxu0
      %8430 = vdwg.mxu0
      %v8431 = vld [vmem:[%s4 + $0x1a0] sm:$0xff]
      %v8432 = vld [vmem:[%s4 + $0x1a8] sm:$0xff]
      %v8433 = vld [vmem:[%s4 + $0x1b0] sm:$0xff]
      %v8434 = vld [vmem:[%s4 + $0x1b8] sm:$0xff]
      %v8435 = vmax.f32 %v8410, 0.0
      %v8436 = vmax.f32 %v8416, 0.0
      %v8437 = vmax.f32 %v8422, 0.0
      %v8438 = vmax.f32 %v8428, 0.0
      %v8439 = vld [vmem:[%s5 + $0x100] sm:$0xff]
      %v8440 = vld [vmem:[%s5 + $0x108] sm:$0xff]
      %v8441 = vld [vmem:[%s5 + $0x110] sm:$0xff]
      %v8442 = vld [vmem:[%s5 + $0x118] sm:$0xff]
      %8444 = vset.pattern.permute.xlu0 0
      %8445 = vperm.xlu0 %8444, %v8439
      %v8446 = vpop.permute.xlu0 %8445
      %8449 = vset.pattern.permute.xlu0 0
      %8450 = vperm.xlu0 %8449, %v8440
      %v8451 = vpop.permute.xlu0 %8450
      %8454 = vset.pattern.permute.xlu0 0
      %8455 = vperm.xlu0 %8454, %v8441
      %v8456 = vpop.permute.xlu0 %8455
      %8459 = vset.pattern.permute.xlu0 0
      %8460 = vperm.xlu0 %8459, %v8442
      %v8461 = vpop.permute.xlu0 %8460
      %v8464 = vsel %vm1184, %v8431, 0
      %v8467 = vsel %vm1184, %v8432, 0
      %v8470 = vsel %vm1184, %v8433, 0
      %v8473 = vsel %vm1184, %v8434, 0
      %8475 = vmatprep.subr.mxu0 0.0
      %8476 = vmatpush1.msra.mxu0 0.0
      %8477 = vmatprep.subr.mxu0 0.0
      %8478 = vmatpush1.msra.mxu0 0.0
      %8479 = vmatprep.subr.mxu0 0.0
      %8480 = vmatpush1.msra.mxu0 0.0
      %8481 = vmatprep.subr.mxu0 0.0
      %8482 = vmatpush1.msra.mxu0 0.0
      %8483 = vmatprep.subr.mxu0 0.0
      %8484 = vmatpush1.msra.mxu0 0.0
      %8485 = vmatprep.subr.mxu0 0.0
      %8486 = vmatpush1.msra.mxu0 0.0
      %8487 = vmatprep.subr.mxu0 0.0
      %8488 = vmatpush1.msra.mxu0 0.0
      %8489 = vmatprep.subr.mxu0 0.0
      %8490 = vmatpush1.msra.mxu0 0.0
      %8491 = vmatprep.subr.mxu0 0.0
      %8492 = vmatpush1.msra.mxu0 0.0
      %8493 = vmatprep.subr.mxu0 0.0
      %8494 = vmatpush1.msra.mxu0 0.0
      %8495 = vmatprep.subr.mxu0 0.0
      %8496 = vmatpush1.msra.mxu0 0.0
      %8497 = vmatprep.subr.mxu0 0.0
      %8498 = vmatpush1.msra.mxu0 0.0
      %8499 = vmatprep.subr.mxu0 0.0
      %v8500 = vand.u32 %v8438, 4294901760
      %8501 = vmatpush1.msra.mxu0 %v8500
      %8502 = vmatprep.subr.mxu0 0.0
      %v8503 = vand.u32 %v8437, 4294901760
      %8504 = vmatpush1.msra.mxu0 %v8503
      %8505 = vmatprep.subr.mxu0 0.0
      %v8506 = vand.u32 %v8436, 4294901760
      %8507 = vmatpush1.msra.mxu0 %v8506
      %8508 = vmatprep.subr.mxu0 0.0
      %v8509 = vand.u32 %v8435, 4294901760
      %8510 = vmatpush1.msra.mxu0 %v8509
      %8511 = vmatprep.subr.mxu0 0.0
      %8512 = vmatpush2.msra.mxu0 0.0
      %8513 = vmatprep.subr.mxu0 0.0
      %8514 = vmatpush2.msra.mxu0 0.0
      %8515 = vmatprep.subr.mxu0 0.0
      %8516 = vmatpush2.msra.mxu0 0.0
      %8517 = vmatprep.subr.mxu0 0.0
      %8518 = vmatpush2.msra.mxu0 0.0
      %8519 = vmatprep.subr.mxu0 0.0
      %8520 = vmatpush2.msra.mxu0 0.0
      %8521 = vmatprep.subr.mxu0 0.0
      %8522 = vmatpush2.msra.mxu0 0.0
      %8523 = vmatprep.subr.mxu0 0.0
      %8524 = vmatpush2.msra.mxu0 0.0
      %8525 = vmatprep.subr.mxu0 0.0
      %8526 = vmatpush2.msra.mxu0 0.0
      %8527 = vmatprep.subr.mxu0 0.0
      %8528 = vmatpush2.msra.mxu0 0.0
      %8529 = vmatprep.subr.mxu0 0.0
      %8530 = vmatpush2.msra.mxu0 0.0
      %8531 = vmatprep.subr.mxu0 0.0
      %8532 = vmatpush2.msra.mxu0 0.0
      %8533 = vmatprep.subr.mxu0 0.0
      %8534 = vmatpush2.msra.mxu0 0.0
      %8535 = vmatprep.subr.mxu0 0.0
      %8536 = vmatpush2.msra.mxu0 0.0
      %8537 = vmatprep.subr.mxu0 0.0
      %8538 = vmatpush2.msra.mxu0 0.0
      %8539 = vmatprep.subr.mxu0 0.0
      %8540 = vmatpush2.msra.mxu0 0.0
      %8541 = vmatprep.subr.mxu0 0.0
      %8542 = vmatpush2.msra.mxu0 0.0
      %8543 = vmatprep.mubr.f32.mxu0 0.0
      %v8544 = vand.u32 %v8464, 4294901760
      %v8545 = vsub.f32 %v8464, %v8544
      %v8546 = vand.u32 %v8545, 4294901760
      %v8547 = vsub.f32 %v8545, %v8546
      %v8548 = vand.u32 %v8547, 4294901760
      %8549 = vmatmul.mubr.f32.gmra.mxu0 %v8548
      %v8550 = vpop.f32.mrf.mxu0
      %v8551 = vadd.f32 %v8446, %v8550
      %v8552 = vpop.f32.mrf.mxu0
      %8553 = vmatprep.mubr.f32.mxu0 0.0
      %v8554 = vand.u32 %v8467, 4294901760
      %v8555 = vsub.f32 %v8467, %v8554
      %v8556 = vand.u32 %v8555, 4294901760
      %v8557 = vsub.f32 %v8555, %v8556
      %v8558 = vand.u32 %v8557, 4294901760
      %8559 = vmatmul.mubr.f32.gmra.mxu0 %v8558
      %v8560 = vpop.f32.mrf.mxu0
      %v8561 = vadd.f32 %v8451, %v8560
      %v8562 = vpop.f32.mrf.mxu0
      %8563 = vmatprep.mubr.f32.mxu0 0.0
      %v8564 = vand.u32 %v8470, 4294901760
      %v8565 = vsub.f32 %v8470, %v8564
      %v8566 = vand.u32 %v8565, 4294901760
      %v8567 = vsub.f32 %v8565, %v8566
      %v8568 = vand.u32 %v8567, 4294901760
      %8569 = vmatmul.mubr.f32.gmra.mxu0 %v8568
      %v8570 = vpop.f32.mrf.mxu0
      %v8571 = vadd.f32 %v8456, %v8570
      %v8572 = vpop.f32.mrf.mxu0
      %8573 = vmatprep.mubr.f32.mxu0 0.0
      %v8574 = vand.u32 %v8473, 4294901760
      %v8575 = vsub.f32 %v8473, %v8574
      %v8576 = vand.u32 %v8575, 4294901760
      %v8577 = vsub.f32 %v8575, %v8576
      %v8578 = vand.u32 %v8577, 4294901760
      %8579 = vmatmul.mubr.f32.gmra.mxu0 %v8578
      %v8580 = vpop.f32.mrf.mxu0
      %v8581 = vadd.f32 %v8461, %v8580
      %v8582 = vpop.f32.mrf.mxu0
      %8583 = vdwg.mxu0
      %8584 = vmatprep.subr.mxu0 0.0
      %8585 = vmatpush1.msra.mxu0 0.0
      %8586 = vmatprep.subr.mxu0 0.0
      %8587 = vmatpush1.msra.mxu0 0.0
      %8588 = vmatprep.subr.mxu0 0.0
      %8589 = vmatpush1.msra.mxu0 0.0
      %8590 = vmatprep.subr.mxu0 0.0
      %8591 = vmatpush1.msra.mxu0 0.0
      %8592 = vmatprep.subr.mxu0 0.0
      %8593 = vmatpush1.msra.mxu0 0.0
      %8594 = vmatprep.subr.mxu0 0.0
      %8595 = vmatpush1.msra.mxu0 0.0
      %8596 = vmatprep.subr.mxu0 0.0
      %8597 = vmatpush1.msra.mxu0 0.0
      %8598 = vmatprep.subr.mxu0 0.0
      %8599 = vmatpush1.msra.mxu0 0.0
      %8600 = vmatprep.subr.mxu0 0.0
      %8601 = vmatpush1.msra.mxu0 0.0
      %8602 = vmatprep.subr.mxu0 0.0
      %8603 = vmatpush1.msra.mxu0 0.0
      %8604 = vmatprep.subr.mxu0 0.0
      %8605 = vmatpush1.msra.mxu0 0.0
      %8606 = vmatprep.subr.mxu0 0.0
      %8607 = vmatpush1.msra.mxu0 0.0
      %8608 = vmatprep.subr.mxu0 0.0
      %v8609 = vand.u32 %v8438, 4294901760
      %v8610 = vsub.f32 %v8438, %v8609
      %v8611 = vand.u32 %v8610, 4294901760
      %v8612 = vsub.f32 %v8610, %v8611
      %v8613 = vand.u32 %v8612, 4294901760
      %8614 = vmatpush1.msra.mxu0 %v8613
      %8615 = vmatprep.subr.mxu0 0.0
      %v8616 = vand.u32 %v8437, 4294901760
      %v8617 = vsub.f32 %v8437, %v8616
      %v8618 = vand.u32 %v8617, 4294901760
      %v8619 = vsub.f32 %v8617, %v8618
      %v8620 = vand.u32 %v8619, 4294901760
      %8621 = vmatpush1.msra.mxu0 %v8620
      %8622 = vmatprep.subr.mxu0 0.0
      %v8623 = vand.u32 %v8436, 4294901760
      %v8624 = vsub.f32 %v8436, %v8623
      %v8625 = vand.u32 %v8624, 4294901760
      %v8626 = vsub.f32 %v8624, %v8625
      %v8627 = vand.u32 %v8626, 4294901760
      %8628 = vmatpush1.msra.mxu0 %v8627
      %8629 = vmatprep.subr.mxu0 0.0
      %v8630 = vand.u32 %v8435, 4294901760
      %v8631 = vsub.f32 %v8435, %v8630
      %v8632 = vand.u32 %v8631, 4294901760
      %v8633 = vsub.f32 %v8631, %v8632
      %v8634 = vand.u32 %v8633, 4294901760
      %8635 = vmatpush1.msra.mxu0 %v8634
      %8636 = vmatprep.subr.mxu0 0.0
      %8637 = vmatpush2.msra.mxu0 0.0
      %8638 = vmatprep.subr.mxu0 0.0
      %8639 = vmatpush2.msra.mxu0 0.0
      %8640 = vmatprep.subr.mxu0 0.0
      %8641 = vmatpush2.msra.mxu0 0.0
      %8642 = vmatprep.subr.mxu0 0.0
      %8643 = vmatpush2.msra.mxu0 0.0
      %8644 = vmatprep.subr.mxu0 0.0
      %8645 = vmatpush2.msra.mxu0 0.0
      %8646 = vmatprep.subr.mxu0 0.0
      %8647 = vmatpush2.msra.mxu0 0.0
      %8648 = vmatprep.subr.mxu0 0.0
      %8649 = vmatpush2.msra.mxu0 0.0
      %8650 = vmatprep.subr.mxu0 0.0
      %8651 = vmatpush2.msra.mxu0 0.0
      %8652 = vmatprep.subr.mxu0 0.0
      %8653 = vmatpush2.msra.mxu0 0.0
      %8654 = vmatprep.subr.mxu0 0.0
      %8655 = vmatpush2.msra.mxu0 0.0
      %8656 = vmatprep.subr.mxu0 0.0
      %8657 = vmatpush2.msra.mxu0 0.0
      %8658 = vmatprep.subr.mxu0 0.0
      %8659 = vmatpush2.msra.mxu0 0.0
      %8660 = vmatprep.subr.mxu0 0.0
      %8661 = vmatpush2.msra.mxu0 0.0
      %8662 = vmatprep.subr.mxu0 0.0
      %8663 = vmatpush2.msra.mxu0 0.0
      %8664 = vmatprep.subr.mxu0 0.0
      %8665 = vmatpush2.msra.mxu0 0.0
      %8666 = vmatprep.subr.mxu0 0.0
      %8667 = vmatpush2.msra.mxu0 0.0
      %8668 = vmatprep.mubr.f32.mxu0 0.0
      %v8669 = vand.u32 %v8464, 4294901760
      %8670 = vmatmul.mubr.f32.gmra.mxu0 %v8669
      %v8671 = vpop.f32.mrf.mxu0
      %v8672 = vadd.f32 %v8551, %v8671
      %v8673 = vpop.f32.mrf.mxu0
      %8674 = vmatprep.mubr.f32.mxu0 0.0
      %v8675 = vand.u32 %v8467, 4294901760
      %8676 = vmatmul.mubr.f32.gmra.mxu0 %v8675
      %v8677 = vpop.f32.mrf.mxu0
      %v8678 = vadd.f32 %v8561, %v8677
      %v8679 = vpop.f32.mrf.mxu0
      %8680 = vmatprep.mubr.f32.mxu0 0.0
      %v8681 = vand.u32 %v8470, 4294901760
      %8682 = vmatmul.mubr.f32.gmra.mxu0 %v8681
      %v8683 = vpop.f32.mrf.mxu0
      %v8684 = vadd.f32 %v8571, %v8683
      %v8685 = vpop.f32.mrf.mxu0
      %8686 = vmatprep.mubr.f32.mxu0 0.0
      %v8687 = vand.u32 %v8473, 4294901760
      %8688 = vmatmul.mubr.f32.gmra.mxu0 %v8687
      %v8689 = vpop.f32.mrf.mxu0
      %v8690 = vadd.f32 %v8581, %v8689
      %v8691 = vpop.f32.mrf.mxu0
      %8692 = vdwg.mxu0
      %8693 = vmatprep.subr.mxu0 0.0
      %8694 = vmatpush1.msra.mxu0 0.0
      %8695 = vmatprep.subr.mxu0 0.0
      %8696 = vmatpush1.msra.mxu0 0.0
      %8697 = vmatprep.subr.mxu0 0.0
      %8698 = vmatpush1.msra.mxu0 0.0
      %8699 = vmatprep.subr.mxu0 0.0
      %8700 = vmatpush1.msra.mxu0 0.0
      %8701 = vmatprep.subr.mxu0 0.0
      %8702 = vmatpush1.msra.mxu0 0.0
      %8703 = vmatprep.subr.mxu0 0.0
      %8704 = vmatpush1.msra.mxu0 0.0
      %8705 = vmatprep.subr.mxu0 0.0
      %8706 = vmatpush1.msra.mxu0 0.0
      %8707 = vmatprep.subr.mxu0 0.0
      %8708 = vmatpush1.msra.mxu0 0.0
      %8709 = vmatprep.subr.mxu0 0.0
      %8710 = vmatpush1.msra.mxu0 0.0
      %8711 = vmatprep.subr.mxu0 0.0
      %8712 = vmatpush1.msra.mxu0 0.0
      %8713 = vmatprep.subr.mxu0 0.0
      %8714 = vmatpush1.msra.mxu0 0.0
      %8715 = vmatprep.subr.mxu0 0.0
      %8716 = vmatpush1.msra.mxu0 0.0
      %8717 = vmatprep.subr.mxu0 0.0
      %v8718 = vand.u32 %v8438, 4294901760
      %v8719 = vsub.f32 %v8438, %v8718
      %8720 = vmatpush1.msra.mxu0 %v8719
      %8721 = vmatprep.subr.mxu0 0.0
      %v8722 = vand.u32 %v8437, 4294901760
      %v8723 = vsub.f32 %v8437, %v8722
      %8724 = vmatpush1.msra.mxu0 %v8723
      %8725 = vmatprep.subr.mxu0 0.0
      %v8726 = vand.u32 %v8436, 4294901760
      %v8727 = vsub.f32 %v8436, %v8726
      %8728 = vmatpush1.msra.mxu0 %v8727
      %8729 = vmatprep.subr.mxu0 0.0
      %v8730 = vand.u32 %v8435, 4294901760
      %v8731 = vsub.f32 %v8435, %v8730
      %8732 = vmatpush1.msra.mxu0 %v8731
      %8733 = vmatprep.subr.mxu0 0.0
      %8734 = vmatpush2.msra.mxu0 0.0
      %8735 = vmatprep.subr.mxu0 0.0
      %8736 = vmatpush2.msra.mxu0 0.0
      %8737 = vmatprep.subr.mxu0 0.0
      %8738 = vmatpush2.msra.mxu0 0.0
      %8739 = vmatprep.subr.mxu0 0.0
      %8740 = vmatpush2.msra.mxu0 0.0
      %8741 = vmatprep.subr.mxu0 0.0
      %8742 = vmatpush2.msra.mxu0 0.0
      %8743 = vmatprep.subr.mxu0 0.0
      %8744 = vmatpush2.msra.mxu0 0.0
      %8745 = vmatprep.subr.mxu0 0.0
      %8746 = vmatpush2.msra.mxu0 0.0
      %8747 = vmatprep.subr.mxu0 0.0
      %8748 = vmatpush2.msra.mxu0 0.0
      %8749 = vmatprep.subr.mxu0 0.0
      %8750 = vmatpush2.msra.mxu0 0.0
      %8751 = vmatprep.subr.mxu0 0.0
      %8752 = vmatpush2.msra.mxu0 0.0
      %8753 = vmatprep.subr.mxu0 0.0
      %8754 = vmatpush2.msra.mxu0 0.0
      %8755 = vmatprep.subr.mxu0 0.0
      %8756 = vmatpush2.msra.mxu0 0.0
      %8757 = vmatprep.subr.mxu0 0.0
      %8758 = vmatpush2.msra.mxu0 0.0
      %8759 = vmatprep.subr.mxu0 0.0
      %8760 = vmatpush2.msra.mxu0 0.0
      %8761 = vmatprep.subr.mxu0 0.0
      %8762 = vmatpush2.msra.mxu0 0.0
      %8763 = vmatprep.subr.mxu0 0.0
      %8764 = vmatpush2.msra.mxu0 0.0
      %8765 = vmatprep.mubr.f32.mxu0 0.0
      %v8766 = vand.u32 %v8464, 4294901760
      %v8767 = vsub.f32 %v8464, %v8766
      %8768 = vmatmul.mubr.f32.gmra.mxu0 %v8767
      %v8769 = vpop.f32.mrf.mxu0
      %v8770 = vadd.f32 %v8672, %v8769
      %v8771 = vpop.f32.mrf.mxu0
      %8772 = vmatprep.mubr.f32.mxu0 0.0
      %v8773 = vand.u32 %v8467, 4294901760
      %v8774 = vsub.f32 %v8467, %v8773
      %8775 = vmatmul.mubr.f32.gmra.mxu0 %v8774
      %v8776 = vpop.f32.mrf.mxu0
      %v8777 = vadd.f32 %v8678, %v8776
      %v8778 = vpop.f32.mrf.mxu0
      %8779 = vmatprep.mubr.f32.mxu0 0.0
      %v8780 = vand.u32 %v8470, 4294901760
      %v8781 = vsub.f32 %v8470, %v8780
      %8782 = vmatmul.mubr.f32.gmra.mxu0 %v8781
      %v8783 = vpop.f32.mrf.mxu0
      %v8784 = vadd.f32 %v8684, %v8783
      %v8785 = vpop.f32.mrf.mxu0
      %8786 = vmatprep.mubr.f32.mxu0 0.0
      %v8787 = vand.u32 %v8473, 4294901760
      %v8788 = vsub.f32 %v8473, %v8787
      %8789 = vmatmul.mubr.f32.gmra.mxu0 %v8788
      %v8790 = vpop.f32.mrf.mxu0
      %v8791 = vadd.f32 %v8690, %v8790
      %v8792 = vpop.f32.mrf.mxu0
      %8793 = vdwg.mxu0
      %8794 = vmatprep.subr.mxu0 0.0
      %8795 = vmatpush1.msra.mxu0 0.0
      %8796 = vmatprep.subr.mxu0 0.0
      %8797 = vmatpush1.msra.mxu0 0.0
      %8798 = vmatprep.subr.mxu0 0.0
      %8799 = vmatpush1.msra.mxu0 0.0
      %8800 = vmatprep.subr.mxu0 0.0
      %8801 = vmatpush1.msra.mxu0 0.0
      %8802 = vmatprep.subr.mxu0 0.0
      %8803 = vmatpush1.msra.mxu0 0.0
      %8804 = vmatprep.subr.mxu0 0.0
      %8805 = vmatpush1.msra.mxu0 0.0
      %8806 = vmatprep.subr.mxu0 0.0
      %8807 = vmatpush1.msra.mxu0 0.0
      %8808 = vmatprep.subr.mxu0 0.0
      %8809 = vmatpush1.msra.mxu0 0.0
      %8810 = vmatprep.subr.mxu0 0.0
      %8811 = vmatpush1.msra.mxu0 0.0
      %8812 = vmatprep.subr.mxu0 0.0
      %8813 = vmatpush1.msra.mxu0 0.0
      %8814 = vmatprep.subr.mxu0 0.0
      %8815 = vmatpush1.msra.mxu0 0.0
      %8816 = vmatprep.subr.mxu0 0.0
      %8817 = vmatpush1.msra.mxu0 0.0
      %8818 = vmatprep.subr.mxu0 0.0
      %v8819 = vand.u32 %v8438, 4294901760
      %8820 = vmatpush1.msra.mxu0 %v8819
      %8821 = vmatprep.subr.mxu0 0.0
      %v8822 = vand.u32 %v8437, 4294901760
      %8823 = vmatpush1.msra.mxu0 %v8822
      %8824 = vmatprep.subr.mxu0 0.0
      %v8825 = vand.u32 %v8436, 4294901760
      %8826 = vmatpush1.msra.mxu0 %v8825
      %8827 = vmatprep.subr.mxu0 0.0
      %v8828 = vand.u32 %v8435, 4294901760
      %8829 = vmatpush1.msra.mxu0 %v8828
      %8830 = vmatprep.subr.mxu0 0.0
      %8831 = vmatpush2.msra.mxu0 0.0
      %8832 = vmatprep.subr.mxu0 0.0
      %8833 = vmatpush2.msra.mxu0 0.0
      %8834 = vmatprep.subr.mxu0 0.0
      %8835 = vmatpush2.msra.mxu0 0.0
      %8836 = vmatprep.subr.mxu0 0.0
      %8837 = vmatpush2.msra.mxu0 0.0
      %8838 = vmatprep.subr.mxu0 0.0
      %8839 = vmatpush2.msra.mxu0 0.0
      %8840 = vmatprep.subr.mxu0 0.0
      %8841 = vmatpush2.msra.mxu0 0.0
      %8842 = vmatprep.subr.mxu0 0.0
      %8843 = vmatpush2.msra.mxu0 0.0
      %8844 = vmatprep.subr.mxu0 0.0
      %8845 = vmatpush2.msra.mxu0 0.0
      %8846 = vmatprep.subr.mxu0 0.0
      %8847 = vmatpush2.msra.mxu0 0.0
      %8848 = vmatprep.subr.mxu0 0.0
      %8849 = vmatpush2.msra.mxu0 0.0
      %8850 = vmatprep.subr.mxu0 0.0
      %8851 = vmatpush2.msra.mxu0 0.0
      %8852 = vmatprep.subr.mxu0 0.0
      %8853 = vmatpush2.msra.mxu0 0.0
      %8854 = vmatprep.subr.mxu0 0.0
      %8855 = vmatpush2.msra.mxu0 0.0
      %8856 = vmatprep.subr.mxu0 0.0
      %8857 = vmatpush2.msra.mxu0 0.0
      %8858 = vmatprep.subr.mxu0 0.0
      %8859 = vmatpush2.msra.mxu0 0.0
      %8860 = vmatprep.subr.mxu0 0.0
      %8861 = vmatpush2.msra.mxu0 0.0
      %8862 = vmatprep.mubr.f32.mxu0 0.0
      %v8863 = vand.u32 %v8464, 4294901760
      %v8864 = vsub.f32 %v8464, %v8863
      %v8865 = vand.u32 %v8864, 4294901760
      %8866 = vmatmul.mubr.f32.gmra.mxu0 %v8865
      %v8867 = vpop.f32.mrf.mxu0
      %v8868 = vadd.f32 %v8770, %v8867
      %v8869 = vpop.f32.mrf.mxu0
      %8870 = vmatprep.mubr.f32.mxu0 0.0
      %v8871 = vand.u32 %v8467, 4294901760
      %v8872 = vsub.f32 %v8467, %v8871
      %v8873 = vand.u32 %v8872, 4294901760
      %8874 = vmatmul.mubr.f32.gmra.mxu0 %v8873
      %v8875 = vpop.f32.mrf.mxu0
      %v8876 = vadd.f32 %v8777, %v8875
      %v8877 = vpop.f32.mrf.mxu0
      %8878 = vmatprep.mubr.f32.mxu0 0.0
      %v8879 = vand.u32 %v8470, 4294901760
      %v8880 = vsub.f32 %v8470, %v8879
      %v8881 = vand.u32 %v8880, 4294901760
      %8882 = vmatmul.mubr.f32.gmra.mxu0 %v8881
      %v8883 = vpop.f32.mrf.mxu0
      %v8884 = vadd.f32 %v8784, %v8883
      %v8885 = vpop.f32.mrf.mxu0
      %8886 = vmatprep.mubr.f32.mxu0 0.0
      %v8887 = vand.u32 %v8473, 4294901760
      %v8888 = vsub.f32 %v8473, %v8887
      %v8889 = vand.u32 %v8888, 4294901760
      %8890 = vmatmul.mubr.f32.gmra.mxu0 %v8889
      %v8891 = vpop.f32.mrf.mxu0
      %v8892 = vadd.f32 %v8791, %v8891
      %v8893 = vpop.f32.mrf.mxu0
      %8894 = vdwg.mxu0
      %8895 = vmatprep.subr.mxu0 0.0
      %8896 = vmatpush1.msra.mxu0 0.0
      %8897 = vmatprep.subr.mxu0 0.0
      %8898 = vmatpush1.msra.mxu0 0.0
      %8899 = vmatprep.subr.mxu0 0.0
      %8900 = vmatpush1.msra.mxu0 0.0
      %8901 = vmatprep.subr.mxu0 0.0
      %8902 = vmatpush1.msra.mxu0 0.0
      %8903 = vmatprep.subr.mxu0 0.0
      %8904 = vmatpush1.msra.mxu0 0.0
      %8905 = vmatprep.subr.mxu0 0.0
      %8906 = vmatpush1.msra.mxu0 0.0
      %8907 = vmatprep.subr.mxu0 0.0
      %8908 = vmatpush1.msra.mxu0 0.0
      %8909 = vmatprep.subr.mxu0 0.0
      %8910 = vmatpush1.msra.mxu0 0.0
      %8911 = vmatprep.subr.mxu0 0.0
      %8912 = vmatpush1.msra.mxu0 0.0
      %8913 = vmatprep.subr.mxu0 0.0
      %8914 = vmatpush1.msra.mxu0 0.0
      %8915 = vmatprep.subr.mxu0 0.0
      %8916 = vmatpush1.msra.mxu0 0.0
      %8917 = vmatprep.subr.mxu0 0.0
      %8918 = vmatpush1.msra.mxu0 0.0
      %8919 = vmatprep.subr.mxu0 0.0
      %v8920 = vand.u32 %v8438, 4294901760
      %v8921 = vsub.f32 %v8438, %v8920
      %v8922 = vand.u32 %v8921, 4294901760
      %8923 = vmatpush1.msra.mxu0 %v8922
      %8924 = vmatprep.subr.mxu0 0.0
      %v8925 = vand.u32 %v8437, 4294901760
      %v8926 = vsub.f32 %v8437, %v8925
      %v8927 = vand.u32 %v8926, 4294901760
      %8928 = vmatpush1.msra.mxu0 %v8927
      %8929 = vmatprep.subr.mxu0 0.0
      %v8930 = vand.u32 %v8436, 4294901760
      %v8931 = vsub.f32 %v8436, %v8930
      %v8932 = vand.u32 %v8931, 4294901760
      %8933 = vmatpush1.msra.mxu0 %v8932
      %8934 = vmatprep.subr.mxu0 0.0
      %v8935 = vand.u32 %v8435, 4294901760
      %v8936 = vsub.f32 %v8435, %v8935
      %v8937 = vand.u32 %v8936, 4294901760
      %8938 = vmatpush1.msra.mxu0 %v8937
      %8939 = vmatprep.subr.mxu0 0.0
      %8940 = vmatpush2.msra.mxu0 0.0
      %8941 = vmatprep.subr.mxu0 0.0
      %8942 = vmatpush2.msra.mxu0 0.0
      %8943 = vmatprep.subr.mxu0 0.0
      %8944 = vmatpush2.msra.mxu0 0.0
      %8945 = vmatprep.subr.mxu0 0.0
      %8946 = vmatpush2.msra.mxu0 0.0
      %8947 = vmatprep.subr.mxu0 0.0
      %8948 = vmatpush2.msra.mxu0 0.0
      %8949 = vmatprep.subr.mxu0 0.0
      %8950 = vmatpush2.msra.mxu0 0.0
      %8951 = vmatprep.subr.mxu0 0.0
      %8952 = vmatpush2.msra.mxu0 0.0
      %8953 = vmatprep.subr.mxu0 0.0
      %8954 = vmatpush2.msra.mxu0 0.0
      %8955 = vmatprep.subr.mxu0 0.0
      %8956 = vmatpush2.msra.mxu0 0.0
      %8957 = vmatprep.subr.mxu0 0.0
      %8958 = vmatpush2.msra.mxu0 0.0
      %8959 = vmatprep.subr.mxu0 0.0
      %8960 = vmatpush2.msra.mxu0 0.0
      %8961 = vmatprep.subr.mxu0 0.0
      %8962 = vmatpush2.msra.mxu0 0.0
      %8963 = vmatprep.subr.mxu0 0.0
      %8964 = vmatpush2.msra.mxu0 0.0
      %8965 = vmatprep.subr.mxu0 0.0
      %8966 = vmatpush2.msra.mxu0 0.0
      %8967 = vmatprep.subr.mxu0 0.0
      %8968 = vmatpush2.msra.mxu0 0.0
      %8969 = vmatprep.subr.mxu0 0.0
      %8970 = vmatpush2.msra.mxu0 0.0
      %8971 = vmatprep.mubr.f32.mxu0 0.0
      %v8972 = vand.u32 %v8464, 4294901760
      %8973 = vmatmul.mubr.f32.gmra.mxu0 %v8972
      %v8974 = vpop.f32.mrf.mxu0
      %v8975 = vadd.f32 %v8868, %v8974
      %v8976 = vpop.f32.mrf.mxu0
      %8977 = vmatprep.mubr.f32.mxu0 0.0
      %v8978 = vand.u32 %v8467, 4294901760
      %8979 = vmatmul.mubr.f32.gmra.mxu0 %v8978
      %v8980 = vpop.f32.mrf.mxu0
      %v8981 = vadd.f32 %v8876, %v8980
      %v8982 = vpop.f32.mrf.mxu0
      %8983 = vmatprep.mubr.f32.mxu0 0.0
      %v8984 = vand.u32 %v8470, 4294901760
      %8985 = vmatmul.mubr.f32.gmra.mxu0 %v8984
      %v8986 = vpop.f32.mrf.mxu0
      %v8987 = vadd.f32 %v8884, %v8986
      %v8988 = vpop.f32.mrf.mxu0
      %8989 = vmatprep.mubr.f32.mxu0 0.0
      %v8990 = vand.u32 %v8473, 4294901760
      %8991 = vmatmul.mubr.f32.gmra.mxu0 %v8990
      %v8992 = vpop.f32.mrf.mxu0
      %v8993 = vadd.f32 %v8892, %v8992
      %v8994 = vpop.f32.mrf.mxu0
      %8995 = vdwg.mxu0
      %8996 = vmatprep.subr.mxu0 0.0
      %8997 = vmatpush1.msra.mxu0 0.0
      %8998 = vmatprep.subr.mxu0 0.0
      %8999 = vmatpush1.msra.mxu0 0.0
      %9000 = vmatprep.subr.mxu0 0.0
      %9001 = vmatpush1.msra.mxu0 0.0
      %9002 = vmatprep.subr.mxu0 0.0
      %9003 = vmatpush1.msra.mxu0 0.0
      %9004 = vmatprep.subr.mxu0 0.0
      %9005 = vmatpush1.msra.mxu0 0.0
      %9006 = vmatprep.subr.mxu0 0.0
      %9007 = vmatpush1.msra.mxu0 0.0
      %9008 = vmatprep.subr.mxu0 0.0
      %9009 = vmatpush1.msra.mxu0 0.0
      %9010 = vmatprep.subr.mxu0 0.0
      %9011 = vmatpush1.msra.mxu0 0.0
      %9012 = vmatprep.subr.mxu0 0.0
      %9013 = vmatpush1.msra.mxu0 0.0
      %9014 = vmatprep.subr.mxu0 0.0
      %9015 = vmatpush1.msra.mxu0 0.0
      %9016 = vmatprep.subr.mxu0 0.0
      %9017 = vmatpush1.msra.mxu0 0.0
      %9018 = vmatprep.subr.mxu0 0.0
      %9019 = vmatpush1.msra.mxu0 0.0
      %9020 = vmatprep.subr.mxu0 0.0
      %v9021 = vand.u32 %v8438, 4294901760
      %9022 = vmatpush1.msra.mxu0 %v9021
      %9023 = vmatprep.subr.mxu0 0.0
      %v9024 = vand.u32 %v8437, 4294901760
      %9025 = vmatpush1.msra.mxu0 %v9024
      %9026 = vmatprep.subr.mxu0 0.0
      %v9027 = vand.u32 %v8436, 4294901760
      %9028 = vmatpush1.msra.mxu0 %v9027
      %9029 = vmatprep.subr.mxu0 0.0
      %v9030 = vand.u32 %v8435, 4294901760
      %9031 = vmatpush1.msra.mxu0 %v9030
      %9032 = vmatprep.subr.mxu0 0.0
      %9033 = vmatpush2.msra.mxu0 0.0
      %9034 = vmatprep.subr.mxu0 0.0
      %9035 = vmatpush2.msra.mxu0 0.0
      %9036 = vmatprep.subr.mxu0 0.0
      %9037 = vmatpush2.msra.mxu0 0.0
      %9038 = vmatprep.subr.mxu0 0.0
      %9039 = vmatpush2.msra.mxu0 0.0
      %9040 = vmatprep.subr.mxu0 0.0
      %9041 = vmatpush2.msra.mxu0 0.0
      %9042 = vmatprep.subr.mxu0 0.0
      %9043 = vmatpush2.msra.mxu0 0.0
      %9044 = vmatprep.subr.mxu0 0.0
      %9045 = vmatpush2.msra.mxu0 0.0
      %9046 = vmatprep.subr.mxu0 0.0
      %9047 = vmatpush2.msra.mxu0 0.0
      %9048 = vmatprep.subr.mxu0 0.0
      %9049 = vmatpush2.msra.mxu0 0.0
      %9050 = vmatprep.subr.mxu0 0.0
      %9051 = vmatpush2.msra.mxu0 0.0
      %9052 = vmatprep.subr.mxu0 0.0
      %9053 = vmatpush2.msra.mxu0 0.0
      %9054 = vmatprep.subr.mxu0 0.0
      %9055 = vmatpush2.msra.mxu0 0.0
      %9056 = vmatprep.subr.mxu0 0.0
      %9057 = vmatpush2.msra.mxu0 0.0
      %9058 = vmatprep.subr.mxu0 0.0
      %9059 = vmatpush2.msra.mxu0 0.0
      %9060 = vmatprep.subr.mxu0 0.0
      %9061 = vmatpush2.msra.mxu0 0.0
      %9062 = vmatprep.subr.mxu0 0.0
      %9063 = vmatpush2.msra.mxu0 0.0
      %9064 = vmatprep.mubr.f32.mxu0 0.0
      %v9065 = vand.u32 %v8464, 4294901760
      %9066 = vmatmul.mubr.f32.gmra.mxu0 %v9065
      %v9067 = vpop.f32.mrf.mxu0
      %v9068 = vadd.f32 %v8975, %v9067
      %v9069 = vpop.f32.mrf.mxu0
      %9070 = vmatprep.mubr.f32.mxu0 0.0
      %v9071 = vand.u32 %v8467, 4294901760
      %9072 = vmatmul.mubr.f32.gmra.mxu0 %v9071
      %v9073 = vpop.f32.mrf.mxu0
      %v9074 = vadd.f32 %v8981, %v9073
      %v9075 = vpop.f32.mrf.mxu0
      %9076 = vmatprep.mubr.f32.mxu0 0.0
      %v9077 = vand.u32 %v8470, 4294901760
      %9078 = vmatmul.mubr.f32.gmra.mxu0 %v9077
      %v9079 = vpop.f32.mrf.mxu0
      %v9080 = vadd.f32 %v8987, %v9079
      %v9081 = vpop.f32.mrf.mxu0
      %9082 = vmatprep.mubr.f32.mxu0 0.0
      %v9083 = vand.u32 %v8473, 4294901760
      %9084 = vmatmul.mubr.f32.gmra.mxu0 %v9083
      %v9085 = vpop.f32.mrf.mxu0
      %v9086 = vadd.f32 %v8993, %v9085
      %v9087 = vpop.f32.mrf.mxu0
      %9088 = vdwg.mxu0
      %v9089 = vadd.f32 %v7769, %v9068
      %v9090 = vadd.f32 %v7770, %v9074
      %v9091 = vadd.f32 %v7771, %v9080
      %v9092 = vadd.f32 %v7772, %v9086
      %v9093 = vld [vmem:[%s4 + $0x80] sm:$0xff]
      %v9094 = vld [vmem:[%s4 + $0x88] sm:$0xff]
      %v9095 = vld [vmem:[%s4 + $0x90] sm:$0xff]
      %v9096 = vld [vmem:[%s4 + $0x98] sm:$0xff]
      %v9098 = vsel %vm1184, %v9093, 0
      %v9101 = vsel %vm1184, %v9094, 0
      %v9104 = vsel %vm1184, %v9095, 0
      %v9107 = vsel %vm1184, %v9096, 0
      %9109 = vmatprep.subr.mxu0 0.0
      %9110 = vmatpush1.msra.mxu0 0.0
      %9111 = vmatprep.subr.mxu0 0.0
      %9112 = vmatpush1.msra.mxu0 0.0
      %9113 = vmatprep.subr.mxu0 0.0
      %9114 = vmatpush1.msra.mxu0 0.0
      %9115 = vmatprep.subr.mxu0 0.0
      %9116 = vmatpush1.msra.mxu0 0.0
      %9117 = vmatprep.subr.mxu0 0.0
      %9118 = vmatpush1.msra.mxu0 0.0
      %9119 = vmatprep.subr.mxu0 0.0
      %9120 = vmatpush1.msra.mxu0 0.0
      %9121 = vmatprep.subr.mxu0 0.0
      %9122 = vmatpush1.msra.mxu0 0.0
      %9123 = vmatprep.subr.mxu0 0.0
      %9124 = vmatpush1.msra.mxu0 0.0
      %9125 = vmatprep.subr.mxu0 0.0
      %9126 = vmatpush1.msra.mxu0 0.0
      %9127 = vmatprep.subr.mxu0 0.0
      %9128 = vmatpush1.msra.mxu0 0.0
      %9129 = vmatprep.subr.mxu0 0.0
      %9130 = vmatpush1.msra.mxu0 0.0
      %9131 = vmatprep.subr.mxu0 0.0
      %9132 = vmatpush1.msra.mxu0 0.0
      %9133 = vmatprep.subr.mxu0 0.0
      %v9134 = vand.u32 %v1159, 4294901760
      %9135 = vmatpush1.msra.mxu0 %v9134
      %9136 = vmatprep.subr.mxu0 0.0
      %v9137 = vand.u32 %v1158, 4294901760
      %9138 = vmatpush1.msra.mxu0 %v9137
      %9139 = vmatprep.subr.mxu0 0.0
      %v9140 = vand.u32 %v1157, 4294901760
      %9141 = vmatpush1.msra.mxu0 %v9140
      %9142 = vmatprep.subr.mxu0 0.0
      %v9143 = vand.u32 %v1156, 4294901760
      %9144 = vmatpush1.msra.mxu0 %v9143
      %9145 = vmatprep.subr.mxu0 0.0
      %9146 = vmatpush2.msra.mxu0 0.0
      %9147 = vmatprep.subr.mxu0 0.0
      %9148 = vmatpush2.msra.mxu0 0.0
      %9149 = vmatprep.subr.mxu0 0.0
      %9150 = vmatpush2.msra.mxu0 0.0
      %9151 = vmatprep.subr.mxu0 0.0
      %9152 = vmatpush2.msra.mxu0 0.0
      %9153 = vmatprep.subr.mxu0 0.0
      %9154 = vmatpush2.msra.mxu0 0.0
      %9155 = vmatprep.subr.mxu0 0.0
      %9156 = vmatpush2.msra.mxu0 0.0
      %9157 = vmatprep.subr.mxu0 0.0
      %9158 = vmatpush2.msra.mxu0 0.0
      %9159 = vmatprep.subr.mxu0 0.0
      %9160 = vmatpush2.msra.mxu0 0.0
      %9161 = vmatprep.subr.mxu0 0.0
      %9162 = vmatpush2.msra.mxu0 0.0
      %9163 = vmatprep.subr.mxu0 0.0
      %9164 = vmatpush2.msra.mxu0 0.0
      %9165 = vmatprep.subr.mxu0 0.0
      %9166 = vmatpush2.msra.mxu0 0.0
      %9167 = vmatprep.subr.mxu0 0.0
      %9168 = vmatpush2.msra.mxu0 0.0
      %9169 = vmatprep.subr.mxu0 0.0
      %9170 = vmatpush2.msra.mxu0 0.0
      %9171 = vmatprep.subr.mxu0 0.0
      %9172 = vmatpush2.msra.mxu0 0.0
      %9173 = vmatprep.subr.mxu0 0.0
      %9174 = vmatpush2.msra.mxu0 0.0
      %9175 = vmatprep.subr.mxu0 0.0
      %9176 = vmatpush2.msra.mxu0 0.0
      %9177 = vmatprep.mubr.f32.mxu0 0.0
      %v9178 = vand.u32 %v9098, 4294901760
      %v9179 = vsub.f32 %v9098, %v9178
      %v9180 = vand.u32 %v9179, 4294901760
      %v9181 = vsub.f32 %v9179, %v9180
      %v9182 = vand.u32 %v9181, 4294901760
      %9183 = vmatmul.mubr.f32.gmra.mxu0 %v9182
      %v9184 = vpop.f32.mrf.mxu0
      %v9185 = vadd.f32 0.0, %v9184
      %v9186 = vpop.f32.mrf.mxu0
      %9187 = vmatprep.mubr.f32.mxu0 0.0
      %v9188 = vand.u32 %v9101, 4294901760
      %v9189 = vsub.f32 %v9101, %v9188
      %v9190 = vand.u32 %v9189, 4294901760
      %v9191 = vsub.f32 %v9189, %v9190
      %v9192 = vand.u32 %v9191, 4294901760
      %9193 = vmatmul.mubr.f32.gmra.mxu0 %v9192
      %v9194 = vpop.f32.mrf.mxu0
      %v9195 = vadd.f32 0.0, %v9194
      %v9196 = vpop.f32.mrf.mxu0
      %9197 = vmatprep.mubr.f32.mxu0 0.0
      %v9198 = vand.u32 %v9104, 4294901760
      %v9199 = vsub.f32 %v9104, %v9198
      %v9200 = vand.u32 %v9199, 4294901760
      %v9201 = vsub.f32 %v9199, %v9200
      %v9202 = vand.u32 %v9201, 4294901760
      %9203 = vmatmul.mubr.f32.gmra.mxu0 %v9202
      %v9204 = vpop.f32.mrf.mxu0
      %v9205 = vadd.f32 0.0, %v9204
      %v9206 = vpop.f32.mrf.mxu0
      %9207 = vmatprep.mubr.f32.mxu0 0.0
      %v9208 = vand.u32 %v9107, 4294901760
      %v9209 = vsub.f32 %v9107, %v9208
      %v9210 = vand.u32 %v9209, 4294901760
      %v9211 = vsub.f32 %v9209, %v9210
      %v9212 = vand.u32 %v9211, 4294901760
      %9213 = vmatmul.mubr.f32.gmra.mxu0 %v9212
      %v9214 = vpop.f32.mrf.mxu0
      %v9215 = vadd.f32 0.0, %v9214
      %v9216 = vpop.f32.mrf.mxu0
      %9217 = vdwg.mxu0
      %9218 = vmatprep.subr.mxu0 0.0
      %9219 = vmatpush1.msra.mxu0 0.0
      %9220 = vmatprep.subr.mxu0 0.0
      %9221 = vmatpush1.msra.mxu0 0.0
      %9222 = vmatprep.subr.mxu0 0.0
      %9223 = vmatpush1.msra.mxu0 0.0
      %9224 = vmatprep.subr.mxu0 0.0
      %9225 = vmatpush1.msra.mxu0 0.0
      %9226 = vmatprep.subr.mxu0 0.0
      %9227 = vmatpush1.msra.mxu0 0.0
      %9228 = vmatprep.subr.mxu0 0.0
      %9229 = vmatpush1.msra.mxu0 0.0
      %9230 = vmatprep.subr.mxu0 0.0
      %9231 = vmatpush1.msra.mxu0 0.0
      %9232 = vmatprep.subr.mxu0 0.0
      %9233 = vmatpush1.msra.mxu0 0.0
      %9234 = vmatprep.subr.mxu0 0.0
      %9235 = vmatpush1.msra.mxu0 0.0
      %9236 = vmatprep.subr.mxu0 0.0
      %9237 = vmatpush1.msra.mxu0 0.0
      %9238 = vmatprep.subr.mxu0 0.0
      %9239 = vmatpush1.msra.mxu0 0.0
      %9240 = vmatprep.subr.mxu0 0.0
      %9241 = vmatpush1.msra.mxu0 0.0
      %9242 = vmatprep.subr.mxu0 0.0
      %v9243 = vand.u32 %v1159, 4294901760
      %v9244 = vsub.f32 %v1159, %v9243
      %v9245 = vand.u32 %v9244, 4294901760
      %v9246 = vsub.f32 %v9244, %v9245
      %v9247 = vand.u32 %v9246, 4294901760
      %9248 = vmatpush1.msra.mxu0 %v9247
      %9249 = vmatprep.subr.mxu0 0.0
      %v9250 = vand.u32 %v1158, 4294901760
      %v9251 = vsub.f32 %v1158, %v9250
      %v9252 = vand.u32 %v9251, 4294901760
      %v9253 = vsub.f32 %v9251, %v9252
      %v9254 = vand.u32 %v9253, 4294901760
      %9255 = vmatpush1.msra.mxu0 %v9254
      %9256 = vmatprep.subr.mxu0 0.0
      %v9257 = vand.u32 %v1157, 4294901760
      %v9258 = vsub.f32 %v1157, %v9257
      %v9259 = vand.u32 %v9258, 4294901760
      %v9260 = vsub.f32 %v9258, %v9259
      %v9261 = vand.u32 %v9260, 4294901760
      %9262 = vmatpush1.msra.mxu0 %v9261
      %9263 = vmatprep.subr.mxu0 0.0
      %v9264 = vand.u32 %v1156, 4294901760
      %v9265 = vsub.f32 %v1156, %v9264
      %v9266 = vand.u32 %v9265, 4294901760
      %v9267 = vsub.f32 %v9265, %v9266
      %v9268 = vand.u32 %v9267, 4294901760
      %9269 = vmatpush1.msra.mxu0 %v9268
      %9270 = vmatprep.subr.mxu0 0.0
      %9271 = vmatpush2.msra.mxu0 0.0
      %9272 = vmatprep.subr.mxu0 0.0
      %9273 = vmatpush2.msra.mxu0 0.0
      %9274 = vmatprep.subr.mxu0 0.0
      %9275 = vmatpush2.msra.mxu0 0.0
      %9276 = vmatprep.subr.mxu0 0.0
      %9277 = vmatpush2.msra.mxu0 0.0
      %9278 = vmatprep.subr.mxu0 0.0
      %9279 = vmatpush2.msra.mxu0 0.0
      %9280 = vmatprep.subr.mxu0 0.0
      %9281 = vmatpush2.msra.mxu0 0.0
      %9282 = vmatprep.subr.mxu0 0.0
      %9283 = vmatpush2.msra.mxu0 0.0
      %9284 = vmatprep.subr.mxu0 0.0
      %9285 = vmatpush2.msra.mxu0 0.0
      %9286 = vmatprep.subr.mxu0 0.0
      %9287 = vmatpush2.msra.mxu0 0.0
      %9288 = vmatprep.subr.mxu0 0.0
      %9289 = vmatpush2.msra.mxu0 0.0
      %9290 = vmatprep.subr.mxu0 0.0
      %9291 = vmatpush2.msra.mxu0 0.0
      %9292 = vmatprep.subr.mxu0 0.0
      %9293 = vmatpush2.msra.mxu0 0.0
      %9294 = vmatprep.subr.mxu0 0.0
      %9295 = vmatpush2.msra.mxu0 0.0
      %9296 = vmatprep.subr.mxu0 0.0
      %9297 = vmatpush2.msra.mxu0 0.0
      %9298 = vmatprep.subr.mxu0 0.0
      %9299 = vmatpush2.msra.mxu0 0.0
      %9300 = vmatprep.subr.mxu0 0.0
      %9301 = vmatpush2.msra.mxu0 0.0
      %9302 = vmatprep.mubr.f32.mxu0 0.0
      %v9303 = vand.u32 %v9098, 4294901760
      %9304 = vmatmul.mubr.f32.gmra.mxu0 %v9303
      %v9305 = vpop.f32.mrf.mxu0
      %v9306 = vadd.f32 %v9185, %v9305
      %v9307 = vpop.f32.mrf.mxu0
      %9308 = vmatprep.mubr.f32.mxu0 0.0
      %v9309 = vand.u32 %v9101, 4294901760
      %9310 = vmatmul.mubr.f32.gmra.mxu0 %v9309
      %v9311 = vpop.f32.mrf.mxu0
      %v9312 = vadd.f32 %v9195, %v9311
      %v9313 = vpop.f32.mrf.mxu0
      %9314 = vmatprep.mubr.f32.mxu0 0.0
      %v9315 = vand.u32 %v9104, 4294901760
      %9316 = vmatmul.mubr.f32.gmra.mxu0 %v9315
      %v9317 = vpop.f32.mrf.mxu0
      %v9318 = vadd.f32 %v9205, %v9317
      %v9319 = vpop.f32.mrf.mxu0
      %9320 = vmatprep.mubr.f32.mxu0 0.0
      %v9321 = vand.u32 %v9107, 4294901760
      %9322 = vmatmul.mubr.f32.gmra.mxu0 %v9321
      %v9323 = vpop.f32.mrf.mxu0
      %v9324 = vadd.f32 %v9215, %v9323
      %v9325 = vpop.f32.mrf.mxu0
      %9326 = vdwg.mxu0
      %9327 = vmatprep.subr.mxu0 0.0
      %9328 = vmatpush1.msra.mxu0 0.0
      %9329 = vmatprep.subr.mxu0 0.0
      %9330 = vmatpush1.msra.mxu0 0.0
      %9331 = vmatprep.subr.mxu0 0.0
      %9332 = vmatpush1.msra.mxu0 0.0
      %9333 = vmatprep.subr.mxu0 0.0
      %9334 = vmatpush1.msra.mxu0 0.0
      %9335 = vmatprep.subr.mxu0 0.0
      %9336 = vmatpush1.msra.mxu0 0.0
      %9337 = vmatprep.subr.mxu0 0.0
      %9338 = vmatpush1.msra.mxu0 0.0
      %9339 = vmatprep.subr.mxu0 0.0
      %9340 = vmatpush1.msra.mxu0 0.0
      %9341 = vmatprep.subr.mxu0 0.0
      %9342 = vmatpush1.msra.mxu0 0.0
      %9343 = vmatprep.subr.mxu0 0.0
      %9344 = vmatpush1.msra.mxu0 0.0
      %9345 = vmatprep.subr.mxu0 0.0
      %9346 = vmatpush1.msra.mxu0 0.0
      %9347 = vmatprep.subr.mxu0 0.0
      %9348 = vmatpush1.msra.mxu0 0.0
      %9349 = vmatprep.subr.mxu0 0.0
      %9350 = vmatpush1.msra.mxu0 0.0
      %9351 = vmatprep.subr.mxu0 0.0
      %v9352 = vand.u32 %v1159, 4294901760
      %v9353 = vsub.f32 %v1159, %v9352
      %9354 = vmatpush1.msra.mxu0 %v9353
      %9355 = vmatprep.subr.mxu0 0.0
      %v9356 = vand.u32 %v1158, 4294901760
      %v9357 = vsub.f32 %v1158, %v9356
      %9358 = vmatpush1.msra.mxu0 %v9357
      %9359 = vmatprep.subr.mxu0 0.0
      %v9360 = vand.u32 %v1157, 4294901760
      %v9361 = vsub.f32 %v1157, %v9360
      %9362 = vmatpush1.msra.mxu0 %v9361
      %9363 = vmatprep.subr.mxu0 0.0
      %v9364 = vand.u32 %v1156, 4294901760
      %v9365 = vsub.f32 %v1156, %v9364
      %9366 = vmatpush1.msra.mxu0 %v9365
      %9367 = vmatprep.subr.mxu0 0.0
      %9368 = vmatpush2.msra.mxu0 0.0
      %9369 = vmatprep.subr.mxu0 0.0
      %9370 = vmatpush2.msra.mxu0 0.0
      %9371 = vmatprep.subr.mxu0 0.0
      %9372 = vmatpush2.msra.mxu0 0.0
      %9373 = vmatprep.subr.mxu0 0.0
      %9374 = vmatpush2.msra.mxu0 0.0
      %9375 = vmatprep.subr.mxu0 0.0
      %9376 = vmatpush2.msra.mxu0 0.0
      %9377 = vmatprep.subr.mxu0 0.0
      %9378 = vmatpush2.msra.mxu0 0.0
      %9379 = vmatprep.subr.mxu0 0.0
      %9380 = vmatpush2.msra.mxu0 0.0
      %9381 = vmatprep.subr.mxu0 0.0
      %9382 = vmatpush2.msra.mxu0 0.0
      %9383 = vmatprep.subr.mxu0 0.0
      %9384 = vmatpush2.msra.mxu0 0.0
      %9385 = vmatprep.subr.mxu0 0.0
      %9386 = vmatpush2.msra.mxu0 0.0
      %9387 = vmatprep.subr.mxu0 0.0
      %9388 = vmatpush2.msra.mxu0 0.0
      %9389 = vmatprep.subr.mxu0 0.0
      %9390 = vmatpush2.msra.mxu0 0.0
      %9391 = vmatprep.subr.mxu0 0.0
      %9392 = vmatpush2.msra.mxu0 0.0
      %9393 = vmatprep.subr.mxu0 0.0
      %9394 = vmatpush2.msra.mxu0 0.0
      %9395 = vmatprep.subr.mxu0 0.0
      %9396 = vmatpush2.msra.mxu0 0.0
      %9397 = vmatprep.subr.mxu0 0.0
      %9398 = vmatpush2.msra.mxu0 0.0
      %9399 = vmatprep.mubr.f32.mxu0 0.0
      %v9400 = vand.u32 %v9098, 4294901760
      %v9401 = vsub.f32 %v9098, %v9400
      %9402 = vmatmul.mubr.f32.gmra.mxu0 %v9401
      %v9403 = vpop.f32.mrf.mxu0
      %v9404 = vadd.f32 %v9306, %v9403
      %v9405 = vpop.f32.mrf.mxu0
      %9406 = vmatprep.mubr.f32.mxu0 0.0
      %v9407 = vand.u32 %v9101, 4294901760
      %v9408 = vsub.f32 %v9101, %v9407
      %9409 = vmatmul.mubr.f32.gmra.mxu0 %v9408
      %v9410 = vpop.f32.mrf.mxu0
      %v9411 = vadd.f32 %v9312, %v9410
      %v9412 = vpop.f32.mrf.mxu0
      %9413 = vmatprep.mubr.f32.mxu0 0.0
      %v9414 = vand.u32 %v9104, 4294901760
      %v9415 = vsub.f32 %v9104, %v9414
      %9416 = vmatmul.mubr.f32.gmra.mxu0 %v9415
      %v9417 = vpop.f32.mrf.mxu0
      %v9418 = vadd.f32 %v9318, %v9417
      %v9419 = vpop.f32.mrf.mxu0
      %9420 = vmatprep.mubr.f32.mxu0 0.0
      %v9421 = vand.u32 %v9107, 4294901760
      %v9422 = vsub.f32 %v9107, %v9421
      %9423 = vmatmul.mubr.f32.gmra.mxu0 %v9422
      %v9424 = vpop.f32.mrf.mxu0
      %v9425 = vadd.f32 %v9324, %v9424
      %v9426 = vpop.f32.mrf.mxu0
      %9427 = vdwg.mxu0
      %9428 = vmatprep.subr.mxu0 0.0
      %9429 = vmatpush1.msra.mxu0 0.0
      %9430 = vmatprep.subr.mxu0 0.0
      %9431 = vmatpush1.msra.mxu0 0.0
      %9432 = vmatprep.subr.mxu0 0.0
      %9433 = vmatpush1.msra.mxu0 0.0
      %9434 = vmatprep.subr.mxu0 0.0
      %9435 = vmatpush1.msra.mxu0 0.0
      %9436 = vmatprep.subr.mxu0 0.0
      %9437 = vmatpush1.msra.mxu0 0.0
      %9438 = vmatprep.subr.mxu0 0.0
      %9439 = vmatpush1.msra.mxu0 0.0
      %9440 = vmatprep.subr.mxu0 0.0
      %9441 = vmatpush1.msra.mxu0 0.0
      %9442 = vmatprep.subr.mxu0 0.0
      %9443 = vmatpush1.msra.mxu0 0.0
      %9444 = vmatprep.subr.mxu0 0.0
      %9445 = vmatpush1.msra.mxu0 0.0
      %9446 = vmatprep.subr.mxu0 0.0
      %9447 = vmatpush1.msra.mxu0 0.0
      %9448 = vmatprep.subr.mxu0 0.0
      %9449 = vmatpush1.msra.mxu0 0.0
      %9450 = vmatprep.subr.mxu0 0.0
      %9451 = vmatpush1.msra.mxu0 0.0
      %9452 = vmatprep.subr.mxu0 0.0
      %v9453 = vand.u32 %v1159, 4294901760
      %9454 = vmatpush1.msra.mxu0 %v9453
      %9455 = vmatprep.subr.mxu0 0.0
      %v9456 = vand.u32 %v1158, 4294901760
      %9457 = vmatpush1.msra.mxu0 %v9456
      %9458 = vmatprep.subr.mxu0 0.0
      %v9459 = vand.u32 %v1157, 4294901760
      %9460 = vmatpush1.msra.mxu0 %v9459
      %9461 = vmatprep.subr.mxu0 0.0
      %v9462 = vand.u32 %v1156, 4294901760
      %9463 = vmatpush1.msra.mxu0 %v9462
      %9464 = vmatprep.subr.mxu0 0.0
      %9465 = vmatpush2.msra.mxu0 0.0
      %9466 = vmatprep.subr.mxu0 0.0
      %9467 = vmatpush2.msra.mxu0 0.0
      %9468 = vmatprep.subr.mxu0 0.0
      %9469 = vmatpush2.msra.mxu0 0.0
      %9470 = vmatprep.subr.mxu0 0.0
      %9471 = vmatpush2.msra.mxu0 0.0
      %9472 = vmatprep.subr.mxu0 0.0
      %9473 = vmatpush2.msra.mxu0 0.0
      %9474 = vmatprep.subr.mxu0 0.0
      %9475 = vmatpush2.msra.mxu0 0.0
      %9476 = vmatprep.subr.mxu0 0.0
      %9477 = vmatpush2.msra.mxu0 0.0
      %9478 = vmatprep.subr.mxu0 0.0
      %9479 = vmatpush2.msra.mxu0 0.0
      %9480 = vmatprep.subr.mxu0 0.0
      %9481 = vmatpush2.msra.mxu0 0.0
      %9482 = vmatprep.subr.mxu0 0.0
      %9483 = vmatpush2.msra.mxu0 0.0
      %9484 = vmatprep.subr.mxu0 0.0
      %9485 = vmatpush2.msra.mxu0 0.0
      %9486 = vmatprep.subr.mxu0 0.0
      %9487 = vmatpush2.msra.mxu0 0.0
      %9488 = vmatprep.subr.mxu0 0.0
      %9489 = vmatpush2.msra.mxu0 0.0
      %9490 = vmatprep.subr.mxu0 0.0
      %9491 = vmatpush2.msra.mxu0 0.0
      %9492 = vmatprep.subr.mxu0 0.0
      %9493 = vmatpush2.msra.mxu0 0.0
      %9494 = vmatprep.subr.mxu0 0.0
      %9495 = vmatpush2.msra.mxu0 0.0
      %9496 = vmatprep.mubr.f32.mxu0 0.0
      %v9497 = vand.u32 %v9098, 4294901760
      %v9498 = vsub.f32 %v9098, %v9497
      %v9499 = vand.u32 %v9498, 4294901760
      %9500 = vmatmul.mubr.f32.gmra.mxu0 %v9499
      %v9501 = vpop.f32.mrf.mxu0
      %v9502 = vadd.f32 %v9404, %v9501
      %v9503 = vpop.f32.mrf.mxu0
      %9504 = vmatprep.mubr.f32.mxu0 0.0
      %v9505 = vand.u32 %v9101, 4294901760
      %v9506 = vsub.f32 %v9101, %v9505
      %v9507 = vand.u32 %v9506, 4294901760
      %9508 = vmatmul.mubr.f32.gmra.mxu0 %v9507
      %v9509 = vpop.f32.mrf.mxu0
      %v9510 = vadd.f32 %v9411, %v9509
      %v9511 = vpop.f32.mrf.mxu0
      %9512 = vmatprep.mubr.f32.mxu0 0.0
      %v9513 = vand.u32 %v9104, 4294901760
      %v9514 = vsub.f32 %v9104, %v9513
      %v9515 = vand.u32 %v9514, 4294901760
      %9516 = vmatmul.mubr.f32.gmra.mxu0 %v9515
      %v9517 = vpop.f32.mrf.mxu0
      %v9518 = vadd.f32 %v9418, %v9517
      %v9519 = vpop.f32.mrf.mxu0
      %9520 = vmatprep.mubr.f32.mxu0 0.0
      %v9521 = vand.u32 %v9107, 4294901760
      %v9522 = vsub.f32 %v9107, %v9521
      %v9523 = vand.u32 %v9522, 4294901760
      %9524 = vmatmul.mubr.f32.gmra.mxu0 %v9523
      %v9525 = vpop.f32.mrf.mxu0
      %v9526 = vadd.f32 %v9425, %v9525
      %v9527 = vpop.f32.mrf.mxu0
      %9528 = vdwg.mxu0
      %9529 = vmatprep.subr.mxu0 0.0
      %9530 = vmatpush1.msra.mxu0 0.0
      %9531 = vmatprep.subr.mxu0 0.0
      %9532 = vmatpush1.msra.mxu0 0.0
      %9533 = vmatprep.subr.mxu0 0.0
      %9534 = vmatpush1.msra.mxu0 0.0
      %9535 = vmatprep.subr.mxu0 0.0
      %9536 = vmatpush1.msra.mxu0 0.0
      %9537 = vmatprep.subr.mxu0 0.0
      %9538 = vmatpush1.msra.mxu0 0.0
      %9539 = vmatprep.subr.mxu0 0.0
      %9540 = vmatpush1.msra.mxu0 0.0
      %9541 = vmatprep.subr.mxu0 0.0
      %9542 = vmatpush1.msra.mxu0 0.0
      %9543 = vmatprep.subr.mxu0 0.0
      %9544 = vmatpush1.msra.mxu0 0.0
      %9545 = vmatprep.subr.mxu0 0.0
      %9546 = vmatpush1.msra.mxu0 0.0
      %9547 = vmatprep.subr.mxu0 0.0
      %9548 = vmatpush1.msra.mxu0 0.0
      %9549 = vmatprep.subr.mxu0 0.0
      %9550 = vmatpush1.msra.mxu0 0.0
      %9551 = vmatprep.subr.mxu0 0.0
      %9552 = vmatpush1.msra.mxu0 0.0
      %9553 = vmatprep.subr.mxu0 0.0
      %v9554 = vand.u32 %v1159, 4294901760
      %v9555 = vsub.f32 %v1159, %v9554
      %v9556 = vand.u32 %v9555, 4294901760
      %9557 = vmatpush1.msra.mxu0 %v9556
      %9558 = vmatprep.subr.mxu0 0.0
      %v9559 = vand.u32 %v1158, 4294901760
      %v9560 = vsub.f32 %v1158, %v9559
      %v9561 = vand.u32 %v9560, 4294901760
      %9562 = vmatpush1.msra.mxu0 %v9561
      %9563 = vmatprep.subr.mxu0 0.0
      %v9564 = vand.u32 %v1157, 4294901760
      %v9565 = vsub.f32 %v1157, %v9564
      %v9566 = vand.u32 %v9565, 4294901760
      %9567 = vmatpush1.msra.mxu0 %v9566
      %9568 = vmatprep.subr.mxu0 0.0
      %v9569 = vand.u32 %v1156, 4294901760
      %v9570 = vsub.f32 %v1156, %v9569
      %v9571 = vand.u32 %v9570, 4294901760
      %9572 = vmatpush1.msra.mxu0 %v9571
      %9573 = vmatprep.subr.mxu0 0.0
      %9574 = vmatpush2.msra.mxu0 0.0
      %9575 = vmatprep.subr.mxu0 0.0
      %9576 = vmatpush2.msra.mxu0 0.0
      %9577 = vmatprep.subr.mxu0 0.0
      %9578 = vmatpush2.msra.mxu0 0.0
      %9579 = vmatprep.subr.mxu0 0.0
      %9580 = vmatpush2.msra.mxu0 0.0
      %9581 = vmatprep.subr.mxu0 0.0
      %9582 = vmatpush2.msra.mxu0 0.0
      %9583 = vmatprep.subr.mxu0 0.0
      %9584 = vmatpush2.msra.mxu0 0.0
      %9585 = vmatprep.subr.mxu0 0.0
      %9586 = vmatpush2.msra.mxu0 0.0
      %9587 = vmatprep.subr.mxu0 0.0
      %9588 = vmatpush2.msra.mxu0 0.0
      %9589 = vmatprep.subr.mxu0 0.0
      %9590 = vmatpush2.msra.mxu0 0.0
      %9591 = vmatprep.subr.mxu0 0.0
      %9592 = vmatpush2.msra.mxu0 0.0
      %9593 = vmatprep.subr.mxu0 0.0
      %9594 = vmatpush2.msra.mxu0 0.0
      %9595 = vmatprep.subr.mxu0 0.0
      %9596 = vmatpush2.msra.mxu0 0.0
      %9597 = vmatprep.subr.mxu0 0.0
      %9598 = vmatpush2.msra.mxu0 0.0
      %9599 = vmatprep.subr.mxu0 0.0
      %9600 = vmatpush2.msra.mxu0 0.0
      %9601 = vmatprep.subr.mxu0 0.0
      %9602 = vmatpush2.msra.mxu0 0.0
      %9603 = vmatprep.subr.mxu0 0.0
      %9604 = vmatpush2.msra.mxu0 0.0
      %9605 = vmatprep.mubr.f32.mxu0 0.0
      %v9606 = vand.u32 %v9098, 4294901760
      %9607 = vmatmul.mubr.f32.gmra.mxu0 %v9606
      %v9608 = vpop.f32.mrf.mxu0
      %v9609 = vadd.f32 %v9502, %v9608
      %v9610 = vpop.f32.mrf.mxu0
      %9611 = vmatprep.mubr.f32.mxu0 0.0
      %v9612 = vand.u32 %v9101, 4294901760
      %9613 = vmatmul.mubr.f32.gmra.mxu0 %v9612
      %v9614 = vpop.f32.mrf.mxu0
      %v9615 = vadd.f32 %v9510, %v9614
      %v9616 = vpop.f32.mrf.mxu0
      %9617 = vmatprep.mubr.f32.mxu0 0.0
      %v9618 = vand.u32 %v9104, 4294901760
      %9619 = vmatmul.mubr.f32.gmra.mxu0 %v9618
      %v9620 = vpop.f32.mrf.mxu0
      %v9621 = vadd.f32 %v9518, %v9620
      %v9622 = vpop.f32.mrf.mxu0
      %9623 = vmatprep.mubr.f32.mxu0 0.0
      %v9624 = vand.u32 %v9107, 4294901760
      %9625 = vmatmul.mubr.f32.gmra.mxu0 %v9624
      %v9626 = vpop.f32.mrf.mxu0
      %v9627 = vadd.f32 %v9526, %v9626
      %v9628 = vpop.f32.mrf.mxu0
      %9629 = vdwg.mxu0
      %9630 = vmatprep.subr.mxu0 0.0
      %9631 = vmatpush1.msra.mxu0 0.0
      %9632 = vmatprep.subr.mxu0 0.0
      %9633 = vmatpush1.msra.mxu0 0.0
      %9634 = vmatprep.subr.mxu0 0.0
      %9635 = vmatpush1.msra.mxu0 0.0
      %9636 = vmatprep.subr.mxu0 0.0
      %9637 = vmatpush1.msra.mxu0 0.0
      %9638 = vmatprep.subr.mxu0 0.0
      %9639 = vmatpush1.msra.mxu0 0.0
      %9640 = vmatprep.subr.mxu0 0.0
      %9641 = vmatpush1.msra.mxu0 0.0
      %9642 = vmatprep.subr.mxu0 0.0
      %9643 = vmatpush1.msra.mxu0 0.0
      %9644 = vmatprep.subr.mxu0 0.0
      %9645 = vmatpush1.msra.mxu0 0.0
      %9646 = vmatprep.subr.mxu0 0.0
      %9647 = vmatpush1.msra.mxu0 0.0
      %9648 = vmatprep.subr.mxu0 0.0
      %9649 = vmatpush1.msra.mxu0 0.0
      %9650 = vmatprep.subr.mxu0 0.0
      %9651 = vmatpush1.msra.mxu0 0.0
      %9652 = vmatprep.subr.mxu0 0.0
      %9653 = vmatpush1.msra.mxu0 0.0
      %9654 = vmatprep.subr.mxu0 0.0
      %v9655 = vand.u32 %v1159, 4294901760
      %9656 = vmatpush1.msra.mxu0 %v9655
      %9657 = vmatprep.subr.mxu0 0.0
      %v9658 = vand.u32 %v1158, 4294901760
      %9659 = vmatpush1.msra.mxu0 %v9658
      %9660 = vmatprep.subr.mxu0 0.0
      %v9661 = vand.u32 %v1157, 4294901760
      %9662 = vmatpush1.msra.mxu0 %v9661
      %9663 = vmatprep.subr.mxu0 0.0
      %v9664 = vand.u32 %v1156, 4294901760
      %9665 = vmatpush1.msra.mxu0 %v9664
      %9666 = vmatprep.subr.mxu0 0.0
      %9667 = vmatpush2.msra.mxu0 0.0
      %9668 = vmatprep.subr.mxu0 0.0
      %9669 = vmatpush2.msra.mxu0 0.0
      %9670 = vmatprep.subr.mxu0 0.0
      %9671 = vmatpush2.msra.mxu0 0.0
      %9672 = vmatprep.subr.mxu0 0.0
      %9673 = vmatpush2.msra.mxu0 0.0
      %9674 = vmatprep.subr.mxu0 0.0
      %9675 = vmatpush2.msra.mxu0 0.0
      %9676 = vmatprep.subr.mxu0 0.0
      %9677 = vmatpush2.msra.mxu0 0.0
      %9678 = vmatprep.subr.mxu0 0.0
      %9679 = vmatpush2.msra.mxu0 0.0
      %9680 = vmatprep.subr.mxu0 0.0
      %9681 = vmatpush2.msra.mxu0 0.0
      %9682 = vmatprep.subr.mxu0 0.0
      %9683 = vmatpush2.msra.mxu0 0.0
      %9684 = vmatprep.subr.mxu0 0.0
      %9685 = vmatpush2.msra.mxu0 0.0
      %9686 = vmatprep.subr.mxu0 0.0
      %9687 = vmatpush2.msra.mxu0 0.0
      %9688 = vmatprep.subr.mxu0 0.0
      %9689 = vmatpush2.msra.mxu0 0.0
      %9690 = vmatprep.subr.mxu0 0.0
      %9691 = vmatpush2.msra.mxu0 0.0
      %9692 = vmatprep.subr.mxu0 0.0
      %9693 = vmatpush2.msra.mxu0 0.0
      %9694 = vmatprep.subr.mxu0 0.0
      %9695 = vmatpush2.msra.mxu0 0.0
      %9696 = vmatprep.subr.mxu0 0.0
      %9697 = vmatpush2.msra.mxu0 0.0
      %9698 = vmatprep.mubr.f32.mxu0 0.0
      %v9699 = vand.u32 %v9098, 4294901760
      %9700 = vmatmul.mubr.f32.gmra.mxu0 %v9699
      %v9701 = vpop.f32.mrf.mxu0
      %v9702 = vadd.f32 %v9609, %v9701
      %v9703 = vpop.f32.mrf.mxu0
      %9704 = vmatprep.mubr.f32.mxu0 0.0
      %v9705 = vand.u32 %v9101, 4294901760
      %9706 = vmatmul.mubr.f32.gmra.mxu0 %v9705
      %v9707 = vpop.f32.mrf.mxu0
      %v9708 = vadd.f32 %v9615, %v9707
      %v9709 = vpop.f32.mrf.mxu0
      %9710 = vmatprep.mubr.f32.mxu0 0.0
      %v9711 = vand.u32 %v9104, 4294901760
      %9712 = vmatmul.mubr.f32.gmra.mxu0 %v9711
      %v9713 = vpop.f32.mrf.mxu0
      %v9714 = vadd.f32 %v9621, %v9713
      %v9715 = vpop.f32.mrf.mxu0
      %9716 = vmatprep.mubr.f32.mxu0 0.0
      %v9717 = vand.u32 %v9107, 4294901760
      %9718 = vmatmul.mubr.f32.gmra.mxu0 %v9717
      %v9719 = vpop.f32.mrf.mxu0
      %v9720 = vadd.f32 %v9627, %v9719
      %v9721 = vpop.f32.mrf.mxu0
      %9722 = vdwg.mxu0
      %v9723 = vadd.f32 %v9089, %v9702
      %v9724 = vadd.f32 %v9090, %v9708
      %v9725 = vadd.f32 %v9091, %v9714
      %v9726 = vadd.f32 %v9092, %v9720
      %9728 = vset.pattern.permute.xlu0 0
      %9729 = vperm.xlu0 %9728, %v1176
      %v9730 = vpop.permute.xlu0 %9729
      %9733 = vset.pattern.permute.xlu0 0
      %9734 = vperm.xlu0 %9733, %v1177
      %v9735 = vpop.permute.xlu0 %9734
      %9738 = vset.pattern.permute.xlu0 0
      %9739 = vperm.xlu0 %9738, %v1178
      %v9740 = vpop.permute.xlu0 %9739
      %9743 = vset.pattern.permute.xlu0 0
      %9744 = vperm.xlu0 %9743, %v1179
      %v9745 = vpop.permute.xlu0 %9744
      %v9747 = vadd.f32 %v9723, %v9730
      %v9748 = vadd.f32 %v9724, %v9735
      %v9749 = vadd.f32 %v9725, %v9740
      %v9750 = vadd.f32 %v9726, %v9745
      %v9751 = vld [vmem:[%s4 + $0x120] sm:$0xff]
      %v9752 = vld [vmem:[%s4 + $0x128] sm:$0xff]
      %v9753 = vld [vmem:[%s4 + $0x130] sm:$0xff]
      %v9754 = vld [vmem:[%s4 + $0x138] sm:$0xff]
      %v9755 = vmax.f32 %v9747, 0.0
      %v9756 = vmax.f32 %v9748, 0.0
      %v9757 = vmax.f32 %v9749, 0.0
      %v9758 = vmax.f32 %v9750, 0.0
      %v9759 = vld [vmem:[%s5 + $0x80] sm:$0xff]
      %v9760 = vld [vmem:[%s5 + $0x88] sm:$0xff]
      %v9761 = vld [vmem:[%s5 + $0x90] sm:$0xff]
      %v9762 = vld [vmem:[%s5 + $0x98] sm:$0xff]
      %9764 = vset.pattern.permute.xlu0 0
      %9765 = vperm.xlu0 %9764, %v9759
      %v9766 = vpop.permute.xlu0 %9765
      %9769 = vset.pattern.permute.xlu0 0
      %9770 = vperm.xlu0 %9769, %v9760
      %v9771 = vpop.permute.xlu0 %9770
      %9774 = vset.pattern.permute.xlu0 0
      %9775 = vperm.xlu0 %9774, %v9761
      %v9776 = vpop.permute.xlu0 %9775
      %9779 = vset.pattern.permute.xlu0 0
      %9780 = vperm.xlu0 %9779, %v9762
      %v9781 = vpop.permute.xlu0 %9780
      %v9784 = vsel %vm1184, %v9751, 0
      %v9787 = vsel %vm1184, %v9752, 0
      %v9790 = vsel %vm1184, %v9753, 0
      %v9793 = vsel %vm1184, %v9754, 0
      %9795 = vmatprep.subr.mxu0 0.0
      %9796 = vmatpush1.msra.mxu0 0.0
      %9797 = vmatprep.subr.mxu0 0.0
      %9798 = vmatpush1.msra.mxu0 0.0
      %9799 = vmatprep.subr.mxu0 0.0
      %9800 = vmatpush1.msra.mxu0 0.0
      %9801 = vmatprep.subr.mxu0 0.0
      %9802 = vmatpush1.msra.mxu0 0.0
      %9803 = vmatprep.subr.mxu0 0.0
      %9804 = vmatpush1.msra.mxu0 0.0
      %9805 = vmatprep.subr.mxu0 0.0
      %9806 = vmatpush1.msra.mxu0 0.0
      %9807 = vmatprep.subr.mxu0 0.0
      %9808 = vmatpush1.msra.mxu0 0.0
      %9809 = vmatprep.subr.mxu0 0.0
      %9810 = vmatpush1.msra.mxu0 0.0
      %9811 = vmatprep.subr.mxu0 0.0
      %9812 = vmatpush1.msra.mxu0 0.0
      %9813 = vmatprep.subr.mxu0 0.0
      %9814 = vmatpush1.msra.mxu0 0.0
      %9815 = vmatprep.subr.mxu0 0.0
      %9816 = vmatpush1.msra.mxu0 0.0
      %9817 = vmatprep.subr.mxu0 0.0
      %9818 = vmatpush1.msra.mxu0 0.0
      %9819 = vmatprep.subr.mxu0 0.0
      %v9820 = vand.u32 %v9758, 4294901760
      %9821 = vmatpush1.msra.mxu0 %v9820
      %9822 = vmatprep.subr.mxu0 0.0
      %v9823 = vand.u32 %v9757, 4294901760
      %9824 = vmatpush1.msra.mxu0 %v9823
      %9825 = vmatprep.subr.mxu0 0.0
      %v9826 = vand.u32 %v9756, 4294901760
      %9827 = vmatpush1.msra.mxu0 %v9826
      %9828 = vmatprep.subr.mxu0 0.0
      %v9829 = vand.u32 %v9755, 4294901760
      %9830 = vmatpush1.msra.mxu0 %v9829
      %9831 = vmatprep.subr.mxu0 0.0
      %9832 = vmatpush2.msra.mxu0 0.0
      %9833 = vmatprep.subr.mxu0 0.0
      %9834 = vmatpush2.msra.mxu0 0.0
      %9835 = vmatprep.subr.mxu0 0.0
      %9836 = vmatpush2.msra.mxu0 0.0
      %9837 = vmatprep.subr.mxu0 0.0
      %9838 = vmatpush2.msra.mxu0 0.0
      %9839 = vmatprep.subr.mxu0 0.0
      %9840 = vmatpush2.msra.mxu0 0.0
      %9841 = vmatprep.subr.mxu0 0.0
      %9842 = vmatpush2.msra.mxu0 0.0
      %9843 = vmatprep.subr.mxu0 0.0
      %9844 = vmatpush2.msra.mxu0 0.0
      %9845 = vmatprep.subr.mxu0 0.0
      %9846 = vmatpush2.msra.mxu0 0.0
      %9847 = vmatprep.subr.mxu0 0.0
      %9848 = vmatpush2.msra.mxu0 0.0
      %9849 = vmatprep.subr.mxu0 0.0
      %9850 = vmatpush2.msra.mxu0 0.0
      %9851 = vmatprep.subr.mxu0 0.0
      %9852 = vmatpush2.msra.mxu0 0.0
      %9853 = vmatprep.subr.mxu0 0.0
      %9854 = vmatpush2.msra.mxu0 0.0
      %9855 = vmatprep.subr.mxu0 0.0
      %9856 = vmatpush2.msra.mxu0 0.0
      %9857 = vmatprep.subr.mxu0 0.0
      %9858 = vmatpush2.msra.mxu0 0.0
      %9859 = vmatprep.subr.mxu0 0.0
      %9860 = vmatpush2.msra.mxu0 0.0
      %9861 = vmatprep.subr.mxu0 0.0
      %9862 = vmatpush2.msra.mxu0 0.0
      %9863 = vmatprep.mubr.f32.mxu0 0.0
      %v9864 = vand.u32 %v9784, 4294901760
      %v9865 = vsub.f32 %v9784, %v9864
      %v9866 = vand.u32 %v9865, 4294901760
      %v9867 = vsub.f32 %v9865, %v9866
      %v9868 = vand.u32 %v9867, 4294901760
      %9869 = vmatmul.mubr.f32.gmra.mxu0 %v9868
      %v9870 = vpop.f32.mrf.mxu0
      %v9871 = vadd.f32 %v9766, %v9870
      %v9872 = vpop.f32.mrf.mxu0
      %9873 = vmatprep.mubr.f32.mxu0 0.0
      %v9874 = vand.u32 %v9787, 4294901760
      %v9875 = vsub.f32 %v9787, %v9874
      %v9876 = vand.u32 %v9875, 4294901760
      %v9877 = vsub.f32 %v9875, %v9876
      %v9878 = vand.u32 %v9877, 4294901760
      %9879 = vmatmul.mubr.f32.gmra.mxu0 %v9878
      %v9880 = vpop.f32.mrf.mxu0
      %v9881 = vadd.f32 %v9771, %v9880
      %v9882 = vpop.f32.mrf.mxu0
      %9883 = vmatprep.mubr.f32.mxu0 0.0
      %v9884 = vand.u32 %v9790, 4294901760
      %v9885 = vsub.f32 %v9790, %v9884
      %v9886 = vand.u32 %v9885, 4294901760
      %v9887 = vsub.f32 %v9885, %v9886
      %v9888 = vand.u32 %v9887, 4294901760
      %9889 = vmatmul.mubr.f32.gmra.mxu0 %v9888
      %v9890 = vpop.f32.mrf.mxu0
      %v9891 = vadd.f32 %v9776, %v9890
      %v9892 = vpop.f32.mrf.mxu0
      %9893 = vmatprep.mubr.f32.mxu0 0.0
      %v9894 = vand.u32 %v9793, 4294901760
      %v9895 = vsub.f32 %v9793, %v9894
      %v9896 = vand.u32 %v9895, 4294901760
      %v9897 = vsub.f32 %v9895, %v9896
      %v9898 = vand.u32 %v9897, 4294901760
      %9899 = vmatmul.mubr.f32.gmra.mxu0 %v9898
      %v9900 = vpop.f32.mrf.mxu0
      %v9901 = vadd.f32 %v9781, %v9900
      %v9902 = vpop.f32.mrf.mxu0
      %9903 = vdwg.mxu0
      %9904 = vmatprep.subr.mxu0 0.0
      %9905 = vmatpush1.msra.mxu0 0.0
      %9906 = vmatprep.subr.mxu0 0.0
      %9907 = vmatpush1.msra.mxu0 0.0
      %9908 = vmatprep.subr.mxu0 0.0
      %9909 = vmatpush1.msra.mxu0 0.0
      %9910 = vmatprep.subr.mxu0 0.0
      %9911 = vmatpush1.msra.mxu0 0.0
      %9912 = vmatprep.subr.mxu0 0.0
      %9913 = vmatpush1.msra.mxu0 0.0
      %9914 = vmatprep.subr.mxu0 0.0
      %9915 = vmatpush1.msra.mxu0 0.0
      %9916 = vmatprep.subr.mxu0 0.0
      %9917 = vmatpush1.msra.mxu0 0.0
      %9918 = vmatprep.subr.mxu0 0.0
      %9919 = vmatpush1.msra.mxu0 0.0
      %9920 = vmatprep.subr.mxu0 0.0
      %9921 = vmatpush1.msra.mxu0 0.0
      %9922 = vmatprep.subr.mxu0 0.0
      %9923 = vmatpush1.msra.mxu0 0.0
      %9924 = vmatprep.subr.mxu0 0.0
      %9925 = vmatpush1.msra.mxu0 0.0
      %9926 = vmatprep.subr.mxu0 0.0
      %9927 = vmatpush1.msra.mxu0 0.0
      %9928 = vmatprep.subr.mxu0 0.0
      %v9929 = vand.u32 %v9758, 4294901760
      %v9930 = vsub.f32 %v9758, %v9929
      %v9931 = vand.u32 %v9930, 4294901760
      %v9932 = vsub.f32 %v9930, %v9931
      %v9933 = vand.u32 %v9932, 4294901760
      %9934 = vmatpush1.msra.mxu0 %v9933
      %9935 = vmatprep.subr.mxu0 0.0
      %v9936 = vand.u32 %v9757, 4294901760
      %v9937 = vsub.f32 %v9757, %v9936
      %v9938 = vand.u32 %v9937, 4294901760
      %v9939 = vsub.f32 %v9937, %v9938
      %v9940 = vand.u32 %v9939, 4294901760
      %9941 = vmatpush1.msra.mxu0 %v9940
      %9942 = vmatprep.subr.mxu0 0.0
      %v9943 = vand.u32 %v9756, 4294901760
      %v9944 = vsub.f32 %v9756, %v9943
      %v9945 = vand.u32 %v9944, 4294901760
      %v9946 = vsub.f32 %v9944, %v9945
      %v9947 = vand.u32 %v9946, 4294901760
      %9948 = vmatpush1.msra.mxu0 %v9947
      %9949 = vmatprep.subr.mxu0 0.0
      %v9950 = vand.u32 %v9755, 4294901760
      %v9951 = vsub.f32 %v9755, %v9950
      %v9952 = vand.u32 %v9951, 4294901760
      %v9953 = vsub.f32 %v9951, %v9952
      %v9954 = vand.u32 %v9953, 4294901760
      %9955 = vmatpush1.msra.mxu0 %v9954
      %9956 = vmatprep.subr.mxu0 0.0
      %9957 = vmatpush2.msra.mxu0 0.0
      %9958 = vmatprep.subr.mxu0 0.0
      %9959 = vmatpush2.msra.mxu0 0.0
      %9960 = vmatprep.subr.mxu0 0.0
      %9961 = vmatpush2.msra.mxu0 0.0
      %9962 = vmatprep.subr.mxu0 0.0
      %9963 = vmatpush2.msra.mxu0 0.0
      %9964 = vmatprep.subr.mxu0 0.0
      %9965 = vmatpush2.msra.mxu0 0.0
      %9966 = vmatprep.subr.mxu0 0.0
      %9967 = vmatpush2.msra.mxu0 0.0
      %9968 = vmatprep.subr.mxu0 0.0
      %9969 = vmatpush2.msra.mxu0 0.0
      %9970 = vmatprep.subr.mxu0 0.0
      %9971 = vmatpush2.msra.mxu0 0.0
      %9972 = vmatprep.subr.mxu0 0.0
      %9973 = vmatpush2.msra.mxu0 0.0
      %9974 = vmatprep.subr.mxu0 0.0
      %9975 = vmatpush2.msra.mxu0 0.0
      %9976 = vmatprep.subr.mxu0 0.0
      %9977 = vmatpush2.msra.mxu0 0.0
      %9978 = vmatprep.subr.mxu0 0.0
      %9979 = vmatpush2.msra.mxu0 0.0
      %9980 = vmatprep.subr.mxu0 0.0
      %9981 = vmatpush2.msra.mxu0 0.0
      %9982 = vmatprep.subr.mxu0 0.0
      %9983 = vmatpush2.msra.mxu0 0.0
      %9984 = vmatprep.subr.mxu0 0.0
      %9985 = vmatpush2.msra.mxu0 0.0
      %9986 = vmatprep.subr.mxu0 0.0
      %9987 = vmatpush2.msra.mxu0 0.0
      %9988 = vmatprep.mubr.f32.mxu0 0.0
      %v9989 = vand.u32 %v9784, 4294901760
      %9990 = vmatmul.mubr.f32.gmra.mxu0 %v9989
      %v9991 = vpop.f32.mrf.mxu0
      %v9992 = vadd.f32 %v9871, %v9991
      %v9993 = vpop.f32.mrf.mxu0
      %9994 = vmatprep.mubr.f32.mxu0 0.0
      %v9995 = vand.u32 %v9787, 4294901760
      %9996 = vmatmul.mubr.f32.gmra.mxu0 %v9995
      %v9997 = vpop.f32.mrf.mxu0
      %v9998 = vadd.f32 %v9881, %v9997
      %v9999 = vpop.f32.mrf.mxu0
      %10000 = vmatprep.mubr.f32.mxu0 0.0
      %v10001 = vand.u32 %v9790, 4294901760
      %10002 = vmatmul.mubr.f32.gmra.mxu0 %v10001
      %v10003 = vpop.f32.mrf.mxu0
      %v10004 = vadd.f32 %v9891, %v10003
      %v10005 = vpop.f32.mrf.mxu0
      %10006 = vmatprep.mubr.f32.mxu0 0.0
      %v10007 = vand.u32 %v9793, 4294901760
      %10008 = vmatmul.mubr.f32.gmra.mxu0 %v10007
      %v10009 = vpop.f32.mrf.mxu0
      %v10010 = vadd.f32 %v9901, %v10009
      %v10011 = vpop.f32.mrf.mxu0
      %10012 = vdwg.mxu0
      %10013 = vmatprep.subr.mxu0 0.0
      %10014 = vmatpush1.msra.mxu0 0.0
      %10015 = vmatprep.subr.mxu0 0.0
      %10016 = vmatpush1.msra.mxu0 0.0
      %10017 = vmatprep.subr.mxu0 0.0
      %10018 = vmatpush1.msra.mxu0 0.0
      %10019 = vmatprep.subr.mxu0 0.0
      %10020 = vmatpush1.msra.mxu0 0.0
      %10021 = vmatprep.subr.mxu0 0.0
      %10022 = vmatpush1.msra.mxu0 0.0
      %10023 = vmatprep.subr.mxu0 0.0
      %10024 = vmatpush1.msra.mxu0 0.0
      %10025 = vmatprep.subr.mxu0 0.0
      %10026 = vmatpush1.msra.mxu0 0.0
      %10027 = vmatprep.subr.mxu0 0.0
      %10028 = vmatpush1.msra.mxu0 0.0
      %10029 = vmatprep.subr.mxu0 0.0
      %10030 = vmatpush1.msra.mxu0 0.0
      %10031 = vmatprep.subr.mxu0 0.0
      %10032 = vmatpush1.msra.mxu0 0.0
      %10033 = vmatprep.subr.mxu0 0.0
      %10034 = vmatpush1.msra.mxu0 0.0
      %10035 = vmatprep.subr.mxu0 0.0
      %10036 = vmatpush1.msra.mxu0 0.0
      %10037 = vmatprep.subr.mxu0 0.0
      %v10038 = vand.u32 %v9758, 4294901760
      %v10039 = vsub.f32 %v9758, %v10038
      %10040 = vmatpush1.msra.mxu0 %v10039
      %10041 = vmatprep.subr.mxu0 0.0
      %v10042 = vand.u32 %v9757, 4294901760
      %v10043 = vsub.f32 %v9757, %v10042
      %10044 = vmatpush1.msra.mxu0 %v10043
      %10045 = vmatprep.subr.mxu0 0.0
      %v10046 = vand.u32 %v9756, 4294901760
      %v10047 = vsub.f32 %v9756, %v10046
      %10048 = vmatpush1.msra.mxu0 %v10047
      %10049 = vmatprep.subr.mxu0 0.0
      %v10050 = vand.u32 %v9755, 4294901760
      %v10051 = vsub.f32 %v9755, %v10050
      %10052 = vmatpush1.msra.mxu0 %v10051
      %10053 = vmatprep.subr.mxu0 0.0
      %10054 = vmatpush2.msra.mxu0 0.0
      %10055 = vmatprep.subr.mxu0 0.0
      %10056 = vmatpush2.msra.mxu0 0.0
      %10057 = vmatprep.subr.mxu0 0.0
      %10058 = vmatpush2.msra.mxu0 0.0
      %10059 = vmatprep.subr.mxu0 0.0
      %10060 = vmatpush2.msra.mxu0 0.0
      %10061 = vmatprep.subr.mxu0 0.0
      %10062 = vmatpush2.msra.mxu0 0.0
      %10063 = vmatprep.subr.mxu0 0.0
      %10064 = vmatpush2.msra.mxu0 0.0
      %10065 = vmatprep.subr.mxu0 0.0
      %10066 = vmatpush2.msra.mxu0 0.0
      %10067 = vmatprep.subr.mxu0 0.0
      %10068 = vmatpush2.msra.mxu0 0.0
      %10069 = vmatprep.subr.mxu0 0.0
      %10070 = vmatpush2.msra.mxu0 0.0
      %10071 = vmatprep.subr.mxu0 0.0
      %10072 = vmatpush2.msra.mxu0 0.0
      %10073 = vmatprep.subr.mxu0 0.0
      %10074 = vmatpush2.msra.mxu0 0.0
      %10075 = vmatprep.subr.mxu0 0.0
      %10076 = vmatpush2.msra.mxu0 0.0
      %10077 = vmatprep.subr.mxu0 0.0
      %10078 = vmatpush2.msra.mxu0 0.0
      %10079 = vmatprep.subr.mxu0 0.0
      %10080 = vmatpush2.msra.mxu0 0.0
      %10081 = vmatprep.subr.mxu0 0.0
      %10082 = vmatpush2.msra.mxu0 0.0
      %10083 = vmatprep.subr.mxu0 0.0
      %10084 = vmatpush2.msra.mxu0 0.0
      %10085 = vmatprep.mubr.f32.mxu0 0.0
      %v10086 = vand.u32 %v9784, 4294901760
      %v10087 = vsub.f32 %v9784, %v10086
      %10088 = vmatmul.mubr.f32.gmra.mxu0 %v10087
      %v10089 = vpop.f32.mrf.mxu0
      %v10090 = vadd.f32 %v9992, %v10089
      %v10091 = vpop.f32.mrf.mxu0
      %10092 = vmatprep.mubr.f32.mxu0 0.0
      %v10093 = vand.u32 %v9787, 4294901760
      %v10094 = vsub.f32 %v9787, %v10093
      %10095 = vmatmul.mubr.f32.gmra.mxu0 %v10094
      %v10096 = vpop.f32.mrf.mxu0
      %v10097 = vadd.f32 %v9998, %v10096
      %v10098 = vpop.f32.mrf.mxu0
      %10099 = vmatprep.mubr.f32.mxu0 0.0
      %v10100 = vand.u32 %v9790, 4294901760
      %v10101 = vsub.f32 %v9790, %v10100
      %10102 = vmatmul.mubr.f32.gmra.mxu0 %v10101
      %v10103 = vpop.f32.mrf.mxu0
      %v10104 = vadd.f32 %v10004, %v10103
      %v10105 = vpop.f32.mrf.mxu0
      %10106 = vmatprep.mubr.f32.mxu0 0.0
      %v10107 = vand.u32 %v9793, 4294901760
      %v10108 = vsub.f32 %v9793, %v10107
      %10109 = vmatmul.mubr.f32.gmra.mxu0 %v10108
      %v10110 = vpop.f32.mrf.mxu0
      %v10111 = vadd.f32 %v10010, %v10110
      %v10112 = vpop.f32.mrf.mxu0
      %10113 = vdwg.mxu0
      %10114 = vmatprep.subr.mxu0 0.0
      %10115 = vmatpush1.msra.mxu0 0.0
      %10116 = vmatprep.subr.mxu0 0.0
      %10117 = vmatpush1.msra.mxu0 0.0
      %10118 = vmatprep.subr.mxu0 0.0
      %10119 = vmatpush1.msra.mxu0 0.0
      %10120 = vmatprep.subr.mxu0 0.0
      %10121 = vmatpush1.msra.mxu0 0.0
      %10122 = vmatprep.subr.mxu0 0.0
      %10123 = vmatpush1.msra.mxu0 0.0
      %10124 = vmatprep.subr.mxu0 0.0
      %10125 = vmatpush1.msra.mxu0 0.0
      %10126 = vmatprep.subr.mxu0 0.0
      %10127 = vmatpush1.msra.mxu0 0.0
      %10128 = vmatprep.subr.mxu0 0.0
      %10129 = vmatpush1.msra.mxu0 0.0
      %10130 = vmatprep.subr.mxu0 0.0
      %10131 = vmatpush1.msra.mxu0 0.0
      %10132 = vmatprep.subr.mxu0 0.0
      %10133 = vmatpush1.msra.mxu0 0.0
      %10134 = vmatprep.subr.mxu0 0.0
      %10135 = vmatpush1.msra.mxu0 0.0
      %10136 = vmatprep.subr.mxu0 0.0
      %10137 = vmatpush1.msra.mxu0 0.0
      %10138 = vmatprep.subr.mxu0 0.0
      %v10139 = vand.u32 %v9758, 4294901760
      %10140 = vmatpush1.msra.mxu0 %v10139
      %10141 = vmatprep.subr.mxu0 0.0
      %v10142 = vand.u32 %v9757, 4294901760
      %10143 = vmatpush1.msra.mxu0 %v10142
      %10144 = vmatprep.subr.mxu0 0.0
      %v10145 = vand.u32 %v9756, 4294901760
      %10146 = vmatpush1.msra.mxu0 %v10145
      %10147 = vmatprep.subr.mxu0 0.0
      %v10148 = vand.u32 %v9755, 4294901760
      %10149 = vmatpush1.msra.mxu0 %v10148
      %10150 = vmatprep.subr.mxu0 0.0
      %10151 = vmatpush2.msra.mxu0 0.0
      %10152 = vmatprep.subr.mxu0 0.0
      %10153 = vmatpush2.msra.mxu0 0.0
      %10154 = vmatprep.subr.mxu0 0.0
      %10155 = vmatpush2.msra.mxu0 0.0
      %10156 = vmatprep.subr.mxu0 0.0
      %10157 = vmatpush2.msra.mxu0 0.0
      %10158 = vmatprep.subr.mxu0 0.0
      %10159 = vmatpush2.msra.mxu0 0.0
      %10160 = vmatprep.subr.mxu0 0.0
      %10161 = vmatpush2.msra.mxu0 0.0
      %10162 = vmatprep.subr.mxu0 0.0
      %10163 = vmatpush2.msra.mxu0 0.0
      %10164 = vmatprep.subr.mxu0 0.0
      %10165 = vmatpush2.msra.mxu0 0.0
      %10166 = vmatprep.subr.mxu0 0.0
      %10167 = vmatpush2.msra.mxu0 0.0
      %10168 = vmatprep.subr.mxu0 0.0
      %10169 = vmatpush2.msra.mxu0 0.0
      %10170 = vmatprep.subr.mxu0 0.0
      %10171 = vmatpush2.msra.mxu0 0.0
      %10172 = vmatprep.subr.mxu0 0.0
      %10173 = vmatpush2.msra.mxu0 0.0
      %10174 = vmatprep.subr.mxu0 0.0
      %10175 = vmatpush2.msra.mxu0 0.0
      %10176 = vmatprep.subr.mxu0 0.0
      %10177 = vmatpush2.msra.mxu0 0.0
      %10178 = vmatprep.subr.mxu0 0.0
      %10179 = vmatpush2.msra.mxu0 0.0
      %10180 = vmatprep.subr.mxu0 0.0
      %10181 = vmatpush2.msra.mxu0 0.0
      %10182 = vmatprep.mubr.f32.mxu0 0.0
      %v10183 = vand.u32 %v9784, 4294901760
      %v10184 = vsub.f32 %v9784, %v10183
      %v10185 = vand.u32 %v10184, 4294901760
      %10186 = vmatmul.mubr.f32.gmra.mxu0 %v10185
      %v10187 = vpop.f32.mrf.mxu0
      %v10188 = vadd.f32 %v10090, %v10187
      %v10189 = vpop.f32.mrf.mxu0
      %10190 = vmatprep.mubr.f32.mxu0 0.0
      %v10191 = vand.u32 %v9787, 4294901760
      %v10192 = vsub.f32 %v9787, %v10191
      %v10193 = vand.u32 %v10192, 4294901760
      %10194 = vmatmul.mubr.f32.gmra.mxu0 %v10193
      %v10195 = vpop.f32.mrf.mxu0
      %v10196 = vadd.f32 %v10097, %v10195
      %v10197 = vpop.f32.mrf.mxu0
      %10198 = vmatprep.mubr.f32.mxu0 0.0
      %v10199 = vand.u32 %v9790, 4294901760
      %v10200 = vsub.f32 %v9790, %v10199
      %v10201 = vand.u32 %v10200, 4294901760
      %10202 = vmatmul.mubr.f32.gmra.mxu0 %v10201
      %v10203 = vpop.f32.mrf.mxu0
      %v10204 = vadd.f32 %v10104, %v10203
      %v10205 = vpop.f32.mrf.mxu0
      %10206 = vmatprep.mubr.f32.mxu0 0.0
      %v10207 = vand.u32 %v9793, 4294901760
      %v10208 = vsub.f32 %v9793, %v10207
      %v10209 = vand.u32 %v10208, 4294901760
      %10210 = vmatmul.mubr.f32.gmra.mxu0 %v10209
      %v10211 = vpop.f32.mrf.mxu0
      %v10212 = vadd.f32 %v10111, %v10211
      %v10213 = vpop.f32.mrf.mxu0
      %10214 = vdwg.mxu0
      %10215 = vmatprep.subr.mxu0 0.0
      %10216 = vmatpush1.msra.mxu0 0.0
      %10217 = vmatprep.subr.mxu0 0.0
      %10218 = vmatpush1.msra.mxu0 0.0
      %10219 = vmatprep.subr.mxu0 0.0
      %10220 = vmatpush1.msra.mxu0 0.0
      %10221 = vmatprep.subr.mxu0 0.0
      %10222 = vmatpush1.msra.mxu0 0.0
      %10223 = vmatprep.subr.mxu0 0.0
      %10224 = vmatpush1.msra.mxu0 0.0
      %10225 = vmatprep.subr.mxu0 0.0
      %10226 = vmatpush1.msra.mxu0 0.0
      %10227 = vmatprep.subr.mxu0 0.0
      %10228 = vmatpush1.msra.mxu0 0.0
      %10229 = vmatprep.subr.mxu0 0.0
      %10230 = vmatpush1.msra.mxu0 0.0
      %10231 = vmatprep.subr.mxu0 0.0
      %10232 = vmatpush1.msra.mxu0 0.0
      %10233 = vmatprep.subr.mxu0 0.0
      %10234 = vmatpush1.msra.mxu0 0.0
      %10235 = vmatprep.subr.mxu0 0.0
      %10236 = vmatpush1.msra.mxu0 0.0
      %10237 = vmatprep.subr.mxu0 0.0
      %10238 = vmatpush1.msra.mxu0 0.0
      %10239 = vmatprep.subr.mxu0 0.0
      %v10240 = vand.u32 %v9758, 4294901760
      %v10241 = vsub.f32 %v9758, %v10240
      %v10242 = vand.u32 %v10241, 4294901760
      %10243 = vmatpush1.msra.mxu0 %v10242
      %10244 = vmatprep.subr.mxu0 0.0
      %v10245 = vand.u32 %v9757, 4294901760
      %v10246 = vsub.f32 %v9757, %v10245
      %v10247 = vand.u32 %v10246, 4294901760
      %10248 = vmatpush1.msra.mxu0 %v10247
      %10249 = vmatprep.subr.mxu0 0.0
      %v10250 = vand.u32 %v9756, 4294901760
      %v10251 = vsub.f32 %v9756, %v10250
      %v10252 = vand.u32 %v10251, 4294901760
      %10253 = vmatpush1.msra.mxu0 %v10252
      %10254 = vmatprep.subr.mxu0 0.0
      %v10255 = vand.u32 %v9755, 4294901760
      %v10256 = vsub.f32 %v9755, %v10255
      %v10257 = vand.u32 %v10256, 4294901760
      %10258 = vmatpush1.msra.mxu0 %v10257
      %10259 = vmatprep.subr.mxu0 0.0
      %10260 = vmatpush2.msra.mxu0 0.0
      %10261 = vmatprep.subr.mxu0 0.0
      %10262 = vmatpush2.msra.mxu0 0.0
      %10263 = vmatprep.subr.mxu0 0.0
      %10264 = vmatpush2.msra.mxu0 0.0
      %10265 = vmatprep.subr.mxu0 0.0
      %10266 = vmatpush2.msra.mxu0 0.0
      %10267 = vmatprep.subr.mxu0 0.0
      %10268 = vmatpush2.msra.mxu0 0.0
      %10269 = vmatprep.subr.mxu0 0.0
      %10270 = vmatpush2.msra.mxu0 0.0
      %10271 = vmatprep.subr.mxu0 0.0
      %10272 = vmatpush2.msra.mxu0 0.0
      %10273 = vmatprep.subr.mxu0 0.0
      %10274 = vmatpush2.msra.mxu0 0.0
      %10275 = vmatprep.subr.mxu0 0.0
      %10276 = vmatpush2.msra.mxu0 0.0
      %10277 = vmatprep.subr.mxu0 0.0
      %10278 = vmatpush2.msra.mxu0 0.0
      %10279 = vmatprep.subr.mxu0 0.0
      %10280 = vmatpush2.msra.mxu0 0.0
      %10281 = vmatprep.subr.mxu0 0.0
      %10282 = vmatpush2.msra.mxu0 0.0
      %10283 = vmatprep.subr.mxu0 0.0
      %10284 = vmatpush2.msra.mxu0 0.0
      %10285 = vmatprep.subr.mxu0 0.0
      %10286 = vmatpush2.msra.mxu0 0.0
      %10287 = vmatprep.subr.mxu0 0.0
      %10288 = vmatpush2.msra.mxu0 0.0
      %10289 = vmatprep.subr.mxu0 0.0
      %10290 = vmatpush2.msra.mxu0 0.0
      %10291 = vmatprep.mubr.f32.mxu0 0.0
      %v10292 = vand.u32 %v9784, 4294901760
      %10293 = vmatmul.mubr.f32.gmra.mxu0 %v10292
      %v10294 = vpop.f32.mrf.mxu0
      %v10295 = vadd.f32 %v10188, %v10294
      %v10296 = vpop.f32.mrf.mxu0
      %10297 = vmatprep.mubr.f32.mxu0 0.0
      %v10298 = vand.u32 %v9787, 4294901760
      %10299 = vmatmul.mubr.f32.gmra.mxu0 %v10298
      %v10300 = vpop.f32.mrf.mxu0
      %v10301 = vadd.f32 %v10196, %v10300
      %v10302 = vpop.f32.mrf.mxu0
      %10303 = vmatprep.mubr.f32.mxu0 0.0
      %v10304 = vand.u32 %v9790, 4294901760
      %10305 = vmatmul.mubr.f32.gmra.mxu0 %v10304
      %v10306 = vpop.f32.mrf.mxu0
      %v10307 = vadd.f32 %v10204, %v10306
      %v10308 = vpop.f32.mrf.mxu0
      %10309 = vmatprep.mubr.f32.mxu0 0.0
      %v10310 = vand.u32 %v9793, 4294901760
      %10311 = vmatmul.mubr.f32.gmra.mxu0 %v10310
      %v10312 = vpop.f32.mrf.mxu0
      %v10313 = vadd.f32 %v10212, %v10312
      %v10314 = vpop.f32.mrf.mxu0
      %10315 = vdwg.mxu0
      %10316 = vmatprep.subr.mxu0 0.0
      %10317 = vmatpush1.msra.mxu0 0.0
      %10318 = vmatprep.subr.mxu0 0.0
      %10319 = vmatpush1.msra.mxu0 0.0
      %10320 = vmatprep.subr.mxu0 0.0
      %10321 = vmatpush1.msra.mxu0 0.0
      %10322 = vmatprep.subr.mxu0 0.0
      %10323 = vmatpush1.msra.mxu0 0.0
      %10324 = vmatprep.subr.mxu0 0.0
      %10325 = vmatpush1.msra.mxu0 0.0
      %10326 = vmatprep.subr.mxu0 0.0
      %10327 = vmatpush1.msra.mxu0 0.0
      %10328 = vmatprep.subr.mxu0 0.0
      %10329 = vmatpush1.msra.mxu0 0.0
      %10330 = vmatprep.subr.mxu0 0.0
      %10331 = vmatpush1.msra.mxu0 0.0
      %10332 = vmatprep.subr.mxu0 0.0
      %10333 = vmatpush1.msra.mxu0 0.0
      %10334 = vmatprep.subr.mxu0 0.0
      %10335 = vmatpush1.msra.mxu0 0.0
      %10336 = vmatprep.subr.mxu0 0.0
      %10337 = vmatpush1.msra.mxu0 0.0
      %10338 = vmatprep.subr.mxu0 0.0
      %10339 = vmatpush1.msra.mxu0 0.0
      %10340 = vmatprep.subr.mxu0 0.0
      %v10341 = vand.u32 %v9758, 4294901760
      %10342 = vmatpush1.msra.mxu0 %v10341
      %10343 = vmatprep.subr.mxu0 0.0
      %v10344 = vand.u32 %v9757, 4294901760
      %10345 = vmatpush1.msra.mxu0 %v10344
      %10346 = vmatprep.subr.mxu0 0.0
      %v10347 = vand.u32 %v9756, 4294901760
      %10348 = vmatpush1.msra.mxu0 %v10347
      %10349 = vmatprep.subr.mxu0 0.0
      %v10350 = vand.u32 %v9755, 4294901760
      %10351 = vmatpush1.msra.mxu0 %v10350
      %10352 = vmatprep.subr.mxu0 0.0
      %10353 = vmatpush2.msra.mxu0 0.0
      %10354 = vmatprep.subr.mxu0 0.0
      %10355 = vmatpush2.msra.mxu0 0.0
      %10356 = vmatprep.subr.mxu0 0.0
      %10357 = vmatpush2.msra.mxu0 0.0
      %10358 = vmatprep.subr.mxu0 0.0
      %10359 = vmatpush2.msra.mxu0 0.0
      %10360 = vmatprep.subr.mxu0 0.0
      %10361 = vmatpush2.msra.mxu0 0.0
      %10362 = vmatprep.subr.mxu0 0.0
      %10363 = vmatpush2.msra.mxu0 0.0
      %10364 = vmatprep.subr.mxu0 0.0
      %10365 = vmatpush2.msra.mxu0 0.0
      %10366 = vmatprep.subr.mxu0 0.0
      %10367 = vmatpush2.msra.mxu0 0.0
      %10368 = vmatprep.subr.mxu0 0.0
      %10369 = vmatpush2.msra.mxu0 0.0
      %10370 = vmatprep.subr.mxu0 0.0
      %10371 = vmatpush2.msra.mxu0 0.0
      %10372 = vmatprep.subr.mxu0 0.0
      %10373 = vmatpush2.msra.mxu0 0.0
      %10374 = vmatprep.subr.mxu0 0.0
      %10375 = vmatpush2.msra.mxu0 0.0
      %10376 = vmatprep.subr.mxu0 0.0
      %10377 = vmatpush2.msra.mxu0 0.0
      %10378 = vmatprep.subr.mxu0 0.0
      %10379 = vmatpush2.msra.mxu0 0.0
      %10380 = vmatprep.subr.mxu0 0.0
      %10381 = vmatpush2.msra.mxu0 0.0
      %10382 = vmatprep.subr.mxu0 0.0
      %10383 = vmatpush2.msra.mxu0 0.0
      %10384 = vmatprep.mubr.f32.mxu0 0.0
      %v10385 = vand.u32 %v9784, 4294901760
      %10386 = vmatmul.mubr.f32.gmra.mxu0 %v10385
      %v10387 = vpop.f32.mrf.mxu0
      %v10388 = vadd.f32 %v10295, %v10387
      %v10389 = vpop.f32.mrf.mxu0
      %10390 = vmatprep.mubr.f32.mxu0 0.0
      %v10391 = vand.u32 %v9787, 4294901760
      %10392 = vmatmul.mubr.f32.gmra.mxu0 %v10391
      %v10393 = vpop.f32.mrf.mxu0
      %v10394 = vadd.f32 %v10301, %v10393
      %v10395 = vpop.f32.mrf.mxu0
      %10396 = vmatprep.mubr.f32.mxu0 0.0
      %v10397 = vand.u32 %v9790, 4294901760
      %10398 = vmatmul.mubr.f32.gmra.mxu0 %v10397
      %v10399 = vpop.f32.mrf.mxu0
      %v10400 = vadd.f32 %v10307, %v10399
      %v10401 = vpop.f32.mrf.mxu0
      %10402 = vmatprep.mubr.f32.mxu0 0.0
      %v10403 = vand.u32 %v9793, 4294901760
      %10404 = vmatmul.mubr.f32.gmra.mxu0 %v10403
      %v10405 = vpop.f32.mrf.mxu0
      %v10406 = vadd.f32 %v10313, %v10405
      %v10407 = vpop.f32.mrf.mxu0
      %10408 = vdwg.mxu0
      %v10409 = vld [vmem:[%s4 + $0x1c0] sm:$0xff]
      %v10410 = vld [vmem:[%s4 + $0x1c8] sm:$0xff]
      %v10411 = vld [vmem:[%s4 + $0x1d0] sm:$0xff]
      %v10412 = vld [vmem:[%s4 + $0x1d8] sm:$0xff]
      %v10413 = vmax.f32 %v10388, 0.0
      %v10414 = vmax.f32 %v10394, 0.0
      %v10415 = vmax.f32 %v10400, 0.0
      %v10416 = vmax.f32 %v10406, 0.0
      %v10417 = vld [vmem:[%s5 + $0x120] sm:$0xff]
      %v10418 = vld [vmem:[%s5 + $0x128] sm:$0xff]
      %v10419 = vld [vmem:[%s5 + $0x130] sm:$0xff]
      %v10420 = vld [vmem:[%s5 + $0x138] sm:$0xff]
      %10422 = vset.pattern.permute.xlu0 0
      %10423 = vperm.xlu0 %10422, %v10417
      %v10424 = vpop.permute.xlu0 %10423
      %10427 = vset.pattern.permute.xlu0 0
      %10428 = vperm.xlu0 %10427, %v10418
      %v10429 = vpop.permute.xlu0 %10428
      %10432 = vset.pattern.permute.xlu0 0
      %10433 = vperm.xlu0 %10432, %v10419
      %v10434 = vpop.permute.xlu0 %10433
      %10437 = vset.pattern.permute.xlu0 0
      %10438 = vperm.xlu0 %10437, %v10420
      %v10439 = vpop.permute.xlu0 %10438
      %v10442 = vsel %vm1184, %v10409, 0
      %v10445 = vsel %vm1184, %v10410, 0
      %v10448 = vsel %vm1184, %v10411, 0
      %v10451 = vsel %vm1184, %v10412, 0
      %10453 = vmatprep.subr.mxu0 0.0
      %10454 = vmatpush1.msra.mxu0 0.0
      %10455 = vmatprep.subr.mxu0 0.0
      %10456 = vmatpush1.msra.mxu0 0.0
      %10457 = vmatprep.subr.mxu0 0.0
      %10458 = vmatpush1.msra.mxu0 0.0
      %10459 = vmatprep.subr.mxu0 0.0
      %10460 = vmatpush1.msra.mxu0 0.0
      %10461 = vmatprep.subr.mxu0 0.0
      %10462 = vmatpush1.msra.mxu0 0.0
      %10463 = vmatprep.subr.mxu0 0.0
      %10464 = vmatpush1.msra.mxu0 0.0
      %10465 = vmatprep.subr.mxu0 0.0
      %10466 = vmatpush1.msra.mxu0 0.0
      %10467 = vmatprep.subr.mxu0 0.0
      %10468 = vmatpush1.msra.mxu0 0.0
      %10469 = vmatprep.subr.mxu0 0.0
      %10470 = vmatpush1.msra.mxu0 0.0
      %10471 = vmatprep.subr.mxu0 0.0
      %10472 = vmatpush1.msra.mxu0 0.0
      %10473 = vmatprep.subr.mxu0 0.0
      %10474 = vmatpush1.msra.mxu0 0.0
      %10475 = vmatprep.subr.mxu0 0.0
      %10476 = vmatpush1.msra.mxu0 0.0
      %10477 = vmatprep.subr.mxu0 0.0
      %v10478 = vand.u32 %v10416, 4294901760
      %10479 = vmatpush1.msra.mxu0 %v10478
      %10480 = vmatprep.subr.mxu0 0.0
      %v10481 = vand.u32 %v10415, 4294901760
      %10482 = vmatpush1.msra.mxu0 %v10481
      %10483 = vmatprep.subr.mxu0 0.0
      %v10484 = vand.u32 %v10414, 4294901760
      %10485 = vmatpush1.msra.mxu0 %v10484
      %10486 = vmatprep.subr.mxu0 0.0
      %v10487 = vand.u32 %v10413, 4294901760
      %10488 = vmatpush1.msra.mxu0 %v10487
      %10489 = vmatprep.subr.mxu0 0.0
      %10490 = vmatpush2.msra.mxu0 0.0
      %10491 = vmatprep.subr.mxu0 0.0
      %10492 = vmatpush2.msra.mxu0 0.0
      %10493 = vmatprep.subr.mxu0 0.0
      %10494 = vmatpush2.msra.mxu0 0.0
      %10495 = vmatprep.subr.mxu0 0.0
      %10496 = vmatpush2.msra.mxu0 0.0
      %10497 = vmatprep.subr.mxu0 0.0
      %10498 = vmatpush2.msra.mxu0 0.0
      %10499 = vmatprep.subr.mxu0 0.0
      %10500 = vmatpush2.msra.mxu0 0.0
      %10501 = vmatprep.subr.mxu0 0.0
      %10502 = vmatpush2.msra.mxu0 0.0
      %10503 = vmatprep.subr.mxu0 0.0
      %10504 = vmatpush2.msra.mxu0 0.0
      %10505 = vmatprep.subr.mxu0 0.0
      %10506 = vmatpush2.msra.mxu0 0.0
      %10507 = vmatprep.subr.mxu0 0.0
      %10508 = vmatpush2.msra.mxu0 0.0
      %10509 = vmatprep.subr.mxu0 0.0
      %10510 = vmatpush2.msra.mxu0 0.0
      %10511 = vmatprep.subr.mxu0 0.0
      %10512 = vmatpush2.msra.mxu0 0.0
      %10513 = vmatprep.subr.mxu0 0.0
      %10514 = vmatpush2.msra.mxu0 0.0
      %10515 = vmatprep.subr.mxu0 0.0
      %10516 = vmatpush2.msra.mxu0 0.0
      %10517 = vmatprep.subr.mxu0 0.0
      %10518 = vmatpush2.msra.mxu0 0.0
      %10519 = vmatprep.subr.mxu0 0.0
      %10520 = vmatpush2.msra.mxu0 0.0
      %10521 = vmatprep.mubr.f32.mxu0 0.0
      %v10522 = vand.u32 %v10442, 4294901760
      %v10523 = vsub.f32 %v10442, %v10522
      %v10524 = vand.u32 %v10523, 4294901760
      %v10525 = vsub.f32 %v10523, %v10524
      %v10526 = vand.u32 %v10525, 4294901760
      %10527 = vmatmul.mubr.f32.gmra.mxu0 %v10526
      %v10528 = vpop.f32.mrf.mxu0
      %v10529 = vadd.f32 %v10424, %v10528
      %v10530 = vpop.f32.mrf.mxu0
      %10531 = vmatprep.mubr.f32.mxu0 0.0
      %v10532 = vand.u32 %v10445, 4294901760
      %v10533 = vsub.f32 %v10445, %v10532
      %v10534 = vand.u32 %v10533, 4294901760
      %v10535 = vsub.f32 %v10533, %v10534
      %v10536 = vand.u32 %v10535, 4294901760
      %10537 = vmatmul.mubr.f32.gmra.mxu0 %v10536
      %v10538 = vpop.f32.mrf.mxu0
      %v10539 = vadd.f32 %v10429, %v10538
      %v10540 = vpop.f32.mrf.mxu0
      %10541 = vmatprep.mubr.f32.mxu0 0.0
      %v10542 = vand.u32 %v10448, 4294901760
      %v10543 = vsub.f32 %v10448, %v10542
      %v10544 = vand.u32 %v10543, 4294901760
      %v10545 = vsub.f32 %v10543, %v10544
      %v10546 = vand.u32 %v10545, 4294901760
      %10547 = vmatmul.mubr.f32.gmra.mxu0 %v10546
      %v10548 = vpop.f32.mrf.mxu0
      %v10549 = vadd.f32 %v10434, %v10548
      %v10550 = vpop.f32.mrf.mxu0
      %10551 = vmatprep.mubr.f32.mxu0 0.0
      %v10552 = vand.u32 %v10451, 4294901760
      %v10553 = vsub.f32 %v10451, %v10552
      %v10554 = vand.u32 %v10553, 4294901760
      %v10555 = vsub.f32 %v10553, %v10554
      %v10556 = vand.u32 %v10555, 4294901760
      %10557 = vmatmul.mubr.f32.gmra.mxu0 %v10556
      %v10558 = vpop.f32.mrf.mxu0
      %v10559 = vadd.f32 %v10439, %v10558
      %v10560 = vpop.f32.mrf.mxu0
      %10561 = vdwg.mxu0
      %10562 = vmatprep.subr.mxu0 0.0
      %10563 = vmatpush1.msra.mxu0 0.0
      %10564 = vmatprep.subr.mxu0 0.0
      %10565 = vmatpush1.msra.mxu0 0.0
      %10566 = vmatprep.subr.mxu0 0.0
      %10567 = vmatpush1.msra.mxu0 0.0
      %10568 = vmatprep.subr.mxu0 0.0
      %10569 = vmatpush1.msra.mxu0 0.0
      %10570 = vmatprep.subr.mxu0 0.0
      %10571 = vmatpush1.msra.mxu0 0.0
      %10572 = vmatprep.subr.mxu0 0.0
      %10573 = vmatpush1.msra.mxu0 0.0
      %10574 = vmatprep.subr.mxu0 0.0
      %10575 = vmatpush1.msra.mxu0 0.0
      %10576 = vmatprep.subr.mxu0 0.0
      %10577 = vmatpush1.msra.mxu0 0.0
      %10578 = vmatprep.subr.mxu0 0.0
      %10579 = vmatpush1.msra.mxu0 0.0
      %10580 = vmatprep.subr.mxu0 0.0
      %10581 = vmatpush1.msra.mxu0 0.0
      %10582 = vmatprep.subr.mxu0 0.0
      %10583 = vmatpush1.msra.mxu0 0.0
      %10584 = vmatprep.subr.mxu0 0.0
      %10585 = vmatpush1.msra.mxu0 0.0
      %10586 = vmatprep.subr.mxu0 0.0
      %v10587 = vand.u32 %v10416, 4294901760
      %v10588 = vsub.f32 %v10416, %v10587
      %v10589 = vand.u32 %v10588, 4294901760
      %v10590 = vsub.f32 %v10588, %v10589
      %v10591 = vand.u32 %v10590, 4294901760
      %10592 = vmatpush1.msra.mxu0 %v10591
      %10593 = vmatprep.subr.mxu0 0.0
      %v10594 = vand.u32 %v10415, 4294901760
      %v10595 = vsub.f32 %v10415, %v10594
      %v10596 = vand.u32 %v10595, 4294901760
      %v10597 = vsub.f32 %v10595, %v10596
      %v10598 = vand.u32 %v10597, 4294901760
      %10599 = vmatpush1.msra.mxu0 %v10598
      %10600 = vmatprep.subr.mxu0 0.0
      %v10601 = vand.u32 %v10414, 4294901760
      %v10602 = vsub.f32 %v10414, %v10601
      %v10603 = vand.u32 %v10602, 4294901760
      %v10604 = vsub.f32 %v10602, %v10603
      %v10605 = vand.u32 %v10604, 4294901760
      %10606 = vmatpush1.msra.mxu0 %v10605
      %10607 = vmatprep.subr.mxu0 0.0
      %v10608 = vand.u32 %v10413, 4294901760
      %v10609 = vsub.f32 %v10413, %v10608
      %v10610 = vand.u32 %v10609, 4294901760
      %v10611 = vsub.f32 %v10609, %v10610
      %v10612 = vand.u32 %v10611, 4294901760
      %10613 = vmatpush1.msra.mxu0 %v10612
      %10614 = vmatprep.subr.mxu0 0.0
      %10615 = vmatpush2.msra.mxu0 0.0
      %10616 = vmatprep.subr.mxu0 0.0
      %10617 = vmatpush2.msra.mxu0 0.0
      %10618 = vmatprep.subr.mxu0 0.0
      %10619 = vmatpush2.msra.mxu0 0.0
      %10620 = vmatprep.subr.mxu0 0.0
      %10621 = vmatpush2.msra.mxu0 0.0
      %10622 = vmatprep.subr.mxu0 0.0
      %10623 = vmatpush2.msra.mxu0 0.0
      %10624 = vmatprep.subr.mxu0 0.0
      %10625 = vmatpush2.msra.mxu0 0.0
      %10626 = vmatprep.subr.mxu0 0.0
      %10627 = vmatpush2.msra.mxu0 0.0
      %10628 = vmatprep.subr.mxu0 0.0
      %10629 = vmatpush2.msra.mxu0 0.0
      %10630 = vmatprep.subr.mxu0 0.0
      %10631 = vmatpush2.msra.mxu0 0.0
      %10632 = vmatprep.subr.mxu0 0.0
      %10633 = vmatpush2.msra.mxu0 0.0
      %10634 = vmatprep.subr.mxu0 0.0
      %10635 = vmatpush2.msra.mxu0 0.0
      %10636 = vmatprep.subr.mxu0 0.0
      %10637 = vmatpush2.msra.mxu0 0.0
      %10638 = vmatprep.subr.mxu0 0.0
      %10639 = vmatpush2.msra.mxu0 0.0
      %10640 = vmatprep.subr.mxu0 0.0
      %10641 = vmatpush2.msra.mxu0 0.0
      %10642 = vmatprep.subr.mxu0 0.0
      %10643 = vmatpush2.msra.mxu0 0.0
      %10644 = vmatprep.subr.mxu0 0.0
      %10645 = vmatpush2.msra.mxu0 0.0
      %10646 = vmatprep.mubr.f32.mxu0 0.0
      %v10647 = vand.u32 %v10442, 4294901760
      %10648 = vmatmul.mubr.f32.gmra.mxu0 %v10647
      %v10649 = vpop.f32.mrf.mxu0
      %v10650 = vadd.f32 %v10529, %v10649
      %v10651 = vpop.f32.mrf.mxu0
      %10652 = vmatprep.mubr.f32.mxu0 0.0
      %v10653 = vand.u32 %v10445, 4294901760
      %10654 = vmatmul.mubr.f32.gmra.mxu0 %v10653
      %v10655 = vpop.f32.mrf.mxu0
      %v10656 = vadd.f32 %v10539, %v10655
      %v10657 = vpop.f32.mrf.mxu0
      %10658 = vmatprep.mubr.f32.mxu0 0.0
      %v10659 = vand.u32 %v10448, 4294901760
      %10660 = vmatmul.mubr.f32.gmra.mxu0 %v10659
      %v10661 = vpop.f32.mrf.mxu0
      %v10662 = vadd.f32 %v10549, %v10661
      %v10663 = vpop.f32.mrf.mxu0
      %10664 = vmatprep.mubr.f32.mxu0 0.0
      %v10665 = vand.u32 %v10451, 4294901760
      %10666 = vmatmul.mubr.f32.gmra.mxu0 %v10665
      %v10667 = vpop.f32.mrf.mxu0
      %v10668 = vadd.f32 %v10559, %v10667
      %v10669 = vpop.f32.mrf.mxu0
      %10670 = vdwg.mxu0
      %10671 = vmatprep.subr.mxu0 0.0
      %10672 = vmatpush1.msra.mxu0 0.0
      %10673 = vmatprep.subr.mxu0 0.0
      %10674 = vmatpush1.msra.mxu0 0.0
      %10675 = vmatprep.subr.mxu0 0.0
      %10676 = vmatpush1.msra.mxu0 0.0
      %10677 = vmatprep.subr.mxu0 0.0
      %10678 = vmatpush1.msra.mxu0 0.0
      %10679 = vmatprep.subr.mxu0 0.0
      %10680 = vmatpush1.msra.mxu0 0.0
      %10681 = vmatprep.subr.mxu0 0.0
      %10682 = vmatpush1.msra.mxu0 0.0
      %10683 = vmatprep.subr.mxu0 0.0
      %10684 = vmatpush1.msra.mxu0 0.0
      %10685 = vmatprep.subr.mxu0 0.0
      %10686 = vmatpush1.msra.mxu0 0.0
      %10687 = vmatprep.subr.mxu0 0.0
      %10688 = vmatpush1.msra.mxu0 0.0
      %10689 = vmatprep.subr.mxu0 0.0
      %10690 = vmatpush1.msra.mxu0 0.0
      %10691 = vmatprep.subr.mxu0 0.0
      %10692 = vmatpush1.msra.mxu0 0.0
      %10693 = vmatprep.subr.mxu0 0.0
      %10694 = vmatpush1.msra.mxu0 0.0
      %10695 = vmatprep.subr.mxu0 0.0
      %v10696 = vand.u32 %v10416, 4294901760
      %v10697 = vsub.f32 %v10416, %v10696
      %10698 = vmatpush1.msra.mxu0 %v10697
      %10699 = vmatprep.subr.mxu0 0.0
      %v10700 = vand.u32 %v10415, 4294901760
      %v10701 = vsub.f32 %v10415, %v10700
      %10702 = vmatpush1.msra.mxu0 %v10701
      %10703 = vmatprep.subr.mxu0 0.0
      %v10704 = vand.u32 %v10414, 4294901760
      %v10705 = vsub.f32 %v10414, %v10704
      %10706 = vmatpush1.msra.mxu0 %v10705
      %10707 = vmatprep.subr.mxu0 0.0
      %v10708 = vand.u32 %v10413, 4294901760
      %v10709 = vsub.f32 %v10413, %v10708
      %10710 = vmatpush1.msra.mxu0 %v10709
      %10711 = vmatprep.subr.mxu0 0.0
      %10712 = vmatpush2.msra.mxu0 0.0
      %10713 = vmatprep.subr.mxu0 0.0
      %10714 = vmatpush2.msra.mxu0 0.0
      %10715 = vmatprep.subr.mxu0 0.0
      %10716 = vmatpush2.msra.mxu0 0.0
      %10717 = vmatprep.subr.mxu0 0.0
      %10718 = vmatpush2.msra.mxu0 0.0
      %10719 = vmatprep.subr.mxu0 0.0
      %10720 = vmatpush2.msra.mxu0 0.0
      %10721 = vmatprep.subr.mxu0 0.0
      %10722 = vmatpush2.msra.mxu0 0.0
      %10723 = vmatprep.subr.mxu0 0.0
      %10724 = vmatpush2.msra.mxu0 0.0
      %10725 = vmatprep.subr.mxu0 0.0
      %10726 = vmatpush2.msra.mxu0 0.0
      %10727 = vmatprep.subr.mxu0 0.0
      %10728 = vmatpush2.msra.mxu0 0.0
      %10729 = vmatprep.subr.mxu0 0.0
      %10730 = vmatpush2.msra.mxu0 0.0
      %10731 = vmatprep.subr.mxu0 0.0
      %10732 = vmatpush2.msra.mxu0 0.0
      %10733 = vmatprep.subr.mxu0 0.0
      %10734 = vmatpush2.msra.mxu0 0.0
      %10735 = vmatprep.subr.mxu0 0.0
      %10736 = vmatpush2.msra.mxu0 0.0
      %10737 = vmatprep.subr.mxu0 0.0
      %10738 = vmatpush2.msra.mxu0 0.0
      %10739 = vmatprep.subr.mxu0 0.0
      %10740 = vmatpush2.msra.mxu0 0.0
      %10741 = vmatprep.subr.mxu0 0.0
      %10742 = vmatpush2.msra.mxu0 0.0
      %10743 = vmatprep.mubr.f32.mxu0 0.0
      %v10744 = vand.u32 %v10442, 4294901760
      %v10745 = vsub.f32 %v10442, %v10744
      %10746 = vmatmul.mubr.f32.gmra.mxu0 %v10745
      %v10747 = vpop.f32.mrf.mxu0
      %v10748 = vadd.f32 %v10650, %v10747
      %v10749 = vpop.f32.mrf.mxu0
      %10750 = vmatprep.mubr.f32.mxu0 0.0
      %v10751 = vand.u32 %v10445, 4294901760
      %v10752 = vsub.f32 %v10445, %v10751
      %10753 = vmatmul.mubr.f32.gmra.mxu0 %v10752
      %v10754 = vpop.f32.mrf.mxu0
      %v10755 = vadd.f32 %v10656, %v10754
      %v10756 = vpop.f32.mrf.mxu0
      %10757 = vmatprep.mubr.f32.mxu0 0.0
      %v10758 = vand.u32 %v10448, 4294901760
      %v10759 = vsub.f32 %v10448, %v10758
      %10760 = vmatmul.mubr.f32.gmra.mxu0 %v10759
      %v10761 = vpop.f32.mrf.mxu0
      %v10762 = vadd.f32 %v10662, %v10761
      %v10763 = vpop.f32.mrf.mxu0
      %10764 = vmatprep.mubr.f32.mxu0 0.0
      %v10765 = vand.u32 %v10451, 4294901760
      %v10766 = vsub.f32 %v10451, %v10765
      %10767 = vmatmul.mubr.f32.gmra.mxu0 %v10766
      %v10768 = vpop.f32.mrf.mxu0
      %v10769 = vadd.f32 %v10668, %v10768
      %v10770 = vpop.f32.mrf.mxu0
      %10771 = vdwg.mxu0
      %10772 = vmatprep.subr.mxu0 0.0
      %10773 = vmatpush1.msra.mxu0 0.0
      %10774 = vmatprep.subr.mxu0 0.0
      %10775 = vmatpush1.msra.mxu0 0.0
      %10776 = vmatprep.subr.mxu0 0.0
      %10777 = vmatpush1.msra.mxu0 0.0
      %10778 = vmatprep.subr.mxu0 0.0
      %10779 = vmatpush1.msra.mxu0 0.0
      %10780 = vmatprep.subr.mxu0 0.0
      %10781 = vmatpush1.msra.mxu0 0.0
      %10782 = vmatprep.subr.mxu0 0.0
      %10783 = vmatpush1.msra.mxu0 0.0
      %10784 = vmatprep.subr.mxu0 0.0
      %10785 = vmatpush1.msra.mxu0 0.0
      %10786 = vmatprep.subr.mxu0 0.0
      %10787 = vmatpush1.msra.mxu0 0.0
      %10788 = vmatprep.subr.mxu0 0.0
      %10789 = vmatpush1.msra.mxu0 0.0
      %10790 = vmatprep.subr.mxu0 0.0
      %10791 = vmatpush1.msra.mxu0 0.0
      %10792 = vmatprep.subr.mxu0 0.0
      %10793 = vmatpush1.msra.mxu0 0.0
      %10794 = vmatprep.subr.mxu0 0.0
      %10795 = vmatpush1.msra.mxu0 0.0
      %10796 = vmatprep.subr.mxu0 0.0
      %v10797 = vand.u32 %v10416, 4294901760
      %10798 = vmatpush1.msra.mxu0 %v10797
      %10799 = vmatprep.subr.mxu0 0.0
      %v10800 = vand.u32 %v10415, 4294901760
      %10801 = vmatpush1.msra.mxu0 %v10800
      %10802 = vmatprep.subr.mxu0 0.0
      %v10803 = vand.u32 %v10414, 4294901760
      %10804 = vmatpush1.msra.mxu0 %v10803
      %10805 = vmatprep.subr.mxu0 0.0
      %v10806 = vand.u32 %v10413, 4294901760
      %10807 = vmatpush1.msra.mxu0 %v10806
      %10808 = vmatprep.subr.mxu0 0.0
      %10809 = vmatpush2.msra.mxu0 0.0
      %10810 = vmatprep.subr.mxu0 0.0
      %10811 = vmatpush2.msra.mxu0 0.0
      %10812 = vmatprep.subr.mxu0 0.0
      %10813 = vmatpush2.msra.mxu0 0.0
      %10814 = vmatprep.subr.mxu0 0.0
      %10815 = vmatpush2.msra.mxu0 0.0
      %10816 = vmatprep.subr.mxu0 0.0
      %10817 = vmatpush2.msra.mxu0 0.0
      %10818 = vmatprep.subr.mxu0 0.0
      %10819 = vmatpush2.msra.mxu0 0.0
      %10820 = vmatprep.subr.mxu0 0.0
      %10821 = vmatpush2.msra.mxu0 0.0
      %10822 = vmatprep.subr.mxu0 0.0
      %10823 = vmatpush2.msra.mxu0 0.0
      %10824 = vmatprep.subr.mxu0 0.0
      %10825 = vmatpush2.msra.mxu0 0.0
      %10826 = vmatprep.subr.mxu0 0.0
      %10827 = vmatpush2.msra.mxu0 0.0
      %10828 = vmatprep.subr.mxu0 0.0
      %10829 = vmatpush2.msra.mxu0 0.0
      %10830 = vmatprep.subr.mxu0 0.0
      %10831 = vmatpush2.msra.mxu0 0.0
      %10832 = vmatprep.subr.mxu0 0.0
      %10833 = vmatpush2.msra.mxu0 0.0
      %10834 = vmatprep.subr.mxu0 0.0
      %10835 = vmatpush2.msra.mxu0 0.0
      %10836 = vmatprep.subr.mxu0 0.0
      %10837 = vmatpush2.msra.mxu0 0.0
      %10838 = vmatprep.subr.mxu0 0.0
      %10839 = vmatpush2.msra.mxu0 0.0
      %10840 = vmatprep.mubr.f32.mxu0 0.0
      %v10841 = vand.u32 %v10442, 4294901760
      %v10842 = vsub.f32 %v10442, %v10841
      %v10843 = vand.u32 %v10842, 4294901760
      %10844 = vmatmul.mubr.f32.gmra.mxu0 %v10843
      %v10845 = vpop.f32.mrf.mxu0
      %v10846 = vadd.f32 %v10748, %v10845
      %v10847 = vpop.f32.mrf.mxu0
      %10848 = vmatprep.mubr.f32.mxu0 0.0
      %v10849 = vand.u32 %v10445, 4294901760
      %v10850 = vsub.f32 %v10445, %v10849
      %v10851 = vand.u32 %v10850, 4294901760
      %10852 = vmatmul.mubr.f32.gmra.mxu0 %v10851
      %v10853 = vpop.f32.mrf.mxu0
      %v10854 = vadd.f32 %v10755, %v10853
      %v10855 = vpop.f32.mrf.mxu0
      %10856 = vmatprep.mubr.f32.mxu0 0.0
      %v10857 = vand.u32 %v10448, 4294901760
      %v10858 = vsub.f32 %v10448, %v10857
      %v10859 = vand.u32 %v10858, 4294901760
      %10860 = vmatmul.mubr.f32.gmra.mxu0 %v10859
      %v10861 = vpop.f32.mrf.mxu0
      %v10862 = vadd.f32 %v10762, %v10861
      %v10863 = vpop.f32.mrf.mxu0
      %10864 = vmatprep.mubr.f32.mxu0 0.0
      %v10865 = vand.u32 %v10451, 4294901760
      %v10866 = vsub.f32 %v10451, %v10865
      %v10867 = vand.u32 %v10866, 4294901760
      %10868 = vmatmul.mubr.f32.gmra.mxu0 %v10867
      %v10869 = vpop.f32.mrf.mxu0
      %v10870 = vadd.f32 %v10769, %v10869
      %v10871 = vpop.f32.mrf.mxu0
      %10872 = vdwg.mxu0
      %10873 = vmatprep.subr.mxu0 0.0
      %10874 = vmatpush1.msra.mxu0 0.0
      %10875 = vmatprep.subr.mxu0 0.0
      %10876 = vmatpush1.msra.mxu0 0.0
      %10877 = vmatprep.subr.mxu0 0.0
      %10878 = vmatpush1.msra.mxu0 0.0
      %10879 = vmatprep.subr.mxu0 0.0
      %10880 = vmatpush1.msra.mxu0 0.0
      %10881 = vmatprep.subr.mxu0 0.0
      %10882 = vmatpush1.msra.mxu0 0.0
      %10883 = vmatprep.subr.mxu0 0.0
      %10884 = vmatpush1.msra.mxu0 0.0
      %10885 = vmatprep.subr.mxu0 0.0
      %10886 = vmatpush1.msra.mxu0 0.0
      %10887 = vmatprep.subr.mxu0 0.0
      %10888 = vmatpush1.msra.mxu0 0.0
      %10889 = vmatprep.subr.mxu0 0.0
      %10890 = vmatpush1.msra.mxu0 0.0
      %10891 = vmatprep.subr.mxu0 0.0
      %10892 = vmatpush1.msra.mxu0 0.0
      %10893 = vmatprep.subr.mxu0 0.0
      %10894 = vmatpush1.msra.mxu0 0.0
      %10895 = vmatprep.subr.mxu0 0.0
      %10896 = vmatpush1.msra.mxu0 0.0
      %10897 = vmatprep.subr.mxu0 0.0
      %v10898 = vand.u32 %v10416, 4294901760
      %v10899 = vsub.f32 %v10416, %v10898
      %v10900 = vand.u32 %v10899, 4294901760
      %10901 = vmatpush1.msra.mxu0 %v10900
      %10902 = vmatprep.subr.mxu0 0.0
      %v10903 = vand.u32 %v10415, 4294901760
      %v10904 = vsub.f32 %v10415, %v10903
      %v10905 = vand.u32 %v10904, 4294901760
      %10906 = vmatpush1.msra.mxu0 %v10905
      %10907 = vmatprep.subr.mxu0 0.0
      %v10908 = vand.u32 %v10414, 4294901760
      %v10909 = vsub.f32 %v10414, %v10908
      %v10910 = vand.u32 %v10909, 4294901760
      %10911 = vmatpush1.msra.mxu0 %v10910
      %10912 = vmatprep.subr.mxu0 0.0
      %v10913 = vand.u32 %v10413, 4294901760
      %v10914 = vsub.f32 %v10413, %v10913
      %v10915 = vand.u32 %v10914, 4294901760
      %10916 = vmatpush1.msra.mxu0 %v10915
      %10917 = vmatprep.subr.mxu0 0.0
      %10918 = vmatpush2.msra.mxu0 0.0
      %10919 = vmatprep.subr.mxu0 0.0
      %10920 = vmatpush2.msra.mxu0 0.0
      %10921 = vmatprep.subr.mxu0 0.0
      %10922 = vmatpush2.msra.mxu0 0.0
      %10923 = vmatprep.subr.mxu0 0.0
      %10924 = vmatpush2.msra.mxu0 0.0
      %10925 = vmatprep.subr.mxu0 0.0
      %10926 = vmatpush2.msra.mxu0 0.0
      %10927 = vmatprep.subr.mxu0 0.0
      %10928 = vmatpush2.msra.mxu0 0.0
      %10929 = vmatprep.subr.mxu0 0.0
      %10930 = vmatpush2.msra.mxu0 0.0
      %10931 = vmatprep.subr.mxu0 0.0
      %10932 = vmatpush2.msra.mxu0 0.0
      %10933 = vmatprep.subr.mxu0 0.0
      %10934 = vmatpush2.msra.mxu0 0.0
      %10935 = vmatprep.subr.mxu0 0.0
      %10936 = vmatpush2.msra.mxu0 0.0
      %10937 = vmatprep.subr.mxu0 0.0
      %10938 = vmatpush2.msra.mxu0 0.0
      %10939 = vmatprep.subr.mxu0 0.0
      %10940 = vmatpush2.msra.mxu0 0.0
      %10941 = vmatprep.subr.mxu0 0.0
      %10942 = vmatpush2.msra.mxu0 0.0
      %10943 = vmatprep.subr.mxu0 0.0
      %10944 = vmatpush2.msra.mxu0 0.0
      %10945 = vmatprep.subr.mxu0 0.0
      %10946 = vmatpush2.msra.mxu0 0.0
      %10947 = vmatprep.subr.mxu0 0.0
      %10948 = vmatpush2.msra.mxu0 0.0
      %10949 = vmatprep.mubr.f32.mxu0 0.0
      %v10950 = vand.u32 %v10442, 4294901760
      %10951 = vmatmul.mubr.f32.gmra.mxu0 %v10950
      %v10952 = vpop.f32.mrf.mxu0
      %v10953 = vadd.f32 %v10846, %v10952
      %v10954 = vpop.f32.mrf.mxu0
      %10955 = vmatprep.mubr.f32.mxu0 0.0
      %v10956 = vand.u32 %v10445, 4294901760
      %10957 = vmatmul.mubr.f32.gmra.mxu0 %v10956
      %v10958 = vpop.f32.mrf.mxu0
      %v10959 = vadd.f32 %v10854, %v10958
      %v10960 = vpop.f32.mrf.mxu0
      %10961 = vmatprep.mubr.f32.mxu0 0.0
      %v10962 = vand.u32 %v10448, 4294901760
      %10963 = vmatmul.mubr.f32.gmra.mxu0 %v10962
      %v10964 = vpop.f32.mrf.mxu0
      %v10965 = vadd.f32 %v10862, %v10964
      %v10966 = vpop.f32.mrf.mxu0
      %10967 = vmatprep.mubr.f32.mxu0 0.0
      %v10968 = vand.u32 %v10451, 4294901760
      %10969 = vmatmul.mubr.f32.gmra.mxu0 %v10968
      %v10970 = vpop.f32.mrf.mxu0
      %v10971 = vadd.f32 %v10870, %v10970
      %v10972 = vpop.f32.mrf.mxu0
      %10973 = vdwg.mxu0
      %10974 = vmatprep.subr.mxu0 0.0
      %10975 = vmatpush1.msra.mxu0 0.0
      %10976 = vmatprep.subr.mxu0 0.0
      %10977 = vmatpush1.msra.mxu0 0.0
      %10978 = vmatprep.subr.mxu0 0.0
      %10979 = vmatpush1.msra.mxu0 0.0
      %10980 = vmatprep.subr.mxu0 0.0
      %10981 = vmatpush1.msra.mxu0 0.0
      %10982 = vmatprep.subr.mxu0 0.0
      %10983 = vmatpush1.msra.mxu0 0.0
      %10984 = vmatprep.subr.mxu0 0.0
      %10985 = vmatpush1.msra.mxu0 0.0
      %10986 = vmatprep.subr.mxu0 0.0
      %10987 = vmatpush1.msra.mxu0 0.0
      %10988 = vmatprep.subr.mxu0 0.0
      %10989 = vmatpush1.msra.mxu0 0.0
      %10990 = vmatprep.subr.mxu0 0.0
      %10991 = vmatpush1.msra.mxu0 0.0
      %10992 = vmatprep.subr.mxu0 0.0
      %10993 = vmatpush1.msra.mxu0 0.0
      %10994 = vmatprep.subr.mxu0 0.0
      %10995 = vmatpush1.msra.mxu0 0.0
      %10996 = vmatprep.subr.mxu0 0.0
      %10997 = vmatpush1.msra.mxu0 0.0
      %10998 = vmatprep.subr.mxu0 0.0
      %v10999 = vand.u32 %v10416, 4294901760
      %11000 = vmatpush1.msra.mxu0 %v10999
      %11001 = vmatprep.subr.mxu0 0.0
      %v11002 = vand.u32 %v10415, 4294901760
      %11003 = vmatpush1.msra.mxu0 %v11002
      %11004 = vmatprep.subr.mxu0 0.0
      %v11005 = vand.u32 %v10414, 4294901760
      %11006 = vmatpush1.msra.mxu0 %v11005
      %11007 = vmatprep.subr.mxu0 0.0
      %v11008 = vand.u32 %v10413, 4294901760
      %11009 = vmatpush1.msra.mxu0 %v11008
      %11010 = vmatprep.subr.mxu0 0.0
      %11011 = vmatpush2.msra.mxu0 0.0
      %11012 = vmatprep.subr.mxu0 0.0
      %11013 = vmatpush2.msra.mxu0 0.0
      %11014 = vmatprep.subr.mxu0 0.0
      %11015 = vmatpush2.msra.mxu0 0.0
      %11016 = vmatprep.subr.mxu0 0.0
      %11017 = vmatpush2.msra.mxu0 0.0
      %11018 = vmatprep.subr.mxu0 0.0
      %11019 = vmatpush2.msra.mxu0 0.0
      %11020 = vmatprep.subr.mxu0 0.0
      %11021 = vmatpush2.msra.mxu0 0.0
      %11022 = vmatprep.subr.mxu0 0.0
      %11023 = vmatpush2.msra.mxu0 0.0
      %11024 = vmatprep.subr.mxu0 0.0
      %11025 = vmatpush2.msra.mxu0 0.0
      %11026 = vmatprep.subr.mxu0 0.0
      %11027 = vmatpush2.msra.mxu0 0.0
      %11028 = vmatprep.subr.mxu0 0.0
      %11029 = vmatpush2.msra.mxu0 0.0
      %11030 = vmatprep.subr.mxu0 0.0
      %11031 = vmatpush2.msra.mxu0 0.0
      %11032 = vmatprep.subr.mxu0 0.0
      %11033 = vmatpush2.msra.mxu0 0.0
      %11034 = vmatprep.subr.mxu0 0.0
      %11035 = vmatpush2.msra.mxu0 0.0
      %11036 = vmatprep.subr.mxu0 0.0
      %11037 = vmatpush2.msra.mxu0 0.0
      %11038 = vmatprep.subr.mxu0 0.0
      %11039 = vmatpush2.msra.mxu0 0.0
      %11040 = vmatprep.subr.mxu0 0.0
      %11041 = vmatpush2.msra.mxu0 0.0
      %11042 = vmatprep.mubr.f32.mxu0 0.0
      %v11043 = vand.u32 %v10442, 4294901760
      %11044 = vmatmul.mubr.f32.gmra.mxu0 %v11043
      %v11045 = vpop.f32.mrf.mxu0
      %v11046 = vadd.f32 %v10953, %v11045
      %v11047 = vpop.f32.mrf.mxu0
      %11048 = vmatprep.mubr.f32.mxu0 0.0
      %v11049 = vand.u32 %v10445, 4294901760
      %11050 = vmatmul.mubr.f32.gmra.mxu0 %v11049
      %v11051 = vpop.f32.mrf.mxu0
      %v11052 = vadd.f32 %v10959, %v11051
      %v11053 = vpop.f32.mrf.mxu0
      %11054 = vmatprep.mubr.f32.mxu0 0.0
      %v11055 = vand.u32 %v10448, 4294901760
      %11056 = vmatmul.mubr.f32.gmra.mxu0 %v11055
      %v11057 = vpop.f32.mrf.mxu0
      %v11058 = vadd.f32 %v10965, %v11057
      %v11059 = vpop.f32.mrf.mxu0
      %11060 = vmatprep.mubr.f32.mxu0 0.0
      %v11061 = vand.u32 %v10451, 4294901760
      %11062 = vmatmul.mubr.f32.gmra.mxu0 %v11061
      %v11063 = vpop.f32.mrf.mxu0
      %v11064 = vadd.f32 %v10971, %v11063
      %v11065 = vpop.f32.mrf.mxu0
      %11066 = vdwg.mxu0
      %v11067 = vadd.f32 %v9747, %v11046
      %v11068 = vadd.f32 %v9748, %v11052
      %v11069 = vadd.f32 %v9749, %v11058
      %v11070 = vadd.f32 %v9750, %v11064
      %v11071 = vld [vmem:[%s4 + $0x1e0] sm:$0x7]
      %v11072 = vld [vmem:[%s5 + $0x140] sm:$0x7]
      %11074 = vset.pattern.permute.xlu0 0
      %11075 = vperm.xlu0 %11074, %v11072
      %v11076 = vpop.permute.xlu0 %11075
      %v11079 = vsel %vm1184, %v11071, 0
      %11081 = vmatprep.subr.mxu0 0.0
      %11082 = vmatpush1.msra.mxu0 0.0
      %11083 = vmatprep.subr.mxu0 0.0
      %11084 = vmatpush1.msra.mxu0 0.0
      %11085 = vmatprep.subr.mxu0 0.0
      %11086 = vmatpush1.msra.mxu0 0.0
      %11087 = vmatprep.subr.mxu0 0.0
      %11088 = vmatpush1.msra.mxu0 0.0
      %11089 = vmatprep.subr.mxu0 0.0
      %11090 = vmatpush1.msra.mxu0 0.0
      %11091 = vmatprep.subr.mxu0 0.0
      %11092 = vmatpush1.msra.mxu0 0.0
      %11093 = vmatprep.subr.mxu0 0.0
      %11094 = vmatpush1.msra.mxu0 0.0
      %11095 = vmatprep.subr.mxu0 0.0
      %11096 = vmatpush1.msra.mxu0 0.0
      %11097 = vmatprep.subr.mxu0 0.0
      %11098 = vmatpush1.msra.mxu0 0.0
      %11099 = vmatprep.subr.mxu0 0.0
      %11100 = vmatpush1.msra.mxu0 0.0
      %11101 = vmatprep.subr.mxu0 0.0
      %11102 = vmatpush1.msra.mxu0 0.0
      %11103 = vmatprep.subr.mxu0 0.0
      %11104 = vmatpush1.msra.mxu0 0.0
      %11105 = vmatprep.subr.mxu0 0.0
      %v11106 = vand.u32 %v11070, 4294901760
      %11107 = vmatpush1.msra.mxu0 %v11106
      %11108 = vmatprep.subr.mxu0 0.0
      %v11109 = vand.u32 %v11069, 4294901760
      %11110 = vmatpush1.msra.mxu0 %v11109
      %11111 = vmatprep.subr.mxu0 0.0
      %v11112 = vand.u32 %v11068, 4294901760
      %11113 = vmatpush1.msra.mxu0 %v11112
      %11114 = vmatprep.subr.mxu0 0.0
      %v11115 = vand.u32 %v11067, 4294901760
      %11116 = vmatpush1.msra.mxu0 %v11115
      %11117 = vmatprep.subr.mxu0 0.0
      %11118 = vmatpush2.msra.mxu0 0.0
      %11119 = vmatprep.subr.mxu0 0.0
      %11120 = vmatpush2.msra.mxu0 0.0
      %11121 = vmatprep.subr.mxu0 0.0
      %11122 = vmatpush2.msra.mxu0 0.0
      %11123 = vmatprep.subr.mxu0 0.0
      %11124 = vmatpush2.msra.mxu0 0.0
      %11125 = vmatprep.subr.mxu0 0.0
      %11126 = vmatpush2.msra.mxu0 0.0
      %11127 = vmatprep.subr.mxu0 0.0
      %11128 = vmatpush2.msra.mxu0 0.0
      %11129 = vmatprep.subr.mxu0 0.0
      %11130 = vmatpush2.msra.mxu0 0.0
      %11131 = vmatprep.subr.mxu0 0.0
      %11132 = vmatpush2.msra.mxu0 0.0
      %11133 = vmatprep.subr.mxu0 0.0
      %11134 = vmatpush2.msra.mxu0 0.0
      %11135 = vmatprep.subr.mxu0 0.0
      %11136 = vmatpush2.msra.mxu0 0.0
      %11137 = vmatprep.subr.mxu0 0.0
      %11138 = vmatpush2.msra.mxu0 0.0
      %11139 = vmatprep.subr.mxu0 0.0
      %11140 = vmatpush2.msra.mxu0 0.0
      %11141 = vmatprep.subr.mxu0 0.0
      %11142 = vmatpush2.msra.mxu0 0.0
      %11143 = vmatprep.subr.mxu0 0.0
      %11144 = vmatpush2.msra.mxu0 0.0
      %11145 = vmatprep.subr.mxu0 0.0
      %11146 = vmatpush2.msra.mxu0 0.0
      %11147 = vmatprep.subr.mxu0 0.0
      %11148 = vmatpush2.msra.mxu0 0.0
      %11149 = vmatprep.mubr.f32.mxu0 0.0
      %v11150 = vand.u32 %v11079, 4294901760
      %v11151 = vsub.f32 %v11079, %v11150
      %v11152 = vand.u32 %v11151, 4294901760
      %v11153 = vsub.f32 %v11151, %v11152
      %v11154 = vand.u32 %v11153, 4294901760
      %11155 = vmatmul.mubr.f32.gmra.mxu0 %v11154
      %v11156 = vpop.f32.mrf.mxu0
      %v11157 = vadd.f32 %v11076, %v11156
      %v11158 = vpop.f32.mrf.mxu0
      %11159 = vdwg.mxu0
      %11160 = vmatprep.subr.mxu0 0.0
      %11161 = vmatpush1.msra.mxu0 0.0
      %11162 = vmatprep.subr.mxu0 0.0
      %11163 = vmatpush1.msra.mxu0 0.0
      %11164 = vmatprep.subr.mxu0 0.0
      %11165 = vmatpush1.msra.mxu0 0.0
      %11166 = vmatprep.subr.mxu0 0.0
      %11167 = vmatpush1.msra.mxu0 0.0
      %11168 = vmatprep.subr.mxu0 0.0
      %11169 = vmatpush1.msra.mxu0 0.0
      %11170 = vmatprep.subr.mxu0 0.0
      %11171 = vmatpush1.msra.mxu0 0.0
      %11172 = vmatprep.subr.mxu0 0.0
      %11173 = vmatpush1.msra.mxu0 0.0
      %11174 = vmatprep.subr.mxu0 0.0
      %11175 = vmatpush1.msra.mxu0 0.0
      %11176 = vmatprep.subr.mxu0 0.0
      %11177 = vmatpush1.msra.mxu0 0.0
      %11178 = vmatprep.subr.mxu0 0.0
      %11179 = vmatpush1.msra.mxu0 0.0
      %11180 = vmatprep.subr.mxu0 0.0
      %11181 = vmatpush1.msra.mxu0 0.0
      %11182 = vmatprep.subr.mxu0 0.0
      %11183 = vmatpush1.msra.mxu0 0.0
      %11184 = vmatprep.subr.mxu0 0.0
      %v11185 = vand.u32 %v11070, 4294901760
      %v11186 = vsub.f32 %v11070, %v11185
      %v11187 = vand.u32 %v11186, 4294901760
      %v11188 = vsub.f32 %v11186, %v11187
      %v11189 = vand.u32 %v11188, 4294901760
      %11190 = vmatpush1.msra.mxu0 %v11189
      %11191 = vmatprep.subr.mxu0 0.0
      %v11192 = vand.u32 %v11069, 4294901760
      %v11193 = vsub.f32 %v11069, %v11192
      %v11194 = vand.u32 %v11193, 4294901760
      %v11195 = vsub.f32 %v11193, %v11194
      %v11196 = vand.u32 %v11195, 4294901760
      %11197 = vmatpush1.msra.mxu0 %v11196
      %11198 = vmatprep.subr.mxu0 0.0
      %v11199 = vand.u32 %v11068, 4294901760
      %v11200 = vsub.f32 %v11068, %v11199
      %v11201 = vand.u32 %v11200, 4294901760
      %v11202 = vsub.f32 %v11200, %v11201
      %v11203 = vand.u32 %v11202, 4294901760
      %11204 = vmatpush1.msra.mxu0 %v11203
      %11205 = vmatprep.subr.mxu0 0.0
      %v11206 = vand.u32 %v11067, 4294901760
      %v11207 = vsub.f32 %v11067, %v11206
      %v11208 = vand.u32 %v11207, 4294901760
      %v11209 = vsub.f32 %v11207, %v11208
      %v11210 = vand.u32 %v11209, 4294901760
      %11211 = vmatpush1.msra.mxu0 %v11210
      %11212 = vmatprep.subr.mxu0 0.0
      %11213 = vmatpush2.msra.mxu0 0.0
      %11214 = vmatprep.subr.mxu0 0.0
      %11215 = vmatpush2.msra.mxu0 0.0
      %11216 = vmatprep.subr.mxu0 0.0
      %11217 = vmatpush2.msra.mxu0 0.0
      %11218 = vmatprep.subr.mxu0 0.0
      %11219 = vmatpush2.msra.mxu0 0.0
      %11220 = vmatprep.subr.mxu0 0.0
      %11221 = vmatpush2.msra.mxu0 0.0
      %11222 = vmatprep.subr.mxu0 0.0
      %11223 = vmatpush2.msra.mxu0 0.0
      %11224 = vmatprep.subr.mxu0 0.0
      %11225 = vmatpush2.msra.mxu0 0.0
      %11226 = vmatprep.subr.mxu0 0.0
      %11227 = vmatpush2.msra.mxu0 0.0
      %11228 = vmatprep.subr.mxu0 0.0
      %11229 = vmatpush2.msra.mxu0 0.0
      %11230 = vmatprep.subr.mxu0 0.0
      %11231 = vmatpush2.msra.mxu0 0.0
      %11232 = vmatprep.subr.mxu0 0.0
      %11233 = vmatpush2.msra.mxu0 0.0
      %11234 = vmatprep.subr.mxu0 0.0
      %11235 = vmatpush2.msra.mxu0 0.0
      %11236 = vmatprep.subr.mxu0 0.0
      %11237 = vmatpush2.msra.mxu0 0.0
      %11238 = vmatprep.subr.mxu0 0.0
      %11239 = vmatpush2.msra.mxu0 0.0
      %11240 = vmatprep.subr.mxu0 0.0
      %11241 = vmatpush2.msra.mxu0 0.0
      %11242 = vmatprep.subr.mxu0 0.0
      %11243 = vmatpush2.msra.mxu0 0.0
      %11244 = vmatprep.mubr.f32.mxu0 0.0
      %v11245 = vand.u32 %v11079, 4294901760
      %11246 = vmatmul.mubr.f32.gmra.mxu0 %v11245
      %v11247 = vpop.f32.mrf.mxu0
      %v11248 = vadd.f32 %v11157, %v11247
      %v11249 = vpop.f32.mrf.mxu0
      %11250 = vdwg.mxu0
      %11251 = vmatprep.subr.mxu0 0.0
      %11252 = vmatpush1.msra.mxu0 0.0
      %11253 = vmatprep.subr.mxu0 0.0
      %11254 = vmatpush1.msra.mxu0 0.0
      %11255 = vmatprep.subr.mxu0 0.0
      %11256 = vmatpush1.msra.mxu0 0.0
      %11257 = vmatprep.subr.mxu0 0.0
      %11258 = vmatpush1.msra.mxu0 0.0
      %11259 = vmatprep.subr.mxu0 0.0
      %11260 = vmatpush1.msra.mxu0 0.0
      %11261 = vmatprep.subr.mxu0 0.0
      %11262 = vmatpush1.msra.mxu0 0.0
      %11263 = vmatprep.subr.mxu0 0.0
      %11264 = vmatpush1.msra.mxu0 0.0
      %11265 = vmatprep.subr.mxu0 0.0
      %11266 = vmatpush1.msra.mxu0 0.0
      %11267 = vmatprep.subr.mxu0 0.0
      %11268 = vmatpush1.msra.mxu0 0.0
      %11269 = vmatprep.subr.mxu0 0.0
      %11270 = vmatpush1.msra.mxu0 0.0
      %11271 = vmatprep.subr.mxu0 0.0
      %11272 = vmatpush1.msra.mxu0 0.0
      %11273 = vmatprep.subr.mxu0 0.0
      %11274 = vmatpush1.msra.mxu0 0.0
      %11275 = vmatprep.subr.mxu0 0.0
      %v11276 = vand.u32 %v11070, 4294901760
      %v11277 = vsub.f32 %v11070, %v11276
      %11278 = vmatpush1.msra.mxu0 %v11277
      %11279 = vmatprep.subr.mxu0 0.0
      %v11280 = vand.u32 %v11069, 4294901760
      %v11281 = vsub.f32 %v11069, %v11280
      %11282 = vmatpush1.msra.mxu0 %v11281
      %11283 = vmatprep.subr.mxu0 0.0
      %v11284 = vand.u32 %v11068, 4294901760
      %v11285 = vsub.f32 %v11068, %v11284
      %11286 = vmatpush1.msra.mxu0 %v11285
      %11287 = vmatprep.subr.mxu0 0.0
      %v11288 = vand.u32 %v11067, 4294901760
      %v11289 = vsub.f32 %v11067, %v11288
      %11290 = vmatpush1.msra.mxu0 %v11289
      %11291 = vmatprep.subr.mxu0 0.0
      %11292 = vmatpush2.msra.mxu0 0.0
      %11293 = vmatprep.subr.mxu0 0.0
      %11294 = vmatpush2.msra.mxu0 0.0
      %11295 = vmatprep.subr.mxu0 0.0
      %11296 = vmatpush2.msra.mxu0 0.0
      %11297 = vmatprep.subr.mxu0 0.0
      %11298 = vmatpush2.msra.mxu0 0.0
      %11299 = vmatprep.subr.mxu0 0.0
      %11300 = vmatpush2.msra.mxu0 0.0
      %11301 = vmatprep.subr.mxu0 0.0
      %11302 = vmatpush2.msra.mxu0 0.0
      %11303 = vmatprep.subr.mxu0 0.0
      %11304 = vmatpush2.msra.mxu0 0.0
      %11305 = vmatprep.subr.mxu0 0.0
      %11306 = vmatpush2.msra.mxu0 0.0
      %11307 = vmatprep.subr.mxu0 0.0
      %11308 = vmatpush2.msra.mxu0 0.0
      %11309 = vmatprep.subr.mxu0 0.0
      %11310 = vmatpush2.msra.mxu0 0.0
      %11311 = vmatprep.subr.mxu0 0.0
      %11312 = vmatpush2.msra.mxu0 0.0
      %11313 = vmatprep.subr.mxu0 0.0
      %11314 = vmatpush2.msra.mxu0 0.0
      %11315 = vmatprep.subr.mxu0 0.0
      %11316 = vmatpush2.msra.mxu0 0.0
      %11317 = vmatprep.subr.mxu0 0.0
      %11318 = vmatpush2.msra.mxu0 0.0
      %11319 = vmatprep.subr.mxu0 0.0
      %11320 = vmatpush2.msra.mxu0 0.0
      %11321 = vmatprep.subr.mxu0 0.0
      %11322 = vmatpush2.msra.mxu0 0.0
      %11323 = vmatprep.mubr.f32.mxu0 0.0
      %v11324 = vand.u32 %v11079, 4294901760
      %v11325 = vsub.f32 %v11079, %v11324
      %11326 = vmatmul.mubr.f32.gmra.mxu0 %v11325
      %v11327 = vpop.f32.mrf.mxu0
      %v11328 = vadd.f32 %v11248, %v11327
      %v11329 = vpop.f32.mrf.mxu0
      %11330 = vdwg.mxu0
      %11331 = vmatprep.subr.mxu0 0.0
      %11332 = vmatpush1.msra.mxu0 0.0
      %11333 = vmatprep.subr.mxu0 0.0
      %11334 = vmatpush1.msra.mxu0 0.0
      %11335 = vmatprep.subr.mxu0 0.0
      %11336 = vmatpush1.msra.mxu0 0.0
      %11337 = vmatprep.subr.mxu0 0.0
      %11338 = vmatpush1.msra.mxu0 0.0
      %11339 = vmatprep.subr.mxu0 0.0
      %11340 = vmatpush1.msra.mxu0 0.0
      %11341 = vmatprep.subr.mxu0 0.0
      %11342 = vmatpush1.msra.mxu0 0.0
      %11343 = vmatprep.subr.mxu0 0.0
      %11344 = vmatpush1.msra.mxu0 0.0
      %11345 = vmatprep.subr.mxu0 0.0
      %11346 = vmatpush1.msra.mxu0 0.0
      %11347 = vmatprep.subr.mxu0 0.0
      %11348 = vmatpush1.msra.mxu0 0.0
      %11349 = vmatprep.subr.mxu0 0.0
      %11350 = vmatpush1.msra.mxu0 0.0
      %11351 = vmatprep.subr.mxu0 0.0
      %11352 = vmatpush1.msra.mxu0 0.0
      %11353 = vmatprep.subr.mxu0 0.0
      %11354 = vmatpush1.msra.mxu0 0.0
      %11355 = vmatprep.subr.mxu0 0.0
      %v11356 = vand.u32 %v11070, 4294901760
      %11357 = vmatpush1.msra.mxu0 %v11356
      %11358 = vmatprep.subr.mxu0 0.0
      %v11359 = vand.u32 %v11069, 4294901760
      %11360 = vmatpush1.msra.mxu0 %v11359
      %11361 = vmatprep.subr.mxu0 0.0
      %v11362 = vand.u32 %v11068, 4294901760
      %11363 = vmatpush1.msra.mxu0 %v11362
      %11364 = vmatprep.subr.mxu0 0.0
      %v11365 = vand.u32 %v11067, 4294901760
      %11366 = vmatpush1.msra.mxu0 %v11365
      %11367 = vmatprep.subr.mxu0 0.0
      %11368 = vmatpush2.msra.mxu0 0.0
      %11369 = vmatprep.subr.mxu0 0.0
      %11370 = vmatpush2.msra.mxu0 0.0
      %11371 = vmatprep.subr.mxu0 0.0
      %11372 = vmatpush2.msra.mxu0 0.0
      %11373 = vmatprep.subr.mxu0 0.0
      %11374 = vmatpush2.msra.mxu0 0.0
      %11375 = vmatprep.subr.mxu0 0.0
      %11376 = vmatpush2.msra.mxu0 0.0
      %11377 = vmatprep.subr.mxu0 0.0
      %11378 = vmatpush2.msra.mxu0 0.0
      %11379 = vmatprep.subr.mxu0 0.0
      %11380 = vmatpush2.msra.mxu0 0.0
      %11381 = vmatprep.subr.mxu0 0.0
      %11382 = vmatpush2.msra.mxu0 0.0
      %11383 = vmatprep.subr.mxu0 0.0
      %11384 = vmatpush2.msra.mxu0 0.0
      %11385 = vmatprep.subr.mxu0 0.0
      %11386 = vmatpush2.msra.mxu0 0.0
      %11387 = vmatprep.subr.mxu0 0.0
      %11388 = vmatpush2.msra.mxu0 0.0
      %11389 = vmatprep.subr.mxu0 0.0
      %11390 = vmatpush2.msra.mxu0 0.0
      %11391 = vmatprep.subr.mxu0 0.0
      %11392 = vmatpush2.msra.mxu0 0.0
      %11393 = vmatprep.subr.mxu0 0.0
      %11394 = vmatpush2.msra.mxu0 0.0
      %11395 = vmatprep.subr.mxu0 0.0
      %11396 = vmatpush2.msra.mxu0 0.0
      %11397 = vmatprep.subr.mxu0 0.0
      %11398 = vmatpush2.msra.mxu0 0.0
      %11399 = vmatprep.mubr.f32.mxu0 0.0
      %v11400 = vand.u32 %v11079, 4294901760
      %v11401 = vsub.f32 %v11079, %v11400
      %v11402 = vand.u32 %v11401, 4294901760
      %11403 = vmatmul.mubr.f32.gmra.mxu0 %v11402
      %v11404 = vpop.f32.mrf.mxu0
      %v11405 = vadd.f32 %v11328, %v11404
      %v11406 = vpop.f32.mrf.mxu0
      %11407 = vdwg.mxu0
      %11408 = vmatprep.subr.mxu0 0.0
      %11409 = vmatpush1.msra.mxu0 0.0
      %11410 = vmatprep.subr.mxu0 0.0
      %11411 = vmatpush1.msra.mxu0 0.0
      %11412 = vmatprep.subr.mxu0 0.0
      %11413 = vmatpush1.msra.mxu0 0.0
      %11414 = vmatprep.subr.mxu0 0.0
      %11415 = vmatpush1.msra.mxu0 0.0
      %11416 = vmatprep.subr.mxu0 0.0
      %11417 = vmatpush1.msra.mxu0 0.0
      %11418 = vmatprep.subr.mxu0 0.0
      %11419 = vmatpush1.msra.mxu0 0.0
      %11420 = vmatprep.subr.mxu0 0.0
      %11421 = vmatpush1.msra.mxu0 0.0
      %11422 = vmatprep.subr.mxu0 0.0
      %11423 = vmatpush1.msra.mxu0 0.0
      %11424 = vmatprep.subr.mxu0 0.0
      %11425 = vmatpush1.msra.mxu0 0.0
      %11426 = vmatprep.subr.mxu0 0.0
      %11427 = vmatpush1.msra.mxu0 0.0
      %11428 = vmatprep.subr.mxu0 0.0
      %11429 = vmatpush1.msra.mxu0 0.0
      %11430 = vmatprep.subr.mxu0 0.0
      %11431 = vmatpush1.msra.mxu0 0.0
      %11432 = vmatprep.subr.mxu0 0.0
      %v11433 = vand.u32 %v11070, 4294901760
      %v11434 = vsub.f32 %v11070, %v11433
      %v11435 = vand.u32 %v11434, 4294901760
      %11436 = vmatpush1.msra.mxu0 %v11435
      %11437 = vmatprep.subr.mxu0 0.0
      %v11438 = vand.u32 %v11069, 4294901760
      %v11439 = vsub.f32 %v11069, %v11438
      %v11440 = vand.u32 %v11439, 4294901760
      %11441 = vmatpush1.msra.mxu0 %v11440
      %11442 = vmatprep.subr.mxu0 0.0
      %v11443 = vand.u32 %v11068, 4294901760
      %v11444 = vsub.f32 %v11068, %v11443
      %v11445 = vand.u32 %v11444, 4294901760
      %11446 = vmatpush1.msra.mxu0 %v11445
      %11447 = vmatprep.subr.mxu0 0.0
      %v11448 = vand.u32 %v11067, 4294901760
      %v11449 = vsub.f32 %v11067, %v11448
      %v11450 = vand.u32 %v11449, 4294901760
      %11451 = vmatpush1.msra.mxu0 %v11450
      %11452 = vmatprep.subr.mxu0 0.0
      %11453 = vmatpush2.msra.mxu0 0.0
      %11454 = vmatprep.subr.mxu0 0.0
      %11455 = vmatpush2.msra.mxu0 0.0
      %11456 = vmatprep.subr.mxu0 0.0
      %11457 = vmatpush2.msra.mxu0 0.0
      %11458 = vmatprep.subr.mxu0 0.0
      %11459 = vmatpush2.msra.mxu0 0.0
      %11460 = vmatprep.subr.mxu0 0.0
      %11461 = vmatpush2.msra.mxu0 0.0
      %11462 = vmatprep.subr.mxu0 0.0
      %11463 = vmatpush2.msra.mxu0 0.0
      %11464 = vmatprep.subr.mxu0 0.0
      %11465 = vmatpush2.msra.mxu0 0.0
      %11466 = vmatprep.subr.mxu0 0.0
      %11467 = vmatpush2.msra.mxu0 0.0
      %11468 = vmatprep.subr.mxu0 0.0
      %11469 = vmatpush2.msra.mxu0 0.0
      %11470 = vmatprep.subr.mxu0 0.0
      %11471 = vmatpush2.msra.mxu0 0.0
      %11472 = vmatprep.subr.mxu0 0.0
      %11473 = vmatpush2.msra.mxu0 0.0
      %11474 = vmatprep.subr.mxu0 0.0
      %11475 = vmatpush2.msra.mxu0 0.0
      %11476 = vmatprep.subr.mxu0 0.0
      %11477 = vmatpush2.msra.mxu0 0.0
      %11478 = vmatprep.subr.mxu0 0.0
      %11479 = vmatpush2.msra.mxu0 0.0
      %11480 = vmatprep.subr.mxu0 0.0
      %11481 = vmatpush2.msra.mxu0 0.0
      %11482 = vmatprep.subr.mxu0 0.0
      %11483 = vmatpush2.msra.mxu0 0.0
      %11484 = vmatprep.mubr.f32.mxu0 0.0
      %v11485 = vand.u32 %v11079, 4294901760
      %11486 = vmatmul.mubr.f32.gmra.mxu0 %v11485
      %v11487 = vpop.f32.mrf.mxu0
      %v11488 = vadd.f32 %v11405, %v11487
      %v11489 = vpop.f32.mrf.mxu0
      %11490 = vdwg.mxu0
      %11491 = vmatprep.subr.mxu0 0.0
      %11492 = vmatpush1.msra.mxu0 0.0
      %11493 = vmatprep.subr.mxu0 0.0
      %11494 = vmatpush1.msra.mxu0 0.0
      %11495 = vmatprep.subr.mxu0 0.0
      %11496 = vmatpush1.msra.mxu0 0.0
      %11497 = vmatprep.subr.mxu0 0.0
      %11498 = vmatpush1.msra.mxu0 0.0
      %11499 = vmatprep.subr.mxu0 0.0
      %11500 = vmatpush1.msra.mxu0 0.0
      %11501 = vmatprep.subr.mxu0 0.0
      %11502 = vmatpush1.msra.mxu0 0.0
      %11503 = vmatprep.subr.mxu0 0.0
      %11504 = vmatpush1.msra.mxu0 0.0
      %11505 = vmatprep.subr.mxu0 0.0
      %11506 = vmatpush1.msra.mxu0 0.0
      %11507 = vmatprep.subr.mxu0 0.0
      %11508 = vmatpush1.msra.mxu0 0.0
      %11509 = vmatprep.subr.mxu0 0.0
      %11510 = vmatpush1.msra.mxu0 0.0
      %11511 = vmatprep.subr.mxu0 0.0
      %11512 = vmatpush1.msra.mxu0 0.0
      %11513 = vmatprep.subr.mxu0 0.0
      %11514 = vmatpush1.msra.mxu0 0.0
      %11515 = vmatprep.subr.mxu0 0.0
      %v11516 = vand.u32 %v11070, 4294901760
      %11517 = vmatpush1.msra.mxu0 %v11516
      %11518 = vmatprep.subr.mxu0 0.0
      %v11519 = vand.u32 %v11069, 4294901760
      %11520 = vmatpush1.msra.mxu0 %v11519
      %11521 = vmatprep.subr.mxu0 0.0
      %v11522 = vand.u32 %v11068, 4294901760
      %11523 = vmatpush1.msra.mxu0 %v11522
      %11524 = vmatprep.subr.mxu0 0.0
      %v11525 = vand.u32 %v11067, 4294901760
      %11526 = vmatpush1.msra.mxu0 %v11525
      %11527 = vmatprep.subr.mxu0 0.0
      %11528 = vmatpush2.msra.mxu0 0.0
      %11529 = vmatprep.subr.mxu0 0.0
      %11530 = vmatpush2.msra.mxu0 0.0
      %11531 = vmatprep.subr.mxu0 0.0
      %11532 = vmatpush2.msra.mxu0 0.0
      %11533 = vmatprep.subr.mxu0 0.0
      %11534 = vmatpush2.msra.mxu0 0.0
      %11535 = vmatprep.subr.mxu0 0.0
      %11536 = vmatpush2.msra.mxu0 0.0
      %11537 = vmatprep.subr.mxu0 0.0
      %11538 = vmatpush2.msra.mxu0 0.0
      %11539 = vmatprep.subr.mxu0 0.0
      %11540 = vmatpush2.msra.mxu0 0.0
      %11541 = vmatprep.subr.mxu0 0.0
      %11542 = vmatpush2.msra.mxu0 0.0
      %11543 = vmatprep.subr.mxu0 0.0
      %11544 = vmatpush2.msra.mxu0 0.0
      %11545 = vmatprep.subr.mxu0 0.0
      %11546 = vmatpush2.msra.mxu0 0.0
      %11547 = vmatprep.subr.mxu0 0.0
      %11548 = vmatpush2.msra.mxu0 0.0
      %11549 = vmatprep.subr.mxu0 0.0
      %11550 = vmatpush2.msra.mxu0 0.0
      %11551 = vmatprep.subr.mxu0 0.0
      %11552 = vmatpush2.msra.mxu0 0.0
      %11553 = vmatprep.subr.mxu0 0.0
      %11554 = vmatpush2.msra.mxu0 0.0
      %11555 = vmatprep.subr.mxu0 0.0
      %11556 = vmatpush2.msra.mxu0 0.0
      %11557 = vmatprep.subr.mxu0 0.0
      %11558 = vmatpush2.msra.mxu0 0.0
      %11559 = vmatprep.mubr.f32.mxu0 0.0
      %v11560 = vand.u32 %v11079, 4294901760
      %11561 = vmatmul.mubr.f32.gmra.mxu0 %v11560
      %v11562 = vpop.f32.mrf.mxu0
      %v11563 = vadd.f32 %v11488, %v11562
      %v11564 = vpop.f32.mrf.mxu0
      %11565 = vdwg.mxu0
      %11566 = vst [vmem:[%s328] sm:$0x7] %v11563
      %p11567 = scmp.lt.s32.totalorder %s21, 1
      %s11568 = scalar_select %p11567, %s21, 1
      %p11569 = scmp.lt.s32.totalorder %s22, 0
      %s11570 = scalar_select %p11569, %s22, 0
      %s11571 = sadd.s32 %s11570, %s11568
      %s11572 = smul.addr %s11571, 4
      %s11573 = scalar_lea.vmem %s6, %s11572
      // Predicated region
      $region45: #{_decoder_impl.1} parent=43 // pred_check
        %p11574 = pneg %p194
      $region46: #{_decoder_impl.1} parent=43 // pred_check_branch
        %11576 = sbr.rel (%p11574) target = $region48
      $region47: #{_decoder_impl.1} parent=43 // pred_region
        _
      $region48: #{_decoder_impl.1} parent=43 // pred_fallthru
        _
    $region44: #{_decoder_impl.1} parent=5 // pred_fallthru
      _
    %p11577 = scmp.le.s32.totalorder 2, %s12
    // Predicated region
    $region49: #{_decoder_impl.1} parent=5 // pred_check
      %p11578 = pneg %p11577
    $region50: #{_decoder_impl.1} parent=5 // pred_check_branch
      %11580 = sbr.rel (%p11578) target = $region52
    $region51: #{_decoder_impl.1} parent=5 // pred_region
      %s11581 = ssub.s32 %s12, 2
      // Predicated region
      $region53: #{_decoder_impl.1} parent=51 // pred_check
        %p11582 = pneg %p200
      $region54: #{_decoder_impl.1} parent=51 // pred_check_branch
        %11584 = sbr.rel (%p11582) target = $region56
      $region55: #{_decoder_impl.1} parent=51 // pred_region
        %p11585 = scmp.lt.s32.totalorder %s23, 1
        %s11586 = scalar_select %p11585, %s23, 1
        %p11587 = scmp.lt.s32.totalorder %s24, 0
        %s11588 = scalar_select %p11587, %s24, 0
        %s11589 = sadd.s32 %s11588, %s11586
        %s11590 = smul.addr %s11589, 4
        %s11591 = scalar_lea.vmem %s6, %s11590
      $region56: #{_decoder_impl.1} parent=51 // pred_fallthru
        _
    $region52: #{_decoder_impl.1} parent=5 // pred_fallthru
      _
  $region6: #{_decoder_impl.1} parent=0 // loop_footer
    %s16 = sadd.s32 1, %s12
  $region7: #{_decoder_impl.1} parent=0 // loop_footer_branch
    %11 = sbr.rel target = $region3
  $region8: #{_decoder_impl.1} parent=0 // loop_exit
    _

</llo_original>
